<compile_context>
chip_gen: v6e
topology: v6e:2x2x1
jax: 0.10.0
libtpu: 0.0.40
codegen_flags: <defaults>
</compile_context>

<pallas_src>
import jax
import jax.numpy as jnp
import numpy as np
from jax.experimental import pallas as pl
from jax.experimental.pallas import tpu as pltpu

C = 32                   # channels (in == out for both convs in cfg '0_3')
HW = 6                   # input spatial size (6x6 -> 3x3 after the 2x2 max-pool)
PADHW = HW + 2           # zero-padded spatial size (8)
PIX = PADHW * PADHW      # padded-flat pixels per image (64)
GUARD = 16               # zero guard rows above/below each block of activations
POOL = HW // 2           # pooled spatial size (3)
FEAT = C * POOL * POOL   # 288
NCLS = 2
NB = 8                   # images per grid block (batch padded to a multiple of NB)
NR = NB * PIX            # activation rows per block (512)
KCOL = 9 * C             # im2col width = conv matmul K (288)

# 3x3 tap offsets in padded-flat rows, (kh, kw) row-major (matches weight row order)
_TAP_OFFS = tuple((kh - 1) * PADHW + (kw - 1) for kh in range(3) for kw in range(3))


# ---------------------------------------------------------------------------------
# Host-side constants (built once with numpy -> embedded as literals, never rebuilt)
# ---------------------------------------------------------------------------------
def _perm_sm_to_chw():
    # fsm lane i = s*C + c  ->  PyTorch-flatten lane j = c*9 + s   (0/1 matrix)
    s = np.arange(POOL * POOL)[:, None]
    c = np.arange(C)[None, :]
    i = (s * C + c).reshape(-1)
    j = (c * (POOL * POOL) + s).reshape(-1)
    perm = np.zeros((FEAT, FEAT), np.float32)
    perm[i, j] = 1.0
    return perm


def _interior_mask():
    # 1.0 at real-pixel rows (hp, wp in [1, 6]) of the padded-flat layout, else 0.0
    r = np.arange(PIX)
    hp, wp = r // PADHW, r % PADHW
    inter = ((hp >= 1) & (hp <= HW) & (wp >= 1) & (wp <= HW)).astype(np.float32)
    return np.tile(inter, NB)[:, None] * np.ones((1, C), np.float32)   # (NR, C)


_PERM = _perm_sm_to_chw()
_MASK = _interior_mask()
# fc column index mapping spatial-major row i = s*C + c  ->  PyTorch column c*9 + s
_SM_COLS = (np.arange(C)[None, :] * (POOL * POOL)
            + np.arange(POOL * POOL)[:, None]).reshape(-1)


# ---------------------------------------------------------------------------------
# Fused per-block kernel: conv1+BN+ReLU -> conv2+BN+ReLU -> MaxPool(2,2) -> head
# Activations live in a guarded VMEM scratch laid out as
#   row = img*64 + hp*8 + wp   (padded-flat spatial, channels on the 32 lanes)
# so every shifted 3x3 tap is an in-bounds static sublane slice.
# ---------------------------------------------------------------------------------
def fused_block_kernel(x_ref, mask_ref, w1_ref, sh1_ref, w2_ref, sh2_ref,
                       perm_ref, wfc_ref, bfc_ref,
                       feat_ref, out_ref,
                       act_ref, col_ref, fsm_ref):
    # guard bands must read as zero; the interior is fully overwritten below
    act_ref[0:GUARD, :] = jnp.zeros((GUARD, C), jnp.float32)
    act_ref[GUARD + NR:GUARD + NR + GUARD, :] = jnp.zeros((GUARD, C), jnp.float32)

    # stage this block's zero-padded input into the guarded activation scratch
    act_ref[GUARD:GUARD + NR, :] = x_ref[...]

    def conv3x3(w_ref, sh_ref):
        # im2col (9 shifted copies) -> ONE K=288 MXU matmul, then shift-add + ReLU
        for t, d in enumerate(_TAP_OFFS):
            col_ref[:, t * C:(t + 1) * C] = act_ref[GUARD + d:GUARD + d + NR, :]
        y = jnp.dot(col_ref[...], w_ref[...], preferred_element_type=jnp.float32)
        return jnp.maximum(y + sh_ref[...], 0.0)

    # conv1 + folded BN1 + ReLU; padding/border rows zeroed with the precomputed
    # mask (conv2's taps must read zeros at its padding positions)
    act_ref[GUARD:GUARD + NR, :] = conv3x3(w1_ref, sh1_ref) * mask_ref[...]

    # conv2 + folded BN2 + ReLU (border rows hold garbage; never gathered below)
    act_ref[GUARD:GUARD + NR, :] = conv3x3(w2_ref, sh2_ref)

    # MaxPool(2,2), vectorized: vertical 2-row max, then horizontal 2-col max via
    # sublane-shifted full-tensor slices (wrap rows land on unused border rows)
    act_ref[GUARD:GUARD + NR, :] = jnp.maximum(
        act_ref[GUARD:GUARD + NR, :],
        act_ref[GUARD + PADHW:GUARD + PADHW + NR, :])
    act_ref[GUARD:GUARD + NR, :] = jnp.maximum(
        act_ref[GUARD:GUARD + NR, :],
        act_ref[GUARD + 1:GUARD + 1 + NR, :])

    # gather the 9 pooled positions: one strided (stride=PIX) read of (NB, C) each,
    # stored lane-blocked into the spatial-major feature (lane = s*C + c)
    for s in range(POOL * POOL):
        ph, pw = divmod(s, POOL)
        roff = (2 * ph + 1) * PADHW + (2 * pw + 1)
        fsm_ref[:, s * C:(s + 1) * C] = act_ref[pl.ds(GUARD + roff, NB, stride=PIX), :]

    # head: feature output permuted to PyTorch (C,H,W) order on the MXU; logits use
    # the spatial-major-reordered fc weight directly (permutation folded in wrapper),
    # so the two matmuls are independent (no serial feat -> out dependency)
    fsm = fsm_ref[...]
    feat_ref[...] = jnp.dot(fsm, perm_ref[...], preferred_element_type=jnp.float32)
    out_ref[...] = (jnp.dot(fsm, wfc_ref[...], preferred_element_type=jnp.float32)
                    + bfc_ref[...])


# ---------------------------------------------------------------------------------
# Wrapper: parameter prep (BN fold, weight layout) + pallas_call over batch blocks
# ---------------------------------------------------------------------------------
def _fold_bn(conv_b, gamma, beta, mean, var, eps=1e-5):
    scale = gamma * jax.lax.rsqrt(var + eps)
    shift = conv_b * scale + beta - mean * scale
    return scale, shift.reshape(1, -1)


def _conv_weight_mxu(w_oihw, scale):
    # PyTorch (Cout, Cin, 3, 3) -> ((kh, kw, cin), cout), BN scale folded per column
    w = jnp.transpose(w_oihw, (2, 3, 1, 0)).reshape(KCOL, C)
    return w * scale[None, :]


@jax.jit
def mod_zero_three_forward(x_nchw, p):
    n, cin, h, w = x_nchw.shape
    assert (cin, h, w) == (C, HW, HW), "mod_zero_three expects (N, 32, 6, 6) inputs"

    # pad the batch to a multiple of the per-block image count
    n_pad = -(-n // NB) * NB
    if n_pad != n:
        x_nchw = jnp.pad(x_nchw, ((0, n_pad - n), (0, 0), (0, 0), (0, 0)))
    n_blk = n_pad // NB

    # layout plumbing (kept minimal): NCHW -> zero-padded, flattened NHWC (row, chan)
    # TODO(synk): accept NHWC input to drop the transpose and fold into one pad op.
    x_nhwc = jnp.transpose(x_nchw, (0, 2, 3, 1))
    x_pad = jnp.pad(x_nhwc, ((0, 0), (1, 1), (1, 1), (0, 0)))     # (Npad, 8, 8, C)
    x_flat = x_pad.reshape(n_pad * PIX, C)

    # fold BN (inference mode) into the conv weights / per-channel shifts
    sc1, sh1 = _fold_bn(p["b1"], p["g1"], p["be1"], p["m1"], p["v1"])
    sc2, sh2 = _fold_bn(p["b2"], p["g2"], p["be2"], p["m2"], p["v2"])
    w1 = _conv_weight_mxu(p["w1"], sc1)
    w2 = _conv_weight_mxu(p["w2"], sc2)

    perm = jnp.asarray(_PERM)
    mask = jnp.asarray(_MASK)
    wfc_sm = p["fcw"][:, _SM_COLS].T            # (288, 2), rows in spatial-major order
    bfc = p["fcb"].reshape(1, NCLS)

    feat, out = pl.pallas_call(
        fused_block_kernel,
        out_shape=(
            jax.ShapeDtypeStruct((n_pad, FEAT), jnp.float32),
            jax.ShapeDtypeStruct((n_pad, NCLS), jnp.float32),
        ),
        grid=(n_blk,),
        in_specs=[
            pl.BlockSpec((NR, C), lambda i: (i, 0)),        # x block (padded-flat)
            pl.BlockSpec((NR, C), lambda i: (0, 0)),        # interior mask (constant)
            pl.BlockSpec((KCOL, C), lambda i: (0, 0)),      # w1 (BN folded)
            pl.BlockSpec((1, C), lambda i: (0, 0)),         # shift1
            pl.BlockSpec((KCOL, C), lambda i: (0, 0)),      # w2 (BN folded)
            pl.BlockSpec((1, C), lambda i: (0, 0)),         # shift2
            pl.BlockSpec((FEAT, FEAT), lambda i: (0, 0)),   # (s,c)->(c,h,w) permutation
            pl.BlockSpec((FEAT, NCLS), lambda i: (0, 0)),   # fc weight, spatial-major
            pl.BlockSpec((1, NCLS), lambda i: (0, 0)),      # fc bias
        ],
        out_specs=(
            pl.BlockSpec((NB, FEAT), lambda i: (i, 0)),
            pl.BlockSpec((NB, NCLS), lambda i: (i, 0)),
        ),
        scratch_shapes=[
            pltpu.VMEM((2 * GUARD + NR, C), jnp.float32),   # guarded activations
            pltpu.VMEM((NR, KCOL), jnp.float32),            # im2col buffer
            pltpu.VMEM((NB, FEAT), jnp.float32),            # spatial-major pooled feat
        ],
        compiler_params=pltpu.CompilerParams(
            dimension_semantics=("parallel",)),   # blocks independent: both v7x TCs,
                                                  # input DMA double-buffered
    )(x_flat, mask, w1, sh1, w2, sh2, perm, wfc_sm, bfc)

    return feat[:n], out[:n]


def init_params(key):
    ks = jax.random.split(key, 14)
    p = {}
    # conv1: Conv2d(32, 32, 3, padding=1) + BatchNorm2d(32)
    p["w1"] = jax.random.normal(ks[0], (C, C, 3, 3), jnp.float32) * 0.05
    p["b1"] = jax.random.normal(ks[1], (C,), jnp.float32) * 0.05
    p["g1"] = 1.0 + 0.1 * jax.random.normal(ks[2], (C,), jnp.float32)
    p["be1"] = 0.1 * jax.random.normal(ks[3], (C,), jnp.float32)
    p["m1"] = 0.1 * jax.random.normal(ks[4], (C,), jnp.float32)
    p["v1"] = 0.5 + jax.random.uniform(ks[5], (C,), jnp.float32)
    # conv2: Conv2d(32, 32, 3, padding=1) + BatchNorm2d(32)
    p["w2"] = jax.random.normal(ks[6], (C, C, 3, 3), jnp.float32) * 0.05
    p["b2"] = jax.random.normal(ks[7], (C,), jnp.float32) * 0.05
    p["g2"] = 1.0 + 0.1 * jax.random.normal(ks[8], (C,), jnp.float32)
    p["be2"] = 0.1 * jax.random.normal(ks[9], (C,), jnp.float32)
    p["m2"] = 0.1 * jax.random.normal(ks[10], (C,), jnp.float32)
    p["v2"] = 0.5 + jax.random.uniform(ks[11], (C,), jnp.float32)
    # classifier: Linear(32*3*3, 2)  (PyTorch weight shape (2, 288), (C,H,W) columns)
    p["fcw"] = jax.random.normal(ks[12], (NCLS, FEAT), jnp.float32) * 0.05
    p["fcb"] = jax.random.normal(ks[13], (NCLS,), jnp.float32) * 0.05
    return p


if __name__ == "__main__":
    key = jax.random.PRNGKey(0)
    kx, kp = jax.random.split(key)
    # Input spatial size must be 6x6 so that 32*3*3 matches the classifier.
    x = jax.random.normal(kx, (2, C, HW, HW), jnp.float32)   # NCHW, like PyTorch
    params = init_params(kp)

    feat, out = mod_zero_three_forward(x, params)
    jax.block_until_ready((feat, out))
    assert feat.shape == (2, FEAT) and out.shape == (2, NCLS)
    assert bool(jnp.all(jnp.isfinite(feat))) and bool(jnp.all(jnp.isfinite(out)))
    print("KERNEL_OK")
</pallas_src>

<mosaic_0001>
module attributes {stable_mosaic.version = 11 : i64} {
  func.func @fused_block_kernel(%arg0: i32, %arg1: memref<512x32xf32, #tpu.memory_space<vmem>>, %arg2: memref<512x32xf32, #tpu.memory_space<vmem>>, %arg3: memref<288x32xf32, #tpu.memory_space<vmem>>, %arg4: memref<1x32xf32, #tpu.memory_space<vmem>>, %arg5: memref<288x32xf32, #tpu.memory_space<vmem>>, %arg6: memref<1x32xf32, #tpu.memory_space<vmem>>, %arg7: memref<288x288xf32, #tpu.memory_space<vmem>>, %arg8: memref<288x2xf32, #tpu.memory_space<vmem>>, %arg9: memref<1x2xf32, #tpu.memory_space<vmem>>, %arg10: memref<8x288xf32, #tpu.memory_space<vmem>>, %arg11: memref<8x2xf32, #tpu.memory_space<vmem>>, %arg12: memref<544x32xf32, #tpu.memory_space<vmem>>, %arg13: memref<512x288xf32, #tpu.memory_space<vmem>>, %arg14: memref<8x288xf32, #tpu.memory_space<vmem>>) attributes {dimension_semantics = [#tpu.dimension_semantics<parallel>], iteration_bounds = array<i64: 1>, scalar_prefetch = 0 : i64, scratch_operands = 3 : i64, tpu.core_type = #tpu.core_type<tc>, window_params = [{transform_indices = @transform_0, window_bounds = array<i64: 512, 32>}, {pipeline_mode = #tpu.pipeline_mode<synchronous>, transform_indices = @transform_1, window_bounds = array<i64: 512, 32>}, {pipeline_mode = #tpu.pipeline_mode<synchronous>, transform_indices = @transform_2, window_bounds = array<i64: 288, 32>}, {pipeline_mode = #tpu.pipeline_mode<synchronous>, transform_indices = @transform_3, window_bounds = array<i64: 1, 32>}, {pipeline_mode = #tpu.pipeline_mode<synchronous>, transform_indices = @transform_4, window_bounds = array<i64: 288, 32>}, {pipeline_mode = #tpu.pipeline_mode<synchronous>, transform_indices = @transform_5, window_bounds = array<i64: 1, 32>}, {pipeline_mode = #tpu.pipeline_mode<synchronous>, transform_indices = @transform_6, window_bounds = array<i64: 288, 288>}, {pipeline_mode = #tpu.pipeline_mode<synchronous>, transform_indices = @transform_7, window_bounds = array<i64: 288, 2>}, {pipeline_mode = #tpu.pipeline_mode<synchronous>, transform_indices = @transform_8, window_bounds = array<i64: 1, 2>}, {transform_indices = @transform_9, window_bounds = array<i64: 8, 288>}, {transform_indices = @transform_10, window_bounds = array<i64: 8, 2>}]} {
    %cst = arith.constant 0.000000e+00 : f32
    %0 = vector.broadcast %cst : f32 to vector<16x32xf32>
    %c0 = arith.constant 0 : index
    %c0_0 = arith.constant 0 : index
    %1 = vector.load %arg12[%c0, %c0_0] : memref<544x32xf32, #tpu.memory_space<vmem>>, vector<16x32xf32>
    tpu.vector_store %arg12[%c0, %c0_0], %0 {strides = array<i32>} : memref<544x32xf32, #tpu.memory_space<vmem>>, vector<16x32xf32>,
    %cst_1 = arith.constant 0.000000e+00 : f32
    %2 = vector.broadcast %cst_1 : f32 to vector<16x32xf32>
    %c528 = arith.constant 528 : index
    %c0_2 = arith.constant 0 : index
    %3 = vector.load %arg12[%c528, %c0_2] : memref<544x32xf32, #tpu.memory_space<vmem>>, vector<16x32xf32>
    tpu.vector_store %arg12[%c528, %c0_2], %2 {strides = array<i32>} : memref<544x32xf32, #tpu.memory_space<vmem>>, vector<16x32xf32>,
    %c0_3 = arith.constant 0 : index
    %c0_4 = arith.constant 0 : index
    %4 = vector.load %arg1[%c0_3, %c0_4] : memref<512x32xf32, #tpu.memory_space<vmem>>, vector<512x32xf32>
    %c16 = arith.constant 16 : index
    %c0_5 = arith.constant 0 : index
    %5 = vector.load %arg12[%c16, %c0_5] : memref<544x32xf32, #tpu.memory_space<vmem>>, vector<512x32xf32>
    tpu.vector_store %arg12[%c16, %c0_5], %4 {strides = array<i32>} : memref<544x32xf32, #tpu.memory_space<vmem>>, vector<512x32xf32>,
    %c7 = arith.constant 7 : index
    %c0_6 = arith.constant 0 : index
    %6 = vector.load %arg12[%c7, %c0_6] : memref<544x32xf32, #tpu.memory_space<vmem>>, vector<512x32xf32>
    %c0_7 = arith.constant 0 : index
    %c0_8 = arith.constant 0 : index
    %7 = vector.load %arg13[%c0_7, %c0_8] : memref<512x288xf32, #tpu.memory_space<vmem>>, vector<512x32xf32>
    tpu.vector_store %arg13[%c0_7, %c0_8], %6 {strides = array<i32>} : memref<512x288xf32, #tpu.memory_space<vmem>>, vector<512x32xf32>,
    %c8 = arith.constant 8 : index
    %c0_9 = arith.constant 0 : index
    %8 = vector.load %arg12[%c8, %c0_9] : memref<544x32xf32, #tpu.memory_space<vmem>>, vector<512x32xf32>
    %c0_10 = arith.constant 0 : index
    %c32 = arith.constant 32 : index
    %9 = vector.load %arg13[%c0_10, %c32] : memref<512x288xf32, #tpu.memory_space<vmem>>, vector<512x32xf32>
    tpu.vector_store %arg13[%c0_10, %c32], %8 {strides = array<i32>} : memref<512x288xf32, #tpu.memory_space<vmem>>, vector<512x32xf32>,
    %c9 = arith.constant 9 : index
    %c0_11 = arith.constant 0 : index
    %10 = vector.load %arg12[%c9, %c0_11] : memref<544x32xf32, #tpu.memory_space<vmem>>, vector<512x32xf32>
    %c0_12 = arith.constant 0 : index
    %c64 = arith.constant 64 : index
    %11 = vector.load %arg13[%c0_12, %c64] : memref<512x288xf32, #tpu.memory_space<vmem>>, vector<512x32xf32>
    tpu.vector_store %arg13[%c0_12, %c64], %10 {strides = array<i32>} : memref<512x288xf32, #tpu.memory_space<vmem>>, vector<512x32xf32>,
    %c15 = arith.constant 15 : index
    %c0_13 = arith.constant 0 : index
    %12 = vector.load %arg12[%c15, %c0_13] : memref<544x32xf32, #tpu.memory_space<vmem>>, vector<512x32xf32>
    %c0_14 = arith.constant 0 : index
    %c96 = arith.constant 96 : index
    %13 = vector.load %arg13[%c0_14, %c96] : memref<512x288xf32, #tpu.memory_space<vmem>>, vector<512x32xf32>
    tpu.vector_store %arg13[%c0_14, %c96], %12 {strides = array<i32>} : memref<512x288xf32, #tpu.memory_space<vmem>>, vector<512x32xf32>,
    %c16_15 = arith.constant 16 : index
    %c0_16 = arith.constant 0 : index
    %14 = vector.load %arg12[%c16_15, %c0_16] : memref<544x32xf32, #tpu.memory_space<vmem>>, vector<512x32xf32>
    %c0_17 = arith.constant 0 : index
    %c128 = arith.constant 128 : index
    %15 = vector.load %arg13[%c0_17, %c128] : memref<512x288xf32, #tpu.memory_space<vmem>>, vector<512x32xf32>
    tpu.vector_store %arg13[%c0_17, %c128], %14 {strides = array<i32>} : memref<512x288xf32, #tpu.memory_space<vmem>>, vector<512x32xf32>,
    %c17 = arith.constant 17 : index
    %c0_18 = arith.constant 0 : index
    %16 = vector.load %arg12[%c17, %c0_18] : memref<544x32xf32, #tpu.memory_space<vmem>>, vector<512x32xf32>
    %c0_19 = arith.constant 0 : index
    %c160 = arith.constant 160 : index
    %17 = vector.load %arg13[%c0_19, %c160] : memref<512x288xf32, #tpu.memory_space<vmem>>, vector<512x32xf32>
    tpu.vector_store %arg13[%c0_19, %c160], %16 {strides = array<i32>} : memref<512x288xf32, #tpu.memory_space<vmem>>, vector<512x32xf32>,
    %c23 = arith.constant 23 : index
    %c0_20 = arith.constant 0 : index
    %18 = vector.load %arg12[%c23, %c0_20] : memref<544x32xf32, #tpu.memory_space<vmem>>, vector<512x32xf32>
    %c0_21 = arith.constant 0 : index
    %c192 = arith.constant 192 : index
    %19 = vector.load %arg13[%c0_21, %c192] : memref<512x288xf32, #tpu.memory_space<vmem>>, vector<512x32xf32>
    tpu.vector_store %arg13[%c0_21, %c192], %18 {strides = array<i32>} : memref<512x288xf32, #tpu.memory_space<vmem>>, vector<512x32xf32>,
    %c24 = arith.constant 24 : index
    %c0_22 = arith.constant 0 : index
    %20 = vector.load %arg12[%c24, %c0_22] : memref<544x32xf32, #tpu.memory_space<vmem>>, vector<512x32xf32>
    %c0_23 = arith.constant 0 : index
    %c224 = arith.constant 224 : index
    %21 = vector.load %arg13[%c0_23, %c224] : memref<512x288xf32, #tpu.memory_space<vmem>>, vector<512x32xf32>
    tpu.vector_store %arg13[%c0_23, %c224], %20 {strides = array<i32>} : memref<512x288xf32, #tpu.memory_space<vmem>>, vector<512x32xf32>,
    %c25 = arith.constant 25 : index
    %c0_24 = arith.constant 0 : index
    %22 = vector.load %arg12[%c25, %c0_24] : memref<544x32xf32, #tpu.memory_space<vmem>>, vector<512x32xf32>
    %c0_25 = arith.constant 0 : index
    %c256 = arith.constant 256 : index
    %23 = vector.load %arg13[%c0_25, %c256] : memref<512x288xf32, #tpu.memory_space<vmem>>, vector<512x32xf32>
    tpu.vector_store %arg13[%c0_25, %c256], %22 {strides = array<i32>} : memref<512x288xf32, #tpu.memory_space<vmem>>, vector<512x32xf32>,
    %c0_26 = arith.constant 0 : index
    %c0_27 = arith.constant 0 : index
    %24 = vector.load %arg13[%c0_26, %c0_27] : memref<512x288xf32, #tpu.memory_space<vmem>>, vector<512x288xf32>
    %c0_28 = arith.constant 0 : index
    %c0_29 = arith.constant 0 : index
    %25 = vector.load %arg3[%c0_28, %c0_29] : memref<288x32xf32, #tpu.memory_space<vmem>>, vector<288x32xf32>
    %cst_30 = arith.constant dense<0.000000e+00> : vector<512x32xf32>
    %26 = tpu.matmul %24, %25, %cst_30 {dimension_numbers = #tpu.dot_dimension_numbers<[1], [0], [0], [1], [0, 0, 1, 1], [], []>} : vector<512x288xf32>, vector<288x32xf32>, vector<512x32xf32> -> vector<512x32xf32>
    %c0_31 = arith.constant 0 : index
    %c0_32 = arith.constant 0 : index
    %27 = vector.load %arg4[%c0_31, %c0_32] : memref<1x32xf32, #tpu.memory_space<vmem>>, vector<1x32xf32>
    %28 = vector.broadcast %27 : vector<1x32xf32> to vector<512x32xf32>
    %29 = arith.addf %26, %28 : vector<512x32xf32>
    %cst_33 = arith.constant 0.000000e+00 : f32
    %30 = vector.broadcast %cst_33 : f32 to vector<512x32xf32>
    %31 = arith.maximumf %29, %30 : vector<512x32xf32>
    %c0_34 = arith.constant 0 : index
    %c0_35 = arith.constant 0 : index
    %32 = vector.load %arg2[%c0_34, %c0_35] : memref<512x32xf32, #tpu.memory_space<vmem>>, vector<512x32xf32>
    %33 = arith.mulf %31, %32 : vector<512x32xf32>
    %c16_36 = arith.constant 16 : index
    %c0_37 = arith.constant 0 : index
    %34 = vector.load %arg12[%c16_36, %c0_37] : memref<544x32xf32, #tpu.memory_space<vmem>>, vector<512x32xf32>
    tpu.vector_store %arg12[%c16_36, %c0_37], %33 {strides = array<i32>} : memref<544x32xf32, #tpu.memory_space<vmem>>, vector<512x32xf32>,
    %c7_38 = arith.constant 7 : index
    %c0_39 = arith.constant 0 : index
    %35 = vector.load %arg12[%c7_38, %c0_39] : memref<544x32xf32, #tpu.memory_space<vmem>>, vector<512x32xf32>
    %c0_40 = arith.constant 0 : index
    %c0_41 = arith.constant 0 : index
    %36 = vector.load %arg13[%c0_40, %c0_41] : memref<512x288xf32, #tpu.memory_space<vmem>>, vector<512x32xf32>
    tpu.vector_store %arg13[%c0_40, %c0_41], %35 {strides = array<i32>} : memref<512x288xf32, #tpu.memory_space<vmem>>, vector<512x32xf32>,
    %c8_42 = arith.constant 8 : index
    %c0_43 = arith.constant 0 : index
    %37 = vector.load %arg12[%c8_42, %c0_43] : memref<544x32xf32, #tpu.memory_space<vmem>>, vector<512x32xf32>
    %c0_44 = arith.constant 0 : index
    %c32_45 = arith.constant 32 : index
    %38 = vector.load %arg13[%c0_44, %c32_45] : memref<512x288xf32, #tpu.memory_space<vmem>>, vector<512x32xf32>
    tpu.vector_store %arg13[%c0_44, %c32_45], %37 {strides = array<i32>} : memref<512x288xf32, #tpu.memory_space<vmem>>, vector<512x32xf32>,
    %c9_46 = arith.constant 9 : index
    %c0_47 = arith.constant 0 : index
    %39 = vector.load %arg12[%c9_46, %c0_47] : memref<544x32xf32, #tpu.memory_space<vmem>>, vector<512x32xf32>
    %c0_48 = arith.constant 0 : index
    %c64_49 = arith.constant 64 : index
    %40 = vector.load %arg13[%c0_48, %c64_49] : memref<512x288xf32, #tpu.memory_space<vmem>>, vector<512x32xf32>
    tpu.vector_store %arg13[%c0_48, %c64_49], %39 {strides = array<i32>} : memref<512x288xf32, #tpu.memory_space<vmem>>, vector<512x32xf32>,
    %c15_50 = arith.constant 15 : index
    %c0_51 = arith.constant 0 : index
    %41 = vector.load %arg12[%c15_50, %c0_51] : memref<544x32xf32, #tpu.memory_space<vmem>>, vector<512x32xf32>
    %c0_52 = arith.constant 0 : index
    %c96_53 = arith.constant 96 : index
    %42 = vector.load %arg13[%c0_52, %c96_53] : memref<512x288xf32, #tpu.memory_space<vmem>>, vector<512x32xf32>
    tpu.vector_store %arg13[%c0_52, %c96_53], %41 {strides = array<i32>} : memref<512x288xf32, #tpu.memory_space<vmem>>, vector<512x32xf32>,
    %c16_54 = arith.constant 16 : index
    %c0_55 = arith.constant 0 : index
    %43 = vector.load %arg12[%c16_54, %c0_55] : memref<544x32xf32, #tpu.memory_space<vmem>>, vector<512x32xf32>
    %c0_56 = arith.constant 0 : index
    %c128_57 = arith.constant 128 : index
    %44 = vector.load %arg13[%c0_56, %c128_57] : memref<512x288xf32, #tpu.memory_space<vmem>>, vector<512x32xf32>
    tpu.vector_store %arg13[%c0_56, %c128_57], %43 {strides = array<i32>} : memref<512x288xf32, #tpu.memory_space<vmem>>, vector<512x32xf32>,
    %c17_58 = arith.constant 17 : index
    %c0_59 = arith.constant 0 : index
    %45 = vector.load %arg12[%c17_58, %c0_59] : memref<544x32xf32, #tpu.memory_space<vmem>>, vector<512x32xf32>
    %c0_60 = arith.constant 0 : index
    %c160_61 = arith.constant 160 : index
    %46 = vector.load %arg13[%c0_60, %c160_61] : memref<512x288xf32, #tpu.memory_space<vmem>>, vector<512x32xf32>
    tpu.vector_store %arg13[%c0_60, %c160_61], %45 {strides = array<i32>} : memref<512x288xf32, #tpu.memory_space<vmem>>, vector<512x32xf32>,
    %c23_62 = arith.constant 23 : index
    %c0_63 = arith.constant 0 : index
    %47 = vector.load %arg12[%c23_62, %c0_63] : memref<544x32xf32, #tpu.memory_space<vmem>>, vector<512x32xf32>
    %c0_64 = arith.constant 0 : index
    %c192_65 = arith.constant 192 : index
    %48 = vector.load %arg13[%c0_64, %c192_65] : memref<512x288xf32, #tpu.memory_space<vmem>>, vector<512x32xf32>
    tpu.vector_store %arg13[%c0_64, %c192_65], %47 {strides = array<i32>} : memref<512x288xf32, #tpu.memory_space<vmem>>, vector<512x32xf32>,
    %c24_66 = arith.constant 24 : index
    %c0_67 = arith.constant 0 : index
    %49 = vector.load %arg12[%c24_66, %c0_67] : memref<544x32xf32, #tpu.memory_space<vmem>>, vector<512x32xf32>
    %c0_68 = arith.constant 0 : index
    %c224_69 = arith.constant 224 : index
    %50 = vector.load %arg13[%c0_68, %c224_69] : memref<512x288xf32, #tpu.memory_space<vmem>>, vector<512x32xf32>
    tpu.vector_store %arg13[%c0_68, %c224_69], %49 {strides = array<i32>} : memref<512x288xf32, #tpu.memory_space<vmem>>, vector<512x32xf32>,
    %c25_70 = arith.constant 25 : index
    %c0_71 = arith.constant 0 : index
    %51 = vector.load %arg12[%c25_70, %c0_71] : memref<544x32xf32, #tpu.memory_space<vmem>>, vector<512x32xf32>
    %c0_72 = arith.constant 0 : index
    %c256_73 = arith.constant 256 : index
    %52 = vector.load %arg13[%c0_72, %c256_73] : memref<512x288xf32, #tpu.memory_space<vmem>>, vector<512x32xf32>
    tpu.vector_store %arg13[%c0_72, %c256_73], %51 {strides = array<i32>} : memref<512x288xf32, #tpu.memory_space<vmem>>, vector<512x32xf32>,
    %c0_74 = arith.constant 0 : index
    %c0_75 = arith.constant 0 : index
    %53 = vector.load %arg13[%c0_74, %c0_75] : memref<512x288xf32, #tpu.memory_space<vmem>>, vector<512x288xf32>
    %c0_76 = arith.constant 0 : index
    %c0_77 = arith.constant 0 : index
    %54 = vector.load %arg5[%c0_76, %c0_77] : memref<288x32xf32, #tpu.memory_space<vmem>>, vector<288x32xf32>
    %cst_78 = arith.constant dense<0.000000e+00> : vector<512x32xf32>
    %55 = tpu.matmul %53, %54, %cst_78 {dimension_numbers = #tpu.dot_dimension_numbers<[1], [0], [0], [1], [0, 0, 1, 1], [], []>} : vector<512x288xf32>, vector<288x32xf32>, vector<512x32xf32> -> vector<512x32xf32>
    %c0_79 = arith.constant 0 : index
    %c0_80 = arith.constant 0 : index
    %56 = vector.load %arg6[%c0_79, %c0_80] : memref<1x32xf32, #tpu.memory_space<vmem>>, vector<1x32xf32>
    %57 = vector.broadcast %56 : vector<1x32xf32> to vector<512x32xf32>
    %58 = arith.addf %55, %57 : vector<512x32xf32>
    %cst_81 = arith.constant 0.000000e+00 : f32
    %59 = vector.broadcast %cst_81 : f32 to vector<512x32xf32>
    %60 = arith.maximumf %58, %59 : vector<512x32xf32>
    %c16_82 = arith.constant 16 : index
    %c0_83 = arith.constant 0 : index
    %61 = vector.load %arg12[%c16_82, %c0_83] : memref<544x32xf32, #tpu.memory_space<vmem>>, vector<512x32xf32>
    tpu.vector_store %arg12[%c16_82, %c0_83], %60 {strides = array<i32>} : memref<544x32xf32, #tpu.memory_space<vmem>>, vector<512x32xf32>,
    %c16_84 = arith.constant 16 : index
    %c0_85 = arith.constant 0 : index
    %62 = vector.load %arg12[%c16_84, %c0_85] : memref<544x32xf32, #tpu.memory_space<vmem>>, vector<512x32xf32>
    %c24_86 = arith.constant 24 : index
    %c0_87 = arith.constant 0 : index
    %63 = vector.load %arg12[%c24_86, %c0_87] : memref<544x32xf32, #tpu.memory_space<vmem>>, vector<512x32xf32>
    %64 = arith.maximumf %62, %63 : vector<512x32xf32>
    %c16_88 = arith.constant 16 : index
    %c0_89 = arith.constant 0 : index
    %65 = vector.load %arg12[%c16_88, %c0_89] : memref<544x32xf32, #tpu.memory_space<vmem>>, vector<512x32xf32>
    tpu.vector_store %arg12[%c16_88, %c0_89], %64 {strides = array<i32>} : memref<544x32xf32, #tpu.memory_space<vmem>>, vector<512x32xf32>,
    %c16_90 = arith.constant 16 : index
    %c0_91 = arith.constant 0 : index
    %66 = vector.load %arg12[%c16_90, %c0_91] : memref<544x32xf32, #tpu.memory_space<vmem>>, vector<512x32xf32>
    %c17_92 = arith.constant 17 : index
    %c0_93 = arith.constant 0 : index
    %67 = vector.load %arg12[%c17_92, %c0_93] : memref<544x32xf32, #tpu.memory_space<vmem>>, vector<512x32xf32>
    %68 = arith.maximumf %66, %67 : vector<512x32xf32>
    %c16_94 = arith.constant 16 : index
    %c0_95 = arith.constant 0 : index
    %69 = vector.load %arg12[%c16_94, %c0_95] : memref<544x32xf32, #tpu.memory_space<vmem>>, vector<512x32xf32>
    tpu.vector_store %arg12[%c16_94, %c0_95], %68 {strides = array<i32>} : memref<544x32xf32, #tpu.memory_space<vmem>>, vector<512x32xf32>,
    %c25_96 = arith.constant 25 : index
    %c0_97 = arith.constant 0 : index
    %70 = tpu.strided_load %arg12[%c25_96, %c0_97] {strides = array<i32: 64, 1>} : memref<544x32xf32, #tpu.memory_space<vmem>>, vector<8x32xf32>
    %c0_98 = arith.constant 0 : index
    %c0_99 = arith.constant 0 : index
    %71 = vector.load %arg14[%c0_98, %c0_99] : memref<8x288xf32, #tpu.memory_space<vmem>>, vector<8x32xf32>
    tpu.vector_store %arg14[%c0_98, %c0_99], %70 {strides = array<i32>} : memref<8x288xf32, #tpu.memory_space<vmem>>, vector<8x32xf32>,
    %c27 = arith.constant 27 : index
    %c0_100 = arith.constant 0 : index
    %72 = tpu.strided_load %arg12[%c27, %c0_100] {strides = array<i32: 64, 1>} : memref<544x32xf32, #tpu.memory_space<vmem>>, vector<8x32xf32>
    %c0_101 = arith.constant 0 : index
    %c32_102 = arith.constant 32 : index
    %73 = vector.load %arg14[%c0_101, %c32_102] : memref<8x288xf32, #tpu.memory_space<vmem>>, vector<8x32xf32>
    tpu.vector_store %arg14[%c0_101, %c32_102], %72 {strides = array<i32>} : memref<8x288xf32, #tpu.memory_space<vmem>>, vector<8x32xf32>,
    %c29 = arith.constant 29 : index
    %c0_103 = arith.constant 0 : index
    %74 = tpu.strided_load %arg12[%c29, %c0_103] {strides = array<i32: 64, 1>} : memref<544x32xf32, #tpu.memory_space<vmem>>, vector<8x32xf32>
    %c0_104 = arith.constant 0 : index
    %c64_105 = arith.constant 64 : index
    %75 = vector.load %arg14[%c0_104, %c64_105] : memref<8x288xf32, #tpu.memory_space<vmem>>, vector<8x32xf32>
    tpu.vector_store %arg14[%c0_104, %c64_105], %74 {strides = array<i32>} : memref<8x288xf32, #tpu.memory_space<vmem>>, vector<8x32xf32>,
    %c41 = arith.constant 41 : index
    %c0_106 = arith.constant 0 : index
    %76 = tpu.strided_load %arg12[%c41, %c0_106] {strides = array<i32: 64, 1>} : memref<544x32xf32, #tpu.memory_space<vmem>>, vector<8x32xf32>
    %c0_107 = arith.constant 0 : index
    %c96_108 = arith.constant 96 : index
    %77 = vector.load %arg14[%c0_107, %c96_108] : memref<8x288xf32, #tpu.memory_space<vmem>>, vector<8x32xf32>
    tpu.vector_store %arg14[%c0_107, %c96_108], %76 {strides = array<i32>} : memref<8x288xf32, #tpu.memory_space<vmem>>, vector<8x32xf32>,
    %c43 = arith.constant 43 : index
    %c0_109 = arith.constant 0 : index
    %78 = tpu.strided_load %arg12[%c43, %c0_109] {strides = array<i32: 64, 1>} : memref<544x32xf32, #tpu.memory_space<vmem>>, vector<8x32xf32>
    %c0_110 = arith.constant 0 : index
    %c128_111 = arith.constant 128 : index
    %79 = vector.load %arg14[%c0_110, %c128_111] : memref<8x288xf32, #tpu.memory_space<vmem>>, vector<8x32xf32>
    tpu.vector_store %arg14[%c0_110, %c128_111], %78 {strides = array<i32>} : memref<8x288xf32, #tpu.memory_space<vmem>>, vector<8x32xf32>,
    %c45 = arith.constant 45 : index
    %c0_112 = arith.constant 0 : index
    %80 = tpu.strided_load %arg12[%c45, %c0_112] {strides = array<i32: 64, 1>} : memref<544x32xf32, #tpu.memory_space<vmem>>, vector<8x32xf32>
    %c0_113 = arith.constant 0 : index
    %c160_114 = arith.constant 160 : index
    %81 = vector.load %arg14[%c0_113, %c160_114] : memref<8x288xf32, #tpu.memory_space<vmem>>, vector<8x32xf32>
    tpu.vector_store %arg14[%c0_113, %c160_114], %80 {strides = array<i32>} : memref<8x288xf32, #tpu.memory_space<vmem>>, vector<8x32xf32>,
    %c57 = arith.constant 57 : index
    %c0_115 = arith.constant 0 : index
    %82 = tpu.strided_load %arg12[%c57, %c0_115] {strides = array<i32: 64, 1>} : memref<544x32xf32, #tpu.memory_space<vmem>>, vector<8x32xf32>
    %c0_116 = arith.constant 0 : index
    %c192_117 = arith.constant 192 : index
    %83 = vector.load %arg14[%c0_116, %c192_117] : memref<8x288xf32, #tpu.memory_space<vmem>>, vector<8x32xf32>
    tpu.vector_store %arg14[%c0_116, %c192_117], %82 {strides = array<i32>} : memref<8x288xf32, #tpu.memory_space<vmem>>, vector<8x32xf32>,
    %c59 = arith.constant 59 : index
    %c0_118 = arith.constant 0 : index
    %84 = tpu.strided_load %arg12[%c59, %c0_118] {strides = array<i32: 64, 1>} : memref<544x32xf32, #tpu.memory_space<vmem>>, vector<8x32xf32>
    %c0_119 = arith.constant 0 : index
    %c224_120 = arith.constant 224 : index
    %85 = vector.load %arg14[%c0_119, %c224_120] : memref<8x288xf32, #tpu.memory_space<vmem>>, vector<8x32xf32>
    tpu.vector_store %arg14[%c0_119, %c224_120], %84 {strides = array<i32>} : memref<8x288xf32, #tpu.memory_space<vmem>>, vector<8x32xf32>,
    %c61 = arith.constant 61 : index
    %c0_121 = arith.constant 0 : index
    %86 = tpu.strided_load %arg12[%c61, %c0_121] {strides = array<i32: 64, 1>} : memref<544x32xf32, #tpu.memory_space<vmem>>, vector<8x32xf32>
    %c0_122 = arith.constant 0 : index
    %c256_123 = arith.constant 256 : index
    %87 = vector.load %arg14[%c0_122, %c256_123] : memref<8x288xf32, #tpu.memory_space<vmem>>, vector<8x32xf32>
    tpu.vector_store %arg14[%c0_122, %c256_123], %86 {strides = array<i32>} : memref<8x288xf32, #tpu.memory_space<vmem>>, vector<8x32xf32>,
    %c0_124 = arith.constant 0 : index
    %c0_125 = arith.constant 0 : index
    %88 = vector.load %arg14[%c0_124, %c0_125] : memref<8x288xf32, #tpu.memory_space<vmem>>, vector<8x288xf32>
    %c0_126 = arith.constant 0 : index
    %c0_127 = arith.constant 0 : index
    %89 = vector.load %arg7[%c0_126, %c0_127] : memref<288x288xf32, #tpu.memory_space<vmem>>, vector<288x288xf32>
    %cst_128 = arith.constant dense<0.000000e+00> : vector<8x288xf32>
    %90 = tpu.matmul %88, %89, %cst_128 {dimension_numbers = #tpu.dot_dimension_numbers<[1], [0], [0], [1], [0, 0, 1, 1], [], []>} : vector<8x288xf32>, vector<288x288xf32>, vector<8x288xf32> -> vector<8x288xf32>
    %c0_129 = arith.constant 0 : index
    %c0_130 = arith.constant 0 : index
    %91 = vector.load %arg10[%c0_129, %c0_130] : memref<8x288xf32, #tpu.memory_space<vmem>>, vector<8x288xf32>
    tpu.vector_store %arg10[%c0_129, %c0_130], %90 {strides = array<i32>} : memref<8x288xf32, #tpu.memory_space<vmem>>, vector<8x288xf32>,
    %c0_131 = arith.constant 0 : index
    %c0_132 = arith.constant 0 : index
    %92 = vector.load %arg8[%c0_131, %c0_132] : memref<288x2xf32, #tpu.memory_space<vmem>>, vector<288x2xf32>
    %cst_133 = arith.constant dense<0.000000e+00> : vector<8x2xf32>
    %93 = tpu.matmul %88, %92, %cst_133 {dimension_numbers = #tpu.dot_dimension_numbers<[1], [0], [0], [1], [0, 0, 1, 1], [], []>} : vector<8x288xf32>, vector<288x2xf32>, vector<8x2xf32> -> vector<8x2xf32>
    %c0_134 = arith.constant 0 : index
    %c0_135 = arith.constant 0 : index
    %94 = vector.load %arg9[%c0_134, %c0_135] : memref<1x2xf32, #tpu.memory_space<vmem>>, vector<1x2xf32>
    %95 = vector.broadcast %94 : vector<1x2xf32> to vector<8x2xf32>
    %96 = arith.addf %93, %95 : vector<8x2xf32>
    %c0_136 = arith.constant 0 : index
    %c0_137 = arith.constant 0 : index
    %97 = vector.load %arg11[%c0_136, %c0_137] : memref<8x2xf32, #tpu.memory_space<vmem>>, vector<8x2xf32>
    tpu.vector_store %arg11[%c0_136, %c0_137], %96 {strides = array<i32>} : memref<8x2xf32, #tpu.memory_space<vmem>>, vector<8x2xf32>,
    return
  }
  func.func @transform_0(%arg0: i32) -> (i32, i32) {
    %c0_i32 = arith.constant 0 : i32
    %c0_i32_0 = arith.constant 0 : i32
    return %arg0, %c0_i32 : i32, i32
  }
  func.func @transform_1(%arg0: i32) -> (i32, i32) {
    %c0_i32 = arith.constant 0 : i32
    %c0_i32_0 = arith.constant 0 : i32
    %c0_i32_1 = arith.constant 0 : i32
    return %c0_i32, %c0_i32_0 : i32, i32
  }
  func.func @transform_2(%arg0: i32) -> (i32, i32) {
    %c0_i32 = arith.constant 0 : i32
    %c0_i32_0 = arith.constant 0 : i32
    %c0_i32_1 = arith.constant 0 : i32
    return %c0_i32, %c0_i32_0 : i32, i32
  }
  func.func @transform_3(%arg0: i32) -> (i32, i32) {
    %c0_i32 = arith.constant 0 : i32
    %c0_i32_0 = arith.constant 0 : i32
    %c0_i32_1 = arith.constant 0 : i32
    return %c0_i32, %c0_i32_0 : i32, i32
  }
  func.func @transform_4(%arg0: i32) -> (i32, i32) {
    %c0_i32 = arith.constant 0 : i32
    %c0_i32_0 = arith.constant 0 : i32
    %c0_i32_1 = arith.constant 0 : i32
    return %c0_i32, %c0_i32_0 : i32, i32
  }
  func.func @transform_5(%arg0: i32) -> (i32, i32) {
    %c0_i32 = arith.constant 0 : i32
    %c0_i32_0 = arith.constant 0 : i32
    %c0_i32_1 = arith.constant 0 : i32
    return %c0_i32, %c0_i32_0 : i32, i32
  }
  func.func @transform_6(%arg0: i32) -> (i32, i32) {
    %c0_i32 = arith.constant 0 : i32
    %c0_i32_0 = arith.constant 0 : i32
    %c0_i32_1 = arith.constant 0 : i32
    return %c0_i32, %c0_i32_0 : i32, i32
  }
  func.func @transform_7(%arg0: i32) -> (i32, i32) {
    %c0_i32 = arith.constant 0 : i32
    %c0_i32_0 = arith.constant 0 : i32
    %c0_i32_1 = arith.constant 0 : i32
    return %c0_i32, %c0_i32_0 : i32, i32
  }
  func.func @transform_8(%arg0: i32) -> (i32, i32) {
    %c0_i32 = arith.constant 0 : i32
    %c0_i32_0 = arith.constant 0 : i32
    %c0_i32_1 = arith.constant 0 : i32
    return %c0_i32, %c0_i32_0 : i32, i32
  }
  func.func @transform_9(%arg0: i32) -> (i32, i32) {
    %c0_i32 = arith.constant 0 : i32
    %c0_i32_0 = arith.constant 0 : i32
    return %arg0, %c0_i32 : i32, i32
  }
  func.func @transform_10(%arg0: i32) -> (i32, i32) {
    %c0_i32 = arith.constant 0 : i32
    %c0_i32_0 = arith.constant 0 : i32
    return %arg0, %c0_i32 : i32, i32
  }
}

</mosaic_0001>

<llo_original>
// kernel: mod_zero_three_forward.1
$region0: #{mod_zero_three_forward.1}
  #allocation0 [shape = 'u32[]', space=smem, size = 0x4, offset = 0x4, fixed_abs, tag = 'smem constant byte address 0x4 - core index']
  #allocation1 [shape = 'u32[144,128]{1,0:T(1,128)}', space=vmem, size = 0x12000, scoped, tag = 'internal scratch']
  #allocation2 [shape = 'f32[544,32]{1,0:T(8,128)}', space=vmem, size = 0x44000, scoped, tag = 'scratch operand']
  #allocation3 [shape = 'f32[512,288]{1,0:T(8,128)}', space=vmem, size = 0xc0000, scoped, tag = 'scratch operand']
  #allocation4 [shape = 'f32[8,288]{1,0:T(8,128)}', space=vmem, size = 0x3000, scoped, tag = 'scratch operand']
  %s0 = inlined_call_operand.vmem [shape: f32[512,32], index: 0, kind: input, shape index: {}]
  %s1 = inlined_call_operand.vmem [shape: f32[512,32], index: 1, kind: input, shape index: {}]
  %s2 = inlined_call_operand.vmem [shape: f32[288,32], index: 2, kind: input, shape index: {}]
  %s3 = inlined_call_operand.vmem [shape: f32[1,32], index: 3, kind: input, shape index: {}]
  %s4 = inlined_call_operand.vmem [shape: f32[288,32], index: 4, kind: input, shape index: {}]
  %s5 = inlined_call_operand.vmem [shape: f32[1,32], index: 5, kind: input, shape index: {}]
  %s6 = inlined_call_operand.vmem [shape: f32[288,288], index: 6, kind: input, shape index: {}]
  %s7 = inlined_call_operand.vmem [shape: f32[288,2], index: 7, kind: input, shape index: {}]
  %s8 = inlined_call_operand.vmem [shape: f32[1,2], index: 8, kind: input, shape index: {}]
  %s9 = inlined_call_operand.vmem [shape: f32[8,288], index: 9, kind: output, shape index: {0}]
  %s10 = inlined_call_operand.vmem [shape: f32[8,2], index: 10, kind: output, shape index: {1}]
  %11 = xla_tuple %s9, %s10
  %s12 = sld [smem:[#allocation0]]
  $region54: #{mod_zero_three_forward.1} parent=0
    _
  %s14 = ssub.s32 1, %s12
  %s15 = scalar_select 0, %s14, %s12
  // Predicated region
  $region2: #{mod_zero_three_forward.1} parent=0 // pred_check
    _
  $region3: #{mod_zero_three_forward.1} parent=0 // pred_check_branch
    %17 = sbr.rel (0) target = $region5
  $region4: #{mod_zero_three_forward.1} parent=0 // pred_region
    _
  $region5: #{mod_zero_three_forward.1} parent=0 // pred_fallthru
    _
  // Predicated region
  $region6: #{mod_zero_three_forward.1} parent=0 // pred_check
    _
  $region7: #{mod_zero_three_forward.1} parent=0 // pred_check_branch
    %19 = sbr.rel (0) target = $region9
  $region8: #{mod_zero_three_forward.1} parent=0 // pred_region
    _
  $region9: #{mod_zero_three_forward.1} parent=0 // pred_fallthru
    _
  // Predicated region
  $region10: #{mod_zero_three_forward.1} parent=0 // pred_check
    _
  $region11: #{mod_zero_three_forward.1} parent=0 // pred_check_branch
    %21 = sbr.rel (0) target = $region13
  $region12: #{mod_zero_three_forward.1} parent=0 // pred_region
    _
  $region13: #{mod_zero_three_forward.1} parent=0 // pred_fallthru
    _
  // Predicated region
  $region14: #{mod_zero_three_forward.1} parent=0 // pred_check
    _
  $region15: #{mod_zero_three_forward.1} parent=0 // pred_check_branch
    %23 = sbr.rel (0) target = $region17
  $region16: #{mod_zero_three_forward.1} parent=0 // pred_region
    _
  $region17: #{mod_zero_three_forward.1} parent=0 // pred_fallthru
    _
  // Predicated region
  $region18: #{mod_zero_three_forward.1} parent=0 // pred_check
    _
  $region19: #{mod_zero_three_forward.1} parent=0 // pred_check_branch
    %25 = sbr.rel (0) target = $region21
  $region20: #{mod_zero_three_forward.1} parent=0 // pred_region
    _
  $region21: #{mod_zero_three_forward.1} parent=0 // pred_fallthru
    _
  // Predicated region
  $region22: #{mod_zero_three_forward.1} parent=0 // pred_check
    _
  $region23: #{mod_zero_three_forward.1} parent=0 // pred_check_branch
    %27 = sbr.rel (0) target = $region25
  $region24: #{mod_zero_three_forward.1} parent=0 // pred_region
    _
  $region25: #{mod_zero_three_forward.1} parent=0 // pred_fallthru
    _
  // Predicated region
  $region26: #{mod_zero_three_forward.1} parent=0 // pred_check
    _
  $region27: #{mod_zero_three_forward.1} parent=0 // pred_check_branch
    %29 = sbr.rel (0) target = $region29
  $region28: #{mod_zero_three_forward.1} parent=0 // pred_region
    _
  $region29: #{mod_zero_three_forward.1} parent=0 // pred_fallthru
    _
  // Predicated region
  $region30: #{mod_zero_three_forward.1} parent=0 // pred_check
    _
  $region31: #{mod_zero_three_forward.1} parent=0 // pred_check_branch
    %31 = sbr.rel (0) target = $region33
  $region32: #{mod_zero_three_forward.1} parent=0 // pred_region
    _
  $region33: #{mod_zero_three_forward.1} parent=0 // pred_fallthru
    _
  // Predicated region
  $region34: #{mod_zero_three_forward.1} parent=0 // pred_check
    _
  $region35: #{mod_zero_three_forward.1} parent=0 // pred_check_branch
    %33 = sbr.rel (0) target = $region37
  $region36: #{mod_zero_three_forward.1} parent=0 // pred_region
    _
  $region37: #{mod_zero_three_forward.1} parent=0 // pred_fallthru
    _
  %vm34 = vcmask 261120
  %35 = vst.msk [vmem:[#allocation2] sm:$0xff] %vm34, 0.0
  %36 = vst.msk [vmem:[#allocation2 + $0x8] sm:$0xff] %vm34, 0.0
  %37 = vst.msk [vmem:[#allocation2 + $0x210] sm:$0xff] %vm34, 0.0
  %38 = vst.msk [vmem:[#allocation2 + $0x218] sm:$0xff] %vm34, 0.0
  %v39 = vld [vmem:[%s0] sm:$0xff]
  %v40 = vld [vmem:[%s0 + $0x8] sm:$0xff]
  %v41 = vld [vmem:[%s0 + $0x10] sm:$0xff]
  %v42 = vld [vmem:[%s0 + $0x18] sm:$0xff]
  %v43 = vld [vmem:[%s0 + $0x20] sm:$0xff]
  %v44 = vld [vmem:[%s0 + $0x28] sm:$0xff]
  %v45 = vld [vmem:[%s0 + $0x30] sm:$0xff]
  %v46 = vld [vmem:[%s0 + $0x38] sm:$0xff]
  %v47 = vld [vmem:[%s0 + $0x40] sm:$0xff]
  %v48 = vld [vmem:[%s0 + $0x48] sm:$0xff]
  %v49 = vld [vmem:[%s0 + $0x50] sm:$0xff]
  %v50 = vld [vmem:[%s0 + $0x58] sm:$0xff]
  %v51 = vld [vmem:[%s0 + $0x60] sm:$0xff]
  %v52 = vld [vmem:[%s0 + $0x68] sm:$0xff]
  %v53 = vld [vmem:[%s0 + $0x70] sm:$0xff]
  %v54 = vld [vmem:[%s0 + $0x78] sm:$0xff]
  %v55 = vld [vmem:[%s0 + $0x80] sm:$0xff]
  %v56 = vld [vmem:[%s0 + $0x88] sm:$0xff]
  %v57 = vld [vmem:[%s0 + $0x90] sm:$0xff]
  %v58 = vld [vmem:[%s0 + $0x98] sm:$0xff]
  %v59 = vld [vmem:[%s0 + $0xa0] sm:$0xff]
  %v60 = vld [vmem:[%s0 + $0xa8] sm:$0xff]
  %v61 = vld [vmem:[%s0 + $0xb0] sm:$0xff]
  %v62 = vld [vmem:[%s0 + $0xb8] sm:$0xff]
  %v63 = vld [vmem:[%s0 + $0xc0] sm:$0xff]
  %v64 = vld [vmem:[%s0 + $0xc8] sm:$0xff]
  %v65 = vld [vmem:[%s0 + $0xd0] sm:$0xff]
  %v66 = vld [vmem:[%s0 + $0xd8] sm:$0xff]
  %v67 = vld [vmem:[%s0 + $0xe0] sm:$0xff]
  %v68 = vld [vmem:[%s0 + $0xe8] sm:$0xff]
  %v69 = vld [vmem:[%s0 + $0xf0] sm:$0xff]
  %v70 = vld [vmem:[%s0 + $0xf8] sm:$0xff]
  %v71 = vld [vmem:[%s0 + $0x100] sm:$0xff]
  %v72 = vld [vmem:[%s0 + $0x108] sm:$0xff]
  %v73 = vld [vmem:[%s0 + $0x110] sm:$0xff]
  %v74 = vld [vmem:[%s0 + $0x118] sm:$0xff]
  %v75 = vld [vmem:[%s0 + $0x120] sm:$0xff]
  %v76 = vld [vmem:[%s0 + $0x128] sm:$0xff]
  %v77 = vld [vmem:[%s0 + $0x130] sm:$0xff]
  %v78 = vld [vmem:[%s0 + $0x138] sm:$0xff]
  %v79 = vld [vmem:[%s0 + $0x140] sm:$0xff]
  %v80 = vld [vmem:[%s0 + $0x148] sm:$0xff]
  %v81 = vld [vmem:[%s0 + $0x150] sm:$0xff]
  %v82 = vld [vmem:[%s0 + $0x158] sm:$0xff]
  %v83 = vld [vmem:[%s0 + $0x160] sm:$0xff]
  %v84 = vld [vmem:[%s0 + $0x168] sm:$0xff]
  %v85 = vld [vmem:[%s0 + $0x170] sm:$0xff]
  %v86 = vld [vmem:[%s0 + $0x178] sm:$0xff]
  %v87 = vld [vmem:[%s0 + $0x180] sm:$0xff]
  %v88 = vld [vmem:[%s0 + $0x188] sm:$0xff]
  %v89 = vld [vmem:[%s0 + $0x190] sm:$0xff]
  %v90 = vld [vmem:[%s0 + $0x198] sm:$0xff]
  %v91 = vld [vmem:[%s0 + $0x1a0] sm:$0xff]
  %v92 = vld [vmem:[%s0 + $0x1a8] sm:$0xff]
  %v93 = vld [vmem:[%s0 + $0x1b0] sm:$0xff]
  %v94 = vld [vmem:[%s0 + $0x1b8] sm:$0xff]
  %v95 = vld [vmem:[%s0 + $0x1c0] sm:$0xff]
  %v96 = vld [vmem:[%s0 + $0x1c8] sm:$0xff]
  %v97 = vld [vmem:[%s0 + $0x1d0] sm:$0xff]
  %v98 = vld [vmem:[%s0 + $0x1d8] sm:$0xff]
  %v99 = vld [vmem:[%s0 + $0x1e0] sm:$0xff]
  %v100 = vld [vmem:[%s0 + $0x1e8] sm:$0xff]
  %v101 = vld [vmem:[%s0 + $0x1f0] sm:$0xff]
  %v102 = vld [vmem:[%s0 + $0x1f8] sm:$0xff]
  %103 = vst.msk [vmem:[#allocation2 + $0x10] sm:$0xff] %vm34, %v39
  %104 = vst.msk [vmem:[#allocation2 + $0x18] sm:$0xff] %vm34, %v40
  %105 = vst.msk [vmem:[#allocation2 + $0x20] sm:$0xff] %vm34, %v41
  %106 = vst.msk [vmem:[#allocation2 + $0x28] sm:$0xff] %vm34, %v42
  %107 = vst.msk [vmem:[#allocation2 + $0x30] sm:$0xff] %vm34, %v43
  %108 = vst.msk [vmem:[#allocation2 + $0x38] sm:$0xff] %vm34, %v44
  %109 = vst.msk [vmem:[#allocation2 + $0x40] sm:$0xff] %vm34, %v45
  %110 = vst.msk [vmem:[#allocation2 + $0x48] sm:$0xff] %vm34, %v46
  %111 = vst.msk [vmem:[#allocation2 + $0x50] sm:$0xff] %vm34, %v47
  %112 = vst.msk [vmem:[#allocation2 + $0x58] sm:$0xff] %vm34, %v48
  %113 = vst.msk [vmem:[#allocation2 + $0x60] sm:$0xff] %vm34, %v49
  %114 = vst.msk [vmem:[#allocation2 + $0x68] sm:$0xff] %vm34, %v50
  %115 = vst.msk [vmem:[#allocation2 + $0x70] sm:$0xff] %vm34, %v51
  %116 = vst.msk [vmem:[#allocation2 + $0x78] sm:$0xff] %vm34, %v52
  %117 = vst.msk [vmem:[#allocation2 + $0x80] sm:$0xff] %vm34, %v53
  %118 = vst.msk [vmem:[#allocation2 + $0x88] sm:$0xff] %vm34, %v54
  %119 = vst.msk [vmem:[#allocation2 + $0x90] sm:$0xff] %vm34, %v55
  %120 = vst.msk [vmem:[#allocation2 + $0x98] sm:$0xff] %vm34, %v56
  %121 = vst.msk [vmem:[#allocation2 + $0xa0] sm:$0xff] %vm34, %v57
  %122 = vst.msk [vmem:[#allocation2 + $0xa8] sm:$0xff] %vm34, %v58
  %123 = vst.msk [vmem:[#allocation2 + $0xb0] sm:$0xff] %vm34, %v59
  %124 = vst.msk [vmem:[#allocation2 + $0xb8] sm:$0xff] %vm34, %v60
  %125 = vst.msk [vmem:[#allocation2 + $0xc0] sm:$0xff] %vm34, %v61
  %126 = vst.msk [vmem:[#allocation2 + $0xc8] sm:$0xff] %vm34, %v62
  %127 = vst.msk [vmem:[#allocation2 + $0xd0] sm:$0xff] %vm34, %v63
  %128 = vst.msk [vmem:[#allocation2 + $0xd8] sm:$0xff] %vm34, %v64
  %129 = vst.msk [vmem:[#allocation2 + $0xe0] sm:$0xff] %vm34, %v65
  %130 = vst.msk [vmem:[#allocation2 + $0xe8] sm:$0xff] %vm34, %v66
  %131 = vst.msk [vmem:[#allocation2 + $0xf0] sm:$0xff] %vm34, %v67
  %132 = vst.msk [vmem:[#allocation2 + $0xf8] sm:$0xff] %vm34, %v68
  %133 = vst.msk [vmem:[#allocation2 + $0x100] sm:$0xff] %vm34, %v69
  %134 = vst.msk [vmem:[#allocation2 + $0x108] sm:$0xff] %vm34, %v70
  %135 = vst.msk [vmem:[#allocation2 + $0x110] sm:$0xff] %vm34, %v71
  %136 = vst.msk [vmem:[#allocation2 + $0x118] sm:$0xff] %vm34, %v72
  %137 = vst.msk [vmem:[#allocation2 + $0x120] sm:$0xff] %vm34, %v73
  %138 = vst.msk [vmem:[#allocation2 + $0x128] sm:$0xff] %vm34, %v74
  %139 = vst.msk [vmem:[#allocation2 + $0x130] sm:$0xff] %vm34, %v75
  %140 = vst.msk [vmem:[#allocation2 + $0x138] sm:$0xff] %vm34, %v76
  %141 = vst.msk [vmem:[#allocation2 + $0x140] sm:$0xff] %vm34, %v77
  %142 = vst.msk [vmem:[#allocation2 + $0x148] sm:$0xff] %vm34, %v78
  %143 = vst.msk [vmem:[#allocation2 + $0x150] sm:$0xff] %vm34, %v79
  %144 = vst.msk [vmem:[#allocation2 + $0x158] sm:$0xff] %vm34, %v80
  %145 = vst.msk [vmem:[#allocation2 + $0x160] sm:$0xff] %vm34, %v81
  %146 = vst.msk [vmem:[#allocation2 + $0x168] sm:$0xff] %vm34, %v82
  %147 = vst.msk [vmem:[#allocation2 + $0x170] sm:$0xff] %vm34, %v83
  %148 = vst.msk [vmem:[#allocation2 + $0x178] sm:$0xff] %vm34, %v84
  %149 = vst.msk [vmem:[#allocation2 + $0x180] sm:$0xff] %vm34, %v85
  %150 = vst.msk [vmem:[#allocation2 + $0x188] sm:$0xff] %vm34, %v86
  %151 = vst.msk [vmem:[#allocation2 + $0x190] sm:$0xff] %vm34, %v87
  %152 = vst.msk [vmem:[#allocation2 + $0x198] sm:$0xff] %vm34, %v88
  %153 = vst.msk [vmem:[#allocation2 + $0x1a0] sm:$0xff] %vm34, %v89
  %154 = vst.msk [vmem:[#allocation2 + $0x1a8] sm:$0xff] %vm34, %v90
  %155 = vst.msk [vmem:[#allocation2 + $0x1b0] sm:$0xff] %vm34, %v91
  %156 = vst.msk [vmem:[#allocation2 + $0x1b8] sm:$0xff] %vm34, %v92
  %157 = vst.msk [vmem:[#allocation2 + $0x1c0] sm:$0xff] %vm34, %v93
  %158 = vst.msk [vmem:[#allocation2 + $0x1c8] sm:$0xff] %vm34, %v94
  %159 = vst.msk [vmem:[#allocation2 + $0x1d0] sm:$0xff] %vm34, %v95
  %160 = vst.msk [vmem:[#allocation2 + $0x1d8] sm:$0xff] %vm34, %v96
  %161 = vst.msk [vmem:[#allocation2 + $0x1e0] sm:$0xff] %vm34, %v97
  %162 = vst.msk [vmem:[#allocation2 + $0x1e8] sm:$0xff] %vm34, %v98
  %163 = vst.msk [vmem:[#allocation2 + $0x1f0] sm:$0xff] %vm34, %v99
  %164 = vst.msk [vmem:[#allocation2 + $0x1f8] sm:$0xff] %vm34, %v100
  %165 = vst.msk [vmem:[#allocation2 + $0x200] sm:$0xff] %vm34, %v101
  %166 = vst.msk [vmem:[#allocation2 + $0x208] sm:$0xff] %vm34, %v102
  %v167 = vld [vmem:[#allocation2 + $0x7] sm:$0xff]
  %v168 = vld [vmem:[#allocation2 + $0xf] sm:$0xff]
  %v169 = vld [vmem:[#allocation2 + $0x17] sm:$0xff]
  %v170 = vld [vmem:[#allocation2 + $0x1f] sm:$0xff]
  %v171 = vld [vmem:[#allocation2 + $0x27] sm:$0xff]
  %v172 = vld [vmem:[#allocation2 + $0x2f] sm:$0xff]
  %v173 = vld [vmem:[#allocation2 + $0x37] sm:$0xff]
  %v174 = vld [vmem:[#allocation2 + $0x3f] sm:$0xff]
  %v175 = vld [vmem:[#allocation2 + $0x47] sm:$0xff]
  %v176 = vld [vmem:[#allocation2 + $0x4f] sm:$0xff]
  %v177 = vld [vmem:[#allocation2 + $0x57] sm:$0xff]
  %v178 = vld [vmem:[#allocation2 + $0x5f] sm:$0xff]
  %v179 = vld [vmem:[#allocation2 + $0x67] sm:$0xff]
  %v180 = vld [vmem:[#allocation2 + $0x6f] sm:$0xff]
  %v181 = vld [vmem:[#allocation2 + $0x77] sm:$0xff]
  %v182 = vld [vmem:[#allocation2 + $0x7f] sm:$0xff]
  %v183 = vld [vmem:[#allocation2 + $0x87] sm:$0xff]
  %v184 = vld [vmem:[#allocation2 + $0x8f] sm:$0xff]
  %v185 = vld [vmem:[#allocation2 + $0x97] sm:$0xff]
  %v186 = vld [vmem:[#allocation2 + $0x9f] sm:$0xff]
  %v187 = vld [vmem:[#allocation2 + $0xa7] sm:$0xff]
  %v188 = vld [vmem:[#allocation2 + $0xaf] sm:$0xff]
  %v189 = vld [vmem:[#allocation2 + $0xb7] sm:$0xff]
  %v190 = vld [vmem:[#allocation2 + $0xbf] sm:$0xff]
  %v191 = vld [vmem:[#allocation2 + $0xc7] sm:$0xff]
  %v192 = vld [vmem:[#allocation2 + $0xcf] sm:$0xff]
  %v193 = vld [vmem:[#allocation2 + $0xd7] sm:$0xff]
  %v194 = vld [vmem:[#allocation2 + $0xdf] sm:$0xff]
  %v195 = vld [vmem:[#allocation2 + $0xe7] sm:$0xff]
  %v196 = vld [vmem:[#allocation2 + $0xef] sm:$0xff]
  %v197 = vld [vmem:[#allocation2 + $0xf7] sm:$0xff]
  %v198 = vld [vmem:[#allocation2 + $0xff] sm:$0xff]
  %v199 = vld [vmem:[#allocation2 + $0x107] sm:$0xff]
  %v200 = vld [vmem:[#allocation2 + $0x10f] sm:$0xff]
  %v201 = vld [vmem:[#allocation2 + $0x117] sm:$0xff]
  %v202 = vld [vmem:[#allocation2 + $0x11f] sm:$0xff]
  %v203 = vld [vmem:[#allocation2 + $0x127] sm:$0xff]
  %v204 = vld [vmem:[#allocation2 + $0x12f] sm:$0xff]
  %v205 = vld [vmem:[#allocation2 + $0x137] sm:$0xff]
  %v206 = vld [vmem:[#allocation2 + $0x13f] sm:$0xff]
  %v207 = vld [vmem:[#allocation2 + $0x147] sm:$0xff]
  %v208 = vld [vmem:[#allocation2 + $0x14f] sm:$0xff]
  %v209 = vld [vmem:[#allocation2 + $0x157] sm:$0xff]
  %v210 = vld [vmem:[#allocation2 + $0x15f] sm:$0xff]
  %v211 = vld [vmem:[#allocation2 + $0x167] sm:$0xff]
  %v212 = vld [vmem:[#allocation2 + $0x16f] sm:$0xff]
  %v213 = vld [vmem:[#allocation2 + $0x177] sm:$0xff]
  %v214 = vld [vmem:[#allocation2 + $0x17f] sm:$0xff]
  %v215 = vld [vmem:[#allocation2 + $0x187] sm:$0xff]
  %v216 = vld [vmem:[#allocation2 + $0x18f] sm:$0xff]
  %v217 = vld [vmem:[#allocation2 + $0x197] sm:$0xff]
  %v218 = vld [vmem:[#allocation2 + $0x19f] sm:$0xff]
  %v219 = vld [vmem:[#allocation2 + $0x1a7] sm:$0xff]
  %v220 = vld [vmem:[#allocation2 + $0x1af] sm:$0xff]
  %v221 = vld [vmem:[#allocation2 + $0x1b7] sm:$0xff]
  %v222 = vld [vmem:[#allocation2 + $0x1bf] sm:$0xff]
  %v223 = vld [vmem:[#allocation2 + $0x1c7] sm:$0xff]
  %v224 = vld [vmem:[#allocation2 + $0x1cf] sm:$0xff]
  %v225 = vld [vmem:[#allocation2 + $0x1d7] sm:$0xff]
  %v226 = vld [vmem:[#allocation2 + $0x1df] sm:$0xff]
  %v227 = vld [vmem:[#allocation2 + $0x1e7] sm:$0xff]
  %v228 = vld [vmem:[#allocation2 + $0x1ef] sm:$0xff]
  %v229 = vld [vmem:[#allocation2 + $0x1f7] sm:$0xff]
  %v230 = vld [vmem:[#allocation2 + $0x1ff] sm:$0xff]
  %231 = vst.msk [vmem:[#allocation3] sm:$0xff] %vm34, %v167
  %232 = vst.msk [vmem:[#allocation3 + $0x18] sm:$0xff] %vm34, %v168
  %233 = vst.msk [vmem:[#allocation3 + $0x30] sm:$0xff] %vm34, %v169
  %234 = vst.msk [vmem:[#allocation3 + $0x48] sm:$0xff] %vm34, %v170
  %235 = vst.msk [vmem:[#allocation3 + $0x60] sm:$0xff] %vm34, %v171
  %236 = vst.msk [vmem:[#allocation3 + $0x78] sm:$0xff] %vm34, %v172
  %237 = vst.msk [vmem:[#allocation3 + $0x90] sm:$0xff] %vm34, %v173
  %238 = vst.msk [vmem:[#allocation3 + $0xa8] sm:$0xff] %vm34, %v174
  %239 = vst.msk [vmem:[#allocation3 + $0xc0] sm:$0xff] %vm34, %v175
  %240 = vst.msk [vmem:[#allocation3 + $0xd8] sm:$0xff] %vm34, %v176
  %241 = vst.msk [vmem:[#allocation3 + $0xf0] sm:$0xff] %vm34, %v177
  %242 = vst.msk [vmem:[#allocation3 + $0x108] sm:$0xff] %vm34, %v178
  %243 = vst.msk [vmem:[#allocation3 + $0x120] sm:$0xff] %vm34, %v179
  %244 = vst.msk [vmem:[#allocation3 + $0x138] sm:$0xff] %vm34, %v180
  %245 = vst.msk [vmem:[#allocation3 + $0x150] sm:$0xff] %vm34, %v181
  %246 = vst.msk [vmem:[#allocation3 + $0x168] sm:$0xff] %vm34, %v182
  %247 = vst.msk [vmem:[#allocation3 + $0x180] sm:$0xff] %vm34, %v183
  %248 = vst.msk [vmem:[#allocation3 + $0x198] sm:$0xff] %vm34, %v184
  %249 = vst.msk [vmem:[#allocation3 + $0x1b0] sm:$0xff] %vm34, %v185
  %250 = vst.msk [vmem:[#allocation3 + $0x1c8] sm:$0xff] %vm34, %v186
  %251 = vst.msk [vmem:[#allocation3 + $0x1e0] sm:$0xff] %vm34, %v187
  %252 = vst.msk [vmem:[#allocation3 + $0x1f8] sm:$0xff] %vm34, %v188
  %253 = vst.msk [vmem:[#allocation3 + $0x210] sm:$0xff] %vm34, %v189
  %254 = vst.msk [vmem:[#allocation3 + $0x228] sm:$0xff] %vm34, %v190
  %255 = vst.msk [vmem:[#allocation3 + $0x240] sm:$0xff] %vm34, %v191
  %256 = vst.msk [vmem:[#allocation3 + $0x258] sm:$0xff] %vm34, %v192
  %257 = vst.msk [vmem:[#allocation3 + $0x270] sm:$0xff] %vm34, %v193
  %258 = vst.msk [vmem:[#allocation3 + $0x288] sm:$0xff] %vm34, %v194
  %259 = vst.msk [vmem:[#allocation3 + $0x2a0] sm:$0xff] %vm34, %v195
  %260 = vst.msk [vmem:[#allocation3 + $0x2b8] sm:$0xff] %vm34, %v196
  %261 = vst.msk [vmem:[#allocation3 + $0x2d0] sm:$0xff] %vm34, %v197
  %262 = vst.msk [vmem:[#allocation3 + $0x2e8] sm:$0xff] %vm34, %v198
  %263 = vst.msk [vmem:[#allocation3 + $0x300] sm:$0xff] %vm34, %v199
  %264 = vst.msk [vmem:[#allocation3 + $0x318] sm:$0xff] %vm34, %v200
  %265 = vst.msk [vmem:[#allocation3 + $0x330] sm:$0xff] %vm34, %v201
  %266 = vst.msk [vmem:[#allocation3 + $0x348] sm:$0xff] %vm34, %v202
  %267 = vst.msk [vmem:[#allocation3 + $0x360] sm:$0xff] %vm34, %v203
  %268 = vst.msk [vmem:[#allocation3 + $0x378] sm:$0xff] %vm34, %v204
  %269 = vst.msk [vmem:[#allocation3 + $0x390] sm:$0xff] %vm34, %v205
  %270 = vst.msk [vmem:[#allocation3 + $0x3a8] sm:$0xff] %vm34, %v206
  %271 = vst.msk [vmem:[#allocation3 + $0x3c0] sm:$0xff] %vm34, %v207
  %272 = vst.msk [vmem:[#allocation3 + $0x3d8] sm:$0xff] %vm34, %v208
  %273 = vst.msk [vmem:[#allocation3 + $0x3f0] sm:$0xff] %vm34, %v209
  %274 = vst.msk [vmem:[#allocation3 + $0x408] sm:$0xff] %vm34, %v210
  %275 = vst.msk [vmem:[#allocation3 + $0x420] sm:$0xff] %vm34, %v211
  %276 = vst.msk [vmem:[#allocation3 + $0x438] sm:$0xff] %vm34, %v212
  %277 = vst.msk [vmem:[#allocation3 + $0x450] sm:$0xff] %vm34, %v213
  %278 = vst.msk [vmem:[#allocation3 + $0x468] sm:$0xff] %vm34, %v214
  %279 = vst.msk [vmem:[#allocation3 + $0x480] sm:$0xff] %vm34, %v215
  %280 = vst.msk [vmem:[#allocation3 + $0x498] sm:$0xff] %vm34, %v216
  %281 = vst.msk [vmem:[#allocation3 + $0x4b0] sm:$0xff] %vm34, %v217
  %282 = vst.msk [vmem:[#allocation3 + $0x4c8] sm:$0xff] %vm34, %v218
  %283 = vst.msk [vmem:[#allocation3 + $0x4e0] sm:$0xff] %vm34, %v219
  %284 = vst.msk [vmem:[#allocation3 + $0x4f8] sm:$0xff] %vm34, %v220
  %285 = vst.msk [vmem:[#allocation3 + $0x510] sm:$0xff] %vm34, %v221
  %286 = vst.msk [vmem:[#allocation3 + $0x528] sm:$0xff] %vm34, %v222
  %287 = vst.msk [vmem:[#allocation3 + $0x540] sm:$0xff] %vm34, %v223
  %288 = vst.msk [vmem:[#allocation3 + $0x558] sm:$0xff] %vm34, %v224
  %289 = vst.msk [vmem:[#allocation3 + $0x570] sm:$0xff] %vm34, %v225
  %290 = vst.msk [vmem:[#allocation3 + $0x588] sm:$0xff] %vm34, %v226
  %291 = vst.msk [vmem:[#allocation3 + $0x5a0] sm:$0xff] %vm34, %v227
  %292 = vst.msk [vmem:[#allocation3 + $0x5b8] sm:$0xff] %vm34, %v228
  %293 = vst.msk [vmem:[#allocation3 + $0x5d0] sm:$0xff] %vm34, %v229
  %294 = vst.msk [vmem:[#allocation3 + $0x5e8] sm:$0xff] %vm34, %v230
  %v295 = vld [vmem:[#allocation2 + $0x8] sm:$0xff]
  %v296 = vld [vmem:[#allocation2 + $0x10] sm:$0xff]
  %v297 = vld [vmem:[#allocation2 + $0x18] sm:$0xff]
  %v298 = vld [vmem:[#allocation2 + $0x20] sm:$0xff]
  %v299 = vld [vmem:[#allocation2 + $0x28] sm:$0xff]
  %v300 = vld [vmem:[#allocation2 + $0x30] sm:$0xff]
  %v301 = vld [vmem:[#allocation2 + $0x38] sm:$0xff]
  %v302 = vld [vmem:[#allocation2 + $0x40] sm:$0xff]
  %v303 = vld [vmem:[#allocation2 + $0x48] sm:$0xff]
  %v304 = vld [vmem:[#allocation2 + $0x50] sm:$0xff]
  %v305 = vld [vmem:[#allocation2 + $0x58] sm:$0xff]
  %v306 = vld [vmem:[#allocation2 + $0x60] sm:$0xff]
  %v307 = vld [vmem:[#allocation2 + $0x68] sm:$0xff]
  %v308 = vld [vmem:[#allocation2 + $0x70] sm:$0xff]
  %v309 = vld [vmem:[#allocation2 + $0x78] sm:$0xff]
  %v310 = vld [vmem:[#allocation2 + $0x80] sm:$0xff]
  %v311 = vld [vmem:[#allocation2 + $0x88] sm:$0xff]
  %v312 = vld [vmem:[#allocation2 + $0x90] sm:$0xff]
  %v313 = vld [vmem:[#allocation2 + $0x98] sm:$0xff]
  %v314 = vld [vmem:[#allocation2 + $0xa0] sm:$0xff]
  %v315 = vld [vmem:[#allocation2 + $0xa8] sm:$0xff]
  %v316 = vld [vmem:[#allocation2 + $0xb0] sm:$0xff]
  %v317 = vld [vmem:[#allocation2 + $0xb8] sm:$0xff]
  %v318 = vld [vmem:[#allocation2 + $0xc0] sm:$0xff]
  %v319 = vld [vmem:[#allocation2 + $0xc8] sm:$0xff]
  %v320 = vld [vmem:[#allocation2 + $0xd0] sm:$0xff]
  %v321 = vld [vmem:[#allocation2 + $0xd8] sm:$0xff]
  %v322 = vld [vmem:[#allocation2 + $0xe0] sm:$0xff]
  %v323 = vld [vmem:[#allocation2 + $0xe8] sm:$0xff]
  %v324 = vld [vmem:[#allocation2 + $0xf0] sm:$0xff]
  %v325 = vld [vmem:[#allocation2 + $0xf8] sm:$0xff]
  %v326 = vld [vmem:[#allocation2 + $0x100] sm:$0xff]
  %v327 = vld [vmem:[#allocation2 + $0x108] sm:$0xff]
  %v328 = vld [vmem:[#allocation2 + $0x110] sm:$0xff]
  %v329 = vld [vmem:[#allocation2 + $0x118] sm:$0xff]
  %v330 = vld [vmem:[#allocation2 + $0x120] sm:$0xff]
  %v331 = vld [vmem:[#allocation2 + $0x128] sm:$0xff]
  %v332 = vld [vmem:[#allocation2 + $0x130] sm:$0xff]
  %v333 = vld [vmem:[#allocation2 + $0x138] sm:$0xff]
  %v334 = vld [vmem:[#allocation2 + $0x140] sm:$0xff]
  %v335 = vld [vmem:[#allocation2 + $0x148] sm:$0xff]
  %v336 = vld [vmem:[#allocation2 + $0x150] sm:$0xff]
  %v337 = vld [vmem:[#allocation2 + $0x158] sm:$0xff]
  %v338 = vld [vmem:[#allocation2 + $0x160] sm:$0xff]
  %v339 = vld [vmem:[#allocation2 + $0x168] sm:$0xff]
  %v340 = vld [vmem:[#allocation2 + $0x170] sm:$0xff]
  %v341 = vld [vmem:[#allocation2 + $0x178] sm:$0xff]
  %v342 = vld [vmem:[#allocation2 + $0x180] sm:$0xff]
  %v343 = vld [vmem:[#allocation2 + $0x188] sm:$0xff]
  %v344 = vld [vmem:[#allocation2 + $0x190] sm:$0xff]
  %v345 = vld [vmem:[#allocation2 + $0x198] sm:$0xff]
  %v346 = vld [vmem:[#allocation2 + $0x1a0] sm:$0xff]
  %v347 = vld [vmem:[#allocation2 + $0x1a8] sm:$0xff]
  %v348 = vld [vmem:[#allocation2 + $0x1b0] sm:$0xff]
  %v349 = vld [vmem:[#allocation2 + $0x1b8] sm:$0xff]
  %v350 = vld [vmem:[#allocation2 + $0x1c0] sm:$0xff]
  %v351 = vld [vmem:[#allocation2 + $0x1c8] sm:$0xff]
  %v352 = vld [vmem:[#allocation2 + $0x1d0] sm:$0xff]
  %v353 = vld [vmem:[#allocation2 + $0x1d8] sm:$0xff]
  %v354 = vld [vmem:[#allocation2 + $0x1e0] sm:$0xff]
  %v355 = vld [vmem:[#allocation2 + $0x1e8] sm:$0xff]
  %v356 = vld [vmem:[#allocation2 + $0x1f0] sm:$0xff]
  %v357 = vld [vmem:[#allocation2 + $0x1f8] sm:$0xff]
  %v358 = vld [vmem:[#allocation2 + $0x200] sm:$0xff]
  %423 = vrot.lane.b32.xlu0 %v295, 32
  %v424 = vpop.permute.xlu0 %423
  %425 = vrot.lane.b32.xlu0 %v296, 32
  %v426 = vpop.permute.xlu0 %425
  %427 = vrot.lane.b32.xlu0 %v297, 32
  %v428 = vpop.permute.xlu0 %427
  %429 = vrot.lane.b32.xlu0 %v298, 32
  %v430 = vpop.permute.xlu0 %429
  %431 = vrot.lane.b32.xlu0 %v299, 32
  %v432 = vpop.permute.xlu0 %431
  %433 = vrot.lane.b32.xlu0 %v300, 32
  %v434 = vpop.permute.xlu0 %433
  %435 = vrot.lane.b32.xlu0 %v301, 32
  %v436 = vpop.permute.xlu0 %435
  %437 = vrot.lane.b32.xlu0 %v302, 32
  %v438 = vpop.permute.xlu0 %437
  %439 = vrot.lane.b32.xlu0 %v303, 32
  %v440 = vpop.permute.xlu0 %439
  %441 = vrot.lane.b32.xlu0 %v304, 32
  %v442 = vpop.permute.xlu0 %441
  %443 = vrot.lane.b32.xlu0 %v305, 32
  %v444 = vpop.permute.xlu0 %443
  %445 = vrot.lane.b32.xlu0 %v306, 32
  %v446 = vpop.permute.xlu0 %445
  %447 = vrot.lane.b32.xlu0 %v307, 32
  %v448 = vpop.permute.xlu0 %447
  %449 = vrot.lane.b32.xlu0 %v308, 32
  %v450 = vpop.permute.xlu0 %449
  %451 = vrot.lane.b32.xlu0 %v309, 32
  %v452 = vpop.permute.xlu0 %451
  %453 = vrot.lane.b32.xlu0 %v310, 32
  %v454 = vpop.permute.xlu0 %453
  %455 = vrot.lane.b32.xlu0 %v311, 32
  %v456 = vpop.permute.xlu0 %455
  %457 = vrot.lane.b32.xlu0 %v312, 32
  %v458 = vpop.permute.xlu0 %457
  %459 = vrot.lane.b32.xlu0 %v313, 32
  %v460 = vpop.permute.xlu0 %459
  %461 = vrot.lane.b32.xlu0 %v314, 32
  %v462 = vpop.permute.xlu0 %461
  %463 = vrot.lane.b32.xlu0 %v315, 32
  %v464 = vpop.permute.xlu0 %463
  %465 = vrot.lane.b32.xlu0 %v316, 32
  %v466 = vpop.permute.xlu0 %465
  %467 = vrot.lane.b32.xlu0 %v317, 32
  %v468 = vpop.permute.xlu0 %467
  %469 = vrot.lane.b32.xlu0 %v318, 32
  %v470 = vpop.permute.xlu0 %469
  %471 = vrot.lane.b32.xlu0 %v319, 32
  %v472 = vpop.permute.xlu0 %471
  %473 = vrot.lane.b32.xlu0 %v320, 32
  %v474 = vpop.permute.xlu0 %473
  %475 = vrot.lane.b32.xlu0 %v321, 32
  %v476 = vpop.permute.xlu0 %475
  %477 = vrot.lane.b32.xlu0 %v322, 32
  %v478 = vpop.permute.xlu0 %477
  %479 = vrot.lane.b32.xlu0 %v323, 32
  %v480 = vpop.permute.xlu0 %479
  %481 = vrot.lane.b32.xlu0 %v324, 32
  %v482 = vpop.permute.xlu0 %481
  %483 = vrot.lane.b32.xlu0 %v325, 32
  %v484 = vpop.permute.xlu0 %483
  %485 = vrot.lane.b32.xlu0 %v326, 32
  %v486 = vpop.permute.xlu0 %485
  %487 = vrot.lane.b32.xlu0 %v327, 32
  %v488 = vpop.permute.xlu0 %487
  %489 = vrot.lane.b32.xlu0 %v328, 32
  %v490 = vpop.permute.xlu0 %489
  %491 = vrot.lane.b32.xlu0 %v329, 32
  %v492 = vpop.permute.xlu0 %491
  %493 = vrot.lane.b32.xlu0 %v330, 32
  %v494 = vpop.permute.xlu0 %493
  %495 = vrot.lane.b32.xlu0 %v331, 32
  %v496 = vpop.permute.xlu0 %495
  %497 = vrot.lane.b32.xlu0 %v332, 32
  %v498 = vpop.permute.xlu0 %497
  %499 = vrot.lane.b32.xlu0 %v333, 32
  %v500 = vpop.permute.xlu0 %499
  %501 = vrot.lane.b32.xlu0 %v334, 32
  %v502 = vpop.permute.xlu0 %501
  %503 = vrot.lane.b32.xlu0 %v335, 32
  %v504 = vpop.permute.xlu0 %503
  %505 = vrot.lane.b32.xlu0 %v336, 32
  %v506 = vpop.permute.xlu0 %505
  %507 = vrot.lane.b32.xlu0 %v337, 32
  %v508 = vpop.permute.xlu0 %507
  %509 = vrot.lane.b32.xlu0 %v338, 32
  %v510 = vpop.permute.xlu0 %509
  %511 = vrot.lane.b32.xlu0 %v339, 32
  %v512 = vpop.permute.xlu0 %511
  %513 = vrot.lane.b32.xlu0 %v340, 32
  %v514 = vpop.permute.xlu0 %513
  %515 = vrot.lane.b32.xlu0 %v341, 32
  %v516 = vpop.permute.xlu0 %515
  %517 = vrot.lane.b32.xlu0 %v342, 32
  %v518 = vpop.permute.xlu0 %517
  %519 = vrot.lane.b32.xlu0 %v343, 32
  %v520 = vpop.permute.xlu0 %519
  %521 = vrot.lane.b32.xlu0 %v344, 32
  %v522 = vpop.permute.xlu0 %521
  %523 = vrot.lane.b32.xlu0 %v345, 32
  %v524 = vpop.permute.xlu0 %523
  %525 = vrot.lane.b32.xlu0 %v346, 32
  %v526 = vpop.permute.xlu0 %525
  %527 = vrot.lane.b32.xlu0 %v347, 32
  %v528 = vpop.permute.xlu0 %527
  %529 = vrot.lane.b32.xlu0 %v348, 32
  %v530 = vpop.permute.xlu0 %529
  %531 = vrot.lane.b32.xlu0 %v349, 32
  %v532 = vpop.permute.xlu0 %531
  %533 = vrot.lane.b32.xlu0 %v350, 32
  %v534 = vpop.permute.xlu0 %533
  %535 = vrot.lane.b32.xlu0 %v351, 32
  %v536 = vpop.permute.xlu0 %535
  %537 = vrot.lane.b32.xlu0 %v352, 32
  %v538 = vpop.permute.xlu0 %537
  %539 = vrot.lane.b32.xlu0 %v353, 32
  %v540 = vpop.permute.xlu0 %539
  %541 = vrot.lane.b32.xlu0 %v354, 32
  %v542 = vpop.permute.xlu0 %541
  %543 = vrot.lane.b32.xlu0 %v355, 32
  %v544 = vpop.permute.xlu0 %543
  %545 = vrot.lane.b32.xlu0 %v356, 32
  %v546 = vpop.permute.xlu0 %545
  %547 = vrot.lane.b32.xlu0 %v357, 32
  %v548 = vpop.permute.xlu0 %547
  %549 = vrot.lane.b32.xlu0 %v358, 32
  %v550 = vpop.permute.xlu0 %549
  %vm615 = vcmask 523520
  %616 = vst.msk [vmem:[#allocation3] sm:$0xff] %vm615, %v424
  %617 = vst.msk [vmem:[#allocation3 + $0x18] sm:$0xff] %vm615, %v426
  %618 = vst.msk [vmem:[#allocation3 + $0x30] sm:$0xff] %vm615, %v428
  %619 = vst.msk [vmem:[#allocation3 + $0x48] sm:$0xff] %vm615, %v430
  %620 = vst.msk [vmem:[#allocation3 + $0x60] sm:$0xff] %vm615, %v432
  %621 = vst.msk [vmem:[#allocation3 + $0x78] sm:$0xff] %vm615, %v434
  %622 = vst.msk [vmem:[#allocation3 + $0x90] sm:$0xff] %vm615, %v436
  %623 = vst.msk [vmem:[#allocation3 + $0xa8] sm:$0xff] %vm615, %v438
  %624 = vst.msk [vmem:[#allocation3 + $0xc0] sm:$0xff] %vm615, %v440
  %625 = vst.msk [vmem:[#allocation3 + $0xd8] sm:$0xff] %vm615, %v442
  %626 = vst.msk [vmem:[#allocation3 + $0xf0] sm:$0xff] %vm615, %v444
  %627 = vst.msk [vmem:[#allocation3 + $0x108] sm:$0xff] %vm615, %v446
  %628 = vst.msk [vmem:[#allocation3 + $0x120] sm:$0xff] %vm615, %v448
  %629 = vst.msk [vmem:[#allocation3 + $0x138] sm:$0xff] %vm615, %v450
  %630 = vst.msk [vmem:[#allocation3 + $0x150] sm:$0xff] %vm615, %v452
  %631 = vst.msk [vmem:[#allocation3 + $0x168] sm:$0xff] %vm615, %v454
  %632 = vst.msk [vmem:[#allocation3 + $0x180] sm:$0xff] %vm615, %v456
  %633 = vst.msk [vmem:[#allocation3 + $0x198] sm:$0xff] %vm615, %v458
  %634 = vst.msk [vmem:[#allocation3 + $0x1b0] sm:$0xff] %vm615, %v460
  %635 = vst.msk [vmem:[#allocation3 + $0x1c8] sm:$0xff] %vm615, %v462
  %636 = vst.msk [vmem:[#allocation3 + $0x1e0] sm:$0xff] %vm615, %v464
  %637 = vst.msk [vmem:[#allocation3 + $0x1f8] sm:$0xff] %vm615, %v466
  %638 = vst.msk [vmem:[#allocation3 + $0x210] sm:$0xff] %vm615, %v468
  %639 = vst.msk [vmem:[#allocation3 + $0x228] sm:$0xff] %vm615, %v470
  %640 = vst.msk [vmem:[#allocation3 + $0x240] sm:$0xff] %vm615, %v472
  %641 = vst.msk [vmem:[#allocation3 + $0x258] sm:$0xff] %vm615, %v474
  %642 = vst.msk [vmem:[#allocation3 + $0x270] sm:$0xff] %vm615, %v476
  %643 = vst.msk [vmem:[#allocation3 + $0x288] sm:$0xff] %vm615, %v478
  %644 = vst.msk [vmem:[#allocation3 + $0x2a0] sm:$0xff] %vm615, %v480
  %645 = vst.msk [vmem:[#allocation3 + $0x2b8] sm:$0xff] %vm615, %v482
  %646 = vst.msk [vmem:[#allocation3 + $0x2d0] sm:$0xff] %vm615, %v484
  %647 = vst.msk [vmem:[#allocation3 + $0x2e8] sm:$0xff] %vm615, %v486
  %648 = vst.msk [vmem:[#allocation3 + $0x300] sm:$0xff] %vm615, %v488
  %649 = vst.msk [vmem:[#allocation3 + $0x318] sm:$0xff] %vm615, %v490
  %650 = vst.msk [vmem:[#allocation3 + $0x330] sm:$0xff] %vm615, %v492
  %651 = vst.msk [vmem:[#allocation3 + $0x348] sm:$0xff] %vm615, %v494
  %652 = vst.msk [vmem:[#allocation3 + $0x360] sm:$0xff] %vm615, %v496
  %653 = vst.msk [vmem:[#allocation3 + $0x378] sm:$0xff] %vm615, %v498
  %654 = vst.msk [vmem:[#allocation3 + $0x390] sm:$0xff] %vm615, %v500
  %655 = vst.msk [vmem:[#allocation3 + $0x3a8] sm:$0xff] %vm615, %v502
  %656 = vst.msk [vmem:[#allocation3 + $0x3c0] sm:$0xff] %vm615, %v504
  %657 = vst.msk [vmem:[#allocation3 + $0x3d8] sm:$0xff] %vm615, %v506
  %658 = vst.msk [vmem:[#allocation3 + $0x3f0] sm:$0xff] %vm615, %v508
  %659 = vst.msk [vmem:[#allocation3 + $0x408] sm:$0xff] %vm615, %v510
  %660 = vst.msk [vmem:[#allocation3 + $0x420] sm:$0xff] %vm615, %v512
  %661 = vst.msk [vmem:[#allocation3 + $0x438] sm:$0xff] %vm615, %v514
  %662 = vst.msk [vmem:[#allocation3 + $0x450] sm:$0xff] %vm615, %v516
  %663 = vst.msk [vmem:[#allocation3 + $0x468] sm:$0xff] %vm615, %v518
  %664 = vst.msk [vmem:[#allocation3 + $0x480] sm:$0xff] %vm615, %v520
  %665 = vst.msk [vmem:[#allocation3 + $0x498] sm:$0xff] %vm615, %v522
  %666 = vst.msk [vmem:[#allocation3 + $0x4b0] sm:$0xff] %vm615, %v524
  %667 = vst.msk [vmem:[#allocation3 + $0x4c8] sm:$0xff] %vm615, %v526
  %668 = vst.msk [vmem:[#allocation3 + $0x4e0] sm:$0xff] %vm615, %v528
  %669 = vst.msk [vmem:[#allocation3 + $0x4f8] sm:$0xff] %vm615, %v530
  %670 = vst.msk [vmem:[#allocation3 + $0x510] sm:$0xff] %vm615, %v532
  %671 = vst.msk [vmem:[#allocation3 + $0x528] sm:$0xff] %vm615, %v534
  %672 = vst.msk [vmem:[#allocation3 + $0x540] sm:$0xff] %vm615, %v536
  %673 = vst.msk [vmem:[#allocation3 + $0x558] sm:$0xff] %vm615, %v538
  %674 = vst.msk [vmem:[#allocation3 + $0x570] sm:$0xff] %vm615, %v540
  %675 = vst.msk [vmem:[#allocation3 + $0x588] sm:$0xff] %vm615, %v542
  %676 = vst.msk [vmem:[#allocation3 + $0x5a0] sm:$0xff] %vm615, %v544
  %677 = vst.msk [vmem:[#allocation3 + $0x5b8] sm:$0xff] %vm615, %v546
  %678 = vst.msk [vmem:[#allocation3 + $0x5d0] sm:$0xff] %vm615, %v548
  %679 = vst.msk [vmem:[#allocation3 + $0x5e8] sm:$0xff] %vm615, %v550
  %v680 = vld [vmem:[#allocation2 + $0x9] sm:$0xff]
  %v681 = vld [vmem:[#allocation2 + $0x11] sm:$0xff]
  %v682 = vld [vmem:[#allocation2 + $0x19] sm:$0xff]
  %v683 = vld [vmem:[#allocation2 + $0x21] sm:$0xff]
  %v684 = vld [vmem:[#allocation2 + $0x29] sm:$0xff]
  %v685 = vld [vmem:[#allocation2 + $0x31] sm:$0xff]
  %v686 = vld [vmem:[#allocation2 + $0x39] sm:$0xff]
  %v687 = vld [vmem:[#allocation2 + $0x41] sm:$0xff]
  %v688 = vld [vmem:[#allocation2 + $0x49] sm:$0xff]
  %v689 = vld [vmem:[#allocation2 + $0x51] sm:$0xff]
  %v690 = vld [vmem:[#allocation2 + $0x59] sm:$0xff]
  %v691 = vld [vmem:[#allocation2 + $0x61] sm:$0xff]
  %v692 = vld [vmem:[#allocation2 + $0x69] sm:$0xff]
  %v693 = vld [vmem:[#allocation2 + $0x71] sm:$0xff]
  %v694 = vld [vmem:[#allocation2 + $0x79] sm:$0xff]
  %v695 = vld [vmem:[#allocation2 + $0x81] sm:$0xff]
  %v696 = vld [vmem:[#allocation2 + $0x89] sm:$0xff]
  %v697 = vld [vmem:[#allocation2 + $0x91] sm:$0xff]
  %v698 = vld [vmem:[#allocation2 + $0x99] sm:$0xff]
  %v699 = vld [vmem:[#allocation2 + $0xa1] sm:$0xff]
  %v700 = vld [vmem:[#allocation2 + $0xa9] sm:$0xff]
  %v701 = vld [vmem:[#allocation2 + $0xb1] sm:$0xff]
  %v702 = vld [vmem:[#allocation2 + $0xb9] sm:$0xff]
  %v703 = vld [vmem:[#allocation2 + $0xc1] sm:$0xff]
  %v704 = vld [vmem:[#allocation2 + $0xc9] sm:$0xff]
  %v705 = vld [vmem:[#allocation2 + $0xd1] sm:$0xff]
  %v706 = vld [vmem:[#allocation2 + $0xd9] sm:$0xff]
  %v707 = vld [vmem:[#allocation2 + $0xe1] sm:$0xff]
  %v708 = vld [vmem:[#allocation2 + $0xe9] sm:$0xff]
  %v709 = vld [vmem:[#allocation2 + $0xf1] sm:$0xff]
  %v710 = vld [vmem:[#allocation2 + $0xf9] sm:$0xff]
  %v711 = vld [vmem:[#allocation2 + $0x101] sm:$0xff]
  %v712 = vld [vmem:[#allocation2 + $0x109] sm:$0xff]
  %v713 = vld [vmem:[#allocation2 + $0x111] sm:$0xff]
  %v714 = vld [vmem:[#allocation2 + $0x119] sm:$0xff]
  %v715 = vld [vmem:[#allocation2 + $0x121] sm:$0xff]
  %v716 = vld [vmem:[#allocation2 + $0x129] sm:$0xff]
  %v717 = vld [vmem:[#allocation2 + $0x131] sm:$0xff]
  %v718 = vld [vmem:[#allocation2 + $0x139] sm:$0xff]
  %v719 = vld [vmem:[#allocation2 + $0x141] sm:$0xff]
  %v720 = vld [vmem:[#allocation2 + $0x149] sm:$0xff]
  %v721 = vld [vmem:[#allocation2 + $0x151] sm:$0xff]
  %v722 = vld [vmem:[#allocation2 + $0x159] sm:$0xff]
  %v723 = vld [vmem:[#allocation2 + $0x161] sm:$0xff]
  %v724 = vld [vmem:[#allocation2 + $0x169] sm:$0xff]
  %v725 = vld [vmem:[#allocation2 + $0x171] sm:$0xff]
  %v726 = vld [vmem:[#allocation2 + $0x179] sm:$0xff]
  %v727 = vld [vmem:[#allocation2 + $0x181] sm:$0xff]
  %v728 = vld [vmem:[#allocation2 + $0x189] sm:$0xff]
  %v729 = vld [vmem:[#allocation2 + $0x191] sm:$0xff]
  %v730 = vld [vmem:[#allocation2 + $0x199] sm:$0xff]
  %v731 = vld [vmem:[#allocation2 + $0x1a1] sm:$0xff]
  %v732 = vld [vmem:[#allocation2 + $0x1a9] sm:$0xff]
  %v733 = vld [vmem:[#allocation2 + $0x1b1] sm:$0xff]
  %v734 = vld [vmem:[#allocation2 + $0x1b9] sm:$0xff]
  %v735 = vld [vmem:[#allocation2 + $0x1c1] sm:$0xff]
  %v736 = vld [vmem:[#allocation2 + $0x1c9] sm:$0xff]
  %v737 = vld [vmem:[#allocation2 + $0x1d1] sm:$0xff]
  %v738 = vld [vmem:[#allocation2 + $0x1d9] sm:$0xff]
  %v739 = vld [vmem:[#allocation2 + $0x1e1] sm:$0xff]
  %v740 = vld [vmem:[#allocation2 + $0x1e9] sm:$0xff]
  %v741 = vld [vmem:[#allocation2 + $0x1f1] sm:$0xff]
  %v742 = vld [vmem:[#allocation2 + $0x1f9] sm:$0xff]
  %v743 = vld [vmem:[#allocation2 + $0x201] sm:$0xff]
  %808 = vrot.lane.b32.xlu0 %v680, 64
  %v809 = vpop.permute.xlu0 %808
  %810 = vrot.lane.b32.xlu0 %v681, 64
  %v811 = vpop.permute.xlu0 %810
  %812 = vrot.lane.b32.xlu0 %v682, 64
  %v813 = vpop.permute.xlu0 %812
  %814 = vrot.lane.b32.xlu0 %v683, 64
  %v815 = vpop.permute.xlu0 %814
  %816 = vrot.lane.b32.xlu0 %v684, 64
  %v817 = vpop.permute.xlu0 %816
  %818 = vrot.lane.b32.xlu0 %v685, 64
  %v819 = vpop.permute.xlu0 %818
  %820 = vrot.lane.b32.xlu0 %v686, 64
  %v821 = vpop.permute.xlu0 %820
  %822 = vrot.lane.b32.xlu0 %v687, 64
  %v823 = vpop.permute.xlu0 %822
  %824 = vrot.lane.b32.xlu0 %v688, 64
  %v825 = vpop.permute.xlu0 %824
  %826 = vrot.lane.b32.xlu0 %v689, 64
  %v827 = vpop.permute.xlu0 %826
  %828 = vrot.lane.b32.xlu0 %v690, 64
  %v829 = vpop.permute.xlu0 %828
  %830 = vrot.lane.b32.xlu0 %v691, 64
  %v831 = vpop.permute.xlu0 %830
  %832 = vrot.lane.b32.xlu0 %v692, 64
  %v833 = vpop.permute.xlu0 %832
  %834 = vrot.lane.b32.xlu0 %v693, 64
  %v835 = vpop.permute.xlu0 %834
  %836 = vrot.lane.b32.xlu0 %v694, 64
  %v837 = vpop.permute.xlu0 %836
  %838 = vrot.lane.b32.xlu0 %v695, 64
  %v839 = vpop.permute.xlu0 %838
  %840 = vrot.lane.b32.xlu0 %v696, 64
  %v841 = vpop.permute.xlu0 %840
  %842 = vrot.lane.b32.xlu0 %v697, 64
  %v843 = vpop.permute.xlu0 %842
  %844 = vrot.lane.b32.xlu0 %v698, 64
  %v845 = vpop.permute.xlu0 %844
  %846 = vrot.lane.b32.xlu0 %v699, 64
  %v847 = vpop.permute.xlu0 %846
  %848 = vrot.lane.b32.xlu0 %v700, 64
  %v849 = vpop.permute.xlu0 %848
  %850 = vrot.lane.b32.xlu0 %v701, 64
  %v851 = vpop.permute.xlu0 %850
  %852 = vrot.lane.b32.xlu0 %v702, 64
  %v853 = vpop.permute.xlu0 %852
  %854 = vrot.lane.b32.xlu0 %v703, 64
  %v855 = vpop.permute.xlu0 %854
  %856 = vrot.lane.b32.xlu0 %v704, 64
  %v857 = vpop.permute.xlu0 %856
  %858 = vrot.lane.b32.xlu0 %v705, 64
  %v859 = vpop.permute.xlu0 %858
  %860 = vrot.lane.b32.xlu0 %v706, 64
  %v861 = vpop.permute.xlu0 %860
  %862 = vrot.lane.b32.xlu0 %v707, 64
  %v863 = vpop.permute.xlu0 %862
  %864 = vrot.lane.b32.xlu0 %v708, 64
  %v865 = vpop.permute.xlu0 %864
  %866 = vrot.lane.b32.xlu0 %v709, 64
  %v867 = vpop.permute.xlu0 %866
  %868 = vrot.lane.b32.xlu0 %v710, 64
  %v869 = vpop.permute.xlu0 %868
  %870 = vrot.lane.b32.xlu0 %v711, 64
  %v871 = vpop.permute.xlu0 %870
  %872 = vrot.lane.b32.xlu0 %v712, 64
  %v873 = vpop.permute.xlu0 %872
  %874 = vrot.lane.b32.xlu0 %v713, 64
  %v875 = vpop.permute.xlu0 %874
  %876 = vrot.lane.b32.xlu0 %v714, 64
  %v877 = vpop.permute.xlu0 %876
  %878 = vrot.lane.b32.xlu0 %v715, 64
  %v879 = vpop.permute.xlu0 %878
  %880 = vrot.lane.b32.xlu0 %v716, 64
  %v881 = vpop.permute.xlu0 %880
  %882 = vrot.lane.b32.xlu0 %v717, 64
  %v883 = vpop.permute.xlu0 %882
  %884 = vrot.lane.b32.xlu0 %v718, 64
  %v885 = vpop.permute.xlu0 %884
  %886 = vrot.lane.b32.xlu0 %v719, 64
  %v887 = vpop.permute.xlu0 %886
  %888 = vrot.lane.b32.xlu0 %v720, 64
  %v889 = vpop.permute.xlu0 %888
  %890 = vrot.lane.b32.xlu0 %v721, 64
  %v891 = vpop.permute.xlu0 %890
  %892 = vrot.lane.b32.xlu0 %v722, 64
  %v893 = vpop.permute.xlu0 %892
  %894 = vrot.lane.b32.xlu0 %v723, 64
  %v895 = vpop.permute.xlu0 %894
  %896 = vrot.lane.b32.xlu0 %v724, 64
  %v897 = vpop.permute.xlu0 %896
  %898 = vrot.lane.b32.xlu0 %v725, 64
  %v899 = vpop.permute.xlu0 %898
  %900 = vrot.lane.b32.xlu0 %v726, 64
  %v901 = vpop.permute.xlu0 %900
  %902 = vrot.lane.b32.xlu0 %v727, 64
  %v903 = vpop.permute.xlu0 %902
  %904 = vrot.lane.b32.xlu0 %v728, 64
  %v905 = vpop.permute.xlu0 %904
  %906 = vrot.lane.b32.xlu0 %v729, 64
  %v907 = vpop.permute.xlu0 %906
  %908 = vrot.lane.b32.xlu0 %v730, 64
  %v909 = vpop.permute.xlu0 %908
  %910 = vrot.lane.b32.xlu0 %v731, 64
  %v911 = vpop.permute.xlu0 %910
  %912 = vrot.lane.b32.xlu0 %v732, 64
  %v913 = vpop.permute.xlu0 %912
  %914 = vrot.lane.b32.xlu0 %v733, 64
  %v915 = vpop.permute.xlu0 %914
  %916 = vrot.lane.b32.xlu0 %v734, 64
  %v917 = vpop.permute.xlu0 %916
  %918 = vrot.lane.b32.xlu0 %v735, 64
  %v919 = vpop.permute.xlu0 %918
  %920 = vrot.lane.b32.xlu0 %v736, 64
  %v921 = vpop.permute.xlu0 %920
  %922 = vrot.lane.b32.xlu0 %v737, 64
  %v923 = vpop.permute.xlu0 %922
  %924 = vrot.lane.b32.xlu0 %v738, 64
  %v925 = vpop.permute.xlu0 %924
  %926 = vrot.lane.b32.xlu0 %v739, 64
  %v927 = vpop.permute.xlu0 %926
  %928 = vrot.lane.b32.xlu0 %v740, 64
  %v929 = vpop.permute.xlu0 %928
  %930 = vrot.lane.b32.xlu0 %v741, 64
  %v931 = vpop.permute.xlu0 %930
  %932 = vrot.lane.b32.xlu0 %v742, 64
  %v933 = vpop.permute.xlu0 %932
  %934 = vrot.lane.b32.xlu0 %v743, 64
  %v935 = vpop.permute.xlu0 %934
  %vm1000 = vcmask 785920
  %1001 = vst.msk [vmem:[#allocation3] sm:$0xff] %vm1000, %v809
  %1002 = vst.msk [vmem:[#allocation3 + $0x18] sm:$0xff] %vm1000, %v811
  %1003 = vst.msk [vmem:[#allocation3 + $0x30] sm:$0xff] %vm1000, %v813
  %1004 = vst.msk [vmem:[#allocation3 + $0x48] sm:$0xff] %vm1000, %v815
  %1005 = vst.msk [vmem:[#allocation3 + $0x60] sm:$0xff] %vm1000, %v817
  %1006 = vst.msk [vmem:[#allocation3 + $0x78] sm:$0xff] %vm1000, %v819
  %1007 = vst.msk [vmem:[#allocation3 + $0x90] sm:$0xff] %vm1000, %v821
  %1008 = vst.msk [vmem:[#allocation3 + $0xa8] sm:$0xff] %vm1000, %v823
  %1009 = vst.msk [vmem:[#allocation3 + $0xc0] sm:$0xff] %vm1000, %v825
  %1010 = vst.msk [vmem:[#allocation3 + $0xd8] sm:$0xff] %vm1000, %v827
  %1011 = vst.msk [vmem:[#allocation3 + $0xf0] sm:$0xff] %vm1000, %v829
  %1012 = vst.msk [vmem:[#allocation3 + $0x108] sm:$0xff] %vm1000, %v831
  %1013 = vst.msk [vmem:[#allocation3 + $0x120] sm:$0xff] %vm1000, %v833
  %1014 = vst.msk [vmem:[#allocation3 + $0x138] sm:$0xff] %vm1000, %v835
  %1015 = vst.msk [vmem:[#allocation3 + $0x150] sm:$0xff] %vm1000, %v837
  %1016 = vst.msk [vmem:[#allocation3 + $0x168] sm:$0xff] %vm1000, %v839
  %1017 = vst.msk [vmem:[#allocation3 + $0x180] sm:$0xff] %vm1000, %v841
  %1018 = vst.msk [vmem:[#allocation3 + $0x198] sm:$0xff] %vm1000, %v843
  %1019 = vst.msk [vmem:[#allocation3 + $0x1b0] sm:$0xff] %vm1000, %v845
  %1020 = vst.msk [vmem:[#allocation3 + $0x1c8] sm:$0xff] %vm1000, %v847
  %1021 = vst.msk [vmem:[#allocation3 + $0x1e0] sm:$0xff] %vm1000, %v849
  %1022 = vst.msk [vmem:[#allocation3 + $0x1f8] sm:$0xff] %vm1000, %v851
  %1023 = vst.msk [vmem:[#allocation3 + $0x210] sm:$0xff] %vm1000, %v853
  %1024 = vst.msk [vmem:[#allocation3 + $0x228] sm:$0xff] %vm1000, %v855
  %1025 = vst.msk [vmem:[#allocation3 + $0x240] sm:$0xff] %vm1000, %v857
  %1026 = vst.msk [vmem:[#allocation3 + $0x258] sm:$0xff] %vm1000, %v859
  %1027 = vst.msk [vmem:[#allocation3 + $0x270] sm:$0xff] %vm1000, %v861
  %1028 = vst.msk [vmem:[#allocation3 + $0x288] sm:$0xff] %vm1000, %v863
  %1029 = vst.msk [vmem:[#allocation3 + $0x2a0] sm:$0xff] %vm1000, %v865
  %1030 = vst.msk [vmem:[#allocation3 + $0x2b8] sm:$0xff] %vm1000, %v867
  %1031 = vst.msk [vmem:[#allocation3 + $0x2d0] sm:$0xff] %vm1000, %v869
  %1032 = vst.msk [vmem:[#allocation3 + $0x2e8] sm:$0xff] %vm1000, %v871
  %1033 = vst.msk [vmem:[#allocation3 + $0x300] sm:$0xff] %vm1000, %v873
  %1034 = vst.msk [vmem:[#allocation3 + $0x318] sm:$0xff] %vm1000, %v875
  %1035 = vst.msk [vmem:[#allocation3 + $0x330] sm:$0xff] %vm1000, %v877
  %1036 = vst.msk [vmem:[#allocation3 + $0x348] sm:$0xff] %vm1000, %v879
  %1037 = vst.msk [vmem:[#allocation3 + $0x360] sm:$0xff] %vm1000, %v881
  %1038 = vst.msk [vmem:[#allocation3 + $0x378] sm:$0xff] %vm1000, %v883
  %1039 = vst.msk [vmem:[#allocation3 + $0x390] sm:$0xff] %vm1000, %v885
  %1040 = vst.msk [vmem:[#allocation3 + $0x3a8] sm:$0xff] %vm1000, %v887
  %1041 = vst.msk [vmem:[#allocation3 + $0x3c0] sm:$0xff] %vm1000, %v889
  %1042 = vst.msk [vmem:[#allocation3 + $0x3d8] sm:$0xff] %vm1000, %v891
  %1043 = vst.msk [vmem:[#allocation3 + $0x3f0] sm:$0xff] %vm1000, %v893
  %1044 = vst.msk [vmem:[#allocation3 + $0x408] sm:$0xff] %vm1000, %v895
  %1045 = vst.msk [vmem:[#allocation3 + $0x420] sm:$0xff] %vm1000, %v897
  %1046 = vst.msk [vmem:[#allocation3 + $0x438] sm:$0xff] %vm1000, %v899
  %1047 = vst.msk [vmem:[#allocation3 + $0x450] sm:$0xff] %vm1000, %v901
  %1048 = vst.msk [vmem:[#allocation3 + $0x468] sm:$0xff] %vm1000, %v903
  %1049 = vst.msk [vmem:[#allocation3 + $0x480] sm:$0xff] %vm1000, %v905
  %1050 = vst.msk [vmem:[#allocation3 + $0x498] sm:$0xff] %vm1000, %v907
  %1051 = vst.msk [vmem:[#allocation3 + $0x4b0] sm:$0xff] %vm1000, %v909
  %1052 = vst.msk [vmem:[#allocation3 + $0x4c8] sm:$0xff] %vm1000, %v911
  %1053 = vst.msk [vmem:[#allocation3 + $0x4e0] sm:$0xff] %vm1000, %v913
  %1054 = vst.msk [vmem:[#allocation3 + $0x4f8] sm:$0xff] %vm1000, %v915
  %1055 = vst.msk [vmem:[#allocation3 + $0x510] sm:$0xff] %vm1000, %v917
  %1056 = vst.msk [vmem:[#allocation3 + $0x528] sm:$0xff] %vm1000, %v919
  %1057 = vst.msk [vmem:[#allocation3 + $0x540] sm:$0xff] %vm1000, %v921
  %1058 = vst.msk [vmem:[#allocation3 + $0x558] sm:$0xff] %vm1000, %v923
  %1059 = vst.msk [vmem:[#allocation3 + $0x570] sm:$0xff] %vm1000, %v925
  %1060 = vst.msk [vmem:[#allocation3 + $0x588] sm:$0xff] %vm1000, %v927
  %1061 = vst.msk [vmem:[#allocation3 + $0x5a0] sm:$0xff] %vm1000, %v929
  %1062 = vst.msk [vmem:[#allocation3 + $0x5b8] sm:$0xff] %vm1000, %v931
  %1063 = vst.msk [vmem:[#allocation3 + $0x5d0] sm:$0xff] %vm1000, %v933
  %1064 = vst.msk [vmem:[#allocation3 + $0x5e8] sm:$0xff] %vm1000, %v935
  %v1065 = vld [vmem:[#allocation2 + $0xf] sm:$0xff]
  %v1066 = vld [vmem:[#allocation2 + $0x17] sm:$0xff]
  %v1067 = vld [vmem:[#allocation2 + $0x1f] sm:$0xff]
  %v1068 = vld [vmem:[#allocation2 + $0x27] sm:$0xff]
  %v1069 = vld [vmem:[#allocation2 + $0x2f] sm:$0xff]
  %v1070 = vld [vmem:[#allocation2 + $0x37] sm:$0xff]
  %v1071 = vld [vmem:[#allocation2 + $0x3f] sm:$0xff]
  %v1072 = vld [vmem:[#allocation2 + $0x47] sm:$0xff]
  %v1073 = vld [vmem:[#allocation2 + $0x4f] sm:$0xff]
  %v1074 = vld [vmem:[#allocation2 + $0x57] sm:$0xff]
  %v1075 = vld [vmem:[#allocation2 + $0x5f] sm:$0xff]
  %v1076 = vld [vmem:[#allocation2 + $0x67] sm:$0xff]
  %v1077 = vld [vmem:[#allocation2 + $0x6f] sm:$0xff]
  %v1078 = vld [vmem:[#allocation2 + $0x77] sm:$0xff]
  %v1079 = vld [vmem:[#allocation2 + $0x7f] sm:$0xff]
  %v1080 = vld [vmem:[#allocation2 + $0x87] sm:$0xff]
  %v1081 = vld [vmem:[#allocation2 + $0x8f] sm:$0xff]
  %v1082 = vld [vmem:[#allocation2 + $0x97] sm:$0xff]
  %v1083 = vld [vmem:[#allocation2 + $0x9f] sm:$0xff]
  %v1084 = vld [vmem:[#allocation2 + $0xa7] sm:$0xff]
  %v1085 = vld [vmem:[#allocation2 + $0xaf] sm:$0xff]
  %v1086 = vld [vmem:[#allocation2 + $0xb7] sm:$0xff]
  %v1087 = vld [vmem:[#allocation2 + $0xbf] sm:$0xff]
  %v1088 = vld [vmem:[#allocation2 + $0xc7] sm:$0xff]
  %v1089 = vld [vmem:[#allocation2 + $0xcf] sm:$0xff]
  %v1090 = vld [vmem:[#allocation2 + $0xd7] sm:$0xff]
  %v1091 = vld [vmem:[#allocation2 + $0xdf] sm:$0xff]
  %v1092 = vld [vmem:[#allocation2 + $0xe7] sm:$0xff]
  %v1093 = vld [vmem:[#allocation2 + $0xef] sm:$0xff]
  %v1094 = vld [vmem:[#allocation2 + $0xf7] sm:$0xff]
  %v1095 = vld [vmem:[#allocation2 + $0xff] sm:$0xff]
  %v1096 = vld [vmem:[#allocation2 + $0x107] sm:$0xff]
  %v1097 = vld [vmem:[#allocation2 + $0x10f] sm:$0xff]
  %v1098 = vld [vmem:[#allocation2 + $0x117] sm:$0xff]
  %v1099 = vld [vmem:[#allocation2 + $0x11f] sm:$0xff]
  %v1100 = vld [vmem:[#allocation2 + $0x127] sm:$0xff]
  %v1101 = vld [vmem:[#allocation2 + $0x12f] sm:$0xff]
  %v1102 = vld [vmem:[#allocation2 + $0x137] sm:$0xff]
  %v1103 = vld [vmem:[#allocation2 + $0x13f] sm:$0xff]
  %v1104 = vld [vmem:[#allocation2 + $0x147] sm:$0xff]
  %v1105 = vld [vmem:[#allocation2 + $0x14f] sm:$0xff]
  %v1106 = vld [vmem:[#allocation2 + $0x157] sm:$0xff]
  %v1107 = vld [vmem:[#allocation2 + $0x15f] sm:$0xff]
  %v1108 = vld [vmem:[#allocation2 + $0x167] sm:$0xff]
  %v1109 = vld [vmem:[#allocation2 + $0x16f] sm:$0xff]
  %v1110 = vld [vmem:[#allocation2 + $0x177] sm:$0xff]
  %v1111 = vld [vmem:[#allocation2 + $0x17f] sm:$0xff]
  %v1112 = vld [vmem:[#allocation2 + $0x187] sm:$0xff]
  %v1113 = vld [vmem:[#allocation2 + $0x18f] sm:$0xff]
  %v1114 = vld [vmem:[#allocation2 + $0x197] sm:$0xff]
  %v1115 = vld [vmem:[#allocation2 + $0x19f] sm:$0xff]
  %v1116 = vld [vmem:[#allocation2 + $0x1a7] sm:$0xff]
  %v1117 = vld [vmem:[#allocation2 + $0x1af] sm:$0xff]
  %v1118 = vld [vmem:[#allocation2 + $0x1b7] sm:$0xff]
  %v1119 = vld [vmem:[#allocation2 + $0x1bf] sm:$0xff]
  %v1120 = vld [vmem:[#allocation2 + $0x1c7] sm:$0xff]
  %v1121 = vld [vmem:[#allocation2 + $0x1cf] sm:$0xff]
  %v1122 = vld [vmem:[#allocation2 + $0x1d7] sm:$0xff]
  %v1123 = vld [vmem:[#allocation2 + $0x1df] sm:$0xff]
  %v1124 = vld [vmem:[#allocation2 + $0x1e7] sm:$0xff]
  %v1125 = vld [vmem:[#allocation2 + $0x1ef] sm:$0xff]
  %v1126 = vld [vmem:[#allocation2 + $0x1f7] sm:$0xff]
  %v1127 = vld [vmem:[#allocation2 + $0x1ff] sm:$0xff]
  %v1128 = vld [vmem:[#allocation2 + $0x207] sm:$0xff]
  %1193 = vrot.lane.b32.xlu0 %v1065, 96
  %v1194 = vpop.permute.xlu0 %1193
  %1195 = vrot.lane.b32.xlu0 %v1066, 96
  %v1196 = vpop.permute.xlu0 %1195
  %1197 = vrot.lane.b32.xlu0 %v1067, 96
  %v1198 = vpop.permute.xlu0 %1197
  %1199 = vrot.lane.b32.xlu0 %v1068, 96
  %v1200 = vpop.permute.xlu0 %1199
  %1201 = vrot.lane.b32.xlu0 %v1069, 96
  %v1202 = vpop.permute.xlu0 %1201
  %1203 = vrot.lane.b32.xlu0 %v1070, 96
  %v1204 = vpop.permute.xlu0 %1203
  %1205 = vrot.lane.b32.xlu0 %v1071, 96
  %v1206 = vpop.permute.xlu0 %1205
  %1207 = vrot.lane.b32.xlu0 %v1072, 96
  %v1208 = vpop.permute.xlu0 %1207
  %1209 = vrot.lane.b32.xlu0 %v1073, 96
  %v1210 = vpop.permute.xlu0 %1209
  %1211 = vrot.lane.b32.xlu0 %v1074, 96
  %v1212 = vpop.permute.xlu0 %1211
  %1213 = vrot.lane.b32.xlu0 %v1075, 96
  %v1214 = vpop.permute.xlu0 %1213
  %1215 = vrot.lane.b32.xlu0 %v1076, 96
  %v1216 = vpop.permute.xlu0 %1215
  %1217 = vrot.lane.b32.xlu0 %v1077, 96
  %v1218 = vpop.permute.xlu0 %1217
  %1219 = vrot.lane.b32.xlu0 %v1078, 96
  %v1220 = vpop.permute.xlu0 %1219
  %1221 = vrot.lane.b32.xlu0 %v1079, 96
  %v1222 = vpop.permute.xlu0 %1221
  %1223 = vrot.lane.b32.xlu0 %v1080, 96
  %v1224 = vpop.permute.xlu0 %1223
  %1225 = vrot.lane.b32.xlu0 %v1081, 96
  %v1226 = vpop.permute.xlu0 %1225
  %1227 = vrot.lane.b32.xlu0 %v1082, 96
  %v1228 = vpop.permute.xlu0 %1227
  %1229 = vrot.lane.b32.xlu0 %v1083, 96
  %v1230 = vpop.permute.xlu0 %1229
  %1231 = vrot.lane.b32.xlu0 %v1084, 96
  %v1232 = vpop.permute.xlu0 %1231
  %1233 = vrot.lane.b32.xlu0 %v1085, 96
  %v1234 = vpop.permute.xlu0 %1233
  %1235 = vrot.lane.b32.xlu0 %v1086, 96
  %v1236 = vpop.permute.xlu0 %1235
  %1237 = vrot.lane.b32.xlu0 %v1087, 96
  %v1238 = vpop.permute.xlu0 %1237
  %1239 = vrot.lane.b32.xlu0 %v1088, 96
  %v1240 = vpop.permute.xlu0 %1239
  %1241 = vrot.lane.b32.xlu0 %v1089, 96
  %v1242 = vpop.permute.xlu0 %1241
  %1243 = vrot.lane.b32.xlu0 %v1090, 96
  %v1244 = vpop.permute.xlu0 %1243
  %1245 = vrot.lane.b32.xlu0 %v1091, 96
  %v1246 = vpop.permute.xlu0 %1245
  %1247 = vrot.lane.b32.xlu0 %v1092, 96
  %v1248 = vpop.permute.xlu0 %1247
  %1249 = vrot.lane.b32.xlu0 %v1093, 96
  %v1250 = vpop.permute.xlu0 %1249
  %1251 = vrot.lane.b32.xlu0 %v1094, 96
  %v1252 = vpop.permute.xlu0 %1251
  %1253 = vrot.lane.b32.xlu0 %v1095, 96
  %v1254 = vpop.permute.xlu0 %1253
  %1255 = vrot.lane.b32.xlu0 %v1096, 96
  %v1256 = vpop.permute.xlu0 %1255
  %1257 = vrot.lane.b32.xlu0 %v1097, 96
  %v1258 = vpop.permute.xlu0 %1257
  %1259 = vrot.lane.b32.xlu0 %v1098, 96
  %v1260 = vpop.permute.xlu0 %1259
  %1261 = vrot.lane.b32.xlu0 %v1099, 96
  %v1262 = vpop.permute.xlu0 %1261
  %1263 = vrot.lane.b32.xlu0 %v1100, 96
  %v1264 = vpop.permute.xlu0 %1263
  %1265 = vrot.lane.b32.xlu0 %v1101, 96
  %v1266 = vpop.permute.xlu0 %1265
  %1267 = vrot.lane.b32.xlu0 %v1102, 96
  %v1268 = vpop.permute.xlu0 %1267
  %1269 = vrot.lane.b32.xlu0 %v1103, 96
  %v1270 = vpop.permute.xlu0 %1269
  %1271 = vrot.lane.b32.xlu0 %v1104, 96
  %v1272 = vpop.permute.xlu0 %1271
  %1273 = vrot.lane.b32.xlu0 %v1105, 96
  %v1274 = vpop.permute.xlu0 %1273
  %1275 = vrot.lane.b32.xlu0 %v1106, 96
  %v1276 = vpop.permute.xlu0 %1275
  %1277 = vrot.lane.b32.xlu0 %v1107, 96
  %v1278 = vpop.permute.xlu0 %1277
  %1279 = vrot.lane.b32.xlu0 %v1108, 96
  %v1280 = vpop.permute.xlu0 %1279
  %1281 = vrot.lane.b32.xlu0 %v1109, 96
  %v1282 = vpop.permute.xlu0 %1281
  %1283 = vrot.lane.b32.xlu0 %v1110, 96
  %v1284 = vpop.permute.xlu0 %1283
  %1285 = vrot.lane.b32.xlu0 %v1111, 96
  %v1286 = vpop.permute.xlu0 %1285
  %1287 = vrot.lane.b32.xlu0 %v1112, 96
  %v1288 = vpop.permute.xlu0 %1287
  %1289 = vrot.lane.b32.xlu0 %v1113, 96
  %v1290 = vpop.permute.xlu0 %1289
  %1291 = vrot.lane.b32.xlu0 %v1114, 96
  %v1292 = vpop.permute.xlu0 %1291
  %1293 = vrot.lane.b32.xlu0 %v1115, 96
  %v1294 = vpop.permute.xlu0 %1293
  %1295 = vrot.lane.b32.xlu0 %v1116, 96
  %v1296 = vpop.permute.xlu0 %1295
  %1297 = vrot.lane.b32.xlu0 %v1117, 96
  %v1298 = vpop.permute.xlu0 %1297
  %1299 = vrot.lane.b32.xlu0 %v1118, 96
  %v1300 = vpop.permute.xlu0 %1299
  %1301 = vrot.lane.b32.xlu0 %v1119, 96
  %v1302 = vpop.permute.xlu0 %1301
  %1303 = vrot.lane.b32.xlu0 %v1120, 96
  %v1304 = vpop.permute.xlu0 %1303
  %1305 = vrot.lane.b32.xlu0 %v1121, 96
  %v1306 = vpop.permute.xlu0 %1305
  %1307 = vrot.lane.b32.xlu0 %v1122, 96
  %v1308 = vpop.permute.xlu0 %1307
  %1309 = vrot.lane.b32.xlu0 %v1123, 96
  %v1310 = vpop.permute.xlu0 %1309
  %1311 = vrot.lane.b32.xlu0 %v1124, 96
  %v1312 = vpop.permute.xlu0 %1311
  %1313 = vrot.lane.b32.xlu0 %v1125, 96
  %v1314 = vpop.permute.xlu0 %1313
  %1315 = vrot.lane.b32.xlu0 %v1126, 96
  %v1316 = vpop.permute.xlu0 %1315
  %1317 = vrot.lane.b32.xlu0 %v1127, 96
  %v1318 = vpop.permute.xlu0 %1317
  %1319 = vrot.lane.b32.xlu0 %v1128, 96
  %v1320 = vpop.permute.xlu0 %1319
  %vm1385 = vcmask 1048320
  %1386 = vst.msk [vmem:[#allocation3] sm:$0xff] %vm1385, %v1194
  %1387 = vst.msk [vmem:[#allocation3 + $0x18] sm:$0xff] %vm1385, %v1196
  %1388 = vst.msk [vmem:[#allocation3 + $0x30] sm:$0xff] %vm1385, %v1198
  %1389 = vst.msk [vmem:[#allocation3 + $0x48] sm:$0xff] %vm1385, %v1200
  %1390 = vst.msk [vmem:[#allocation3 + $0x60] sm:$0xff] %vm1385, %v1202
  %1391 = vst.msk [vmem:[#allocation3 + $0x78] sm:$0xff] %vm1385, %v1204
  %1392 = vst.msk [vmem:[#allocation3 + $0x90] sm:$0xff] %vm1385, %v1206
  %1393 = vst.msk [vmem:[#allocation3 + $0xa8] sm:$0xff] %vm1385, %v1208
  %1394 = vst.msk [vmem:[#allocation3 + $0xc0] sm:$0xff] %vm1385, %v1210
  %1395 = vst.msk [vmem:[#allocation3 + $0xd8] sm:$0xff] %vm1385, %v1212
  %1396 = vst.msk [vmem:[#allocation3 + $0xf0] sm:$0xff] %vm1385, %v1214
  %1397 = vst.msk [vmem:[#allocation3 + $0x108] sm:$0xff] %vm1385, %v1216
  %1398 = vst.msk [vmem:[#allocation3 + $0x120] sm:$0xff] %vm1385, %v1218
  %1399 = vst.msk [vmem:[#allocation3 + $0x138] sm:$0xff] %vm1385, %v1220
  %1400 = vst.msk [vmem:[#allocation3 + $0x150] sm:$0xff] %vm1385, %v1222
  %1401 = vst.msk [vmem:[#allocation3 + $0x168] sm:$0xff] %vm1385, %v1224
  %1402 = vst.msk [vmem:[#allocation3 + $0x180] sm:$0xff] %vm1385, %v1226
  %1403 = vst.msk [vmem:[#allocation3 + $0x198] sm:$0xff] %vm1385, %v1228
  %1404 = vst.msk [vmem:[#allocation3 + $0x1b0] sm:$0xff] %vm1385, %v1230
  %1405 = vst.msk [vmem:[#allocation3 + $0x1c8] sm:$0xff] %vm1385, %v1232
  %1406 = vst.msk [vmem:[#allocation3 + $0x1e0] sm:$0xff] %vm1385, %v1234
  %1407 = vst.msk [vmem:[#allocation3 + $0x1f8] sm:$0xff] %vm1385, %v1236
  %1408 = vst.msk [vmem:[#allocation3 + $0x210] sm:$0xff] %vm1385, %v1238
  %1409 = vst.msk [vmem:[#allocation3 + $0x228] sm:$0xff] %vm1385, %v1240
  %1410 = vst.msk [vmem:[#allocation3 + $0x240] sm:$0xff] %vm1385, %v1242
  %1411 = vst.msk [vmem:[#allocation3 + $0x258] sm:$0xff] %vm1385, %v1244
  %1412 = vst.msk [vmem:[#allocation3 + $0x270] sm:$0xff] %vm1385, %v1246
  %1413 = vst.msk [vmem:[#allocation3 + $0x288] sm:$0xff] %vm1385, %v1248
  %1414 = vst.msk [vmem:[#allocation3 + $0x2a0] sm:$0xff] %vm1385, %v1250
  %1415 = vst.msk [vmem:[#allocation3 + $0x2b8] sm:$0xff] %vm1385, %v1252
  %1416 = vst.msk [vmem:[#allocation3 + $0x2d0] sm:$0xff] %vm1385, %v1254
  %1417 = vst.msk [vmem:[#allocation3 + $0x2e8] sm:$0xff] %vm1385, %v1256
  %1418 = vst.msk [vmem:[#allocation3 + $0x300] sm:$0xff] %vm1385, %v1258
  %1419 = vst.msk [vmem:[#allocation3 + $0x318] sm:$0xff] %vm1385, %v1260
  %1420 = vst.msk [vmem:[#allocation3 + $0x330] sm:$0xff] %vm1385, %v1262
  %1421 = vst.msk [vmem:[#allocation3 + $0x348] sm:$0xff] %vm1385, %v1264
  %1422 = vst.msk [vmem:[#allocation3 + $0x360] sm:$0xff] %vm1385, %v1266
  %1423 = vst.msk [vmem:[#allocation3 + $0x378] sm:$0xff] %vm1385, %v1268
  %1424 = vst.msk [vmem:[#allocation3 + $0x390] sm:$0xff] %vm1385, %v1270
  %1425 = vst.msk [vmem:[#allocation3 + $0x3a8] sm:$0xff] %vm1385, %v1272
  %1426 = vst.msk [vmem:[#allocation3 + $0x3c0] sm:$0xff] %vm1385, %v1274
  %1427 = vst.msk [vmem:[#allocation3 + $0x3d8] sm:$0xff] %vm1385, %v1276
  %1428 = vst.msk [vmem:[#allocation3 + $0x3f0] sm:$0xff] %vm1385, %v1278
  %1429 = vst.msk [vmem:[#allocation3 + $0x408] sm:$0xff] %vm1385, %v1280
  %1430 = vst.msk [vmem:[#allocation3 + $0x420] sm:$0xff] %vm1385, %v1282
  %1431 = vst.msk [vmem:[#allocation3 + $0x438] sm:$0xff] %vm1385, %v1284
  %1432 = vst.msk [vmem:[#allocation3 + $0x450] sm:$0xff] %vm1385, %v1286
  %1433 = vst.msk [vmem:[#allocation3 + $0x468] sm:$0xff] %vm1385, %v1288
  %1434 = vst.msk [vmem:[#allocation3 + $0x480] sm:$0xff] %vm1385, %v1290
  %1435 = vst.msk [vmem:[#allocation3 + $0x498] sm:$0xff] %vm1385, %v1292
  %1436 = vst.msk [vmem:[#allocation3 + $0x4b0] sm:$0xff] %vm1385, %v1294
  %1437 = vst.msk [vmem:[#allocation3 + $0x4c8] sm:$0xff] %vm1385, %v1296
  %1438 = vst.msk [vmem:[#allocation3 + $0x4e0] sm:$0xff] %vm1385, %v1298
  %1439 = vst.msk [vmem:[#allocation3 + $0x4f8] sm:$0xff] %vm1385, %v1300
  %1440 = vst.msk [vmem:[#allocation3 + $0x510] sm:$0xff] %vm1385, %v1302
  %1441 = vst.msk [vmem:[#allocation3 + $0x528] sm:$0xff] %vm1385, %v1304
  %1442 = vst.msk [vmem:[#allocation3 + $0x540] sm:$0xff] %vm1385, %v1306
  %1443 = vst.msk [vmem:[#allocation3 + $0x558] sm:$0xff] %vm1385, %v1308
  %1444 = vst.msk [vmem:[#allocation3 + $0x570] sm:$0xff] %vm1385, %v1310
  %1445 = vst.msk [vmem:[#allocation3 + $0x588] sm:$0xff] %vm1385, %v1312
  %1446 = vst.msk [vmem:[#allocation3 + $0x5a0] sm:$0xff] %vm1385, %v1314
  %1447 = vst.msk [vmem:[#allocation3 + $0x5b8] sm:$0xff] %vm1385, %v1316
  %1448 = vst.msk [vmem:[#allocation3 + $0x5d0] sm:$0xff] %vm1385, %v1318
  %1449 = vst.msk [vmem:[#allocation3 + $0x5e8] sm:$0xff] %vm1385, %v1320
  %v1450 = vld [vmem:[#allocation2 + $0x10] sm:$0xff]
  %v1451 = vld [vmem:[#allocation2 + $0x18] sm:$0xff]
  %v1452 = vld [vmem:[#allocation2 + $0x20] sm:$0xff]
  %v1453 = vld [vmem:[#allocation2 + $0x28] sm:$0xff]
  %v1454 = vld [vmem:[#allocation2 + $0x30] sm:$0xff]
  %v1455 = vld [vmem:[#allocation2 + $0x38] sm:$0xff]
  %v1456 = vld [vmem:[#allocation2 + $0x40] sm:$0xff]
  %v1457 = vld [vmem:[#allocation2 + $0x48] sm:$0xff]
  %v1458 = vld [vmem:[#allocation2 + $0x50] sm:$0xff]
  %v1459 = vld [vmem:[#allocation2 + $0x58] sm:$0xff]
  %v1460 = vld [vmem:[#allocation2 + $0x60] sm:$0xff]
  %v1461 = vld [vmem:[#allocation2 + $0x68] sm:$0xff]
  %v1462 = vld [vmem:[#allocation2 + $0x70] sm:$0xff]
  %v1463 = vld [vmem:[#allocation2 + $0x78] sm:$0xff]
  %v1464 = vld [vmem:[#allocation2 + $0x80] sm:$0xff]
  %v1465 = vld [vmem:[#allocation2 + $0x88] sm:$0xff]
  %v1466 = vld [vmem:[#allocation2 + $0x90] sm:$0xff]
  %v1467 = vld [vmem:[#allocation2 + $0x98] sm:$0xff]
  %v1468 = vld [vmem:[#allocation2 + $0xa0] sm:$0xff]
  %v1469 = vld [vmem:[#allocation2 + $0xa8] sm:$0xff]
  %v1470 = vld [vmem:[#allocation2 + $0xb0] sm:$0xff]
  %v1471 = vld [vmem:[#allocation2 + $0xb8] sm:$0xff]
  %v1472 = vld [vmem:[#allocation2 + $0xc0] sm:$0xff]
  %v1473 = vld [vmem:[#allocation2 + $0xc8] sm:$0xff]
  %v1474 = vld [vmem:[#allocation2 + $0xd0] sm:$0xff]
  %v1475 = vld [vmem:[#allocation2 + $0xd8] sm:$0xff]
  %v1476 = vld [vmem:[#allocation2 + $0xe0] sm:$0xff]
  %v1477 = vld [vmem:[#allocation2 + $0xe8] sm:$0xff]
  %v1478 = vld [vmem:[#allocation2 + $0xf0] sm:$0xff]
  %v1479 = vld [vmem:[#allocation2 + $0xf8] sm:$0xff]
  %v1480 = vld [vmem:[#allocation2 + $0x100] sm:$0xff]
  %v1481 = vld [vmem:[#allocation2 + $0x108] sm:$0xff]
  %v1482 = vld [vmem:[#allocation2 + $0x110] sm:$0xff]
  %v1483 = vld [vmem:[#allocation2 + $0x118] sm:$0xff]
  %v1484 = vld [vmem:[#allocation2 + $0x120] sm:$0xff]
  %v1485 = vld [vmem:[#allocation2 + $0x128] sm:$0xff]
  %v1486 = vld [vmem:[#allocation2 + $0x130] sm:$0xff]
  %v1487 = vld [vmem:[#allocation2 + $0x138] sm:$0xff]
  %v1488 = vld [vmem:[#allocation2 + $0x140] sm:$0xff]
  %v1489 = vld [vmem:[#allocation2 + $0x148] sm:$0xff]
  %v1490 = vld [vmem:[#allocation2 + $0x150] sm:$0xff]
  %v1491 = vld [vmem:[#allocation2 + $0x158] sm:$0xff]
  %v1492 = vld [vmem:[#allocation2 + $0x160] sm:$0xff]
  %v1493 = vld [vmem:[#allocation2 + $0x168] sm:$0xff]
  %v1494 = vld [vmem:[#allocation2 + $0x170] sm:$0xff]
  %v1495 = vld [vmem:[#allocation2 + $0x178] sm:$0xff]
  %v1496 = vld [vmem:[#allocation2 + $0x180] sm:$0xff]
  %v1497 = vld [vmem:[#allocation2 + $0x188] sm:$0xff]
  %v1498 = vld [vmem:[#allocation2 + $0x190] sm:$0xff]
  %v1499 = vld [vmem:[#allocation2 + $0x198] sm:$0xff]
  %v1500 = vld [vmem:[#allocation2 + $0x1a0] sm:$0xff]
  %v1501 = vld [vmem:[#allocation2 + $0x1a8] sm:$0xff]
  %v1502 = vld [vmem:[#allocation2 + $0x1b0] sm:$0xff]
  %v1503 = vld [vmem:[#allocation2 + $0x1b8] sm:$0xff]
  %v1504 = vld [vmem:[#allocation2 + $0x1c0] sm:$0xff]
  %v1505 = vld [vmem:[#allocation2 + $0x1c8] sm:$0xff]
  %v1506 = vld [vmem:[#allocation2 + $0x1d0] sm:$0xff]
  %v1507 = vld [vmem:[#allocation2 + $0x1d8] sm:$0xff]
  %v1508 = vld [vmem:[#allocation2 + $0x1e0] sm:$0xff]
  %v1509 = vld [vmem:[#allocation2 + $0x1e8] sm:$0xff]
  %v1510 = vld [vmem:[#allocation2 + $0x1f0] sm:$0xff]
  %v1511 = vld [vmem:[#allocation2 + $0x1f8] sm:$0xff]
  %v1512 = vld [vmem:[#allocation2 + $0x200] sm:$0xff]
  %v1513 = vld [vmem:[#allocation2 + $0x208] sm:$0xff]
  %1514 = vst.msk [vmem:[#allocation3 + $0x8] sm:$0xff] %vm34, %v1450
  %1515 = vst.msk [vmem:[#allocation3 + $0x20] sm:$0xff] %vm34, %v1451
  %1516 = vst.msk [vmem:[#allocation3 + $0x38] sm:$0xff] %vm34, %v1452
  %1517 = vst.msk [vmem:[#allocation3 + $0x50] sm:$0xff] %vm34, %v1453
  %1518 = vst.msk [vmem:[#allocation3 + $0x68] sm:$0xff] %vm34, %v1454
  %1519 = vst.msk [vmem:[#allocation3 + $0x80] sm:$0xff] %vm34, %v1455
  %1520 = vst.msk [vmem:[#allocation3 + $0x98] sm:$0xff] %vm34, %v1456
  %1521 = vst.msk [vmem:[#allocation3 + $0xb0] sm:$0xff] %vm34, %v1457
  %1522 = vst.msk [vmem:[#allocation3 + $0xc8] sm:$0xff] %vm34, %v1458
  %1523 = vst.msk [vmem:[#allocation3 + $0xe0] sm:$0xff] %vm34, %v1459
  %1524 = vst.msk [vmem:[#allocation3 + $0xf8] sm:$0xff] %vm34, %v1460
  %1525 = vst.msk [vmem:[#allocation3 + $0x110] sm:$0xff] %vm34, %v1461
  %1526 = vst.msk [vmem:[#allocation3 + $0x128] sm:$0xff] %vm34, %v1462
  %1527 = vst.msk [vmem:[#allocation3 + $0x140] sm:$0xff] %vm34, %v1463
  %1528 = vst.msk [vmem:[#allocation3 + $0x158] sm:$0xff] %vm34, %v1464
  %1529 = vst.msk [vmem:[#allocation3 + $0x170] sm:$0xff] %vm34, %v1465
  %1530 = vst.msk [vmem:[#allocation3 + $0x188] sm:$0xff] %vm34, %v1466
  %1531 = vst.msk [vmem:[#allocation3 + $0x1a0] sm:$0xff] %vm34, %v1467
  %1532 = vst.msk [vmem:[#allocation3 + $0x1b8] sm:$0xff] %vm34, %v1468
  %1533 = vst.msk [vmem:[#allocation3 + $0x1d0] sm:$0xff] %vm34, %v1469
  %1534 = vst.msk [vmem:[#allocation3 + $0x1e8] sm:$0xff] %vm34, %v1470
  %1535 = vst.msk [vmem:[#allocation3 + $0x200] sm:$0xff] %vm34, %v1471
  %1536 = vst.msk [vmem:[#allocation3 + $0x218] sm:$0xff] %vm34, %v1472
  %1537 = vst.msk [vmem:[#allocation3 + $0x230] sm:$0xff] %vm34, %v1473
  %1538 = vst.msk [vmem:[#allocation3 + $0x248] sm:$0xff] %vm34, %v1474
  %1539 = vst.msk [vmem:[#allocation3 + $0x260] sm:$0xff] %vm34, %v1475
  %1540 = vst.msk [vmem:[#allocation3 + $0x278] sm:$0xff] %vm34, %v1476
  %1541 = vst.msk [vmem:[#allocation3 + $0x290] sm:$0xff] %vm34, %v1477
  %1542 = vst.msk [vmem:[#allocation3 + $0x2a8] sm:$0xff] %vm34, %v1478
  %1543 = vst.msk [vmem:[#allocation3 + $0x2c0] sm:$0xff] %vm34, %v1479
  %1544 = vst.msk [vmem:[#allocation3 + $0x2d8] sm:$0xff] %vm34, %v1480
  %1545 = vst.msk [vmem:[#allocation3 + $0x2f0] sm:$0xff] %vm34, %v1481
  %1546 = vst.msk [vmem:[#allocation3 + $0x308] sm:$0xff] %vm34, %v1482
  %1547 = vst.msk [vmem:[#allocation3 + $0x320] sm:$0xff] %vm34, %v1483
  %1548 = vst.msk [vmem:[#allocation3 + $0x338] sm:$0xff] %vm34, %v1484
  %1549 = vst.msk [vmem:[#allocation3 + $0x350] sm:$0xff] %vm34, %v1485
  %1550 = vst.msk [vmem:[#allocation3 + $0x368] sm:$0xff] %vm34, %v1486
  %1551 = vst.msk [vmem:[#allocation3 + $0x380] sm:$0xff] %vm34, %v1487
  %1552 = vst.msk [vmem:[#allocation3 + $0x398] sm:$0xff] %vm34, %v1488
  %1553 = vst.msk [vmem:[#allocation3 + $0x3b0] sm:$0xff] %vm34, %v1489
  %1554 = vst.msk [vmem:[#allocation3 + $0x3c8] sm:$0xff] %vm34, %v1490
  %1555 = vst.msk [vmem:[#allocation3 + $0x3e0] sm:$0xff] %vm34, %v1491
  %1556 = vst.msk [vmem:[#allocation3 + $0x3f8] sm:$0xff] %vm34, %v1492
  %1557 = vst.msk [vmem:[#allocation3 + $0x410] sm:$0xff] %vm34, %v1493
  %1558 = vst.msk [vmem:[#allocation3 + $0x428] sm:$0xff] %vm34, %v1494
  %1559 = vst.msk [vmem:[#allocation3 + $0x440] sm:$0xff] %vm34, %v1495
  %1560 = vst.msk [vmem:[#allocation3 + $0x458] sm:$0xff] %vm34, %v1496
  %1561 = vst.msk [vmem:[#allocation3 + $0x470] sm:$0xff] %vm34, %v1497
  %1562 = vst.msk [vmem:[#allocation3 + $0x488] sm:$0xff] %vm34, %v1498
  %1563 = vst.msk [vmem:[#allocation3 + $0x4a0] sm:$0xff] %vm34, %v1499
  %1564 = vst.msk [vmem:[#allocation3 + $0x4b8] sm:$0xff] %vm34, %v1500
  %1565 = vst.msk [vmem:[#allocation3 + $0x4d0] sm:$0xff] %vm34, %v1501
  %1566 = vst.msk [vmem:[#allocation3 + $0x4e8] sm:$0xff] %vm34, %v1502
  %1567 = vst.msk [vmem:[#allocation3 + $0x500] sm:$0xff] %vm34, %v1503
  %1568 = vst.msk [vmem:[#allocation3 + $0x518] sm:$0xff] %vm34, %v1504
  %1569 = vst.msk [vmem:[#allocation3 + $0x530] sm:$0xff] %vm34, %v1505
  %1570 = vst.msk [vmem:[#allocation3 + $0x548] sm:$0xff] %vm34, %v1506
  %1571 = vst.msk [vmem:[#allocation3 + $0x560] sm:$0xff] %vm34, %v1507
  %1572 = vst.msk [vmem:[#allocation3 + $0x578] sm:$0xff] %vm34, %v1508
  %1573 = vst.msk [vmem:[#allocation3 + $0x590] sm:$0xff] %vm34, %v1509
  %1574 = vst.msk [vmem:[#allocation3 + $0x5a8] sm:$0xff] %vm34, %v1510
  %1575 = vst.msk [vmem:[#allocation3 + $0x5c0] sm:$0xff] %vm34, %v1511
  %1576 = vst.msk [vmem:[#allocation3 + $0x5d8] sm:$0xff] %vm34, %v1512
  %1577 = vst.msk [vmem:[#allocation3 + $0x5f0] sm:$0xff] %vm34, %v1513
  %v1578 = vld [vmem:[#allocation2 + $0x11] sm:$0xff]
  %v1579 = vld [vmem:[#allocation2 + $0x19] sm:$0xff]
  %v1580 = vld [vmem:[#allocation2 + $0x21] sm:$0xff]
  %v1581 = vld [vmem:[#allocation2 + $0x29] sm:$0xff]
  %v1582 = vld [vmem:[#allocation2 + $0x31] sm:$0xff]
  %v1583 = vld [vmem:[#allocation2 + $0x39] sm:$0xff]
  %v1584 = vld [vmem:[#allocation2 + $0x41] sm:$0xff]
  %v1585 = vld [vmem:[#allocation2 + $0x49] sm:$0xff]
  %v1586 = vld [vmem:[#allocation2 + $0x51] sm:$0xff]
  %v1587 = vld [vmem:[#allocation2 + $0x59] sm:$0xff]
  %v1588 = vld [vmem:[#allocation2 + $0x61] sm:$0xff]
  %v1589 = vld [vmem:[#allocation2 + $0x69] sm:$0xff]
  %v1590 = vld [vmem:[#allocation2 + $0x71] sm:$0xff]
  %v1591 = vld [vmem:[#allocation2 + $0x79] sm:$0xff]
  %v1592 = vld [vmem:[#allocation2 + $0x81] sm:$0xff]
  %v1593 = vld [vmem:[#allocation2 + $0x89] sm:$0xff]
  %v1594 = vld [vmem:[#allocation2 + $0x91] sm:$0xff]
  %v1595 = vld [vmem:[#allocation2 + $0x99] sm:$0xff]
  %v1596 = vld [vmem:[#allocation2 + $0xa1] sm:$0xff]
  %v1597 = vld [vmem:[#allocation2 + $0xa9] sm:$0xff]
  %v1598 = vld [vmem:[#allocation2 + $0xb1] sm:$0xff]
  %v1599 = vld [vmem:[#allocation2 + $0xb9] sm:$0xff]
  %v1600 = vld [vmem:[#allocation2 + $0xc1] sm:$0xff]
  %v1601 = vld [vmem:[#allocation2 + $0xc9] sm:$0xff]
  %v1602 = vld [vmem:[#allocation2 + $0xd1] sm:$0xff]
  %v1603 = vld [vmem:[#allocation2 + $0xd9] sm:$0xff]
  %v1604 = vld [vmem:[#allocation2 + $0xe1] sm:$0xff]
  %v1605 = vld [vmem:[#allocation2 + $0xe9] sm:$0xff]
  %v1606 = vld [vmem:[#allocation2 + $0xf1] sm:$0xff]
  %v1607 = vld [vmem:[#allocation2 + $0xf9] sm:$0xff]
  %v1608 = vld [vmem:[#allocation2 + $0x101] sm:$0xff]
  %v1609 = vld [vmem:[#allocation2 + $0x109] sm:$0xff]
  %v1610 = vld [vmem:[#allocation2 + $0x111] sm:$0xff]
  %v1611 = vld [vmem:[#allocation2 + $0x119] sm:$0xff]
  %v1612 = vld [vmem:[#allocation2 + $0x121] sm:$0xff]
  %v1613 = vld [vmem:[#allocation2 + $0x129] sm:$0xff]
  %v1614 = vld [vmem:[#allocation2 + $0x131] sm:$0xff]
  %v1615 = vld [vmem:[#allocation2 + $0x139] sm:$0xff]
  %v1616 = vld [vmem:[#allocation2 + $0x141] sm:$0xff]
  %v1617 = vld [vmem:[#allocation2 + $0x149] sm:$0xff]
  %v1618 = vld [vmem:[#allocation2 + $0x151] sm:$0xff]
  %v1619 = vld [vmem:[#allocation2 + $0x159] sm:$0xff]
  %v1620 = vld [vmem:[#allocation2 + $0x161] sm:$0xff]
  %v1621 = vld [vmem:[#allocation2 + $0x169] sm:$0xff]
  %v1622 = vld [vmem:[#allocation2 + $0x171] sm:$0xff]
  %v1623 = vld [vmem:[#allocation2 + $0x179] sm:$0xff]
  %v1624 = vld [vmem:[#allocation2 + $0x181] sm:$0xff]
  %v1625 = vld [vmem:[#allocation2 + $0x189] sm:$0xff]
  %v1626 = vld [vmem:[#allocation2 + $0x191] sm:$0xff]
  %v1627 = vld [vmem:[#allocation2 + $0x199] sm:$0xff]
  %v1628 = vld [vmem:[#allocation2 + $0x1a1] sm:$0xff]
  %v1629 = vld [vmem:[#allocation2 + $0x1a9] sm:$0xff]
  %v1630 = vld [vmem:[#allocation2 + $0x1b1] sm:$0xff]
  %v1631 = vld [vmem:[#allocation2 + $0x1b9] sm:$0xff]
  %v1632 = vld [vmem:[#allocation2 + $0x1c1] sm:$0xff]
  %v1633 = vld [vmem:[#allocation2 + $0x1c9] sm:$0xff]
  %v1634 = vld [vmem:[#allocation2 + $0x1d1] sm:$0xff]
  %v1635 = vld [vmem:[#allocation2 + $0x1d9] sm:$0xff]
  %v1636 = vld [vmem:[#allocation2 + $0x1e1] sm:$0xff]
  %v1637 = vld [vmem:[#allocation2 + $0x1e9] sm:$0xff]
  %v1638 = vld [vmem:[#allocation2 + $0x1f1] sm:$0xff]
  %v1639 = vld [vmem:[#allocation2 + $0x1f9] sm:$0xff]
  %v1640 = vld [vmem:[#allocation2 + $0x201] sm:$0xff]
  %v1641 = vld [vmem:[#allocation2 + $0x209] sm:$0xff]
  %1706 = vrot.lane.b32.xlu0 %v1578, 32
  %v1707 = vpop.permute.xlu0 %1706
  %1708 = vrot.lane.b32.xlu0 %v1579, 32
  %v1709 = vpop.permute.xlu0 %1708
  %1710 = vrot.lane.b32.xlu0 %v1580, 32
  %v1711 = vpop.permute.xlu0 %1710
  %1712 = vrot.lane.b32.xlu0 %v1581, 32
  %v1713 = vpop.permute.xlu0 %1712
  %1714 = vrot.lane.b32.xlu0 %v1582, 32
  %v1715 = vpop.permute.xlu0 %1714
  %1716 = vrot.lane.b32.xlu0 %v1583, 32
  %v1717 = vpop.permute.xlu0 %1716
  %1718 = vrot.lane.b32.xlu0 %v1584, 32
  %v1719 = vpop.permute.xlu0 %1718
  %1720 = vrot.lane.b32.xlu0 %v1585, 32
  %v1721 = vpop.permute.xlu0 %1720
  %1722 = vrot.lane.b32.xlu0 %v1586, 32
  %v1723 = vpop.permute.xlu0 %1722
  %1724 = vrot.lane.b32.xlu0 %v1587, 32
  %v1725 = vpop.permute.xlu0 %1724
  %1726 = vrot.lane.b32.xlu0 %v1588, 32
  %v1727 = vpop.permute.xlu0 %1726
  %1728 = vrot.lane.b32.xlu0 %v1589, 32
  %v1729 = vpop.permute.xlu0 %1728
  %1730 = vrot.lane.b32.xlu0 %v1590, 32
  %v1731 = vpop.permute.xlu0 %1730
  %1732 = vrot.lane.b32.xlu0 %v1591, 32
  %v1733 = vpop.permute.xlu0 %1732
  %1734 = vrot.lane.b32.xlu0 %v1592, 32
  %v1735 = vpop.permute.xlu0 %1734
  %1736 = vrot.lane.b32.xlu0 %v1593, 32
  %v1737 = vpop.permute.xlu0 %1736
  %1738 = vrot.lane.b32.xlu0 %v1594, 32
  %v1739 = vpop.permute.xlu0 %1738
  %1740 = vrot.lane.b32.xlu0 %v1595, 32
  %v1741 = vpop.permute.xlu0 %1740
  %1742 = vrot.lane.b32.xlu0 %v1596, 32
  %v1743 = vpop.permute.xlu0 %1742
  %1744 = vrot.lane.b32.xlu0 %v1597, 32
  %v1745 = vpop.permute.xlu0 %1744
  %1746 = vrot.lane.b32.xlu0 %v1598, 32
  %v1747 = vpop.permute.xlu0 %1746
  %1748 = vrot.lane.b32.xlu0 %v1599, 32
  %v1749 = vpop.permute.xlu0 %1748
  %1750 = vrot.lane.b32.xlu0 %v1600, 32
  %v1751 = vpop.permute.xlu0 %1750
  %1752 = vrot.lane.b32.xlu0 %v1601, 32
  %v1753 = vpop.permute.xlu0 %1752
  %1754 = vrot.lane.b32.xlu0 %v1602, 32
  %v1755 = vpop.permute.xlu0 %1754
  %1756 = vrot.lane.b32.xlu0 %v1603, 32
  %v1757 = vpop.permute.xlu0 %1756
  %1758 = vrot.lane.b32.xlu0 %v1604, 32
  %v1759 = vpop.permute.xlu0 %1758
  %1760 = vrot.lane.b32.xlu0 %v1605, 32
  %v1761 = vpop.permute.xlu0 %1760
  %1762 = vrot.lane.b32.xlu0 %v1606, 32
  %v1763 = vpop.permute.xlu0 %1762
  %1764 = vrot.lane.b32.xlu0 %v1607, 32
  %v1765 = vpop.permute.xlu0 %1764
  %1766 = vrot.lane.b32.xlu0 %v1608, 32
  %v1767 = vpop.permute.xlu0 %1766
  %1768 = vrot.lane.b32.xlu0 %v1609, 32
  %v1769 = vpop.permute.xlu0 %1768
  %1770 = vrot.lane.b32.xlu0 %v1610, 32
  %v1771 = vpop.permute.xlu0 %1770
  %1772 = vrot.lane.b32.xlu0 %v1611, 32
  %v1773 = vpop.permute.xlu0 %1772
  %1774 = vrot.lane.b32.xlu0 %v1612, 32
  %v1775 = vpop.permute.xlu0 %1774
  %1776 = vrot.lane.b32.xlu0 %v1613, 32
  %v1777 = vpop.permute.xlu0 %1776
  %1778 = vrot.lane.b32.xlu0 %v1614, 32
  %v1779 = vpop.permute.xlu0 %1778
  %1780 = vrot.lane.b32.xlu0 %v1615, 32
  %v1781 = vpop.permute.xlu0 %1780
  %1782 = vrot.lane.b32.xlu0 %v1616, 32
  %v1783 = vpop.permute.xlu0 %1782
  %1784 = vrot.lane.b32.xlu0 %v1617, 32
  %v1785 = vpop.permute.xlu0 %1784
  %1786 = vrot.lane.b32.xlu0 %v1618, 32
  %v1787 = vpop.permute.xlu0 %1786
  %1788 = vrot.lane.b32.xlu0 %v1619, 32
  %v1789 = vpop.permute.xlu0 %1788
  %1790 = vrot.lane.b32.xlu0 %v1620, 32
  %v1791 = vpop.permute.xlu0 %1790
  %1792 = vrot.lane.b32.xlu0 %v1621, 32
  %v1793 = vpop.permute.xlu0 %1792
  %1794 = vrot.lane.b32.xlu0 %v1622, 32
  %v1795 = vpop.permute.xlu0 %1794
  %1796 = vrot.lane.b32.xlu0 %v1623, 32
  %v1797 = vpop.permute.xlu0 %1796
  %1798 = vrot.lane.b32.xlu0 %v1624, 32
  %v1799 = vpop.permute.xlu0 %1798
  %1800 = vrot.lane.b32.xlu0 %v1625, 32
  %v1801 = vpop.permute.xlu0 %1800
  %1802 = vrot.lane.b32.xlu0 %v1626, 32
  %v1803 = vpop.permute.xlu0 %1802
  %1804 = vrot.lane.b32.xlu0 %v1627, 32
  %v1805 = vpop.permute.xlu0 %1804
  %1806 = vrot.lane.b32.xlu0 %v1628, 32
  %v1807 = vpop.permute.xlu0 %1806
  %1808 = vrot.lane.b32.xlu0 %v1629, 32
  %v1809 = vpop.permute.xlu0 %1808
  %1810 = vrot.lane.b32.xlu0 %v1630, 32
  %v1811 = vpop.permute.xlu0 %1810
  %1812 = vrot.lane.b32.xlu0 %v1631, 32
  %v1813 = vpop.permute.xlu0 %1812
  %1814 = vrot.lane.b32.xlu0 %v1632, 32
  %v1815 = vpop.permute.xlu0 %1814
  %1816 = vrot.lane.b32.xlu0 %v1633, 32
  %v1817 = vpop.permute.xlu0 %1816
  %1818 = vrot.lane.b32.xlu0 %v1634, 32
  %v1819 = vpop.permute.xlu0 %1818
  %1820 = vrot.lane.b32.xlu0 %v1635, 32
  %v1821 = vpop.permute.xlu0 %1820
  %1822 = vrot.lane.b32.xlu0 %v1636, 32
  %v1823 = vpop.permute.xlu0 %1822
  %1824 = vrot.lane.b32.xlu0 %v1637, 32
  %v1825 = vpop.permute.xlu0 %1824
  %1826 = vrot.lane.b32.xlu0 %v1638, 32
  %v1827 = vpop.permute.xlu0 %1826
  %1828 = vrot.lane.b32.xlu0 %v1639, 32
  %v1829 = vpop.permute.xlu0 %1828
  %1830 = vrot.lane.b32.xlu0 %v1640, 32
  %v1831 = vpop.permute.xlu0 %1830
  %1832 = vrot.lane.b32.xlu0 %v1641, 32
  %v1833 = vpop.permute.xlu0 %1832
  %1898 = vst.msk [vmem:[#allocation3 + $0x8] sm:$0xff] %vm615, %v1707
  %1899 = vst.msk [vmem:[#allocation3 + $0x20] sm:$0xff] %vm615, %v1709
  %1900 = vst.msk [vmem:[#allocation3 + $0x38] sm:$0xff] %vm615, %v1711
  %1901 = vst.msk [vmem:[#allocation3 + $0x50] sm:$0xff] %vm615, %v1713
  %1902 = vst.msk [vmem:[#allocation3 + $0x68] sm:$0xff] %vm615, %v1715
  %1903 = vst.msk [vmem:[#allocation3 + $0x80] sm:$0xff] %vm615, %v1717
  %1904 = vst.msk [vmem:[#allocation3 + $0x98] sm:$0xff] %vm615, %v1719
  %1905 = vst.msk [vmem:[#allocation3 + $0xb0] sm:$0xff] %vm615, %v1721
  %1906 = vst.msk [vmem:[#allocation3 + $0xc8] sm:$0xff] %vm615, %v1723
  %1907 = vst.msk [vmem:[#allocation3 + $0xe0] sm:$0xff] %vm615, %v1725
  %1908 = vst.msk [vmem:[#allocation3 + $0xf8] sm:$0xff] %vm615, %v1727
  %1909 = vst.msk [vmem:[#allocation3 + $0x110] sm:$0xff] %vm615, %v1729
  %1910 = vst.msk [vmem:[#allocation3 + $0x128] sm:$0xff] %vm615, %v1731
  %1911 = vst.msk [vmem:[#allocation3 + $0x140] sm:$0xff] %vm615, %v1733
  %1912 = vst.msk [vmem:[#allocation3 + $0x158] sm:$0xff] %vm615, %v1735
  %1913 = vst.msk [vmem:[#allocation3 + $0x170] sm:$0xff] %vm615, %v1737
  %1914 = vst.msk [vmem:[#allocation3 + $0x188] sm:$0xff] %vm615, %v1739
  %1915 = vst.msk [vmem:[#allocation3 + $0x1a0] sm:$0xff] %vm615, %v1741
  %1916 = vst.msk [vmem:[#allocation3 + $0x1b8] sm:$0xff] %vm615, %v1743
  %1917 = vst.msk [vmem:[#allocation3 + $0x1d0] sm:$0xff] %vm615, %v1745
  %1918 = vst.msk [vmem:[#allocation3 + $0x1e8] sm:$0xff] %vm615, %v1747
  %1919 = vst.msk [vmem:[#allocation3 + $0x200] sm:$0xff] %vm615, %v1749
  %1920 = vst.msk [vmem:[#allocation3 + $0x218] sm:$0xff] %vm615, %v1751
  %1921 = vst.msk [vmem:[#allocation3 + $0x230] sm:$0xff] %vm615, %v1753
  %1922 = vst.msk [vmem:[#allocation3 + $0x248] sm:$0xff] %vm615, %v1755
  %1923 = vst.msk [vmem:[#allocation3 + $0x260] sm:$0xff] %vm615, %v1757
  %1924 = vst.msk [vmem:[#allocation3 + $0x278] sm:$0xff] %vm615, %v1759
  %1925 = vst.msk [vmem:[#allocation3 + $0x290] sm:$0xff] %vm615, %v1761
  %1926 = vst.msk [vmem:[#allocation3 + $0x2a8] sm:$0xff] %vm615, %v1763
  %1927 = vst.msk [vmem:[#allocation3 + $0x2c0] sm:$0xff] %vm615, %v1765
  %1928 = vst.msk [vmem:[#allocation3 + $0x2d8] sm:$0xff] %vm615, %v1767
  %1929 = vst.msk [vmem:[#allocation3 + $0x2f0] sm:$0xff] %vm615, %v1769
  %1930 = vst.msk [vmem:[#allocation3 + $0x308] sm:$0xff] %vm615, %v1771
  %1931 = vst.msk [vmem:[#allocation3 + $0x320] sm:$0xff] %vm615, %v1773
  %1932 = vst.msk [vmem:[#allocation3 + $0x338] sm:$0xff] %vm615, %v1775
  %1933 = vst.msk [vmem:[#allocation3 + $0x350] sm:$0xff] %vm615, %v1777
  %1934 = vst.msk [vmem:[#allocation3 + $0x368] sm:$0xff] %vm615, %v1779
  %1935 = vst.msk [vmem:[#allocation3 + $0x380] sm:$0xff] %vm615, %v1781
  %1936 = vst.msk [vmem:[#allocation3 + $0x398] sm:$0xff] %vm615, %v1783
  %1937 = vst.msk [vmem:[#allocation3 + $0x3b0] sm:$0xff] %vm615, %v1785
  %1938 = vst.msk [vmem:[#allocation3 + $0x3c8] sm:$0xff] %vm615, %v1787
  %1939 = vst.msk [vmem:[#allocation3 + $0x3e0] sm:$0xff] %vm615, %v1789
  %1940 = vst.msk [vmem:[#allocation3 + $0x3f8] sm:$0xff] %vm615, %v1791
  %1941 = vst.msk [vmem:[#allocation3 + $0x410] sm:$0xff] %vm615, %v1793
  %1942 = vst.msk [vmem:[#allocation3 + $0x428] sm:$0xff] %vm615, %v1795
  %1943 = vst.msk [vmem:[#allocation3 + $0x440] sm:$0xff] %vm615, %v1797
  %1944 = vst.msk [vmem:[#allocation3 + $0x458] sm:$0xff] %vm615, %v1799
  %1945 = vst.msk [vmem:[#allocation3 + $0x470] sm:$0xff] %vm615, %v1801
  %1946 = vst.msk [vmem:[#allocation3 + $0x488] sm:$0xff] %vm615, %v1803
  %1947 = vst.msk [vmem:[#allocation3 + $0x4a0] sm:$0xff] %vm615, %v1805
  %1948 = vst.msk [vmem:[#allocation3 + $0x4b8] sm:$0xff] %vm615, %v1807
  %1949 = vst.msk [vmem:[#allocation3 + $0x4d0] sm:$0xff] %vm615, %v1809
  %1950 = vst.msk [vmem:[#allocation3 + $0x4e8] sm:$0xff] %vm615, %v1811
  %1951 = vst.msk [vmem:[#allocation3 + $0x500] sm:$0xff] %vm615, %v1813
  %1952 = vst.msk [vmem:[#allocation3 + $0x518] sm:$0xff] %vm615, %v1815
  %1953 = vst.msk [vmem:[#allocation3 + $0x530] sm:$0xff] %vm615, %v1817
  %1954 = vst.msk [vmem:[#allocation3 + $0x548] sm:$0xff] %vm615, %v1819
  %1955 = vst.msk [vmem:[#allocation3 + $0x560] sm:$0xff] %vm615, %v1821
  %1956 = vst.msk [vmem:[#allocation3 + $0x578] sm:$0xff] %vm615, %v1823
  %1957 = vst.msk [vmem:[#allocation3 + $0x590] sm:$0xff] %vm615, %v1825
  %1958 = vst.msk [vmem:[#allocation3 + $0x5a8] sm:$0xff] %vm615, %v1827
  %1959 = vst.msk [vmem:[#allocation3 + $0x5c0] sm:$0xff] %vm615, %v1829
  %1960 = vst.msk [vmem:[#allocation3 + $0x5d8] sm:$0xff] %vm615, %v1831
  %1961 = vst.msk [vmem:[#allocation3 + $0x5f0] sm:$0xff] %vm615, %v1833
  %v1962 = vld [vmem:[#allocation2 + $0x17] sm:$0xff]
  %v1963 = vld [vmem:[#allocation2 + $0x1f] sm:$0xff]
  %v1964 = vld [vmem:[#allocation2 + $0x27] sm:$0xff]
  %v1965 = vld [vmem:[#allocation2 + $0x2f] sm:$0xff]
  %v1966 = vld [vmem:[#allocation2 + $0x37] sm:$0xff]
  %v1967 = vld [vmem:[#allocation2 + $0x3f] sm:$0xff]
  %v1968 = vld [vmem:[#allocation2 + $0x47] sm:$0xff]
  %v1969 = vld [vmem:[#allocation2 + $0x4f] sm:$0xff]
  %v1970 = vld [vmem:[#allocation2 + $0x57] sm:$0xff]
  %v1971 = vld [vmem:[#allocation2 + $0x5f] sm:$0xff]
  %v1972 = vld [vmem:[#allocation2 + $0x67] sm:$0xff]
  %v1973 = vld [vmem:[#allocation2 + $0x6f] sm:$0xff]
  %v1974 = vld [vmem:[#allocation2 + $0x77] sm:$0xff]
  %v1975 = vld [vmem:[#allocation2 + $0x7f] sm:$0xff]
  %v1976 = vld [vmem:[#allocation2 + $0x87] sm:$0xff]
  %v1977 = vld [vmem:[#allocation2 + $0x8f] sm:$0xff]
  %v1978 = vld [vmem:[#allocation2 + $0x97] sm:$0xff]
  %v1979 = vld [vmem:[#allocation2 + $0x9f] sm:$0xff]
  %v1980 = vld [vmem:[#allocation2 + $0xa7] sm:$0xff]
  %v1981 = vld [vmem:[#allocation2 + $0xaf] sm:$0xff]
  %v1982 = vld [vmem:[#allocation2 + $0xb7] sm:$0xff]
  %v1983 = vld [vmem:[#allocation2 + $0xbf] sm:$0xff]
  %v1984 = vld [vmem:[#allocation2 + $0xc7] sm:$0xff]
  %v1985 = vld [vmem:[#allocation2 + $0xcf] sm:$0xff]
  %v1986 = vld [vmem:[#allocation2 + $0xd7] sm:$0xff]
  %v1987 = vld [vmem:[#allocation2 + $0xdf] sm:$0xff]
  %v1988 = vld [vmem:[#allocation2 + $0xe7] sm:$0xff]
  %v1989 = vld [vmem:[#allocation2 + $0xef] sm:$0xff]
  %v1990 = vld [vmem:[#allocation2 + $0xf7] sm:$0xff]
  %v1991 = vld [vmem:[#allocation2 + $0xff] sm:$0xff]
  %v1992 = vld [vmem:[#allocation2 + $0x107] sm:$0xff]
  %v1993 = vld [vmem:[#allocation2 + $0x10f] sm:$0xff]
  %v1994 = vld [vmem:[#allocation2 + $0x117] sm:$0xff]
  %v1995 = vld [vmem:[#allocation2 + $0x11f] sm:$0xff]
  %v1996 = vld [vmem:[#allocation2 + $0x127] sm:$0xff]
  %v1997 = vld [vmem:[#allocation2 + $0x12f] sm:$0xff]
  %v1998 = vld [vmem:[#allocation2 + $0x137] sm:$0xff]
  %v1999 = vld [vmem:[#allocation2 + $0x13f] sm:$0xff]
  %v2000 = vld [vmem:[#allocation2 + $0x147] sm:$0xff]
  %v2001 = vld [vmem:[#allocation2 + $0x14f] sm:$0xff]
  %v2002 = vld [vmem:[#allocation2 + $0x157] sm:$0xff]
  %v2003 = vld [vmem:[#allocation2 + $0x15f] sm:$0xff]
  %v2004 = vld [vmem:[#allocation2 + $0x167] sm:$0xff]
  %v2005 = vld [vmem:[#allocation2 + $0x16f] sm:$0xff]
  %v2006 = vld [vmem:[#allocation2 + $0x177] sm:$0xff]
  %v2007 = vld [vmem:[#allocation2 + $0x17f] sm:$0xff]
  %v2008 = vld [vmem:[#allocation2 + $0x187] sm:$0xff]
  %v2009 = vld [vmem:[#allocation2 + $0x18f] sm:$0xff]
  %v2010 = vld [vmem:[#allocation2 + $0x197] sm:$0xff]
  %v2011 = vld [vmem:[#allocation2 + $0x19f] sm:$0xff]
  %v2012 = vld [vmem:[#allocation2 + $0x1a7] sm:$0xff]
  %v2013 = vld [vmem:[#allocation2 + $0x1af] sm:$0xff]
  %v2014 = vld [vmem:[#allocation2 + $0x1b7] sm:$0xff]
  %v2015 = vld [vmem:[#allocation2 + $0x1bf] sm:$0xff]
  %v2016 = vld [vmem:[#allocation2 + $0x1c7] sm:$0xff]
  %v2017 = vld [vmem:[#allocation2 + $0x1cf] sm:$0xff]
  %v2018 = vld [vmem:[#allocation2 + $0x1d7] sm:$0xff]
  %v2019 = vld [vmem:[#allocation2 + $0x1df] sm:$0xff]
  %v2020 = vld [vmem:[#allocation2 + $0x1e7] sm:$0xff]
  %v2021 = vld [vmem:[#allocation2 + $0x1ef] sm:$0xff]
  %v2022 = vld [vmem:[#allocation2 + $0x1f7] sm:$0xff]
  %v2023 = vld [vmem:[#allocation2 + $0x1ff] sm:$0xff]
  %v2024 = vld [vmem:[#allocation2 + $0x207] sm:$0xff]
  %v2025 = vld [vmem:[#allocation2 + $0x20f] sm:$0xff]
  %2090 = vrot.lane.b32.xlu0 %v1962, 64
  %v2091 = vpop.permute.xlu0 %2090
  %2092 = vrot.lane.b32.xlu0 %v1963, 64
  %v2093 = vpop.permute.xlu0 %2092
  %2094 = vrot.lane.b32.xlu0 %v1964, 64
  %v2095 = vpop.permute.xlu0 %2094
  %2096 = vrot.lane.b32.xlu0 %v1965, 64
  %v2097 = vpop.permute.xlu0 %2096
  %2098 = vrot.lane.b32.xlu0 %v1966, 64
  %v2099 = vpop.permute.xlu0 %2098
  %2100 = vrot.lane.b32.xlu0 %v1967, 64
  %v2101 = vpop.permute.xlu0 %2100
  %2102 = vrot.lane.b32.xlu0 %v1968, 64
  %v2103 = vpop.permute.xlu0 %2102
  %2104 = vrot.lane.b32.xlu0 %v1969, 64
  %v2105 = vpop.permute.xlu0 %2104
  %2106 = vrot.lane.b32.xlu0 %v1970, 64
  %v2107 = vpop.permute.xlu0 %2106
  %2108 = vrot.lane.b32.xlu0 %v1971, 64
  %v2109 = vpop.permute.xlu0 %2108
  %2110 = vrot.lane.b32.xlu0 %v1972, 64
  %v2111 = vpop.permute.xlu0 %2110
  %2112 = vrot.lane.b32.xlu0 %v1973, 64
  %v2113 = vpop.permute.xlu0 %2112
  %2114 = vrot.lane.b32.xlu0 %v1974, 64
  %v2115 = vpop.permute.xlu0 %2114
  %2116 = vrot.lane.b32.xlu0 %v1975, 64
  %v2117 = vpop.permute.xlu0 %2116
  %2118 = vrot.lane.b32.xlu0 %v1976, 64
  %v2119 = vpop.permute.xlu0 %2118
  %2120 = vrot.lane.b32.xlu0 %v1977, 64
  %v2121 = vpop.permute.xlu0 %2120
  %2122 = vrot.lane.b32.xlu0 %v1978, 64
  %v2123 = vpop.permute.xlu0 %2122
  %2124 = vrot.lane.b32.xlu0 %v1979, 64
  %v2125 = vpop.permute.xlu0 %2124
  %2126 = vrot.lane.b32.xlu0 %v1980, 64
  %v2127 = vpop.permute.xlu0 %2126
  %2128 = vrot.lane.b32.xlu0 %v1981, 64
  %v2129 = vpop.permute.xlu0 %2128
  %2130 = vrot.lane.b32.xlu0 %v1982, 64
  %v2131 = vpop.permute.xlu0 %2130
  %2132 = vrot.lane.b32.xlu0 %v1983, 64
  %v2133 = vpop.permute.xlu0 %2132
  %2134 = vrot.lane.b32.xlu0 %v1984, 64
  %v2135 = vpop.permute.xlu0 %2134
  %2136 = vrot.lane.b32.xlu0 %v1985, 64
  %v2137 = vpop.permute.xlu0 %2136
  %2138 = vrot.lane.b32.xlu0 %v1986, 64
  %v2139 = vpop.permute.xlu0 %2138
  %2140 = vrot.lane.b32.xlu0 %v1987, 64
  %v2141 = vpop.permute.xlu0 %2140
  %2142 = vrot.lane.b32.xlu0 %v1988, 64
  %v2143 = vpop.permute.xlu0 %2142
  %2144 = vrot.lane.b32.xlu0 %v1989, 64
  %v2145 = vpop.permute.xlu0 %2144
  %2146 = vrot.lane.b32.xlu0 %v1990, 64
  %v2147 = vpop.permute.xlu0 %2146
  %2148 = vrot.lane.b32.xlu0 %v1991, 64
  %v2149 = vpop.permute.xlu0 %2148
  %2150 = vrot.lane.b32.xlu0 %v1992, 64
  %v2151 = vpop.permute.xlu0 %2150
  %2152 = vrot.lane.b32.xlu0 %v1993, 64
  %v2153 = vpop.permute.xlu0 %2152
  %2154 = vrot.lane.b32.xlu0 %v1994, 64
  %v2155 = vpop.permute.xlu0 %2154
  %2156 = vrot.lane.b32.xlu0 %v1995, 64
  %v2157 = vpop.permute.xlu0 %2156
  %2158 = vrot.lane.b32.xlu0 %v1996, 64
  %v2159 = vpop.permute.xlu0 %2158
  %2160 = vrot.lane.b32.xlu0 %v1997, 64
  %v2161 = vpop.permute.xlu0 %2160
  %2162 = vrot.lane.b32.xlu0 %v1998, 64
  %v2163 = vpop.permute.xlu0 %2162
  %2164 = vrot.lane.b32.xlu0 %v1999, 64
  %v2165 = vpop.permute.xlu0 %2164
  %2166 = vrot.lane.b32.xlu0 %v2000, 64
  %v2167 = vpop.permute.xlu0 %2166
  %2168 = vrot.lane.b32.xlu0 %v2001, 64
  %v2169 = vpop.permute.xlu0 %2168
  %2170 = vrot.lane.b32.xlu0 %v2002, 64
  %v2171 = vpop.permute.xlu0 %2170
  %2172 = vrot.lane.b32.xlu0 %v2003, 64
  %v2173 = vpop.permute.xlu0 %2172
  %2174 = vrot.lane.b32.xlu0 %v2004, 64
  %v2175 = vpop.permute.xlu0 %2174
  %2176 = vrot.lane.b32.xlu0 %v2005, 64
  %v2177 = vpop.permute.xlu0 %2176
  %2178 = vrot.lane.b32.xlu0 %v2006, 64
  %v2179 = vpop.permute.xlu0 %2178
  %2180 = vrot.lane.b32.xlu0 %v2007, 64
  %v2181 = vpop.permute.xlu0 %2180
  %2182 = vrot.lane.b32.xlu0 %v2008, 64
  %v2183 = vpop.permute.xlu0 %2182
  %2184 = vrot.lane.b32.xlu0 %v2009, 64
  %v2185 = vpop.permute.xlu0 %2184
  %2186 = vrot.lane.b32.xlu0 %v2010, 64
  %v2187 = vpop.permute.xlu0 %2186
  %2188 = vrot.lane.b32.xlu0 %v2011, 64
  %v2189 = vpop.permute.xlu0 %2188
  %2190 = vrot.lane.b32.xlu0 %v2012, 64
  %v2191 = vpop.permute.xlu0 %2190
  %2192 = vrot.lane.b32.xlu0 %v2013, 64
  %v2193 = vpop.permute.xlu0 %2192
  %2194 = vrot.lane.b32.xlu0 %v2014, 64
  %v2195 = vpop.permute.xlu0 %2194
  %2196 = vrot.lane.b32.xlu0 %v2015, 64
  %v2197 = vpop.permute.xlu0 %2196
  %2198 = vrot.lane.b32.xlu0 %v2016, 64
  %v2199 = vpop.permute.xlu0 %2198
  %2200 = vrot.lane.b32.xlu0 %v2017, 64
  %v2201 = vpop.permute.xlu0 %2200
  %2202 = vrot.lane.b32.xlu0 %v2018, 64
  %v2203 = vpop.permute.xlu0 %2202
  %2204 = vrot.lane.b32.xlu0 %v2019, 64
  %v2205 = vpop.permute.xlu0 %2204
  %2206 = vrot.lane.b32.xlu0 %v2020, 64
  %v2207 = vpop.permute.xlu0 %2206
  %2208 = vrot.lane.b32.xlu0 %v2021, 64
  %v2209 = vpop.permute.xlu0 %2208
  %2210 = vrot.lane.b32.xlu0 %v2022, 64
  %v2211 = vpop.permute.xlu0 %2210
  %2212 = vrot.lane.b32.xlu0 %v2023, 64
  %v2213 = vpop.permute.xlu0 %2212
  %2214 = vrot.lane.b32.xlu0 %v2024, 64
  %v2215 = vpop.permute.xlu0 %2214
  %2216 = vrot.lane.b32.xlu0 %v2025, 64
  %v2217 = vpop.permute.xlu0 %2216
  %2282 = vst.msk [vmem:[#allocation3 + $0x8] sm:$0xff] %vm1000, %v2091
  %2283 = vst.msk [vmem:[#allocation3 + $0x20] sm:$0xff] %vm1000, %v2093
  %2284 = vst.msk [vmem:[#allocation3 + $0x38] sm:$0xff] %vm1000, %v2095
  %2285 = vst.msk [vmem:[#allocation3 + $0x50] sm:$0xff] %vm1000, %v2097
  %2286 = vst.msk [vmem:[#allocation3 + $0x68] sm:$0xff] %vm1000, %v2099
  %2287 = vst.msk [vmem:[#allocation3 + $0x80] sm:$0xff] %vm1000, %v2101
  %2288 = vst.msk [vmem:[#allocation3 + $0x98] sm:$0xff] %vm1000, %v2103
  %2289 = vst.msk [vmem:[#allocation3 + $0xb0] sm:$0xff] %vm1000, %v2105
  %2290 = vst.msk [vmem:[#allocation3 + $0xc8] sm:$0xff] %vm1000, %v2107
  %2291 = vst.msk [vmem:[#allocation3 + $0xe0] sm:$0xff] %vm1000, %v2109
  %2292 = vst.msk [vmem:[#allocation3 + $0xf8] sm:$0xff] %vm1000, %v2111
  %2293 = vst.msk [vmem:[#allocation3 + $0x110] sm:$0xff] %vm1000, %v2113
  %2294 = vst.msk [vmem:[#allocation3 + $0x128] sm:$0xff] %vm1000, %v2115
  %2295 = vst.msk [vmem:[#allocation3 + $0x140] sm:$0xff] %vm1000, %v2117
  %2296 = vst.msk [vmem:[#allocation3 + $0x158] sm:$0xff] %vm1000, %v2119
  %2297 = vst.msk [vmem:[#allocation3 + $0x170] sm:$0xff] %vm1000, %v2121
  %2298 = vst.msk [vmem:[#allocation3 + $0x188] sm:$0xff] %vm1000, %v2123
  %2299 = vst.msk [vmem:[#allocation3 + $0x1a0] sm:$0xff] %vm1000, %v2125
  %2300 = vst.msk [vmem:[#allocation3 + $0x1b8] sm:$0xff] %vm1000, %v2127
  %2301 = vst.msk [vmem:[#allocation3 + $0x1d0] sm:$0xff] %vm1000, %v2129
  %2302 = vst.msk [vmem:[#allocation3 + $0x1e8] sm:$0xff] %vm1000, %v2131
  %2303 = vst.msk [vmem:[#allocation3 + $0x200] sm:$0xff] %vm1000, %v2133
  %2304 = vst.msk [vmem:[#allocation3 + $0x218] sm:$0xff] %vm1000, %v2135
  %2305 = vst.msk [vmem:[#allocation3 + $0x230] sm:$0xff] %vm1000, %v2137
  %2306 = vst.msk [vmem:[#allocation3 + $0x248] sm:$0xff] %vm1000, %v2139
  %2307 = vst.msk [vmem:[#allocation3 + $0x260] sm:$0xff] %vm1000, %v2141
  %2308 = vst.msk [vmem:[#allocation3 + $0x278] sm:$0xff] %vm1000, %v2143
  %2309 = vst.msk [vmem:[#allocation3 + $0x290] sm:$0xff] %vm1000, %v2145
  %2310 = vst.msk [vmem:[#allocation3 + $0x2a8] sm:$0xff] %vm1000, %v2147
  %2311 = vst.msk [vmem:[#allocation3 + $0x2c0] sm:$0xff] %vm1000, %v2149
  %2312 = vst.msk [vmem:[#allocation3 + $0x2d8] sm:$0xff] %vm1000, %v2151
  %2313 = vst.msk [vmem:[#allocation3 + $0x2f0] sm:$0xff] %vm1000, %v2153
  %2314 = vst.msk [vmem:[#allocation3 + $0x308] sm:$0xff] %vm1000, %v2155
  %2315 = vst.msk [vmem:[#allocation3 + $0x320] sm:$0xff] %vm1000, %v2157
  %2316 = vst.msk [vmem:[#allocation3 + $0x338] sm:$0xff] %vm1000, %v2159
  %2317 = vst.msk [vmem:[#allocation3 + $0x350] sm:$0xff] %vm1000, %v2161
  %2318 = vst.msk [vmem:[#allocation3 + $0x368] sm:$0xff] %vm1000, %v2163
  %2319 = vst.msk [vmem:[#allocation3 + $0x380] sm:$0xff] %vm1000, %v2165
  %2320 = vst.msk [vmem:[#allocation3 + $0x398] sm:$0xff] %vm1000, %v2167
  %2321 = vst.msk [vmem:[#allocation3 + $0x3b0] sm:$0xff] %vm1000, %v2169
  %2322 = vst.msk [vmem:[#allocation3 + $0x3c8] sm:$0xff] %vm1000, %v2171
  %2323 = vst.msk [vmem:[#allocation3 + $0x3e0] sm:$0xff] %vm1000, %v2173
  %2324 = vst.msk [vmem:[#allocation3 + $0x3f8] sm:$0xff] %vm1000, %v2175
  %2325 = vst.msk [vmem:[#allocation3 + $0x410] sm:$0xff] %vm1000, %v2177
  %2326 = vst.msk [vmem:[#allocation3 + $0x428] sm:$0xff] %vm1000, %v2179
  %2327 = vst.msk [vmem:[#allocation3 + $0x440] sm:$0xff] %vm1000, %v2181
  %2328 = vst.msk [vmem:[#allocation3 + $0x458] sm:$0xff] %vm1000, %v2183
  %2329 = vst.msk [vmem:[#allocation3 + $0x470] sm:$0xff] %vm1000, %v2185
  %2330 = vst.msk [vmem:[#allocation3 + $0x488] sm:$0xff] %vm1000, %v2187
  %2331 = vst.msk [vmem:[#allocation3 + $0x4a0] sm:$0xff] %vm1000, %v2189
  %2332 = vst.msk [vmem:[#allocation3 + $0x4b8] sm:$0xff] %vm1000, %v2191
  %2333 = vst.msk [vmem:[#allocation3 + $0x4d0] sm:$0xff] %vm1000, %v2193
  %2334 = vst.msk [vmem:[#allocation3 + $0x4e8] sm:$0xff] %vm1000, %v2195
  %2335 = vst.msk [vmem:[#allocation3 + $0x500] sm:$0xff] %vm1000, %v2197
  %2336 = vst.msk [vmem:[#allocation3 + $0x518] sm:$0xff] %vm1000, %v2199
  %2337 = vst.msk [vmem:[#allocation3 + $0x530] sm:$0xff] %vm1000, %v2201
  %2338 = vst.msk [vmem:[#allocation3 + $0x548] sm:$0xff] %vm1000, %v2203
  %2339 = vst.msk [vmem:[#allocation3 + $0x560] sm:$0xff] %vm1000, %v2205
  %2340 = vst.msk [vmem:[#allocation3 + $0x578] sm:$0xff] %vm1000, %v2207
  %2341 = vst.msk [vmem:[#allocation3 + $0x590] sm:$0xff] %vm1000, %v2209
  %2342 = vst.msk [vmem:[#allocation3 + $0x5a8] sm:$0xff] %vm1000, %v2211
  %2343 = vst.msk [vmem:[#allocation3 + $0x5c0] sm:$0xff] %vm1000, %v2213
  %2344 = vst.msk [vmem:[#allocation3 + $0x5d8] sm:$0xff] %vm1000, %v2215
  %2345 = vst.msk [vmem:[#allocation3 + $0x5f0] sm:$0xff] %vm1000, %v2217
  %v2346 = vld [vmem:[#allocation2 + $0x18] sm:$0xff]
  %v2347 = vld [vmem:[#allocation2 + $0x20] sm:$0xff]
  %v2348 = vld [vmem:[#allocation2 + $0x28] sm:$0xff]
  %v2349 = vld [vmem:[#allocation2 + $0x30] sm:$0xff]
  %v2350 = vld [vmem:[#allocation2 + $0x38] sm:$0xff]
  %v2351 = vld [vmem:[#allocation2 + $0x40] sm:$0xff]
  %v2352 = vld [vmem:[#allocation2 + $0x48] sm:$0xff]
  %v2353 = vld [vmem:[#allocation2 + $0x50] sm:$0xff]
  %v2354 = vld [vmem:[#allocation2 + $0x58] sm:$0xff]
  %v2355 = vld [vmem:[#allocation2 + $0x60] sm:$0xff]
  %v2356 = vld [vmem:[#allocation2 + $0x68] sm:$0xff]
  %v2357 = vld [vmem:[#allocation2 + $0x70] sm:$0xff]
  %v2358 = vld [vmem:[#allocation2 + $0x78] sm:$0xff]
  %v2359 = vld [vmem:[#allocation2 + $0x80] sm:$0xff]
  %v2360 = vld [vmem:[#allocation2 + $0x88] sm:$0xff]
  %v2361 = vld [vmem:[#allocation2 + $0x90] sm:$0xff]
  %v2362 = vld [vmem:[#allocation2 + $0x98] sm:$0xff]
  %v2363 = vld [vmem:[#allocation2 + $0xa0] sm:$0xff]
  %v2364 = vld [vmem:[#allocation2 + $0xa8] sm:$0xff]
  %v2365 = vld [vmem:[#allocation2 + $0xb0] sm:$0xff]
  %v2366 = vld [vmem:[#allocation2 + $0xb8] sm:$0xff]
  %v2367 = vld [vmem:[#allocation2 + $0xc0] sm:$0xff]
  %v2368 = vld [vmem:[#allocation2 + $0xc8] sm:$0xff]
  %v2369 = vld [vmem:[#allocation2 + $0xd0] sm:$0xff]
  %v2370 = vld [vmem:[#allocation2 + $0xd8] sm:$0xff]
  %v2371 = vld [vmem:[#allocation2 + $0xe0] sm:$0xff]
  %v2372 = vld [vmem:[#allocation2 + $0xe8] sm:$0xff]
  %v2373 = vld [vmem:[#allocation2 + $0xf0] sm:$0xff]
  %v2374 = vld [vmem:[#allocation2 + $0xf8] sm:$0xff]
  %v2375 = vld [vmem:[#allocation2 + $0x100] sm:$0xff]
  %v2376 = vld [vmem:[#allocation2 + $0x108] sm:$0xff]
  %v2377 = vld [vmem:[#allocation2 + $0x110] sm:$0xff]
  %v2378 = vld [vmem:[#allocation2 + $0x118] sm:$0xff]
  %v2379 = vld [vmem:[#allocation2 + $0x120] sm:$0xff]
  %v2380 = vld [vmem:[#allocation2 + $0x128] sm:$0xff]
  %v2381 = vld [vmem:[#allocation2 + $0x130] sm:$0xff]
  %v2382 = vld [vmem:[#allocation2 + $0x138] sm:$0xff]
  %v2383 = vld [vmem:[#allocation2 + $0x140] sm:$0xff]
  %v2384 = vld [vmem:[#allocation2 + $0x148] sm:$0xff]
  %v2385 = vld [vmem:[#allocation2 + $0x150] sm:$0xff]
  %v2386 = vld [vmem:[#allocation2 + $0x158] sm:$0xff]
  %v2387 = vld [vmem:[#allocation2 + $0x160] sm:$0xff]
  %v2388 = vld [vmem:[#allocation2 + $0x168] sm:$0xff]
  %v2389 = vld [vmem:[#allocation2 + $0x170] sm:$0xff]
  %v2390 = vld [vmem:[#allocation2 + $0x178] sm:$0xff]
  %v2391 = vld [vmem:[#allocation2 + $0x180] sm:$0xff]
  %v2392 = vld [vmem:[#allocation2 + $0x188] sm:$0xff]
  %v2393 = vld [vmem:[#allocation2 + $0x190] sm:$0xff]
  %v2394 = vld [vmem:[#allocation2 + $0x198] sm:$0xff]
  %v2395 = vld [vmem:[#allocation2 + $0x1a0] sm:$0xff]
  %v2396 = vld [vmem:[#allocation2 + $0x1a8] sm:$0xff]
  %v2397 = vld [vmem:[#allocation2 + $0x1b0] sm:$0xff]
  %v2398 = vld [vmem:[#allocation2 + $0x1b8] sm:$0xff]
  %v2399 = vld [vmem:[#allocation2 + $0x1c0] sm:$0xff]
  %v2400 = vld [vmem:[#allocation2 + $0x1c8] sm:$0xff]
  %v2401 = vld [vmem:[#allocation2 + $0x1d0] sm:$0xff]
  %v2402 = vld [vmem:[#allocation2 + $0x1d8] sm:$0xff]
  %v2403 = vld [vmem:[#allocation2 + $0x1e0] sm:$0xff]
  %v2404 = vld [vmem:[#allocation2 + $0x1e8] sm:$0xff]
  %v2405 = vld [vmem:[#allocation2 + $0x1f0] sm:$0xff]
  %v2406 = vld [vmem:[#allocation2 + $0x1f8] sm:$0xff]
  %v2407 = vld [vmem:[#allocation2 + $0x200] sm:$0xff]
  %v2408 = vld [vmem:[#allocation2 + $0x208] sm:$0xff]
  %v2409 = vld [vmem:[#allocation2 + $0x210] sm:$0xff]
  %2474 = vrot.lane.b32.xlu0 %v2346, 96
  %v2475 = vpop.permute.xlu0 %2474
  %2476 = vrot.lane.b32.xlu0 %v2347, 96
  %v2477 = vpop.permute.xlu0 %2476
  %2478 = vrot.lane.b32.xlu0 %v2348, 96
  %v2479 = vpop.permute.xlu0 %2478
  %2480 = vrot.lane.b32.xlu0 %v2349, 96
  %v2481 = vpop.permute.xlu0 %2480
  %2482 = vrot.lane.b32.xlu0 %v2350, 96
  %v2483 = vpop.permute.xlu0 %2482
  %2484 = vrot.lane.b32.xlu0 %v2351, 96
  %v2485 = vpop.permute.xlu0 %2484
  %2486 = vrot.lane.b32.xlu0 %v2352, 96
  %v2487 = vpop.permute.xlu0 %2486
  %2488 = vrot.lane.b32.xlu0 %v2353, 96
  %v2489 = vpop.permute.xlu0 %2488
  %2490 = vrot.lane.b32.xlu0 %v2354, 96
  %v2491 = vpop.permute.xlu0 %2490
  %2492 = vrot.lane.b32.xlu0 %v2355, 96
  %v2493 = vpop.permute.xlu0 %2492
  %2494 = vrot.lane.b32.xlu0 %v2356, 96
  %v2495 = vpop.permute.xlu0 %2494
  %2496 = vrot.lane.b32.xlu0 %v2357, 96
  %v2497 = vpop.permute.xlu0 %2496
  %2498 = vrot.lane.b32.xlu0 %v2358, 96
  %v2499 = vpop.permute.xlu0 %2498
  %2500 = vrot.lane.b32.xlu0 %v2359, 96
  %v2501 = vpop.permute.xlu0 %2500
  %2502 = vrot.lane.b32.xlu0 %v2360, 96
  %v2503 = vpop.permute.xlu0 %2502
  %2504 = vrot.lane.b32.xlu0 %v2361, 96
  %v2505 = vpop.permute.xlu0 %2504
  %2506 = vrot.lane.b32.xlu0 %v2362, 96
  %v2507 = vpop.permute.xlu0 %2506
  %2508 = vrot.lane.b32.xlu0 %v2363, 96
  %v2509 = vpop.permute.xlu0 %2508
  %2510 = vrot.lane.b32.xlu0 %v2364, 96
  %v2511 = vpop.permute.xlu0 %2510
  %2512 = vrot.lane.b32.xlu0 %v2365, 96
  %v2513 = vpop.permute.xlu0 %2512
  %2514 = vrot.lane.b32.xlu0 %v2366, 96
  %v2515 = vpop.permute.xlu0 %2514
  %2516 = vrot.lane.b32.xlu0 %v2367, 96
  %v2517 = vpop.permute.xlu0 %2516
  %2518 = vrot.lane.b32.xlu0 %v2368, 96
  %v2519 = vpop.permute.xlu0 %2518
  %2520 = vrot.lane.b32.xlu0 %v2369, 96
  %v2521 = vpop.permute.xlu0 %2520
  %2522 = vrot.lane.b32.xlu0 %v2370, 96
  %v2523 = vpop.permute.xlu0 %2522
  %2524 = vrot.lane.b32.xlu0 %v2371, 96
  %v2525 = vpop.permute.xlu0 %2524
  %2526 = vrot.lane.b32.xlu0 %v2372, 96
  %v2527 = vpop.permute.xlu0 %2526
  %2528 = vrot.lane.b32.xlu0 %v2373, 96
  %v2529 = vpop.permute.xlu0 %2528
  %2530 = vrot.lane.b32.xlu0 %v2374, 96
  %v2531 = vpop.permute.xlu0 %2530
  %2532 = vrot.lane.b32.xlu0 %v2375, 96
  %v2533 = vpop.permute.xlu0 %2532
  %2534 = vrot.lane.b32.xlu0 %v2376, 96
  %v2535 = vpop.permute.xlu0 %2534
  %2536 = vrot.lane.b32.xlu0 %v2377, 96
  %v2537 = vpop.permute.xlu0 %2536
  %2538 = vrot.lane.b32.xlu0 %v2378, 96
  %v2539 = vpop.permute.xlu0 %2538
  %2540 = vrot.lane.b32.xlu0 %v2379, 96
  %v2541 = vpop.permute.xlu0 %2540
  %2542 = vrot.lane.b32.xlu0 %v2380, 96
  %v2543 = vpop.permute.xlu0 %2542
  %2544 = vrot.lane.b32.xlu0 %v2381, 96
  %v2545 = vpop.permute.xlu0 %2544
  %2546 = vrot.lane.b32.xlu0 %v2382, 96
  %v2547 = vpop.permute.xlu0 %2546
  %2548 = vrot.lane.b32.xlu0 %v2383, 96
  %v2549 = vpop.permute.xlu0 %2548
  %2550 = vrot.lane.b32.xlu0 %v2384, 96
  %v2551 = vpop.permute.xlu0 %2550
  %2552 = vrot.lane.b32.xlu0 %v2385, 96
  %v2553 = vpop.permute.xlu0 %2552
  %2554 = vrot.lane.b32.xlu0 %v2386, 96
  %v2555 = vpop.permute.xlu0 %2554
  %2556 = vrot.lane.b32.xlu0 %v2387, 96
  %v2557 = vpop.permute.xlu0 %2556
  %2558 = vrot.lane.b32.xlu0 %v2388, 96
  %v2559 = vpop.permute.xlu0 %2558
  %2560 = vrot.lane.b32.xlu0 %v2389, 96
  %v2561 = vpop.permute.xlu0 %2560
  %2562 = vrot.lane.b32.xlu0 %v2390, 96
  %v2563 = vpop.permute.xlu0 %2562
  %2564 = vrot.lane.b32.xlu0 %v2391, 96
  %v2565 = vpop.permute.xlu0 %2564
  %2566 = vrot.lane.b32.xlu0 %v2392, 96
  %v2567 = vpop.permute.xlu0 %2566
  %2568 = vrot.lane.b32.xlu0 %v2393, 96
  %v2569 = vpop.permute.xlu0 %2568
  %2570 = vrot.lane.b32.xlu0 %v2394, 96
  %v2571 = vpop.permute.xlu0 %2570
  %2572 = vrot.lane.b32.xlu0 %v2395, 96
  %v2573 = vpop.permute.xlu0 %2572
  %2574 = vrot.lane.b32.xlu0 %v2396, 96
  %v2575 = vpop.permute.xlu0 %2574
  %2576 = vrot.lane.b32.xlu0 %v2397, 96
  %v2577 = vpop.permute.xlu0 %2576
  %2578 = vrot.lane.b32.xlu0 %v2398, 96
  %v2579 = vpop.permute.xlu0 %2578
  %2580 = vrot.lane.b32.xlu0 %v2399, 96
  %v2581 = vpop.permute.xlu0 %2580
  %2582 = vrot.lane.b32.xlu0 %v2400, 96
  %v2583 = vpop.permute.xlu0 %2582
  %2584 = vrot.lane.b32.xlu0 %v2401, 96
  %v2585 = vpop.permute.xlu0 %2584
  %2586 = vrot.lane.b32.xlu0 %v2402, 96
  %v2587 = vpop.permute.xlu0 %2586
  %2588 = vrot.lane.b32.xlu0 %v2403, 96
  %v2589 = vpop.permute.xlu0 %2588
  %2590 = vrot.lane.b32.xlu0 %v2404, 96
  %v2591 = vpop.permute.xlu0 %2590
  %2592 = vrot.lane.b32.xlu0 %v2405, 96
  %v2593 = vpop.permute.xlu0 %2592
  %2594 = vrot.lane.b32.xlu0 %v2406, 96
  %v2595 = vpop.permute.xlu0 %2594
  %2596 = vrot.lane.b32.xlu0 %v2407, 96
  %v2597 = vpop.permute.xlu0 %2596
  %2598 = vrot.lane.b32.xlu0 %v2408, 96
  %v2599 = vpop.permute.xlu0 %2598
  %2600 = vrot.lane.b32.xlu0 %v2409, 96
  %v2601 = vpop.permute.xlu0 %2600
  %2666 = vst.msk [vmem:[#allocation3 + $0x8] sm:$0xff] %vm1385, %v2475
  %2667 = vst.msk [vmem:[#allocation3 + $0x20] sm:$0xff] %vm1385, %v2477
  %2668 = vst.msk [vmem:[#allocation3 + $0x38] sm:$0xff] %vm1385, %v2479
  %2669 = vst.msk [vmem:[#allocation3 + $0x50] sm:$0xff] %vm1385, %v2481
  %2670 = vst.msk [vmem:[#allocation3 + $0x68] sm:$0xff] %vm1385, %v2483
  %2671 = vst.msk [vmem:[#allocation3 + $0x80] sm:$0xff] %vm1385, %v2485
  %2672 = vst.msk [vmem:[#allocation3 + $0x98] sm:$0xff] %vm1385, %v2487
  %2673 = vst.msk [vmem:[#allocation3 + $0xb0] sm:$0xff] %vm1385, %v2489
  %2674 = vst.msk [vmem:[#allocation3 + $0xc8] sm:$0xff] %vm1385, %v2491
  %2675 = vst.msk [vmem:[#allocation3 + $0xe0] sm:$0xff] %vm1385, %v2493
  %2676 = vst.msk [vmem:[#allocation3 + $0xf8] sm:$0xff] %vm1385, %v2495
  %2677 = vst.msk [vmem:[#allocation3 + $0x110] sm:$0xff] %vm1385, %v2497
  %2678 = vst.msk [vmem:[#allocation3 + $0x128] sm:$0xff] %vm1385, %v2499
  %2679 = vst.msk [vmem:[#allocation3 + $0x140] sm:$0xff] %vm1385, %v2501
  %2680 = vst.msk [vmem:[#allocation3 + $0x158] sm:$0xff] %vm1385, %v2503
  %2681 = vst.msk [vmem:[#allocation3 + $0x170] sm:$0xff] %vm1385, %v2505
  %2682 = vst.msk [vmem:[#allocation3 + $0x188] sm:$0xff] %vm1385, %v2507
  %2683 = vst.msk [vmem:[#allocation3 + $0x1a0] sm:$0xff] %vm1385, %v2509
  %2684 = vst.msk [vmem:[#allocation3 + $0x1b8] sm:$0xff] %vm1385, %v2511
  %2685 = vst.msk [vmem:[#allocation3 + $0x1d0] sm:$0xff] %vm1385, %v2513
  %2686 = vst.msk [vmem:[#allocation3 + $0x1e8] sm:$0xff] %vm1385, %v2515
  %2687 = vst.msk [vmem:[#allocation3 + $0x200] sm:$0xff] %vm1385, %v2517
  %2688 = vst.msk [vmem:[#allocation3 + $0x218] sm:$0xff] %vm1385, %v2519
  %2689 = vst.msk [vmem:[#allocation3 + $0x230] sm:$0xff] %vm1385, %v2521
  %2690 = vst.msk [vmem:[#allocation3 + $0x248] sm:$0xff] %vm1385, %v2523
  %2691 = vst.msk [vmem:[#allocation3 + $0x260] sm:$0xff] %vm1385, %v2525
  %2692 = vst.msk [vmem:[#allocation3 + $0x278] sm:$0xff] %vm1385, %v2527
  %2693 = vst.msk [vmem:[#allocation3 + $0x290] sm:$0xff] %vm1385, %v2529
  %2694 = vst.msk [vmem:[#allocation3 + $0x2a8] sm:$0xff] %vm1385, %v2531
  %2695 = vst.msk [vmem:[#allocation3 + $0x2c0] sm:$0xff] %vm1385, %v2533
  %2696 = vst.msk [vmem:[#allocation3 + $0x2d8] sm:$0xff] %vm1385, %v2535
  %2697 = vst.msk [vmem:[#allocation3 + $0x2f0] sm:$0xff] %vm1385, %v2537
  %2698 = vst.msk [vmem:[#allocation3 + $0x308] sm:$0xff] %vm1385, %v2539
  %2699 = vst.msk [vmem:[#allocation3 + $0x320] sm:$0xff] %vm1385, %v2541
  %2700 = vst.msk [vmem:[#allocation3 + $0x338] sm:$0xff] %vm1385, %v2543
  %2701 = vst.msk [vmem:[#allocation3 + $0x350] sm:$0xff] %vm1385, %v2545
  %2702 = vst.msk [vmem:[#allocation3 + $0x368] sm:$0xff] %vm1385, %v2547
  %2703 = vst.msk [vmem:[#allocation3 + $0x380] sm:$0xff] %vm1385, %v2549
  %2704 = vst.msk [vmem:[#allocation3 + $0x398] sm:$0xff] %vm1385, %v2551
  %2705 = vst.msk [vmem:[#allocation3 + $0x3b0] sm:$0xff] %vm1385, %v2553
  %2706 = vst.msk [vmem:[#allocation3 + $0x3c8] sm:$0xff] %vm1385, %v2555
  %2707 = vst.msk [vmem:[#allocation3 + $0x3e0] sm:$0xff] %vm1385, %v2557
  %2708 = vst.msk [vmem:[#allocation3 + $0x3f8] sm:$0xff] %vm1385, %v2559
  %2709 = vst.msk [vmem:[#allocation3 + $0x410] sm:$0xff] %vm1385, %v2561
  %2710 = vst.msk [vmem:[#allocation3 + $0x428] sm:$0xff] %vm1385, %v2563
  %2711 = vst.msk [vmem:[#allocation3 + $0x440] sm:$0xff] %vm1385, %v2565
  %2712 = vst.msk [vmem:[#allocation3 + $0x458] sm:$0xff] %vm1385, %v2567
  %2713 = vst.msk [vmem:[#allocation3 + $0x470] sm:$0xff] %vm1385, %v2569
  %2714 = vst.msk [vmem:[#allocation3 + $0x488] sm:$0xff] %vm1385, %v2571
  %2715 = vst.msk [vmem:[#allocation3 + $0x4a0] sm:$0xff] %vm1385, %v2573
  %2716 = vst.msk [vmem:[#allocation3 + $0x4b8] sm:$0xff] %vm1385, %v2575
  %2717 = vst.msk [vmem:[#allocation3 + $0x4d0] sm:$0xff] %vm1385, %v2577
  %2718 = vst.msk [vmem:[#allocation3 + $0x4e8] sm:$0xff] %vm1385, %v2579
  %2719 = vst.msk [vmem:[#allocation3 + $0x500] sm:$0xff] %vm1385, %v2581
  %2720 = vst.msk [vmem:[#allocation3 + $0x518] sm:$0xff] %vm1385, %v2583
  %2721 = vst.msk [vmem:[#allocation3 + $0x530] sm:$0xff] %vm1385, %v2585
  %2722 = vst.msk [vmem:[#allocation3 + $0x548] sm:$0xff] %vm1385, %v2587
  %2723 = vst.msk [vmem:[#allocation3 + $0x560] sm:$0xff] %vm1385, %v2589
  %2724 = vst.msk [vmem:[#allocation3 + $0x578] sm:$0xff] %vm1385, %v2591
  %2725 = vst.msk [vmem:[#allocation3 + $0x590] sm:$0xff] %vm1385, %v2593
  %2726 = vst.msk [vmem:[#allocation3 + $0x5a8] sm:$0xff] %vm1385, %v2595
  %2727 = vst.msk [vmem:[#allocation3 + $0x5c0] sm:$0xff] %vm1385, %v2597
  %2728 = vst.msk [vmem:[#allocation3 + $0x5d8] sm:$0xff] %vm1385, %v2599
  %2729 = vst.msk [vmem:[#allocation3 + $0x5f0] sm:$0xff] %vm1385, %v2601
  %v2730 = vld [vmem:[#allocation2 + $0x19] sm:$0xff]
  %v2731 = vld [vmem:[#allocation2 + $0x21] sm:$0xff]
  %v2732 = vld [vmem:[#allocation2 + $0x29] sm:$0xff]
  %v2733 = vld [vmem:[#allocation2 + $0x31] sm:$0xff]
  %v2734 = vld [vmem:[#allocation2 + $0x39] sm:$0xff]
  %v2735 = vld [vmem:[#allocation2 + $0x41] sm:$0xff]
  %v2736 = vld [vmem:[#allocation2 + $0x49] sm:$0xff]
  %v2737 = vld [vmem:[#allocation2 + $0x51] sm:$0xff]
  %v2738 = vld [vmem:[#allocation2 + $0x59] sm:$0xff]
  %v2739 = vld [vmem:[#allocation2 + $0x61] sm:$0xff]
  %v2740 = vld [vmem:[#allocation2 + $0x69] sm:$0xff]
  %v2741 = vld [vmem:[#allocation2 + $0x71] sm:$0xff]
  %v2742 = vld [vmem:[#allocation2 + $0x79] sm:$0xff]
  %v2743 = vld [vmem:[#allocation2 + $0x81] sm:$0xff]
  %v2744 = vld [vmem:[#allocation2 + $0x89] sm:$0xff]
  %v2745 = vld [vmem:[#allocation2 + $0x91] sm:$0xff]
  %v2746 = vld [vmem:[#allocation2 + $0x99] sm:$0xff]
  %v2747 = vld [vmem:[#allocation2 + $0xa1] sm:$0xff]
  %v2748 = vld [vmem:[#allocation2 + $0xa9] sm:$0xff]
  %v2749 = vld [vmem:[#allocation2 + $0xb1] sm:$0xff]
  %v2750 = vld [vmem:[#allocation2 + $0xb9] sm:$0xff]
  %v2751 = vld [vmem:[#allocation2 + $0xc1] sm:$0xff]
  %v2752 = vld [vmem:[#allocation2 + $0xc9] sm:$0xff]
  %v2753 = vld [vmem:[#allocation2 + $0xd1] sm:$0xff]
  %v2754 = vld [vmem:[#allocation2 + $0xd9] sm:$0xff]
  %v2755 = vld [vmem:[#allocation2 + $0xe1] sm:$0xff]
  %v2756 = vld [vmem:[#allocation2 + $0xe9] sm:$0xff]
  %v2757 = vld [vmem:[#allocation2 + $0xf1] sm:$0xff]
  %v2758 = vld [vmem:[#allocation2 + $0xf9] sm:$0xff]
  %v2759 = vld [vmem:[#allocation2 + $0x101] sm:$0xff]
  %v2760 = vld [vmem:[#allocation2 + $0x109] sm:$0xff]
  %v2761 = vld [vmem:[#allocation2 + $0x111] sm:$0xff]
  %v2762 = vld [vmem:[#allocation2 + $0x119] sm:$0xff]
  %v2763 = vld [vmem:[#allocation2 + $0x121] sm:$0xff]
  %v2764 = vld [vmem:[#allocation2 + $0x129] sm:$0xff]
  %v2765 = vld [vmem:[#allocation2 + $0x131] sm:$0xff]
  %v2766 = vld [vmem:[#allocation2 + $0x139] sm:$0xff]
  %v2767 = vld [vmem:[#allocation2 + $0x141] sm:$0xff]
  %v2768 = vld [vmem:[#allocation2 + $0x149] sm:$0xff]
  %v2769 = vld [vmem:[#allocation2 + $0x151] sm:$0xff]
  %v2770 = vld [vmem:[#allocation2 + $0x159] sm:$0xff]
  %v2771 = vld [vmem:[#allocation2 + $0x161] sm:$0xff]
  %v2772 = vld [vmem:[#allocation2 + $0x169] sm:$0xff]
  %v2773 = vld [vmem:[#allocation2 + $0x171] sm:$0xff]
  %v2774 = vld [vmem:[#allocation2 + $0x179] sm:$0xff]
  %v2775 = vld [vmem:[#allocation2 + $0x181] sm:$0xff]
  %v2776 = vld [vmem:[#allocation2 + $0x189] sm:$0xff]
  %v2777 = vld [vmem:[#allocation2 + $0x191] sm:$0xff]
  %v2778 = vld [vmem:[#allocation2 + $0x199] sm:$0xff]
  %v2779 = vld [vmem:[#allocation2 + $0x1a1] sm:$0xff]
  %v2780 = vld [vmem:[#allocation2 + $0x1a9] sm:$0xff]
  %v2781 = vld [vmem:[#allocation2 + $0x1b1] sm:$0xff]
  %v2782 = vld [vmem:[#allocation2 + $0x1b9] sm:$0xff]
  %v2783 = vld [vmem:[#allocation2 + $0x1c1] sm:$0xff]
  %v2784 = vld [vmem:[#allocation2 + $0x1c9] sm:$0xff]
  %v2785 = vld [vmem:[#allocation2 + $0x1d1] sm:$0xff]
  %v2786 = vld [vmem:[#allocation2 + $0x1d9] sm:$0xff]
  %v2787 = vld [vmem:[#allocation2 + $0x1e1] sm:$0xff]
  %v2788 = vld [vmem:[#allocation2 + $0x1e9] sm:$0xff]
  %v2789 = vld [vmem:[#allocation2 + $0x1f1] sm:$0xff]
  %v2790 = vld [vmem:[#allocation2 + $0x1f9] sm:$0xff]
  %v2791 = vld [vmem:[#allocation2 + $0x201] sm:$0xff]
  %v2792 = vld [vmem:[#allocation2 + $0x209] sm:$0xff]
  %v2793 = vld [vmem:[#allocation2 + $0x211] sm:$0xff]
  %2794 = vst.msk [vmem:[#allocation3 + $0x10] sm:$0xff] %vm34, %v2730
  %2795 = vst.msk [vmem:[#allocation3 + $0x28] sm:$0xff] %vm34, %v2731
  %2796 = vst.msk [vmem:[#allocation3 + $0x40] sm:$0xff] %vm34, %v2732
  %2797 = vst.msk [vmem:[#allocation3 + $0x58] sm:$0xff] %vm34, %v2733
  %2798 = vst.msk [vmem:[#allocation3 + $0x70] sm:$0xff] %vm34, %v2734
  %2799 = vst.msk [vmem:[#allocation3 + $0x88] sm:$0xff] %vm34, %v2735
  %2800 = vst.msk [vmem:[#allocation3 + $0xa0] sm:$0xff] %vm34, %v2736
  %2801 = vst.msk [vmem:[#allocation3 + $0xb8] sm:$0xff] %vm34, %v2737
  %2802 = vst.msk [vmem:[#allocation3 + $0xd0] sm:$0xff] %vm34, %v2738
  %2803 = vst.msk [vmem:[#allocation3 + $0xe8] sm:$0xff] %vm34, %v2739
  %2804 = vst.msk [vmem:[#allocation3 + $0x100] sm:$0xff] %vm34, %v2740
  %2805 = vst.msk [vmem:[#allocation3 + $0x118] sm:$0xff] %vm34, %v2741
  %2806 = vst.msk [vmem:[#allocation3 + $0x130] sm:$0xff] %vm34, %v2742
  %2807 = vst.msk [vmem:[#allocation3 + $0x148] sm:$0xff] %vm34, %v2743
  %2808 = vst.msk [vmem:[#allocation3 + $0x160] sm:$0xff] %vm34, %v2744
  %2809 = vst.msk [vmem:[#allocation3 + $0x178] sm:$0xff] %vm34, %v2745
  %2810 = vst.msk [vmem:[#allocation3 + $0x190] sm:$0xff] %vm34, %v2746
  %2811 = vst.msk [vmem:[#allocation3 + $0x1a8] sm:$0xff] %vm34, %v2747
  %2812 = vst.msk [vmem:[#allocation3 + $0x1c0] sm:$0xff] %vm34, %v2748
  %2813 = vst.msk [vmem:[#allocation3 + $0x1d8] sm:$0xff] %vm34, %v2749
  %2814 = vst.msk [vmem:[#allocation3 + $0x1f0] sm:$0xff] %vm34, %v2750
  %2815 = vst.msk [vmem:[#allocation3 + $0x208] sm:$0xff] %vm34, %v2751
  %2816 = vst.msk [vmem:[#allocation3 + $0x220] sm:$0xff] %vm34, %v2752
  %2817 = vst.msk [vmem:[#allocation3 + $0x238] sm:$0xff] %vm34, %v2753
  %2818 = vst.msk [vmem:[#allocation3 + $0x250] sm:$0xff] %vm34, %v2754
  %2819 = vst.msk [vmem:[#allocation3 + $0x268] sm:$0xff] %vm34, %v2755
  %2820 = vst.msk [vmem:[#allocation3 + $0x280] sm:$0xff] %vm34, %v2756
  %2821 = vst.msk [vmem:[#allocation3 + $0x298] sm:$0xff] %vm34, %v2757
  %2822 = vst.msk [vmem:[#allocation3 + $0x2b0] sm:$0xff] %vm34, %v2758
  %2823 = vst.msk [vmem:[#allocation3 + $0x2c8] sm:$0xff] %vm34, %v2759
  %2824 = vst.msk [vmem:[#allocation3 + $0x2e0] sm:$0xff] %vm34, %v2760
  %2825 = vst.msk [vmem:[#allocation3 + $0x2f8] sm:$0xff] %vm34, %v2761
  %2826 = vst.msk [vmem:[#allocation3 + $0x310] sm:$0xff] %vm34, %v2762
  %2827 = vst.msk [vmem:[#allocation3 + $0x328] sm:$0xff] %vm34, %v2763
  %2828 = vst.msk [vmem:[#allocation3 + $0x340] sm:$0xff] %vm34, %v2764
  %2829 = vst.msk [vmem:[#allocation3 + $0x358] sm:$0xff] %vm34, %v2765
  %2830 = vst.msk [vmem:[#allocation3 + $0x370] sm:$0xff] %vm34, %v2766
  %2831 = vst.msk [vmem:[#allocation3 + $0x388] sm:$0xff] %vm34, %v2767
  %2832 = vst.msk [vmem:[#allocation3 + $0x3a0] sm:$0xff] %vm34, %v2768
  %2833 = vst.msk [vmem:[#allocation3 + $0x3b8] sm:$0xff] %vm34, %v2769
  %2834 = vst.msk [vmem:[#allocation3 + $0x3d0] sm:$0xff] %vm34, %v2770
  %2835 = vst.msk [vmem:[#allocation3 + $0x3e8] sm:$0xff] %vm34, %v2771
  %2836 = vst.msk [vmem:[#allocation3 + $0x400] sm:$0xff] %vm34, %v2772
  %2837 = vst.msk [vmem:[#allocation3 + $0x418] sm:$0xff] %vm34, %v2773
  %2838 = vst.msk [vmem:[#allocation3 + $0x430] sm:$0xff] %vm34, %v2774
  %2839 = vst.msk [vmem:[#allocation3 + $0x448] sm:$0xff] %vm34, %v2775
  %2840 = vst.msk [vmem:[#allocation3 + $0x460] sm:$0xff] %vm34, %v2776
  %2841 = vst.msk [vmem:[#allocation3 + $0x478] sm:$0xff] %vm34, %v2777
  %2842 = vst.msk [vmem:[#allocation3 + $0x490] sm:$0xff] %vm34, %v2778
  %2843 = vst.msk [vmem:[#allocation3 + $0x4a8] sm:$0xff] %vm34, %v2779
  %2844 = vst.msk [vmem:[#allocation3 + $0x4c0] sm:$0xff] %vm34, %v2780
  %2845 = vst.msk [vmem:[#allocation3 + $0x4d8] sm:$0xff] %vm34, %v2781
  %2846 = vst.msk [vmem:[#allocation3 + $0x4f0] sm:$0xff] %vm34, %v2782
  %2847 = vst.msk [vmem:[#allocation3 + $0x508] sm:$0xff] %vm34, %v2783
  %2848 = vst.msk [vmem:[#allocation3 + $0x520] sm:$0xff] %vm34, %v2784
  %2849 = vst.msk [vmem:[#allocation3 + $0x538] sm:$0xff] %vm34, %v2785
  %2850 = vst.msk [vmem:[#allocation3 + $0x550] sm:$0xff] %vm34, %v2786
  %2851 = vst.msk [vmem:[#allocation3 + $0x568] sm:$0xff] %vm34, %v2787
  %2852 = vst.msk [vmem:[#allocation3 + $0x580] sm:$0xff] %vm34, %v2788
  %2853 = vst.msk [vmem:[#allocation3 + $0x598] sm:$0xff] %vm34, %v2789
  %2854 = vst.msk [vmem:[#allocation3 + $0x5b0] sm:$0xff] %vm34, %v2790
  %2855 = vst.msk [vmem:[#allocation3 + $0x5c8] sm:$0xff] %vm34, %v2791
  %2856 = vst.msk [vmem:[#allocation3 + $0x5e0] sm:$0xff] %vm34, %v2792
  %2857 = vst.msk [vmem:[#allocation3 + $0x5f8] sm:$0xff] %vm34, %v2793
  %v2858 = vld [vmem:[#allocation3] sm:$0xff]
  %v2859 = vld [vmem:[#allocation3 + $0x8] sm:$0xff]
  %v2860 = vld [vmem:[#allocation3 + $0x10] sm:$0xff]
  %v2861 = vld [vmem:[#allocation3 + $0x18] sm:$0xff]
  %v2862 = vld [vmem:[#allocation3 + $0x20] sm:$0xff]
  %v2863 = vld [vmem:[#allocation3 + $0x28] sm:$0xff]
  %v2864 = vld [vmem:[#allocation3 + $0x30] sm:$0xff]
  %v2865 = vld [vmem:[#allocation3 + $0x38] sm:$0xff]
  %v2866 = vld [vmem:[#allocation3 + $0x40] sm:$0xff]
  %v2867 = vld [vmem:[#allocation3 + $0x48] sm:$0xff]
  %v2868 = vld [vmem:[#allocation3 + $0x50] sm:$0xff]
  %v2869 = vld [vmem:[#allocation3 + $0x58] sm:$0xff]
  %v2870 = vld [vmem:[#allocation3 + $0x60] sm:$0xff]
  %v2871 = vld [vmem:[#allocation3 + $0x68] sm:$0xff]
  %v2872 = vld [vmem:[#allocation3 + $0x70] sm:$0xff]
  %v2873 = vld [vmem:[#allocation3 + $0x78] sm:$0xff]
  %v2874 = vld [vmem:[#allocation3 + $0x80] sm:$0xff]
  %v2875 = vld [vmem:[#allocation3 + $0x88] sm:$0xff]
  %v2876 = vld [vmem:[#allocation3 + $0x90] sm:$0xff]
  %v2877 = vld [vmem:[#allocation3 + $0x98] sm:$0xff]
  %v2878 = vld [vmem:[#allocation3 + $0xa0] sm:$0xff]
  %v2879 = vld [vmem:[#allocation3 + $0xa8] sm:$0xff]
  %v2880 = vld [vmem:[#allocation3 + $0xb0] sm:$0xff]
  %v2881 = vld [vmem:[#allocation3 + $0xb8] sm:$0xff]
  %v2882 = vld [vmem:[#allocation3 + $0xc0] sm:$0xff]
  %v2883 = vld [vmem:[#allocation3 + $0xc8] sm:$0xff]
  %v2884 = vld [vmem:[#allocation3 + $0xd0] sm:$0xff]
  %v2885 = vld [vmem:[#allocation3 + $0xd8] sm:$0xff]
  %v2886 = vld [vmem:[#allocation3 + $0xe0] sm:$0xff]
  %v2887 = vld [vmem:[#allocation3 + $0xe8] sm:$0xff]
  %v2888 = vld [vmem:[#allocation3 + $0xf0] sm:$0xff]
  %v2889 = vld [vmem:[#allocation3 + $0xf8] sm:$0xff]
  %v2890 = vld [vmem:[#allocation3 + $0x100] sm:$0xff]
  %v2891 = vld [vmem:[#allocation3 + $0x108] sm:$0xff]
  %v2892 = vld [vmem:[#allocation3 + $0x110] sm:$0xff]
  %v2893 = vld [vmem:[#allocation3 + $0x118] sm:$0xff]
  %v2894 = vld [vmem:[#allocation3 + $0x120] sm:$0xff]
  %v2895 = vld [vmem:[#allocation3 + $0x128] sm:$0xff]
  %v2896 = vld [vmem:[#allocation3 + $0x130] sm:$0xff]
  %v2897 = vld [vmem:[#allocation3 + $0x138] sm:$0xff]
  %v2898 = vld [vmem:[#allocation3 + $0x140] sm:$0xff]
  %v2899 = vld [vmem:[#allocation3 + $0x148] sm:$0xff]
  %v2900 = vld [vmem:[#allocation3 + $0x150] sm:$0xff]
  %v2901 = vld [vmem:[#allocation3 + $0x158] sm:$0xff]
  %v2902 = vld [vmem:[#allocation3 + $0x160] sm:$0xff]
  %v2903 = vld [vmem:[#allocation3 + $0x168] sm:$0xff]
  %v2904 = vld [vmem:[#allocation3 + $0x170] sm:$0xff]
  %v2905 = vld [vmem:[#allocation3 + $0x178] sm:$0xff]
  %v2906 = vld [vmem:[#allocation3 + $0x180] sm:$0xff]
  %v2907 = vld [vmem:[#allocation3 + $0x188] sm:$0xff]
  %v2908 = vld [vmem:[#allocation3 + $0x190] sm:$0xff]
  %v2909 = vld [vmem:[#allocation3 + $0x198] sm:$0xff]
  %v2910 = vld [vmem:[#allocation3 + $0x1a0] sm:$0xff]
  %v2911 = vld [vmem:[#allocation3 + $0x1a8] sm:$0xff]
  %v2912 = vld [vmem:[#allocation3 + $0x1b0] sm:$0xff]
  %v2913 = vld [vmem:[#allocation3 + $0x1b8] sm:$0xff]
  %v2914 = vld [vmem:[#allocation3 + $0x1c0] sm:$0xff]
  %v2915 = vld [vmem:[#allocation3 + $0x1c8] sm:$0xff]
  %v2916 = vld [vmem:[#allocation3 + $0x1d0] sm:$0xff]
  %v2917 = vld [vmem:[#allocation3 + $0x1d8] sm:$0xff]
  %v2918 = vld [vmem:[#allocation3 + $0x1e0] sm:$0xff]
  %v2919 = vld [vmem:[#allocation3 + $0x1e8] sm:$0xff]
  %v2920 = vld [vmem:[#allocation3 + $0x1f0] sm:$0xff]
  %v2921 = vld [vmem:[#allocation3 + $0x1f8] sm:$0xff]
  %v2922 = vld [vmem:[#allocation3 + $0x200] sm:$0xff]
  %v2923 = vld [vmem:[#allocation3 + $0x208] sm:$0xff]
  %v2924 = vld [vmem:[#allocation3 + $0x210] sm:$0xff]
  %v2925 = vld [vmem:[#allocation3 + $0x218] sm:$0xff]
  %v2926 = vld [vmem:[#allocation3 + $0x220] sm:$0xff]
  %v2927 = vld [vmem:[#allocation3 + $0x228] sm:$0xff]
  %v2928 = vld [vmem:[#allocation3 + $0x230] sm:$0xff]
  %v2929 = vld [vmem:[#allocation3 + $0x238] sm:$0xff]
  %v2930 = vld [vmem:[#allocation3 + $0x240] sm:$0xff]
  %v2931 = vld [vmem:[#allocation3 + $0x248] sm:$0xff]
  %v2932 = vld [vmem:[#allocation3 + $0x250] sm:$0xff]
  %v2933 = vld [vmem:[#allocation3 + $0x258] sm:$0xff]
  %v2934 = vld [vmem:[#allocation3 + $0x260] sm:$0xff]
  %v2935 = vld [vmem:[#allocation3 + $0x268] sm:$0xff]
  %v2936 = vld [vmem:[#allocation3 + $0x270] sm:$0xff]
  %v2937 = vld [vmem:[#allocation3 + $0x278] sm:$0xff]
  %v2938 = vld [vmem:[#allocation3 + $0x280] sm:$0xff]
  %v2939 = vld [vmem:[#allocation3 + $0x288] sm:$0xff]
  %v2940 = vld [vmem:[#allocation3 + $0x290] sm:$0xff]
  %v2941 = vld [vmem:[#allocation3 + $0x298] sm:$0xff]
  %v2942 = vld [vmem:[#allocation3 + $0x2a0] sm:$0xff]
  %v2943 = vld [vmem:[#allocation3 + $0x2a8] sm:$0xff]
  %v2944 = vld [vmem:[#allocation3 + $0x2b0] sm:$0xff]
  %v2945 = vld [vmem:[#allocation3 + $0x2b8] sm:$0xff]
  %v2946 = vld [vmem:[#allocation3 + $0x2c0] sm:$0xff]
  %v2947 = vld [vmem:[#allocation3 + $0x2c8] sm:$0xff]
  %v2948 = vld [vmem:[#allocation3 + $0x2d0] sm:$0xff]
  %v2949 = vld [vmem:[#allocation3 + $0x2d8] sm:$0xff]
  %v2950 = vld [vmem:[#allocation3 + $0x2e0] sm:$0xff]
  %v2951 = vld [vmem:[#allocation3 + $0x2e8] sm:$0xff]
  %v2952 = vld [vmem:[#allocation3 + $0x2f0] sm:$0xff]
  %v2953 = vld [vmem:[#allocation3 + $0x2f8] sm:$0xff]
  %v2954 = vld [vmem:[#allocation3 + $0x300] sm:$0xff]
  %v2955 = vld [vmem:[#allocation3 + $0x308] sm:$0xff]
  %v2956 = vld [vmem:[#allocation3 + $0x310] sm:$0xff]
  %v2957 = vld [vmem:[#allocation3 + $0x318] sm:$0xff]
  %v2958 = vld [vmem:[#allocation3 + $0x320] sm:$0xff]
  %v2959 = vld [vmem:[#allocation3 + $0x328] sm:$0xff]
  %v2960 = vld [vmem:[#allocation3 + $0x330] sm:$0xff]
  %v2961 = vld [vmem:[#allocation3 + $0x338] sm:$0xff]
  %v2962 = vld [vmem:[#allocation3 + $0x340] sm:$0xff]
  %v2963 = vld [vmem:[#allocation3 + $0x348] sm:$0xff]
  %v2964 = vld [vmem:[#allocation3 + $0x350] sm:$0xff]
  %v2965 = vld [vmem:[#allocation3 + $0x358] sm:$0xff]
  %v2966 = vld [vmem:[#allocation3 + $0x360] sm:$0xff]
  %v2967 = vld [vmem:[#allocation3 + $0x368] sm:$0xff]
  %v2968 = vld [vmem:[#allocation3 + $0x370] sm:$0xff]
  %v2969 = vld [vmem:[#allocation3 + $0x378] sm:$0xff]
  %v2970 = vld [vmem:[#allocation3 + $0x380] sm:$0xff]
  %v2971 = vld [vmem:[#allocation3 + $0x388] sm:$0xff]
  %v2972 = vld [vmem:[#allocation3 + $0x390] sm:$0xff]
  %v2973 = vld [vmem:[#allocation3 + $0x398] sm:$0xff]
  %v2974 = vld [vmem:[#allocation3 + $0x3a0] sm:$0xff]
  %v2975 = vld [vmem:[#allocation3 + $0x3a8] sm:$0xff]
  %v2976 = vld [vmem:[#allocation3 + $0x3b0] sm:$0xff]
  %v2977 = vld [vmem:[#allocation3 + $0x3b8] sm:$0xff]
  %v2978 = vld [vmem:[#allocation3 + $0x3c0] sm:$0xff]
  %v2979 = vld [vmem:[#allocation3 + $0x3c8] sm:$0xff]
  %v2980 = vld [vmem:[#allocation3 + $0x3d0] sm:$0xff]
  %v2981 = vld [vmem:[#allocation3 + $0x3d8] sm:$0xff]
  %v2982 = vld [vmem:[#allocation3 + $0x3e0] sm:$0xff]
  %v2983 = vld [vmem:[#allocation3 + $0x3e8] sm:$0xff]
  %v2984 = vld [vmem:[#allocation3 + $0x3f0] sm:$0xff]
  %v2985 = vld [vmem:[#allocation3 + $0x3f8] sm:$0xff]
  %v2986 = vld [vmem:[#allocation3 + $0x400] sm:$0xff]
  %v2987 = vld [vmem:[#allocation3 + $0x408] sm:$0xff]
  %v2988 = vld [vmem:[#allocation3 + $0x410] sm:$0xff]
  %v2989 = vld [vmem:[#allocation3 + $0x418] sm:$0xff]
  %v2990 = vld [vmem:[#allocation3 + $0x420] sm:$0xff]
  %v2991 = vld [vmem:[#allocation3 + $0x428] sm:$0xff]
  %v2992 = vld [vmem:[#allocation3 + $0x430] sm:$0xff]
  %v2993 = vld [vmem:[#allocation3 + $0x438] sm:$0xff]
  %v2994 = vld [vmem:[#allocation3 + $0x440] sm:$0xff]
  %v2995 = vld [vmem:[#allocation3 + $0x448] sm:$0xff]
  %v2996 = vld [vmem:[#allocation3 + $0x450] sm:$0xff]
  %v2997 = vld [vmem:[#allocation3 + $0x458] sm:$0xff]
  %v2998 = vld [vmem:[#allocation3 + $0x460] sm:$0xff]
  %v2999 = vld [vmem:[#allocation3 + $0x468] sm:$0xff]
  %v3000 = vld [vmem:[#allocation3 + $0x470] sm:$0xff]
  %v3001 = vld [vmem:[#allocation3 + $0x478] sm:$0xff]
  %v3002 = vld [vmem:[#allocation3 + $0x480] sm:$0xff]
  %v3003 = vld [vmem:[#allocation3 + $0x488] sm:$0xff]
  %v3004 = vld [vmem:[#allocation3 + $0x490] sm:$0xff]
  %v3005 = vld [vmem:[#allocation3 + $0x498] sm:$0xff]
  %v3006 = vld [vmem:[#allocation3 + $0x4a0] sm:$0xff]
  %v3007 = vld [vmem:[#allocation3 + $0x4a8] sm:$0xff]
  %v3008 = vld [vmem:[#allocation3 + $0x4b0] sm:$0xff]
  %v3009 = vld [vmem:[#allocation3 + $0x4b8] sm:$0xff]
  %v3010 = vld [vmem:[#allocation3 + $0x4c0] sm:$0xff]
  %v3011 = vld [vmem:[#allocation3 + $0x4c8] sm:$0xff]
  %v3012 = vld [vmem:[#allocation3 + $0x4d0] sm:$0xff]
  %v3013 = vld [vmem:[#allocation3 + $0x4d8] sm:$0xff]
  %v3014 = vld [vmem:[#allocation3 + $0x4e0] sm:$0xff]
  %v3015 = vld [vmem:[#allocation3 + $0x4e8] sm:$0xff]
  %v3016 = vld [vmem:[#allocation3 + $0x4f0] sm:$0xff]
  %v3017 = vld [vmem:[#allocation3 + $0x4f8] sm:$0xff]
  %v3018 = vld [vmem:[#allocation3 + $0x500] sm:$0xff]
  %v3019 = vld [vmem:[#allocation3 + $0x508] sm:$0xff]
  %v3020 = vld [vmem:[#allocation3 + $0x510] sm:$0xff]
  %v3021 = vld [vmem:[#allocation3 + $0x518] sm:$0xff]
  %v3022 = vld [vmem:[#allocation3 + $0x520] sm:$0xff]
  %v3023 = vld [vmem:[#allocation3 + $0x528] sm:$0xff]
  %v3024 = vld [vmem:[#allocation3 + $0x530] sm:$0xff]
  %v3025 = vld [vmem:[#allocation3 + $0x538] sm:$0xff]
  %v3026 = vld [vmem:[#allocation3 + $0x540] sm:$0xff]
  %v3027 = vld [vmem:[#allocation3 + $0x548] sm:$0xff]
  %v3028 = vld [vmem:[#allocation3 + $0x550] sm:$0xff]
  %v3029 = vld [vmem:[#allocation3 + $0x558] sm:$0xff]
  %v3030 = vld [vmem:[#allocation3 + $0x560] sm:$0xff]
  %v3031 = vld [vmem:[#allocation3 + $0x568] sm:$0xff]
  %v3032 = vld [vmem:[#allocation3 + $0x570] sm:$0xff]
  %v3033 = vld [vmem:[#allocation3 + $0x578] sm:$0xff]
  %v3034 = vld [vmem:[#allocation3 + $0x580] sm:$0xff]
  %v3035 = vld [vmem:[#allocation3 + $0x588] sm:$0xff]
  %v3036 = vld [vmem:[#allocation3 + $0x590] sm:$0xff]
  %v3037 = vld [vmem:[#allocation3 + $0x598] sm:$0xff]
  %v3038 = vld [vmem:[#allocation3 + $0x5a0] sm:$0xff]
  %v3039 = vld [vmem:[#allocation3 + $0x5a8] sm:$0xff]
  %v3040 = vld [vmem:[#allocation3 + $0x5b0] sm:$0xff]
  %v3041 = vld [vmem:[#allocation3 + $0x5b8] sm:$0xff]
  %v3042 = vld [vmem:[#allocation3 + $0x5c0] sm:$0xff]
  %v3043 = vld [vmem:[#allocation3 + $0x5c8] sm:$0xff]
  %v3044 = vld [vmem:[#allocation3 + $0x5d0] sm:$0xff]
  %v3045 = vld [vmem:[#allocation3 + $0x5d8] sm:$0xff]
  %v3046 = vld [vmem:[#allocation3 + $0x5e0] sm:$0xff]
  %v3047 = vld [vmem:[#allocation3 + $0x5e8] sm:$0xff]
  %v3048 = vld [vmem:[#allocation3 + $0x5f0] sm:$0xff]
  %v3049 = vld [vmem:[#allocation3 + $0x5f8] sm:$0xff]
  %v3050 = vld [vmem:[%s2] sm:$0xff]
  %v3051 = vld [vmem:[%s2 + $0x8] sm:$0xff]
  %v3052 = vld [vmem:[%s2 + $0x10] sm:$0xff]
  %v3053 = vld [vmem:[%s2 + $0x18] sm:$0xff]
  %v3054 = vld [vmem:[%s2 + $0x20] sm:$0xff]
  %v3055 = vld [vmem:[%s2 + $0x28] sm:$0xff]
  %v3056 = vld [vmem:[%s2 + $0x30] sm:$0xff]
  %v3057 = vld [vmem:[%s2 + $0x38] sm:$0xff]
  %v3058 = vld [vmem:[%s2 + $0x40] sm:$0xff]
  %v3059 = vld [vmem:[%s2 + $0x48] sm:$0xff]
  %v3060 = vld [vmem:[%s2 + $0x50] sm:$0xff]
  %v3061 = vld [vmem:[%s2 + $0x58] sm:$0xff]
  %v3062 = vld [vmem:[%s2 + $0x60] sm:$0xff]
  %v3063 = vld [vmem:[%s2 + $0x68] sm:$0xff]
  %v3064 = vld [vmem:[%s2 + $0x70] sm:$0xff]
  %v3065 = vld [vmem:[%s2 + $0x78] sm:$0xff]
  %v3066 = vld [vmem:[%s2 + $0x80] sm:$0xff]
  %v3067 = vld [vmem:[%s2 + $0x88] sm:$0xff]
  %v3068 = vld [vmem:[%s2 + $0x90] sm:$0xff]
  %v3069 = vld [vmem:[%s2 + $0x98] sm:$0xff]
  %v3070 = vld [vmem:[%s2 + $0xa0] sm:$0xff]
  %v3071 = vld [vmem:[%s2 + $0xa8] sm:$0xff]
  %v3072 = vld [vmem:[%s2 + $0xb0] sm:$0xff]
  %v3073 = vld [vmem:[%s2 + $0xb8] sm:$0xff]
  %v3074 = vld [vmem:[%s2 + $0xc0] sm:$0xff]
  %v3075 = vld [vmem:[%s2 + $0xc8] sm:$0xff]
  %v3076 = vld [vmem:[%s2 + $0xd0] sm:$0xff]
  %v3077 = vld [vmem:[%s2 + $0xd8] sm:$0xff]
  %v3078 = vld [vmem:[%s2 + $0xe0] sm:$0xff]
  %v3079 = vld [vmem:[%s2 + $0xe8] sm:$0xff]
  %v3080 = vld [vmem:[%s2 + $0xf0] sm:$0xff]
  %v3081 = vld [vmem:[%s2 + $0xf8] sm:$0xff]
  %v3082 = vld [vmem:[%s2 + $0x100] sm:$0xff]
  %v3083 = vld [vmem:[%s2 + $0x108] sm:$0xff]
  %v3084 = vld [vmem:[%s2 + $0x110] sm:$0xff]
  %v3085 = vld [vmem:[%s2 + $0x118] sm:$0xff]
  %v3086 = vld [vmem:[%s3] sm:$0x1]
  %v3088 = vlaneseq
  %v3089 = vshrl.u32 %v3088, 7
  %v3090 = vsub.s32 0, %v3089
  %v3091 = vrot.slane %v3086, %v3090
  %v3094 = vsel %vm34, %v2860, 0
  %v3097 = vsel %vm34, %v2863, 0
  %v3100 = vsel %vm34, %v2866, 0
  %v3103 = vsel %vm34, %v2869, 0
  %v3106 = vsel %vm34, %v2872, 0
  %v3109 = vsel %vm34, %v2875, 0
  %v3112 = vsel %vm34, %v2878, 0
  %v3115 = vsel %vm34, %v2881, 0
  %v3118 = vsel %vm34, %v2884, 0
  %v3121 = vsel %vm34, %v2887, 0
  %v3124 = vsel %vm34, %v2890, 0
  %v3127 = vsel %vm34, %v2893, 0
  %v3130 = vsel %vm34, %v2896, 0
  %v3133 = vsel %vm34, %v2899, 0
  %v3136 = vsel %vm34, %v2902, 0
  %v3139 = vsel %vm34, %v2905, 0
  %v3142 = vsel %vm34, %v2908, 0
  %v3145 = vsel %vm34, %v2911, 0
  %v3148 = vsel %vm34, %v2914, 0
  %v3151 = vsel %vm34, %v2917, 0
  %v3154 = vsel %vm34, %v2920, 0
  %v3157 = vsel %vm34, %v2923, 0
  %v3160 = vsel %vm34, %v2926, 0
  %v3163 = vsel %vm34, %v2929, 0
  %v3166 = vsel %vm34, %v2932, 0
  %v3169 = vsel %vm34, %v2935, 0
  %v3172 = vsel %vm34, %v2938, 0
  %v3175 = vsel %vm34, %v2941, 0
  %v3178 = vsel %vm34, %v2944, 0
  %v3181 = vsel %vm34, %v2947, 0
  %v3184 = vsel %vm34, %v2950, 0
  %v3187 = vsel %vm34, %v2953, 0
  %v3190 = vsel %vm34, %v2956, 0
  %v3193 = vsel %vm34, %v2959, 0
  %v3196 = vsel %vm34, %v2962, 0
  %v3199 = vsel %vm34, %v2965, 0
  %v3202 = vsel %vm34, %v2968, 0
  %v3205 = vsel %vm34, %v2971, 0
  %v3208 = vsel %vm34, %v2974, 0
  %v3211 = vsel %vm34, %v2977, 0
  %v3214 = vsel %vm34, %v2980, 0
  %v3217 = vsel %vm34, %v2983, 0
  %v3220 = vsel %vm34, %v2986, 0
  %v3223 = vsel %vm34, %v2989, 0
  %v3226 = vsel %vm34, %v2992, 0
  %v3229 = vsel %vm34, %v2995, 0
  %v3232 = vsel %vm34, %v2998, 0
  %v3235 = vsel %vm34, %v3001, 0
  %v3238 = vsel %vm34, %v3004, 0
  %v3241 = vsel %vm34, %v3007, 0
  %v3244 = vsel %vm34, %v3010, 0
  %v3247 = vsel %vm34, %v3013, 0
  %v3250 = vsel %vm34, %v3016, 0
  %v3253 = vsel %vm34, %v3019, 0
  %v3256 = vsel %vm34, %v3022, 0
  %v3259 = vsel %vm34, %v3025, 0
  %v3262 = vsel %vm34, %v3028, 0
  %v3265 = vsel %vm34, %v3031, 0
  %v3268 = vsel %vm34, %v3034, 0
  %v3271 = vsel %vm34, %v3037, 0
  %v3274 = vsel %vm34, %v3040, 0
  %v3277 = vsel %vm34, %v3043, 0
  %v3280 = vsel %vm34, %v3046, 0
  %v3283 = vsel %vm34, %v3049, 0
  %3285 = vmatprep.subr.mxu0 0.0
  %3286 = vmatpush1.msra.mxu0 %v3065
  %3287 = vmatprep.subr.mxu0 0.0
  %3288 = vmatpush1.msra.mxu0 %v3064
  %3289 = vmatprep.subr.mxu0 0.0
  %3290 = vmatpush1.msra.mxu0 %v3063
  %3291 = vmatprep.subr.mxu0 0.0
  %3292 = vmatpush1.msra.mxu0 %v3062
  %3293 = vmatprep.subr.mxu0 0.0
  %3294 = vmatpush1.msra.mxu0 %v3061
  %3295 = vmatprep.subr.mxu0 0.0
  %3296 = vmatpush1.msra.mxu0 %v3060
  %3297 = vmatprep.subr.mxu0 0.0
  %3298 = vmatpush1.msra.mxu0 %v3059
  %3299 = vmatprep.subr.mxu0 0.0
  %3300 = vmatpush1.msra.mxu0 %v3058
  %3301 = vmatprep.subr.mxu0 0.0
  %3302 = vmatpush1.msra.mxu0 %v3057
  %3303 = vmatprep.subr.mxu0 0.0
  %3304 = vmatpush1.msra.mxu0 %v3056
  %3305 = vmatprep.subr.mxu0 0.0
  %3306 = vmatpush1.msra.mxu0 %v3055
  %3307 = vmatprep.subr.mxu0 0.0
  %3308 = vmatpush1.msra.mxu0 %v3054
  %3309 = vmatprep.subr.mxu0 0.0
  %3310 = vmatpush1.msra.mxu0 %v3053
  %3311 = vmatprep.subr.mxu0 0.0
  %3312 = vmatpush1.msra.mxu0 %v3052
  %3313 = vmatprep.subr.mxu0 0.0
  %3314 = vmatpush1.msra.mxu0 %v3051
  %3315 = vmatprep.subr.mxu0 0.0
  %3316 = vmatpush1.msra.mxu0 %v3050
  %3317 = vmatprep.subr.mxu0 0.0
  %3318 = vmatpush2.msra.mxu0 %v3081
  %3319 = vmatprep.subr.mxu0 0.0
  %3320 = vmatpush2.msra.mxu0 %v3080
  %3321 = vmatprep.subr.mxu0 0.0
  %3322 = vmatpush2.msra.mxu0 %v3079
  %3323 = vmatprep.subr.mxu0 0.0
  %3324 = vmatpush2.msra.mxu0 %v3078
  %3325 = vmatprep.subr.mxu0 0.0
  %3326 = vmatpush2.msra.mxu0 %v3077
  %3327 = vmatprep.subr.mxu0 0.0
  %3328 = vmatpush2.msra.mxu0 %v3076
  %3329 = vmatprep.subr.mxu0 0.0
  %3330 = vmatpush2.msra.mxu0 %v3075
  %3331 = vmatprep.subr.mxu0 0.0
  %3332 = vmatpush2.msra.mxu0 %v3074
  %3333 = vmatprep.subr.mxu0 0.0
  %3334 = vmatpush2.msra.mxu0 %v3073
  %3335 = vmatprep.subr.mxu0 0.0
  %3336 = vmatpush2.msra.mxu0 %v3072
  %3337 = vmatprep.subr.mxu0 0.0
  %3338 = vmatpush2.msra.mxu0 %v3071
  %3339 = vmatprep.subr.mxu0 0.0
  %3340 = vmatpush2.msra.mxu0 %v3070
  %3341 = vmatprep.subr.mxu0 0.0
  %3342 = vmatpush2.msra.mxu0 %v3069
  %3343 = vmatprep.subr.mxu0 0.0
  %3344 = vmatpush2.msra.mxu0 %v3068
  %3345 = vmatprep.subr.mxu0 0.0
  %3346 = vmatpush2.msra.mxu0 %v3067
  %3347 = vmatprep.subr.mxu0 0.0
  %3348 = vmatpush2.msra.mxu0 %v3066
  %3349 = vmatprep.mubr.f32.mxu0 %v2859
  %3350 = vmatmul.mubr.f32.gmra.mxu0 %v2858
  %v3351 = vpop.f32.mrf.mxu0
  %v3352 = vadd.f32 %v3091, %v3351
  %v3353 = vpop.f32.mrf.mxu0
  %3354 = vmatprep.mubr.f32.mxu0 %v2862
  %3355 = vmatmul.mubr.f32.gmra.mxu0 %v2861
  %v3356 = vpop.f32.mrf.mxu0
  %v3357 = vadd.f32 %v3091, %v3356
  %v3358 = vpop.f32.mrf.mxu0
  %3359 = vmatprep.mubr.f32.mxu0 %v2865
  %3360 = vmatmul.mubr.f32.gmra.mxu0 %v2864
  %v3361 = vpop.f32.mrf.mxu0
  %v3362 = vadd.f32 %v3091, %v3361
  %v3363 = vpop.f32.mrf.mxu0
  %3364 = vmatprep.mubr.f32.mxu0 %v2868
  %3365 = vmatmul.mubr.f32.gmra.mxu0 %v2867
  %v3366 = vpop.f32.mrf.mxu0
  %v3367 = vadd.f32 %v3091, %v3366
  %v3368 = vpop.f32.mrf.mxu0
  %3369 = vmatprep.mubr.f32.mxu0 %v2871
  %3370 = vmatmul.mubr.f32.gmra.mxu0 %v2870
  %v3371 = vpop.f32.mrf.mxu0
  %v3372 = vadd.f32 %v3091, %v3371
  %v3373 = vpop.f32.mrf.mxu0
  %3374 = vmatprep.mubr.f32.mxu0 %v2874
  %3375 = vmatmul.mubr.f32.gmra.mxu0 %v2873
  %v3376 = vpop.f32.mrf.mxu0
  %v3377 = vadd.f32 %v3091, %v3376
  %v3378 = vpop.f32.mrf.mxu0
  %3379 = vmatprep.mubr.f32.mxu0 %v2877
  %3380 = vmatmul.mubr.f32.gmra.mxu0 %v2876
  %v3381 = vpop.f32.mrf.mxu0
  %v3382 = vadd.f32 %v3091, %v3381
  %v3383 = vpop.f32.mrf.mxu0
  %3384 = vmatprep.mubr.f32.mxu0 %v2880
  %3385 = vmatmul.mubr.f32.gmra.mxu0 %v2879
  %v3386 = vpop.f32.mrf.mxu0
  %v3387 = vadd.f32 %v3091, %v3386
  %v3388 = vpop.f32.mrf.mxu0
  %3389 = vmatprep.mubr.f32.mxu0 %v2883
  %3390 = vmatmul.mubr.f32.gmra.mxu0 %v2882
  %v3391 = vpop.f32.mrf.mxu0
  %v3392 = vadd.f32 %v3091, %v3391
  %v3393 = vpop.f32.mrf.mxu0
  %3394 = vmatprep.mubr.f32.mxu0 %v2886
  %3395 = vmatmul.mubr.f32.gmra.mxu0 %v2885
  %v3396 = vpop.f32.mrf.mxu0
  %v3397 = vadd.f32 %v3091, %v3396
  %v3398 = vpop.f32.mrf.mxu0
  %3399 = vmatprep.mubr.f32.mxu0 %v2889
  %3400 = vmatmul.mubr.f32.gmra.mxu0 %v2888
  %v3401 = vpop.f32.mrf.mxu0
  %v3402 = vadd.f32 %v3091, %v3401
  %v3403 = vpop.f32.mrf.mxu0
  %3404 = vmatprep.mubr.f32.mxu0 %v2892
  %3405 = vmatmul.mubr.f32.gmra.mxu0 %v2891
  %v3406 = vpop.f32.mrf.mxu0
  %v3407 = vadd.f32 %v3091, %v3406
  %v3408 = vpop.f32.mrf.mxu0
  %3409 = vmatprep.mubr.f32.mxu0 %v2895
  %3410 = vmatmul.mubr.f32.gmra.mxu0 %v2894
  %v3411 = vpop.f32.mrf.mxu0
  %v3412 = vadd.f32 %v3091, %v3411
  %v3413 = vpop.f32.mrf.mxu0
  %3414 = vmatprep.mubr.f32.mxu0 %v2898
  %3415 = vmatmul.mubr.f32.gmra.mxu0 %v2897
  %v3416 = vpop.f32.mrf.mxu0
  %v3417 = vadd.f32 %v3091, %v3416
  %v3418 = vpop.f32.mrf.mxu0
  %3419 = vmatprep.mubr.f32.mxu0 %v2901
  %3420 = vmatmul.mubr.f32.gmra.mxu0 %v2900
  %v3421 = vpop.f32.mrf.mxu0
  %v3422 = vadd.f32 %v3091, %v3421
  %v3423 = vpop.f32.mrf.mxu0
  %3424 = vmatprep.mubr.f32.mxu0 %v2904
  %3425 = vmatmul.mubr.f32.gmra.mxu0 %v2903
  %v3426 = vpop.f32.mrf.mxu0
  %v3427 = vadd.f32 %v3091, %v3426
  %v3428 = vpop.f32.mrf.mxu0
  %3429 = vmatprep.mubr.f32.mxu0 %v2907
  %3430 = vmatmul.mubr.f32.gmra.mxu0 %v2906
  %v3431 = vpop.f32.mrf.mxu0
  %v3432 = vadd.f32 %v3091, %v3431
  %v3433 = vpop.f32.mrf.mxu0
  %3434 = vmatprep.mubr.f32.mxu0 %v2910
  %3435 = vmatmul.mubr.f32.gmra.mxu0 %v2909
  %v3436 = vpop.f32.mrf.mxu0
  %v3437 = vadd.f32 %v3091, %v3436
  %v3438 = vpop.f32.mrf.mxu0
  %3439 = vmatprep.mubr.f32.mxu0 %v2913
  %3440 = vmatmul.mubr.f32.gmra.mxu0 %v2912
  %v3441 = vpop.f32.mrf.mxu0
  %v3442 = vadd.f32 %v3091, %v3441
  %v3443 = vpop.f32.mrf.mxu0
  %3444 = vmatprep.mubr.f32.mxu0 %v2916
  %3445 = vmatmul.mubr.f32.gmra.mxu0 %v2915
  %v3446 = vpop.f32.mrf.mxu0
  %v3447 = vadd.f32 %v3091, %v3446
  %v3448 = vpop.f32.mrf.mxu0
  %3449 = vmatprep.mubr.f32.mxu0 %v2919
  %3450 = vmatmul.mubr.f32.gmra.mxu0 %v2918
  %v3451 = vpop.f32.mrf.mxu0
  %v3452 = vadd.f32 %v3091, %v3451
  %v3453 = vpop.f32.mrf.mxu0
  %3454 = vmatprep.mubr.f32.mxu0 %v2922
  %3455 = vmatmul.mubr.f32.gmra.mxu0 %v2921
  %v3456 = vpop.f32.mrf.mxu0
  %v3457 = vadd.f32 %v3091, %v3456
  %v3458 = vpop.f32.mrf.mxu0
  %3459 = vmatprep.mubr.f32.mxu0 %v2925
  %3460 = vmatmul.mubr.f32.gmra.mxu0 %v2924
  %v3461 = vpop.f32.mrf.mxu0
  %v3462 = vadd.f32 %v3091, %v3461
  %v3463 = vpop.f32.mrf.mxu0
  %3464 = vmatprep.mubr.f32.mxu0 %v2928
  %3465 = vmatmul.mubr.f32.gmra.mxu0 %v2927
  %v3466 = vpop.f32.mrf.mxu0
  %v3467 = vadd.f32 %v3091, %v3466
  %v3468 = vpop.f32.mrf.mxu0
  %3469 = vmatprep.mubr.f32.mxu0 %v2931
  %3470 = vmatmul.mubr.f32.gmra.mxu0 %v2930
  %v3471 = vpop.f32.mrf.mxu0
  %v3472 = vadd.f32 %v3091, %v3471
  %v3473 = vpop.f32.mrf.mxu0
  %3474 = vmatprep.mubr.f32.mxu0 %v2934
  %3475 = vmatmul.mubr.f32.gmra.mxu0 %v2933
  %v3476 = vpop.f32.mrf.mxu0
  %v3477 = vadd.f32 %v3091, %v3476
  %v3478 = vpop.f32.mrf.mxu0
  %3479 = vmatprep.mubr.f32.mxu0 %v2937
  %3480 = vmatmul.mubr.f32.gmra.mxu0 %v2936
  %v3481 = vpop.f32.mrf.mxu0
  %v3482 = vadd.f32 %v3091, %v3481
  %v3483 = vpop.f32.mrf.mxu0
  %3484 = vmatprep.mubr.f32.mxu0 %v2940
  %3485 = vmatmul.mubr.f32.gmra.mxu0 %v2939
  %v3486 = vpop.f32.mrf.mxu0
  %v3487 = vadd.f32 %v3091, %v3486
  %v3488 = vpop.f32.mrf.mxu0
  %3489 = vmatprep.mubr.f32.mxu0 %v2943
  %3490 = vmatmul.mubr.f32.gmra.mxu0 %v2942
  %v3491 = vpop.f32.mrf.mxu0
  %v3492 = vadd.f32 %v3091, %v3491
  %v3493 = vpop.f32.mrf.mxu0
  %3494 = vmatprep.mubr.f32.mxu0 %v2946
  %3495 = vmatmul.mubr.f32.gmra.mxu0 %v2945
  %v3496 = vpop.f32.mrf.mxu0
  %v3497 = vadd.f32 %v3091, %v3496
  %v3498 = vpop.f32.mrf.mxu0
  %3499 = vmatprep.mubr.f32.mxu0 %v2949
  %3500 = vmatmul.mubr.f32.gmra.mxu0 %v2948
  %v3501 = vpop.f32.mrf.mxu0
  %v3502 = vadd.f32 %v3091, %v3501
  %v3503 = vpop.f32.mrf.mxu0
  %3504 = vmatprep.mubr.f32.mxu0 %v2952
  %3505 = vmatmul.mubr.f32.gmra.mxu0 %v2951
  %v3506 = vpop.f32.mrf.mxu0
  %v3507 = vadd.f32 %v3091, %v3506
  %v3508 = vpop.f32.mrf.mxu0
  %3509 = vmatprep.mubr.f32.mxu0 %v2955
  %3510 = vmatmul.mubr.f32.gmra.mxu0 %v2954
  %v3511 = vpop.f32.mrf.mxu0
  %v3512 = vadd.f32 %v3091, %v3511
  %v3513 = vpop.f32.mrf.mxu0
  %3514 = vmatprep.mubr.f32.mxu0 %v2958
  %3515 = vmatmul.mubr.f32.gmra.mxu0 %v2957
  %v3516 = vpop.f32.mrf.mxu0
  %v3517 = vadd.f32 %v3091, %v3516
  %v3518 = vpop.f32.mrf.mxu0
  %3519 = vmatprep.mubr.f32.mxu0 %v2961
  %3520 = vmatmul.mubr.f32.gmra.mxu0 %v2960
  %v3521 = vpop.f32.mrf.mxu0
  %v3522 = vadd.f32 %v3091, %v3521
  %v3523 = vpop.f32.mrf.mxu0
  %3524 = vmatprep.mubr.f32.mxu0 %v2964
  %3525 = vmatmul.mubr.f32.gmra.mxu0 %v2963
  %v3526 = vpop.f32.mrf.mxu0
  %v3527 = vadd.f32 %v3091, %v3526
  %v3528 = vpop.f32.mrf.mxu0
  %3529 = vmatprep.mubr.f32.mxu0 %v2967
  %3530 = vmatmul.mubr.f32.gmra.mxu0 %v2966
  %v3531 = vpop.f32.mrf.mxu0
  %v3532 = vadd.f32 %v3091, %v3531
  %v3533 = vpop.f32.mrf.mxu0
  %3534 = vmatprep.mubr.f32.mxu0 %v2970
  %3535 = vmatmul.mubr.f32.gmra.mxu0 %v2969
  %v3536 = vpop.f32.mrf.mxu0
  %v3537 = vadd.f32 %v3091, %v3536
  %v3538 = vpop.f32.mrf.mxu0
  %3539 = vmatprep.mubr.f32.mxu0 %v2973
  %3540 = vmatmul.mubr.f32.gmra.mxu0 %v2972
  %v3541 = vpop.f32.mrf.mxu0
  %v3542 = vadd.f32 %v3091, %v3541
  %v3543 = vpop.f32.mrf.mxu0
  %3544 = vmatprep.mubr.f32.mxu0 %v2976
  %3545 = vmatmul.mubr.f32.gmra.mxu0 %v2975
  %v3546 = vpop.f32.mrf.mxu0
  %v3547 = vadd.f32 %v3091, %v3546
  %v3548 = vpop.f32.mrf.mxu0
  %3549 = vmatprep.mubr.f32.mxu0 %v2979
  %3550 = vmatmul.mubr.f32.gmra.mxu0 %v2978
  %v3551 = vpop.f32.mrf.mxu0
  %v3552 = vadd.f32 %v3091, %v3551
  %v3553 = vpop.f32.mrf.mxu0
  %3554 = vmatprep.mubr.f32.mxu0 %v2982
  %3555 = vmatmul.mubr.f32.gmra.mxu0 %v2981
  %v3556 = vpop.f32.mrf.mxu0
  %v3557 = vadd.f32 %v3091, %v3556
  %v3558 = vpop.f32.mrf.mxu0
  %3559 = vmatprep.mubr.f32.mxu0 %v2985
  %3560 = vmatmul.mubr.f32.gmra.mxu0 %v2984
  %v3561 = vpop.f32.mrf.mxu0
  %v3562 = vadd.f32 %v3091, %v3561
  %v3563 = vpop.f32.mrf.mxu0
  %3564 = vmatprep.mubr.f32.mxu0 %v2988
  %3565 = vmatmul.mubr.f32.gmra.mxu0 %v2987
  %v3566 = vpop.f32.mrf.mxu0
  %v3567 = vadd.f32 %v3091, %v3566
  %v3568 = vpop.f32.mrf.mxu0
  %3569 = vmatprep.mubr.f32.mxu0 %v2991
  %3570 = vmatmul.mubr.f32.gmra.mxu0 %v2990
  %v3571 = vpop.f32.mrf.mxu0
  %v3572 = vadd.f32 %v3091, %v3571
  %v3573 = vpop.f32.mrf.mxu0
  %3574 = vmatprep.mubr.f32.mxu0 %v2994
  %3575 = vmatmul.mubr.f32.gmra.mxu0 %v2993
  %v3576 = vpop.f32.mrf.mxu0
  %v3577 = vadd.f32 %v3091, %v3576
  %v3578 = vpop.f32.mrf.mxu0
  %3579 = vmatprep.mubr.f32.mxu0 %v2997
  %3580 = vmatmul.mubr.f32.gmra.mxu0 %v2996
  %v3581 = vpop.f32.mrf.mxu0
  %v3582 = vadd.f32 %v3091, %v3581
  %v3583 = vpop.f32.mrf.mxu0
  %3584 = vmatprep.mubr.f32.mxu0 %v3000
  %3585 = vmatmul.mubr.f32.gmra.mxu0 %v2999
  %v3586 = vpop.f32.mrf.mxu0
  %v3587 = vadd.f32 %v3091, %v3586
  %v3588 = vpop.f32.mrf.mxu0
  %3589 = vmatprep.mubr.f32.mxu0 %v3003
  %3590 = vmatmul.mubr.f32.gmra.mxu0 %v3002
  %v3591 = vpop.f32.mrf.mxu0
  %v3592 = vadd.f32 %v3091, %v3591
  %v3593 = vpop.f32.mrf.mxu0
  %3594 = vmatprep.mubr.f32.mxu0 %v3006
  %3595 = vmatmul.mubr.f32.gmra.mxu0 %v3005
  %v3596 = vpop.f32.mrf.mxu0
  %v3597 = vadd.f32 %v3091, %v3596
  %v3598 = vpop.f32.mrf.mxu0
  %3599 = vmatprep.mubr.f32.mxu0 %v3009
  %3600 = vmatmul.mubr.f32.gmra.mxu0 %v3008
  %v3601 = vpop.f32.mrf.mxu0
  %v3602 = vadd.f32 %v3091, %v3601
  %v3603 = vpop.f32.mrf.mxu0
  %3604 = vmatprep.mubr.f32.mxu0 %v3012
  %3605 = vmatmul.mubr.f32.gmra.mxu0 %v3011
  %v3606 = vpop.f32.mrf.mxu0
  %v3607 = vadd.f32 %v3091, %v3606
  %v3608 = vpop.f32.mrf.mxu0
  %3609 = vmatprep.mubr.f32.mxu0 %v3015
  %3610 = vmatmul.mubr.f32.gmra.mxu0 %v3014
  %v3611 = vpop.f32.mrf.mxu0
  %v3612 = vadd.f32 %v3091, %v3611
  %v3613 = vpop.f32.mrf.mxu0
  %3614 = vmatprep.mubr.f32.mxu0 %v3018
  %3615 = vmatmul.mubr.f32.gmra.mxu0 %v3017
  %v3616 = vpop.f32.mrf.mxu0
  %v3617 = vadd.f32 %v3091, %v3616
  %v3618 = vpop.f32.mrf.mxu0
  %3619 = vmatprep.mubr.f32.mxu0 %v3021
  %3620 = vmatmul.mubr.f32.gmra.mxu0 %v3020
  %v3621 = vpop.f32.mrf.mxu0
  %v3622 = vadd.f32 %v3091, %v3621
  %v3623 = vpop.f32.mrf.mxu0
  %3624 = vmatprep.mubr.f32.mxu0 %v3024
  %3625 = vmatmul.mubr.f32.gmra.mxu0 %v3023
  %v3626 = vpop.f32.mrf.mxu0
  %v3627 = vadd.f32 %v3091, %v3626
  %v3628 = vpop.f32.mrf.mxu0
  %3629 = vmatprep.mubr.f32.mxu0 %v3027
  %3630 = vmatmul.mubr.f32.gmra.mxu0 %v3026
  %v3631 = vpop.f32.mrf.mxu0
  %v3632 = vadd.f32 %v3091, %v3631
  %v3633 = vpop.f32.mrf.mxu0
  %3634 = vmatprep.mubr.f32.mxu0 %v3030
  %3635 = vmatmul.mubr.f32.gmra.mxu0 %v3029
  %v3636 = vpop.f32.mrf.mxu0
  %v3637 = vadd.f32 %v3091, %v3636
  %v3638 = vpop.f32.mrf.mxu0
  %3639 = vmatprep.mubr.f32.mxu0 %v3033
  %3640 = vmatmul.mubr.f32.gmra.mxu0 %v3032
  %v3641 = vpop.f32.mrf.mxu0
  %v3642 = vadd.f32 %v3091, %v3641
  %v3643 = vpop.f32.mrf.mxu0
  %3644 = vmatprep.mubr.f32.mxu0 %v3036
  %3645 = vmatmul.mubr.f32.gmra.mxu0 %v3035
  %v3646 = vpop.f32.mrf.mxu0
  %v3647 = vadd.f32 %v3091, %v3646
  %v3648 = vpop.f32.mrf.mxu0
  %3649 = vmatprep.mubr.f32.mxu0 %v3039
  %3650 = vmatmul.mubr.f32.gmra.mxu0 %v3038
  %v3651 = vpop.f32.mrf.mxu0
  %v3652 = vadd.f32 %v3091, %v3651
  %v3653 = vpop.f32.mrf.mxu0
  %3654 = vmatprep.mubr.f32.mxu0 %v3042
  %3655 = vmatmul.mubr.f32.gmra.mxu0 %v3041
  %v3656 = vpop.f32.mrf.mxu0
  %v3657 = vadd.f32 %v3091, %v3656
  %v3658 = vpop.f32.mrf.mxu0
  %3659 = vmatprep.mubr.f32.mxu0 %v3045
  %3660 = vmatmul.mubr.f32.gmra.mxu0 %v3044
  %v3661 = vpop.f32.mrf.mxu0
  %v3662 = vadd.f32 %v3091, %v3661
  %v3663 = vpop.f32.mrf.mxu0
  %3664 = vmatprep.mubr.f32.mxu0 %v3048
  %3665 = vmatmul.mubr.f32.gmra.mxu0 %v3047
  %v3666 = vpop.f32.mrf.mxu0
  %v3667 = vadd.f32 %v3091, %v3666
  %v3668 = vpop.f32.mrf.mxu0
  %3669 = vdwg.mxu0
  %3670 = vmatprep.subr.mxu0 0.0
  %3671 = vmatpush1.msra.mxu0 0.0
  %3672 = vmatprep.subr.mxu0 0.0
  %3673 = vmatpush1.msra.mxu0 0.0
  %3674 = vmatprep.subr.mxu0 0.0
  %3675 = vmatpush1.msra.mxu0 0.0
  %3676 = vmatprep.subr.mxu0 0.0
  %3677 = vmatpush1.msra.mxu0 0.0
  %3678 = vmatprep.subr.mxu0 0.0
  %3679 = vmatpush1.msra.mxu0 0.0
  %3680 = vmatprep.subr.mxu0 0.0
  %3681 = vmatpush1.msra.mxu0 0.0
  %3682 = vmatprep.subr.mxu0 0.0
  %3683 = vmatpush1.msra.mxu0 0.0
  %3684 = vmatprep.subr.mxu0 0.0
  %3685 = vmatpush1.msra.mxu0 0.0
  %3686 = vmatprep.subr.mxu0 0.0
  %3687 = vmatpush1.msra.mxu0 0.0
  %3688 = vmatprep.subr.mxu0 0.0
  %3689 = vmatpush1.msra.mxu0 0.0
  %3690 = vmatprep.subr.mxu0 0.0
  %3691 = vmatpush1.msra.mxu0 0.0
  %3692 = vmatprep.subr.mxu0 0.0
  %3693 = vmatpush1.msra.mxu0 0.0
  %3694 = vmatprep.subr.mxu0 0.0
  %3695 = vmatpush1.msra.mxu0 %v3085
  %3696 = vmatprep.subr.mxu0 0.0
  %3697 = vmatpush1.msra.mxu0 %v3084
  %3698 = vmatprep.subr.mxu0 0.0
  %3699 = vmatpush1.msra.mxu0 %v3083
  %3700 = vmatprep.subr.mxu0 0.0
  %3701 = vmatpush1.msra.mxu0 %v3082
  %3702 = vmatprep.subr.mxu0 0.0
  %3703 = vmatpush2.msra.mxu0 0.0
  %3704 = vmatprep.subr.mxu0 0.0
  %3705 = vmatpush2.msra.mxu0 0.0
  %3706 = vmatprep.subr.mxu0 0.0
  %3707 = vmatpush2.msra.mxu0 0.0
  %3708 = vmatprep.subr.mxu0 0.0
  %3709 = vmatpush2.msra.mxu0 0.0
  %3710 = vmatprep.subr.mxu0 0.0
  %3711 = vmatpush2.msra.mxu0 0.0
  %3712 = vmatprep.subr.mxu0 0.0
  %3713 = vmatpush2.msra.mxu0 0.0
  %3714 = vmatprep.subr.mxu0 0.0
  %3715 = vmatpush2.msra.mxu0 0.0
  %3716 = vmatprep.subr.mxu0 0.0
  %3717 = vmatpush2.msra.mxu0 0.0
  %3718 = vmatprep.subr.mxu0 0.0
  %3719 = vmatpush2.msra.mxu0 0.0
  %3720 = vmatprep.subr.mxu0 0.0
  %3721 = vmatpush2.msra.mxu0 0.0
  %3722 = vmatprep.subr.mxu0 0.0
  %3723 = vmatpush2.msra.mxu0 0.0
  %3724 = vmatprep.subr.mxu0 0.0
  %3725 = vmatpush2.msra.mxu0 0.0
  %3726 = vmatprep.subr.mxu0 0.0
  %3727 = vmatpush2.msra.mxu0 0.0
  %3728 = vmatprep.subr.mxu0 0.0
  %3729 = vmatpush2.msra.mxu0 0.0
  %3730 = vmatprep.subr.mxu0 0.0
  %3731 = vmatpush2.msra.mxu0 0.0
  %3732 = vmatprep.subr.mxu0 0.0
  %3733 = vmatpush2.msra.mxu0 0.0
  %3734 = vmatprep.mubr.f32.mxu0 0.0
  %3735 = vmatmul.mubr.f32.gmra.mxu0 %v3094
  %v3736 = vpop.f32.mrf.mxu0
  %v3737 = vadd.f32 %v3352, %v3736
  %v3738 = vpop.f32.mrf.mxu0
  %3739 = vmatprep.mubr.f32.mxu0 0.0
  %3740 = vmatmul.mubr.f32.gmra.mxu0 %v3097
  %v3741 = vpop.f32.mrf.mxu0
  %v3742 = vadd.f32 %v3357, %v3741
  %v3743 = vpop.f32.mrf.mxu0
  %3744 = vmatprep.mubr.f32.mxu0 0.0
  %3745 = vmatmul.mubr.f32.gmra.mxu0 %v3100
  %v3746 = vpop.f32.mrf.mxu0
  %v3747 = vadd.f32 %v3362, %v3746
  %v3748 = vpop.f32.mrf.mxu0
  %3749 = vmatprep.mubr.f32.mxu0 0.0
  %3750 = vmatmul.mubr.f32.gmra.mxu0 %v3103
  %v3751 = vpop.f32.mrf.mxu0
  %v3752 = vadd.f32 %v3367, %v3751
  %v3753 = vpop.f32.mrf.mxu0
  %3754 = vmatprep.mubr.f32.mxu0 0.0
  %3755 = vmatmul.mubr.f32.gmra.mxu0 %v3106
  %v3756 = vpop.f32.mrf.mxu0
  %v3757 = vadd.f32 %v3372, %v3756
  %v3758 = vpop.f32.mrf.mxu0
  %3759 = vmatprep.mubr.f32.mxu0 0.0
  %3760 = vmatmul.mubr.f32.gmra.mxu0 %v3109
  %v3761 = vpop.f32.mrf.mxu0
  %v3762 = vadd.f32 %v3377, %v3761
  %v3763 = vpop.f32.mrf.mxu0
  %3764 = vmatprep.mubr.f32.mxu0 0.0
  %3765 = vmatmul.mubr.f32.gmra.mxu0 %v3112
  %v3766 = vpop.f32.mrf.mxu0
  %v3767 = vadd.f32 %v3382, %v3766
  %v3768 = vpop.f32.mrf.mxu0
  %3769 = vmatprep.mubr.f32.mxu0 0.0
  %3770 = vmatmul.mubr.f32.gmra.mxu0 %v3115
  %v3771 = vpop.f32.mrf.mxu0
  %v3772 = vadd.f32 %v3387, %v3771
  %v3773 = vpop.f32.mrf.mxu0
  %3774 = vmatprep.mubr.f32.mxu0 0.0
  %3775 = vmatmul.mubr.f32.gmra.mxu0 %v3118
  %v3776 = vpop.f32.mrf.mxu0
  %v3777 = vadd.f32 %v3392, %v3776
  %v3778 = vpop.f32.mrf.mxu0
  %3779 = vmatprep.mubr.f32.mxu0 0.0
  %3780 = vmatmul.mubr.f32.gmra.mxu0 %v3121
  %v3781 = vpop.f32.mrf.mxu0
  %v3782 = vadd.f32 %v3397, %v3781
  %v3783 = vpop.f32.mrf.mxu0
  %3784 = vmatprep.mubr.f32.mxu0 0.0
  %3785 = vmatmul.mubr.f32.gmra.mxu0 %v3124
  %v3786 = vpop.f32.mrf.mxu0
  %v3787 = vadd.f32 %v3402, %v3786
  %v3788 = vpop.f32.mrf.mxu0
  %3789 = vmatprep.mubr.f32.mxu0 0.0
  %3790 = vmatmul.mubr.f32.gmra.mxu0 %v3127
  %v3791 = vpop.f32.mrf.mxu0
  %v3792 = vadd.f32 %v3407, %v3791
  %v3793 = vpop.f32.mrf.mxu0
  %3794 = vmatprep.mubr.f32.mxu0 0.0
  %3795 = vmatmul.mubr.f32.gmra.mxu0 %v3130
  %v3796 = vpop.f32.mrf.mxu0
  %v3797 = vadd.f32 %v3412, %v3796
  %v3798 = vpop.f32.mrf.mxu0
  %3799 = vmatprep.mubr.f32.mxu0 0.0
  %3800 = vmatmul.mubr.f32.gmra.mxu0 %v3133
  %v3801 = vpop.f32.mrf.mxu0
  %v3802 = vadd.f32 %v3417, %v3801
  %v3803 = vpop.f32.mrf.mxu0
  %3804 = vmatprep.mubr.f32.mxu0 0.0
  %3805 = vmatmul.mubr.f32.gmra.mxu0 %v3136
  %v3806 = vpop.f32.mrf.mxu0
  %v3807 = vadd.f32 %v3422, %v3806
  %v3808 = vpop.f32.mrf.mxu0
  %3809 = vmatprep.mubr.f32.mxu0 0.0
  %3810 = vmatmul.mubr.f32.gmra.mxu0 %v3139
  %v3811 = vpop.f32.mrf.mxu0
  %v3812 = vadd.f32 %v3427, %v3811
  %v3813 = vpop.f32.mrf.mxu0
  %3814 = vmatprep.mubr.f32.mxu0 0.0
  %3815 = vmatmul.mubr.f32.gmra.mxu0 %v3142
  %v3816 = vpop.f32.mrf.mxu0
  %v3817 = vadd.f32 %v3432, %v3816
  %v3818 = vpop.f32.mrf.mxu0
  %3819 = vmatprep.mubr.f32.mxu0 0.0
  %3820 = vmatmul.mubr.f32.gmra.mxu0 %v3145
  %v3821 = vpop.f32.mrf.mxu0
  %v3822 = vadd.f32 %v3437, %v3821
  %v3823 = vpop.f32.mrf.mxu0
  %3824 = vmatprep.mubr.f32.mxu0 0.0
  %3825 = vmatmul.mubr.f32.gmra.mxu0 %v3148
  %v3826 = vpop.f32.mrf.mxu0
  %v3827 = vadd.f32 %v3442, %v3826
  %v3828 = vpop.f32.mrf.mxu0
  %3829 = vmatprep.mubr.f32.mxu0 0.0
  %3830 = vmatmul.mubr.f32.gmra.mxu0 %v3151
  %v3831 = vpop.f32.mrf.mxu0
  %v3832 = vadd.f32 %v3447, %v3831
  %v3833 = vpop.f32.mrf.mxu0
  %3834 = vmatprep.mubr.f32.mxu0 0.0
  %3835 = vmatmul.mubr.f32.gmra.mxu0 %v3154
  %v3836 = vpop.f32.mrf.mxu0
  %v3837 = vadd.f32 %v3452, %v3836
  %v3838 = vpop.f32.mrf.mxu0
  %3839 = vmatprep.mubr.f32.mxu0 0.0
  %3840 = vmatmul.mubr.f32.gmra.mxu0 %v3157
  %v3841 = vpop.f32.mrf.mxu0
  %v3842 = vadd.f32 %v3457, %v3841
  %v3843 = vpop.f32.mrf.mxu0
  %3844 = vmatprep.mubr.f32.mxu0 0.0
  %3845 = vmatmul.mubr.f32.gmra.mxu0 %v3160
  %v3846 = vpop.f32.mrf.mxu0
  %v3847 = vadd.f32 %v3462, %v3846
  %v3848 = vpop.f32.mrf.mxu0
  %3849 = vmatprep.mubr.f32.mxu0 0.0
  %3850 = vmatmul.mubr.f32.gmra.mxu0 %v3163
  %v3851 = vpop.f32.mrf.mxu0
  %v3852 = vadd.f32 %v3467, %v3851
  %v3853 = vpop.f32.mrf.mxu0
  %3854 = vmatprep.mubr.f32.mxu0 0.0
  %3855 = vmatmul.mubr.f32.gmra.mxu0 %v3166
  %v3856 = vpop.f32.mrf.mxu0
  %v3857 = vadd.f32 %v3472, %v3856
  %v3858 = vpop.f32.mrf.mxu0
  %3859 = vmatprep.mubr.f32.mxu0 0.0
  %3860 = vmatmul.mubr.f32.gmra.mxu0 %v3169
  %v3861 = vpop.f32.mrf.mxu0
  %v3862 = vadd.f32 %v3477, %v3861
  %v3863 = vpop.f32.mrf.mxu0
  %3864 = vmatprep.mubr.f32.mxu0 0.0
  %3865 = vmatmul.mubr.f32.gmra.mxu0 %v3172
  %v3866 = vpop.f32.mrf.mxu0
  %v3867 = vadd.f32 %v3482, %v3866
  %v3868 = vpop.f32.mrf.mxu0
  %3869 = vmatprep.mubr.f32.mxu0 0.0
  %3870 = vmatmul.mubr.f32.gmra.mxu0 %v3175
  %v3871 = vpop.f32.mrf.mxu0
  %v3872 = vadd.f32 %v3487, %v3871
  %v3873 = vpop.f32.mrf.mxu0
  %3874 = vmatprep.mubr.f32.mxu0 0.0
  %3875 = vmatmul.mubr.f32.gmra.mxu0 %v3178
  %v3876 = vpop.f32.mrf.mxu0
  %v3877 = vadd.f32 %v3492, %v3876
  %v3878 = vpop.f32.mrf.mxu0
  %3879 = vmatprep.mubr.f32.mxu0 0.0
  %3880 = vmatmul.mubr.f32.gmra.mxu0 %v3181
  %v3881 = vpop.f32.mrf.mxu0
  %v3882 = vadd.f32 %v3497, %v3881
  %v3883 = vpop.f32.mrf.mxu0
  %3884 = vmatprep.mubr.f32.mxu0 0.0
  %3885 = vmatmul.mubr.f32.gmra.mxu0 %v3184
  %v3886 = vpop.f32.mrf.mxu0
  %v3887 = vadd.f32 %v3502, %v3886
  %v3888 = vpop.f32.mrf.mxu0
  %3889 = vmatprep.mubr.f32.mxu0 0.0
  %3890 = vmatmul.mubr.f32.gmra.mxu0 %v3187
  %v3891 = vpop.f32.mrf.mxu0
  %v3892 = vadd.f32 %v3507, %v3891
  %v3893 = vpop.f32.mrf.mxu0
  %3894 = vmatprep.mubr.f32.mxu0 0.0
  %3895 = vmatmul.mubr.f32.gmra.mxu0 %v3190
  %v3896 = vpop.f32.mrf.mxu0
  %v3897 = vadd.f32 %v3512, %v3896
  %v3898 = vpop.f32.mrf.mxu0
  %3899 = vmatprep.mubr.f32.mxu0 0.0
  %3900 = vmatmul.mubr.f32.gmra.mxu0 %v3193
  %v3901 = vpop.f32.mrf.mxu0
  %v3902 = vadd.f32 %v3517, %v3901
  %v3903 = vpop.f32.mrf.mxu0
  %3904 = vmatprep.mubr.f32.mxu0 0.0
  %3905 = vmatmul.mubr.f32.gmra.mxu0 %v3196
  %v3906 = vpop.f32.mrf.mxu0
  %v3907 = vadd.f32 %v3522, %v3906
  %v3908 = vpop.f32.mrf.mxu0
  %3909 = vmatprep.mubr.f32.mxu0 0.0
  %3910 = vmatmul.mubr.f32.gmra.mxu0 %v3199
  %v3911 = vpop.f32.mrf.mxu0
  %v3912 = vadd.f32 %v3527, %v3911
  %v3913 = vpop.f32.mrf.mxu0
  %3914 = vmatprep.mubr.f32.mxu0 0.0
  %3915 = vmatmul.mubr.f32.gmra.mxu0 %v3202
  %v3916 = vpop.f32.mrf.mxu0
  %v3917 = vadd.f32 %v3532, %v3916
  %v3918 = vpop.f32.mrf.mxu0
  %3919 = vmatprep.mubr.f32.mxu0 0.0
  %3920 = vmatmul.mubr.f32.gmra.mxu0 %v3205
  %v3921 = vpop.f32.mrf.mxu0
  %v3922 = vadd.f32 %v3537, %v3921
  %v3923 = vpop.f32.mrf.mxu0
  %3924 = vmatprep.mubr.f32.mxu0 0.0
  %3925 = vmatmul.mubr.f32.gmra.mxu0 %v3208
  %v3926 = vpop.f32.mrf.mxu0
  %v3927 = vadd.f32 %v3542, %v3926
  %v3928 = vpop.f32.mrf.mxu0
  %3929 = vmatprep.mubr.f32.mxu0 0.0
  %3930 = vmatmul.mubr.f32.gmra.mxu0 %v3211
  %v3931 = vpop.f32.mrf.mxu0
  %v3932 = vadd.f32 %v3547, %v3931
  %v3933 = vpop.f32.mrf.mxu0
  %3934 = vmatprep.mubr.f32.mxu0 0.0
  %3935 = vmatmul.mubr.f32.gmra.mxu0 %v3214
  %v3936 = vpop.f32.mrf.mxu0
  %v3937 = vadd.f32 %v3552, %v3936
  %v3938 = vpop.f32.mrf.mxu0
  %3939 = vmatprep.mubr.f32.mxu0 0.0
  %3940 = vmatmul.mubr.f32.gmra.mxu0 %v3217
  %v3941 = vpop.f32.mrf.mxu0
  %v3942 = vadd.f32 %v3557, %v3941
  %v3943 = vpop.f32.mrf.mxu0
  %3944 = vmatprep.mubr.f32.mxu0 0.0
  %3945 = vmatmul.mubr.f32.gmra.mxu0 %v3220
  %v3946 = vpop.f32.mrf.mxu0
  %v3947 = vadd.f32 %v3562, %v3946
  %v3948 = vpop.f32.mrf.mxu0
  %3949 = vmatprep.mubr.f32.mxu0 0.0
  %3950 = vmatmul.mubr.f32.gmra.mxu0 %v3223
  %v3951 = vpop.f32.mrf.mxu0
  %v3952 = vadd.f32 %v3567, %v3951
  %v3953 = vpop.f32.mrf.mxu0
  %3954 = vmatprep.mubr.f32.mxu0 0.0
  %3955 = vmatmul.mubr.f32.gmra.mxu0 %v3226
  %v3956 = vpop.f32.mrf.mxu0
  %v3957 = vadd.f32 %v3572, %v3956
  %v3958 = vpop.f32.mrf.mxu0
  %3959 = vmatprep.mubr.f32.mxu0 0.0
  %3960 = vmatmul.mubr.f32.gmra.mxu0 %v3229
  %v3961 = vpop.f32.mrf.mxu0
  %v3962 = vadd.f32 %v3577, %v3961
  %v3963 = vpop.f32.mrf.mxu0
  %3964 = vmatprep.mubr.f32.mxu0 0.0
  %3965 = vmatmul.mubr.f32.gmra.mxu0 %v3232
  %v3966 = vpop.f32.mrf.mxu0
  %v3967 = vadd.f32 %v3582, %v3966
  %v3968 = vpop.f32.mrf.mxu0
  %3969 = vmatprep.mubr.f32.mxu0 0.0
  %3970 = vmatmul.mubr.f32.gmra.mxu0 %v3235
  %v3971 = vpop.f32.mrf.mxu0
  %v3972 = vadd.f32 %v3587, %v3971
  %v3973 = vpop.f32.mrf.mxu0
  %3974 = vmatprep.mubr.f32.mxu0 0.0
  %3975 = vmatmul.mubr.f32.gmra.mxu0 %v3238
  %v3976 = vpop.f32.mrf.mxu0
  %v3977 = vadd.f32 %v3592, %v3976
  %v3978 = vpop.f32.mrf.mxu0
  %3979 = vmatprep.mubr.f32.mxu0 0.0
  %3980 = vmatmul.mubr.f32.gmra.mxu0 %v3241
  %v3981 = vpop.f32.mrf.mxu0
  %v3982 = vadd.f32 %v3597, %v3981
  %v3983 = vpop.f32.mrf.mxu0
  %3984 = vmatprep.mubr.f32.mxu0 0.0
  %3985 = vmatmul.mubr.f32.gmra.mxu0 %v3244
  %v3986 = vpop.f32.mrf.mxu0
  %v3987 = vadd.f32 %v3602, %v3986
  %v3988 = vpop.f32.mrf.mxu0
  %3989 = vmatprep.mubr.f32.mxu0 0.0
  %3990 = vmatmul.mubr.f32.gmra.mxu0 %v3247
  %v3991 = vpop.f32.mrf.mxu0
  %v3992 = vadd.f32 %v3607, %v3991
  %v3993 = vpop.f32.mrf.mxu0
  %3994 = vmatprep.mubr.f32.mxu0 0.0
  %3995 = vmatmul.mubr.f32.gmra.mxu0 %v3250
  %v3996 = vpop.f32.mrf.mxu0
  %v3997 = vadd.f32 %v3612, %v3996
  %v3998 = vpop.f32.mrf.mxu0
  %3999 = vmatprep.mubr.f32.mxu0 0.0
  %4000 = vmatmul.mubr.f32.gmra.mxu0 %v3253
  %v4001 = vpop.f32.mrf.mxu0
  %v4002 = vadd.f32 %v3617, %v4001
  %v4003 = vpop.f32.mrf.mxu0
  %4004 = vmatprep.mubr.f32.mxu0 0.0
  %4005 = vmatmul.mubr.f32.gmra.mxu0 %v3256
  %v4006 = vpop.f32.mrf.mxu0
  %v4007 = vadd.f32 %v3622, %v4006
  %v4008 = vpop.f32.mrf.mxu0
  %4009 = vmatprep.mubr.f32.mxu0 0.0
  %4010 = vmatmul.mubr.f32.gmra.mxu0 %v3259
  %v4011 = vpop.f32.mrf.mxu0
  %v4012 = vadd.f32 %v3627, %v4011
  %v4013 = vpop.f32.mrf.mxu0
  %4014 = vmatprep.mubr.f32.mxu0 0.0
  %4015 = vmatmul.mubr.f32.gmra.mxu0 %v3262
  %v4016 = vpop.f32.mrf.mxu0
  %v4017 = vadd.f32 %v3632, %v4016
  %v4018 = vpop.f32.mrf.mxu0
  %4019 = vmatprep.mubr.f32.mxu0 0.0
  %4020 = vmatmul.mubr.f32.gmra.mxu0 %v3265
  %v4021 = vpop.f32.mrf.mxu0
  %v4022 = vadd.f32 %v3637, %v4021
  %v4023 = vpop.f32.mrf.mxu0
  %4024 = vmatprep.mubr.f32.mxu0 0.0
  %4025 = vmatmul.mubr.f32.gmra.mxu0 %v3268
  %v4026 = vpop.f32.mrf.mxu0
  %v4027 = vadd.f32 %v3642, %v4026
  %v4028 = vpop.f32.mrf.mxu0
  %4029 = vmatprep.mubr.f32.mxu0 0.0
  %4030 = vmatmul.mubr.f32.gmra.mxu0 %v3271
  %v4031 = vpop.f32.mrf.mxu0
  %v4032 = vadd.f32 %v3647, %v4031
  %v4033 = vpop.f32.mrf.mxu0
  %4034 = vmatprep.mubr.f32.mxu0 0.0
  %4035 = vmatmul.mubr.f32.gmra.mxu0 %v3274
  %v4036 = vpop.f32.mrf.mxu0
  %v4037 = vadd.f32 %v3652, %v4036
  %v4038 = vpop.f32.mrf.mxu0
  %4039 = vmatprep.mubr.f32.mxu0 0.0
  %4040 = vmatmul.mubr.f32.gmra.mxu0 %v3277
  %v4041 = vpop.f32.mrf.mxu0
  %v4042 = vadd.f32 %v3657, %v4041
  %v4043 = vpop.f32.mrf.mxu0
  %4044 = vmatprep.mubr.f32.mxu0 0.0
  %4045 = vmatmul.mubr.f32.gmra.mxu0 %v3280
  %v4046 = vpop.f32.mrf.mxu0
  %v4047 = vadd.f32 %v3662, %v4046
  %v4048 = vpop.f32.mrf.mxu0
  %4049 = vmatprep.mubr.f32.mxu0 0.0
  %4050 = vmatmul.mubr.f32.gmra.mxu0 %v3283
  %v4051 = vpop.f32.mrf.mxu0
  %v4052 = vadd.f32 %v3667, %v4051
  %v4053 = vpop.f32.mrf.mxu0
  %4054 = vdwg.mxu0
  %v4055 = vmax.f32 %v3737, 0.0
  %v4056 = vmax.f32 %v3742, 0.0
  %v4057 = vmax.f32 %v3747, 0.0
  %v4058 = vmax.f32 %v3752, 0.0
  %v4059 = vmax.f32 %v3757, 0.0
  %v4060 = vmax.f32 %v3762, 0.0
  %v4061 = vmax.f32 %v3767, 0.0
  %v4062 = vmax.f32 %v3772, 0.0
  %v4063 = vmax.f32 %v3777, 0.0
  %v4064 = vmax.f32 %v3782, 0.0
  %v4065 = vmax.f32 %v3787, 0.0
  %v4066 = vmax.f32 %v3792, 0.0
  %v4067 = vmax.f32 %v3797, 0.0
  %v4068 = vmax.f32 %v3802, 0.0
  %v4069 = vmax.f32 %v3807, 0.0
  %v4070 = vmax.f32 %v3812, 0.0
  %v4071 = vmax.f32 %v3817, 0.0
  %v4072 = vmax.f32 %v3822, 0.0
  %v4073 = vmax.f32 %v3827, 0.0
  %v4074 = vmax.f32 %v3832, 0.0
  %v4075 = vmax.f32 %v3837, 0.0
  %v4076 = vmax.f32 %v3842, 0.0
  %v4077 = vmax.f32 %v3847, 0.0
  %v4078 = vmax.f32 %v3852, 0.0
  %v4079 = vmax.f32 %v3857, 0.0
  %v4080 = vmax.f32 %v3862, 0.0
  %v4081 = vmax.f32 %v3867, 0.0
  %v4082 = vmax.f32 %v3872, 0.0
  %v4083 = vmax.f32 %v3877, 0.0
  %v4084 = vmax.f32 %v3882, 0.0
  %v4085 = vmax.f32 %v3887, 0.0
  %v4086 = vmax.f32 %v3892, 0.0
  %v4087 = vmax.f32 %v3897, 0.0
  %v4088 = vmax.f32 %v3902, 0.0
  %v4089 = vmax.f32 %v3907, 0.0
  %v4090 = vmax.f32 %v3912, 0.0
  %v4091 = vmax.f32 %v3917, 0.0
  %v4092 = vmax.f32 %v3922, 0.0
  %v4093 = vmax.f32 %v3927, 0.0
  %v4094 = vmax.f32 %v3932, 0.0
  %v4095 = vmax.f32 %v3937, 0.0
  %v4096 = vmax.f32 %v3942, 0.0
  %v4097 = vmax.f32 %v3947, 0.0
  %v4098 = vmax.f32 %v3952, 0.0
  %v4099 = vmax.f32 %v3957, 0.0
  %v4100 = vmax.f32 %v3962, 0.0
  %v4101 = vmax.f32 %v3967, 0.0
  %v4102 = vmax.f32 %v3972, 0.0
  %v4103 = vmax.f32 %v3977, 0.0
  %v4104 = vmax.f32 %v3982, 0.0
  %v4105 = vmax.f32 %v3987, 0.0
  %v4106 = vmax.f32 %v3992, 0.0
  %v4107 = vmax.f32 %v3997, 0.0
  %v4108 = vmax.f32 %v4002, 0.0
  %v4109 = vmax.f32 %v4007, 0.0
  %v4110 = vmax.f32 %v4012, 0.0
  %v4111 = vmax.f32 %v4017, 0.0
  %v4112 = vmax.f32 %v4022, 0.0
  %v4113 = vmax.f32 %v4027, 0.0
  %v4114 = vmax.f32 %v4032, 0.0
  %v4115 = vmax.f32 %v4037, 0.0
  %v4116 = vmax.f32 %v4042, 0.0
  %v4117 = vmax.f32 %v4047, 0.0
  %v4118 = vmax.f32 %v4052, 0.0
  %v4119 = vld [vmem:[%s1] sm:$0xff]
  %v4120 = vld [vmem:[%s1 + $0x8] sm:$0xff]
  %v4121 = vld [vmem:[%s1 + $0x10] sm:$0xff]
  %v4122 = vld [vmem:[%s1 + $0x18] sm:$0xff]
  %v4123 = vld [vmem:[%s1 + $0x20] sm:$0xff]
  %v4124 = vld [vmem:[%s1 + $0x28] sm:$0xff]
  %v4125 = vld [vmem:[%s1 + $0x30] sm:$0xff]
  %v4126 = vld [vmem:[%s1 + $0x38] sm:$0xff]
  %v4127 = vld [vmem:[%s1 + $0x40] sm:$0xff]
  %v4128 = vld [vmem:[%s1 + $0x48] sm:$0xff]
  %v4129 = vld [vmem:[%s1 + $0x50] sm:$0xff]
  %v4130 = vld [vmem:[%s1 + $0x58] sm:$0xff]
  %v4131 = vld [vmem:[%s1 + $0x60] sm:$0xff]
  %v4132 = vld [vmem:[%s1 + $0x68] sm:$0xff]
  %v4133 = vld [vmem:[%s1 + $0x70] sm:$0xff]
  %v4134 = vld [vmem:[%s1 + $0x78] sm:$0xff]
  %v4135 = vld [vmem:[%s1 + $0x80] sm:$0xff]
  %v4136 = vld [vmem:[%s1 + $0x88] sm:$0xff]
  %v4137 = vld [vmem:[%s1 + $0x90] sm:$0xff]
  %v4138 = vld [vmem:[%s1 + $0x98] sm:$0xff]
  %v4139 = vld [vmem:[%s1 + $0xa0] sm:$0xff]
  %v4140 = vld [vmem:[%s1 + $0xa8] sm:$0xff]
  %v4141 = vld [vmem:[%s1 + $0xb0] sm:$0xff]
  %v4142 = vld [vmem:[%s1 + $0xb8] sm:$0xff]
  %v4143 = vld [vmem:[%s1 + $0xc0] sm:$0xff]
  %v4144 = vld [vmem:[%s1 + $0xc8] sm:$0xff]
  %v4145 = vld [vmem:[%s1 + $0xd0] sm:$0xff]
  %v4146 = vld [vmem:[%s1 + $0xd8] sm:$0xff]
  %v4147 = vld [vmem:[%s1 + $0xe0] sm:$0xff]
  %v4148 = vld [vmem:[%s1 + $0xe8] sm:$0xff]
  %v4149 = vld [vmem:[%s1 + $0xf0] sm:$0xff]
  %v4150 = vld [vmem:[%s1 + $0xf8] sm:$0xff]
  %v4151 = vld [vmem:[%s1 + $0x100] sm:$0xff]
  %v4152 = vld [vmem:[%s1 + $0x108] sm:$0xff]
  %v4153 = vld [vmem:[%s1 + $0x110] sm:$0xff]
  %v4154 = vld [vmem:[%s1 + $0x118] sm:$0xff]
  %v4155 = vld [vmem:[%s1 + $0x120] sm:$0xff]
  %v4156 = vld [vmem:[%s1 + $0x128] sm:$0xff]
  %v4157 = vld [vmem:[%s1 + $0x130] sm:$0xff]
  %v4158 = vld [vmem:[%s1 + $0x138] sm:$0xff]
  %v4159 = vld [vmem:[%s1 + $0x140] sm:$0xff]
  %v4160 = vld [vmem:[%s1 + $0x148] sm:$0xff]
  %v4161 = vld [vmem:[%s1 + $0x150] sm:$0xff]
  %v4162 = vld [vmem:[%s1 + $0x158] sm:$0xff]
  %v4163 = vld [vmem:[%s1 + $0x160] sm:$0xff]
  %v4164 = vld [vmem:[%s1 + $0x168] sm:$0xff]
  %v4165 = vld [vmem:[%s1 + $0x170] sm:$0xff]
  %v4166 = vld [vmem:[%s1 + $0x178] sm:$0xff]
  %v4167 = vld [vmem:[%s1 + $0x180] sm:$0xff]
  %v4168 = vld [vmem:[%s1 + $0x188] sm:$0xff]
  %v4169 = vld [vmem:[%s1 + $0x190] sm:$0xff]
  %v4170 = vld [vmem:[%s1 + $0x198] sm:$0xff]
  %v4171 = vld [vmem:[%s1 + $0x1a0] sm:$0xff]
  %v4172 = vld [vmem:[%s1 + $0x1a8] sm:$0xff]
  %v4173 = vld [vmem:[%s1 + $0x1b0] sm:$0xff]
  %v4174 = vld [vmem:[%s1 + $0x1b8] sm:$0xff]
  %v4175 = vld [vmem:[%s1 + $0x1c0] sm:$0xff]
  %v4176 = vld [vmem:[%s1 + $0x1c8] sm:$0xff]
  %v4177 = vld [vmem:[%s1 + $0x1d0] sm:$0xff]
  %v4178 = vld [vmem:[%s1 + $0x1d8] sm:$0xff]
  %v4179 = vld [vmem:[%s1 + $0x1e0] sm:$0xff]
  %v4180 = vld [vmem:[%s1 + $0x1e8] sm:$0xff]
  %v4181 = vld [vmem:[%s1 + $0x1f0] sm:$0xff]
  %v4182 = vld [vmem:[%s1 + $0x1f8] sm:$0xff]
  %v4183 = vmul.f32 %v4055, %v4119
  %v4184 = vmul.f32 %v4056, %v4120
  %v4185 = vmul.f32 %v4057, %v4121
  %v4186 = vmul.f32 %v4058, %v4122
  %v4187 = vmul.f32 %v4059, %v4123
  %v4188 = vmul.f32 %v4060, %v4124
  %v4189 = vmul.f32 %v4061, %v4125
  %v4190 = vmul.f32 %v4062, %v4126
  %v4191 = vmul.f32 %v4063, %v4127
  %v4192 = vmul.f32 %v4064, %v4128
  %v4193 = vmul.f32 %v4065, %v4129
  %v4194 = vmul.f32 %v4066, %v4130
  %v4195 = vmul.f32 %v4067, %v4131
  %v4196 = vmul.f32 %v4068, %v4132
  %v4197 = vmul.f32 %v4069, %v4133
  %v4198 = vmul.f32 %v4070, %v4134
  %v4199 = vmul.f32 %v4071, %v4135
  %v4200 = vmul.f32 %v4072, %v4136
  %v4201 = vmul.f32 %v4073, %v4137
  %v4202 = vmul.f32 %v4074, %v4138
  %v4203 = vmul.f32 %v4075, %v4139
  %v4204 = vmul.f32 %v4076, %v4140
  %v4205 = vmul.f32 %v4077, %v4141
  %v4206 = vmul.f32 %v4078, %v4142
  %v4207 = vmul.f32 %v4079, %v4143
  %v4208 = vmul.f32 %v4080, %v4144
  %v4209 = vmul.f32 %v4081, %v4145
  %v4210 = vmul.f32 %v4082, %v4146
  %v4211 = vmul.f32 %v4083, %v4147
  %v4212 = vmul.f32 %v4084, %v4148
  %v4213 = vmul.f32 %v4085, %v4149
  %v4214 = vmul.f32 %v4086, %v4150
  %v4215 = vmul.f32 %v4087, %v4151
  %v4216 = vmul.f32 %v4088, %v4152
  %v4217 = vmul.f32 %v4089, %v4153
  %v4218 = vmul.f32 %v4090, %v4154
  %v4219 = vmul.f32 %v4091, %v4155
  %v4220 = vmul.f32 %v4092, %v4156
  %v4221 = vmul.f32 %v4093, %v4157
  %v4222 = vmul.f32 %v4094, %v4158
  %v4223 = vmul.f32 %v4095, %v4159
  %v4224 = vmul.f32 %v4096, %v4160
  %v4225 = vmul.f32 %v4097, %v4161
  %v4226 = vmul.f32 %v4098, %v4162
  %v4227 = vmul.f32 %v4099, %v4163
  %v4228 = vmul.f32 %v4100, %v4164
  %v4229 = vmul.f32 %v4101, %v4165
  %v4230 = vmul.f32 %v4102, %v4166
  %v4231 = vmul.f32 %v4103, %v4167
  %v4232 = vmul.f32 %v4104, %v4168
  %v4233 = vmul.f32 %v4105, %v4169
  %v4234 = vmul.f32 %v4106, %v4170
  %v4235 = vmul.f32 %v4107, %v4171
  %v4236 = vmul.f32 %v4108, %v4172
  %v4237 = vmul.f32 %v4109, %v4173
  %v4238 = vmul.f32 %v4110, %v4174
  %v4239 = vmul.f32 %v4111, %v4175
  %v4240 = vmul.f32 %v4112, %v4176
  %v4241 = vmul.f32 %v4113, %v4177
  %v4242 = vmul.f32 %v4114, %v4178
  %v4243 = vmul.f32 %v4115, %v4179
  %v4244 = vmul.f32 %v4116, %v4180
  %v4245 = vmul.f32 %v4117, %v4181
  %v4246 = vmul.f32 %v4118, %v4182
  %4247 = vst.msk [vmem:[#allocation2 + $0x10] sm:$0xff] %vm34, %v4183
  %4248 = vst.msk [vmem:[#allocation2 + $0x18] sm:$0xff] %vm34, %v4184
  %4249 = vst.msk [vmem:[#allocation2 + $0x20] sm:$0xff] %vm34, %v4185
  %4250 = vst.msk [vmem:[#allocation2 + $0x28] sm:$0xff] %vm34, %v4186
  %4251 = vst.msk [vmem:[#allocation2 + $0x30] sm:$0xff] %vm34, %v4187
  %4252 = vst.msk [vmem:[#allocation2 + $0x38] sm:$0xff] %vm34, %v4188
  %4253 = vst.msk [vmem:[#allocation2 + $0x40] sm:$0xff] %vm34, %v4189
  %4254 = vst.msk [vmem:[#allocation2 + $0x48] sm:$0xff] %vm34, %v4190
  %4255 = vst.msk [vmem:[#allocation2 + $0x50] sm:$0xff] %vm34, %v4191
  %4256 = vst.msk [vmem:[#allocation2 + $0x58] sm:$0xff] %vm34, %v4192
  %4257 = vst.msk [vmem:[#allocation2 + $0x60] sm:$0xff] %vm34, %v4193
  %4258 = vst.msk [vmem:[#allocation2 + $0x68] sm:$0xff] %vm34, %v4194
  %4259 = vst.msk [vmem:[#allocation2 + $0x70] sm:$0xff] %vm34, %v4195
  %4260 = vst.msk [vmem:[#allocation2 + $0x78] sm:$0xff] %vm34, %v4196
  %4261 = vst.msk [vmem:[#allocation2 + $0x80] sm:$0xff] %vm34, %v4197
  %4262 = vst.msk [vmem:[#allocation2 + $0x88] sm:$0xff] %vm34, %v4198
  %4263 = vst.msk [vmem:[#allocation2 + $0x90] sm:$0xff] %vm34, %v4199
  %4264 = vst.msk [vmem:[#allocation2 + $0x98] sm:$0xff] %vm34, %v4200
  %4265 = vst.msk [vmem:[#allocation2 + $0xa0] sm:$0xff] %vm34, %v4201
  %4266 = vst.msk [vmem:[#allocation2 + $0xa8] sm:$0xff] %vm34, %v4202
  %4267 = vst.msk [vmem:[#allocation2 + $0xb0] sm:$0xff] %vm34, %v4203
  %4268 = vst.msk [vmem:[#allocation2 + $0xb8] sm:$0xff] %vm34, %v4204
  %4269 = vst.msk [vmem:[#allocation2 + $0xc0] sm:$0xff] %vm34, %v4205
  %4270 = vst.msk [vmem:[#allocation2 + $0xc8] sm:$0xff] %vm34, %v4206
  %4271 = vst.msk [vmem:[#allocation2 + $0xd0] sm:$0xff] %vm34, %v4207
  %4272 = vst.msk [vmem:[#allocation2 + $0xd8] sm:$0xff] %vm34, %v4208
  %4273 = vst.msk [vmem:[#allocation2 + $0xe0] sm:$0xff] %vm34, %v4209
  %4274 = vst.msk [vmem:[#allocation2 + $0xe8] sm:$0xff] %vm34, %v4210
  %4275 = vst.msk [vmem:[#allocation2 + $0xf0] sm:$0xff] %vm34, %v4211
  %4276 = vst.msk [vmem:[#allocation2 + $0xf8] sm:$0xff] %vm34, %v4212
  %4277 = vst.msk [vmem:[#allocation2 + $0x100] sm:$0xff] %vm34, %v4213
  %4278 = vst.msk [vmem:[#allocation2 + $0x108] sm:$0xff] %vm34, %v4214
  %4279 = vst.msk [vmem:[#allocation2 + $0x110] sm:$0xff] %vm34, %v4215
  %4280 = vst.msk [vmem:[#allocation2 + $0x118] sm:$0xff] %vm34, %v4216
  %4281 = vst.msk [vmem:[#allocation2 + $0x120] sm:$0xff] %vm34, %v4217
  %4282 = vst.msk [vmem:[#allocation2 + $0x128] sm:$0xff] %vm34, %v4218
  %4283 = vst.msk [vmem:[#allocation2 + $0x130] sm:$0xff] %vm34, %v4219
  %4284 = vst.msk [vmem:[#allocation2 + $0x138] sm:$0xff] %vm34, %v4220
  %4285 = vst.msk [vmem:[#allocation2 + $0x140] sm:$0xff] %vm34, %v4221
  %4286 = vst.msk [vmem:[#allocation2 + $0x148] sm:$0xff] %vm34, %v4222
  %4287 = vst.msk [vmem:[#allocation2 + $0x150] sm:$0xff] %vm34, %v4223
  %4288 = vst.msk [vmem:[#allocation2 + $0x158] sm:$0xff] %vm34, %v4224
  %4289 = vst.msk [vmem:[#allocation2 + $0x160] sm:$0xff] %vm34, %v4225
  %4290 = vst.msk [vmem:[#allocation2 + $0x168] sm:$0xff] %vm34, %v4226
  %4291 = vst.msk [vmem:[#allocation2 + $0x170] sm:$0xff] %vm34, %v4227
  %4292 = vst.msk [vmem:[#allocation2 + $0x178] sm:$0xff] %vm34, %v4228
  %4293 = vst.msk [vmem:[#allocation2 + $0x180] sm:$0xff] %vm34, %v4229
  %4294 = vst.msk [vmem:[#allocation2 + $0x188] sm:$0xff] %vm34, %v4230
  %4295 = vst.msk [vmem:[#allocation2 + $0x190] sm:$0xff] %vm34, %v4231
  %4296 = vst.msk [vmem:[#allocation2 + $0x198] sm:$0xff] %vm34, %v4232
  %4297 = vst.msk [vmem:[#allocation2 + $0x1a0] sm:$0xff] %vm34, %v4233
  %4298 = vst.msk [vmem:[#allocation2 + $0x1a8] sm:$0xff] %vm34, %v4234
  %4299 = vst.msk [vmem:[#allocation2 + $0x1b0] sm:$0xff] %vm34, %v4235
  %4300 = vst.msk [vmem:[#allocation2 + $0x1b8] sm:$0xff] %vm34, %v4236
  %4301 = vst.msk [vmem:[#allocation2 + $0x1c0] sm:$0xff] %vm34, %v4237
  %4302 = vst.msk [vmem:[#allocation2 + $0x1c8] sm:$0xff] %vm34, %v4238
  %4303 = vst.msk [vmem:[#allocation2 + $0x1d0] sm:$0xff] %vm34, %v4239
  %4304 = vst.msk [vmem:[#allocation2 + $0x1d8] sm:$0xff] %vm34, %v4240
  %4305 = vst.msk [vmem:[#allocation2 + $0x1e0] sm:$0xff] %vm34, %v4241
  %4306 = vst.msk [vmem:[#allocation2 + $0x1e8] sm:$0xff] %vm34, %v4242
  %4307 = vst.msk [vmem:[#allocation2 + $0x1f0] sm:$0xff] %vm34, %v4243
  %4308 = vst.msk [vmem:[#allocation2 + $0x1f8] sm:$0xff] %vm34, %v4244
  %4309 = vst.msk [vmem:[#allocation2 + $0x200] sm:$0xff] %vm34, %v4245
  %4310 = vst.msk [vmem:[#allocation2 + $0x208] sm:$0xff] %vm34, %v4246
  %v4311 = vld [vmem:[#allocation2 + $0x7] sm:$0xff]
  %v4312 = vld [vmem:[#allocation2 + $0xf] sm:$0xff]
  %v4313 = vld [vmem:[#allocation2 + $0x17] sm:$0xff]
  %v4314 = vld [vmem:[#allocation2 + $0x1f] sm:$0xff]
  %v4315 = vld [vmem:[#allocation2 + $0x27] sm:$0xff]
  %v4316 = vld [vmem:[#allocation2 + $0x2f] sm:$0xff]
  %v4317 = vld [vmem:[#allocation2 + $0x37] sm:$0xff]
  %v4318 = vld [vmem:[#allocation2 + $0x3f] sm:$0xff]
  %v4319 = vld [vmem:[#allocation2 + $0x47] sm:$0xff]
  %v4320 = vld [vmem:[#allocation2 + $0x4f] sm:$0xff]
  %v4321 = vld [vmem:[#allocation2 + $0x57] sm:$0xff]
  %v4322 = vld [vmem:[#allocation2 + $0x5f] sm:$0xff]
  %v4323 = vld [vmem:[#allocation2 + $0x67] sm:$0xff]
  %v4324 = vld [vmem:[#allocation2 + $0x6f] sm:$0xff]
  %v4325 = vld [vmem:[#allocation2 + $0x77] sm:$0xff]
  %v4326 = vld [vmem:[#allocation2 + $0x7f] sm:$0xff]
  %v4327 = vld [vmem:[#allocation2 + $0x87] sm:$0xff]
  %v4328 = vld [vmem:[#allocation2 + $0x8f] sm:$0xff]
  %v4329 = vld [vmem:[#allocation2 + $0x97] sm:$0xff]
  %v4330 = vld [vmem:[#allocation2 + $0x9f] sm:$0xff]
  %v4331 = vld [vmem:[#allocation2 + $0xa7] sm:$0xff]
  %v4332 = vld [vmem:[#allocation2 + $0xaf] sm:$0xff]
  %v4333 = vld [vmem:[#allocation2 + $0xb7] sm:$0xff]
  %v4334 = vld [vmem:[#allocation2 + $0xbf] sm:$0xff]
  %v4335 = vld [vmem:[#allocation2 + $0xc7] sm:$0xff]
  %v4336 = vld [vmem:[#allocation2 + $0xcf] sm:$0xff]
  %v4337 = vld [vmem:[#allocation2 + $0xd7] sm:$0xff]
  %v4338 = vld [vmem:[#allocation2 + $0xdf] sm:$0xff]
  %v4339 = vld [vmem:[#allocation2 + $0xe7] sm:$0xff]
  %v4340 = vld [vmem:[#allocation2 + $0xef] sm:$0xff]
  %v4341 = vld [vmem:[#allocation2 + $0xf7] sm:$0xff]
  %v4342 = vld [vmem:[#allocation2 + $0xff] sm:$0xff]
  %v4343 = vld [vmem:[#allocation2 + $0x107] sm:$0xff]
  %v4344 = vld [vmem:[#allocation2 + $0x10f] sm:$0xff]
  %v4345 = vld [vmem:[#allocation2 + $0x117] sm:$0xff]
  %v4346 = vld [vmem:[#allocation2 + $0x11f] sm:$0xff]
  %v4347 = vld [vmem:[#allocation2 + $0x127] sm:$0xff]
  %v4348 = vld [vmem:[#allocation2 + $0x12f] sm:$0xff]
  %v4349 = vld [vmem:[#allocation2 + $0x137] sm:$0xff]
  %v4350 = vld [vmem:[#allocation2 + $0x13f] sm:$0xff]
  %v4351 = vld [vmem:[#allocation2 + $0x147] sm:$0xff]
  %v4352 = vld [vmem:[#allocation2 + $0x14f] sm:$0xff]
  %v4353 = vld [vmem:[#allocation2 + $0x157] sm:$0xff]
  %v4354 = vld [vmem:[#allocation2 + $0x15f] sm:$0xff]
  %v4355 = vld [vmem:[#allocation2 + $0x167] sm:$0xff]
  %v4356 = vld [vmem:[#allocation2 + $0x16f] sm:$0xff]
  %v4357 = vld [vmem:[#allocation2 + $0x177] sm:$0xff]
  %v4358 = vld [vmem:[#allocation2 + $0x17f] sm:$0xff]
  %v4359 = vld [vmem:[#allocation2 + $0x187] sm:$0xff]
  %v4360 = vld [vmem:[#allocation2 + $0x18f] sm:$0xff]
  %v4361 = vld [vmem:[#allocation2 + $0x197] sm:$0xff]
  %v4362 = vld [vmem:[#allocation2 + $0x19f] sm:$0xff]
  %v4363 = vld [vmem:[#allocation2 + $0x1a7] sm:$0xff]
  %v4364 = vld [vmem:[#allocation2 + $0x1af] sm:$0xff]
  %v4365 = vld [vmem:[#allocation2 + $0x1b7] sm:$0xff]
  %v4366 = vld [vmem:[#allocation2 + $0x1bf] sm:$0xff]
  %v4367 = vld [vmem:[#allocation2 + $0x1c7] sm:$0xff]
  %v4368 = vld [vmem:[#allocation2 + $0x1cf] sm:$0xff]
  %v4369 = vld [vmem:[#allocation2 + $0x1d7] sm:$0xff]
  %v4370 = vld [vmem:[#allocation2 + $0x1df] sm:$0xff]
  %v4371 = vld [vmem:[#allocation2 + $0x1e7] sm:$0xff]
  %v4372 = vld [vmem:[#allocation2 + $0x1ef] sm:$0xff]
  %v4373 = vld [vmem:[#allocation2 + $0x1f7] sm:$0xff]
  %v4374 = vld [vmem:[#allocation2 + $0x1ff] sm:$0xff]
  %4375 = vst.msk [vmem:[#allocation3] sm:$0xff] %vm34, %v4311
  %4376 = vst.msk [vmem:[#allocation3 + $0x18] sm:$0xff] %vm34, %v4312
  %4377 = vst.msk [vmem:[#allocation3 + $0x30] sm:$0xff] %vm34, %v4313
  %4378 = vst.msk [vmem:[#allocation3 + $0x48] sm:$0xff] %vm34, %v4314
  %4379 = vst.msk [vmem:[#allocation3 + $0x60] sm:$0xff] %vm34, %v4315
  %4380 = vst.msk [vmem:[#allocation3 + $0x78] sm:$0xff] %vm34, %v4316
  %4381 = vst.msk [vmem:[#allocation3 + $0x90] sm:$0xff] %vm34, %v4317
  %4382 = vst.msk [vmem:[#allocation3 + $0xa8] sm:$0xff] %vm34, %v4318
  %4383 = vst.msk [vmem:[#allocation3 + $0xc0] sm:$0xff] %vm34, %v4319
  %4384 = vst.msk [vmem:[#allocation3 + $0xd8] sm:$0xff] %vm34, %v4320
  %4385 = vst.msk [vmem:[#allocation3 + $0xf0] sm:$0xff] %vm34, %v4321
  %4386 = vst.msk [vmem:[#allocation3 + $0x108] sm:$0xff] %vm34, %v4322
  %4387 = vst.msk [vmem:[#allocation3 + $0x120] sm:$0xff] %vm34, %v4323
  %4388 = vst.msk [vmem:[#allocation3 + $0x138] sm:$0xff] %vm34, %v4324
  %4389 = vst.msk [vmem:[#allocation3 + $0x150] sm:$0xff] %vm34, %v4325
  %4390 = vst.msk [vmem:[#allocation3 + $0x168] sm:$0xff] %vm34, %v4326
  %4391 = vst.msk [vmem:[#allocation3 + $0x180] sm:$0xff] %vm34, %v4327
  %4392 = vst.msk [vmem:[#allocation3 + $0x198] sm:$0xff] %vm34, %v4328
  %4393 = vst.msk [vmem:[#allocation3 + $0x1b0] sm:$0xff] %vm34, %v4329
  %4394 = vst.msk [vmem:[#allocation3 + $0x1c8] sm:$0xff] %vm34, %v4330
  %4395 = vst.msk [vmem:[#allocation3 + $0x1e0] sm:$0xff] %vm34, %v4331
  %4396 = vst.msk [vmem:[#allocation3 + $0x1f8] sm:$0xff] %vm34, %v4332
  %4397 = vst.msk [vmem:[#allocation3 + $0x210] sm:$0xff] %vm34, %v4333
  %4398 = vst.msk [vmem:[#allocation3 + $0x228] sm:$0xff] %vm34, %v4334
  %4399 = vst.msk [vmem:[#allocation3 + $0x240] sm:$0xff] %vm34, %v4335
  %4400 = vst.msk [vmem:[#allocation3 + $0x258] sm:$0xff] %vm34, %v4336
  %4401 = vst.msk [vmem:[#allocation3 + $0x270] sm:$0xff] %vm34, %v4337
  %4402 = vst.msk [vmem:[#allocation3 + $0x288] sm:$0xff] %vm34, %v4338
  %4403 = vst.msk [vmem:[#allocation3 + $0x2a0] sm:$0xff] %vm34, %v4339
  %4404 = vst.msk [vmem:[#allocation3 + $0x2b8] sm:$0xff] %vm34, %v4340
  %4405 = vst.msk [vmem:[#allocation3 + $0x2d0] sm:$0xff] %vm34, %v4341
  %4406 = vst.msk [vmem:[#allocation3 + $0x2e8] sm:$0xff] %vm34, %v4342
  %4407 = vst.msk [vmem:[#allocation3 + $0x300] sm:$0xff] %vm34, %v4343
  %4408 = vst.msk [vmem:[#allocation3 + $0x318] sm:$0xff] %vm34, %v4344
  %4409 = vst.msk [vmem:[#allocation3 + $0x330] sm:$0xff] %vm34, %v4345
  %4410 = vst.msk [vmem:[#allocation3 + $0x348] sm:$0xff] %vm34, %v4346
  %4411 = vst.msk [vmem:[#allocation3 + $0x360] sm:$0xff] %vm34, %v4347
  %4412 = vst.msk [vmem:[#allocation3 + $0x378] sm:$0xff] %vm34, %v4348
  %4413 = vst.msk [vmem:[#allocation3 + $0x390] sm:$0xff] %vm34, %v4349
  %4414 = vst.msk [vmem:[#allocation3 + $0x3a8] sm:$0xff] %vm34, %v4350
  %4415 = vst.msk [vmem:[#allocation3 + $0x3c0] sm:$0xff] %vm34, %v4351
  %4416 = vst.msk [vmem:[#allocation3 + $0x3d8] sm:$0xff] %vm34, %v4352
  %4417 = vst.msk [vmem:[#allocation3 + $0x3f0] sm:$0xff] %vm34, %v4353
  %4418 = vst.msk [vmem:[#allocation3 + $0x408] sm:$0xff] %vm34, %v4354
  %4419 = vst.msk [vmem:[#allocation3 + $0x420] sm:$0xff] %vm34, %v4355
  %4420 = vst.msk [vmem:[#allocation3 + $0x438] sm:$0xff] %vm34, %v4356
  %4421 = vst.msk [vmem:[#allocation3 + $0x450] sm:$0xff] %vm34, %v4357
  %4422 = vst.msk [vmem:[#allocation3 + $0x468] sm:$0xff] %vm34, %v4358
  %4423 = vst.msk [vmem:[#allocation3 + $0x480] sm:$0xff] %vm34, %v4359
  %4424 = vst.msk [vmem:[#allocation3 + $0x498] sm:$0xff] %vm34, %v4360
  %4425 = vst.msk [vmem:[#allocation3 + $0x4b0] sm:$0xff] %vm34, %v4361
  %4426 = vst.msk [vmem:[#allocation3 + $0x4c8] sm:$0xff] %vm34, %v4362
  %4427 = vst.msk [vmem:[#allocation3 + $0x4e0] sm:$0xff] %vm34, %v4363
  %4428 = vst.msk [vmem:[#allocation3 + $0x4f8] sm:$0xff] %vm34, %v4364
  %4429 = vst.msk [vmem:[#allocation3 + $0x510] sm:$0xff] %vm34, %v4365
  %4430 = vst.msk [vmem:[#allocation3 + $0x528] sm:$0xff] %vm34, %v4366
  %4431 = vst.msk [vmem:[#allocation3 + $0x540] sm:$0xff] %vm34, %v4367
  %4432 = vst.msk [vmem:[#allocation3 + $0x558] sm:$0xff] %vm34, %v4368
  %4433 = vst.msk [vmem:[#allocation3 + $0x570] sm:$0xff] %vm34, %v4369
  %4434 = vst.msk [vmem:[#allocation3 + $0x588] sm:$0xff] %vm34, %v4370
  %4435 = vst.msk [vmem:[#allocation3 + $0x5a0] sm:$0xff] %vm34, %v4371
  %4436 = vst.msk [vmem:[#allocation3 + $0x5b8] sm:$0xff] %vm34, %v4372
  %4437 = vst.msk [vmem:[#allocation3 + $0x5d0] sm:$0xff] %vm34, %v4373
  %4438 = vst.msk [vmem:[#allocation3 + $0x5e8] sm:$0xff] %vm34, %v4374
  %v4439 = vld [vmem:[#allocation2 + $0x8] sm:$0xff]
  %v4440 = vld [vmem:[#allocation2 + $0x10] sm:$0xff]
  %v4441 = vld [vmem:[#allocation2 + $0x18] sm:$0xff]
  %v4442 = vld [vmem:[#allocation2 + $0x20] sm:$0xff]
  %v4443 = vld [vmem:[#allocation2 + $0x28] sm:$0xff]
  %v4444 = vld [vmem:[#allocation2 + $0x30] sm:$0xff]
  %v4445 = vld [vmem:[#allocation2 + $0x38] sm:$0xff]
  %v4446 = vld [vmem:[#allocation2 + $0x40] sm:$0xff]
  %v4447 = vld [vmem:[#allocation2 + $0x48] sm:$0xff]
  %v4448 = vld [vmem:[#allocation2 + $0x50] sm:$0xff]
  %v4449 = vld [vmem:[#allocation2 + $0x58] sm:$0xff]
  %v4450 = vld [vmem:[#allocation2 + $0x60] sm:$0xff]
  %v4451 = vld [vmem:[#allocation2 + $0x68] sm:$0xff]
  %v4452 = vld [vmem:[#allocation2 + $0x70] sm:$0xff]
  %v4453 = vld [vmem:[#allocation2 + $0x78] sm:$0xff]
  %v4454 = vld [vmem:[#allocation2 + $0x80] sm:$0xff]
  %v4455 = vld [vmem:[#allocation2 + $0x88] sm:$0xff]
  %v4456 = vld [vmem:[#allocation2 + $0x90] sm:$0xff]
  %v4457 = vld [vmem:[#allocation2 + $0x98] sm:$0xff]
  %v4458 = vld [vmem:[#allocation2 + $0xa0] sm:$0xff]
  %v4459 = vld [vmem:[#allocation2 + $0xa8] sm:$0xff]
  %v4460 = vld [vmem:[#allocation2 + $0xb0] sm:$0xff]
  %v4461 = vld [vmem:[#allocation2 + $0xb8] sm:$0xff]
  %v4462 = vld [vmem:[#allocation2 + $0xc0] sm:$0xff]
  %v4463 = vld [vmem:[#allocation2 + $0xc8] sm:$0xff]
  %v4464 = vld [vmem:[#allocation2 + $0xd0] sm:$0xff]
  %v4465 = vld [vmem:[#allocation2 + $0xd8] sm:$0xff]
  %v4466 = vld [vmem:[#allocation2 + $0xe0] sm:$0xff]
  %v4467 = vld [vmem:[#allocation2 + $0xe8] sm:$0xff]
  %v4468 = vld [vmem:[#allocation2 + $0xf0] sm:$0xff]
  %v4469 = vld [vmem:[#allocation2 + $0xf8] sm:$0xff]
  %v4470 = vld [vmem:[#allocation2 + $0x100] sm:$0xff]
  %v4471 = vld [vmem:[#allocation2 + $0x108] sm:$0xff]
  %v4472 = vld [vmem:[#allocation2 + $0x110] sm:$0xff]
  %v4473 = vld [vmem:[#allocation2 + $0x118] sm:$0xff]
  %v4474 = vld [vmem:[#allocation2 + $0x120] sm:$0xff]
  %v4475 = vld [vmem:[#allocation2 + $0x128] sm:$0xff]
  %v4476 = vld [vmem:[#allocation2 + $0x130] sm:$0xff]
  %v4477 = vld [vmem:[#allocation2 + $0x138] sm:$0xff]
  %v4478 = vld [vmem:[#allocation2 + $0x140] sm:$0xff]
  %v4479 = vld [vmem:[#allocation2 + $0x148] sm:$0xff]
  %v4480 = vld [vmem:[#allocation2 + $0x150] sm:$0xff]
  %v4481 = vld [vmem:[#allocation2 + $0x158] sm:$0xff]
  %v4482 = vld [vmem:[#allocation2 + $0x160] sm:$0xff]
  %v4483 = vld [vmem:[#allocation2 + $0x168] sm:$0xff]
  %v4484 = vld [vmem:[#allocation2 + $0x170] sm:$0xff]
  %v4485 = vld [vmem:[#allocation2 + $0x178] sm:$0xff]
  %v4486 = vld [vmem:[#allocation2 + $0x180] sm:$0xff]
  %v4487 = vld [vmem:[#allocation2 + $0x188] sm:$0xff]
  %v4488 = vld [vmem:[#allocation2 + $0x190] sm:$0xff]
  %v4489 = vld [vmem:[#allocation2 + $0x198] sm:$0xff]
  %v4490 = vld [vmem:[#allocation2 + $0x1a0] sm:$0xff]
  %v4491 = vld [vmem:[#allocation2 + $0x1a8] sm:$0xff]
  %v4492 = vld [vmem:[#allocation2 + $0x1b0] sm:$0xff]
  %v4493 = vld [vmem:[#allocation2 + $0x1b8] sm:$0xff]
  %v4494 = vld [vmem:[#allocation2 + $0x1c0] sm:$0xff]
  %v4495 = vld [vmem:[#allocation2 + $0x1c8] sm:$0xff]
  %v4496 = vld [vmem:[#allocation2 + $0x1d0] sm:$0xff]
  %v4497 = vld [vmem:[#allocation2 + $0x1d8] sm:$0xff]
  %v4498 = vld [vmem:[#allocation2 + $0x1e0] sm:$0xff]
  %v4499 = vld [vmem:[#allocation2 + $0x1e8] sm:$0xff]
  %v4500 = vld [vmem:[#allocation2 + $0x1f0] sm:$0xff]
  %v4501 = vld [vmem:[#allocation2 + $0x1f8] sm:$0xff]
  %v4502 = vld [vmem:[#allocation2 + $0x200] sm:$0xff]
  %4567 = vrot.lane.b32.xlu0 %v4439, 32
  %v4568 = vpop.permute.xlu0 %4567
  %4569 = vrot.lane.b32.xlu0 %v4440, 32
  %v4570 = vpop.permute.xlu0 %4569
  %4571 = vrot.lane.b32.xlu0 %v4441, 32
  %v4572 = vpop.permute.xlu0 %4571
  %4573 = vrot.lane.b32.xlu0 %v4442, 32
  %v4574 = vpop.permute.xlu0 %4573
  %4575 = vrot.lane.b32.xlu0 %v4443, 32
  %v4576 = vpop.permute.xlu0 %4575
  %4577 = vrot.lane.b32.xlu0 %v4444, 32
  %v4578 = vpop.permute.xlu0 %4577
  %4579 = vrot.lane.b32.xlu0 %v4445, 32
  %v4580 = vpop.permute.xlu0 %4579
  %4581 = vrot.lane.b32.xlu0 %v4446, 32
  %v4582 = vpop.permute.xlu0 %4581
  %4583 = vrot.lane.b32.xlu0 %v4447, 32
  %v4584 = vpop.permute.xlu0 %4583
  %4585 = vrot.lane.b32.xlu0 %v4448, 32
  %v4586 = vpop.permute.xlu0 %4585
  %4587 = vrot.lane.b32.xlu0 %v4449, 32
  %v4588 = vpop.permute.xlu0 %4587
  %4589 = vrot.lane.b32.xlu0 %v4450, 32
  %v4590 = vpop.permute.xlu0 %4589
  %4591 = vrot.lane.b32.xlu0 %v4451, 32
  %v4592 = vpop.permute.xlu0 %4591
  %4593 = vrot.lane.b32.xlu0 %v4452, 32
  %v4594 = vpop.permute.xlu0 %4593
  %4595 = vrot.lane.b32.xlu0 %v4453, 32
  %v4596 = vpop.permute.xlu0 %4595
  %4597 = vrot.lane.b32.xlu0 %v4454, 32
  %v4598 = vpop.permute.xlu0 %4597
  %4599 = vrot.lane.b32.xlu0 %v4455, 32
  %v4600 = vpop.permute.xlu0 %4599
  %4601 = vrot.lane.b32.xlu0 %v4456, 32
  %v4602 = vpop.permute.xlu0 %4601
  %4603 = vrot.lane.b32.xlu0 %v4457, 32
  %v4604 = vpop.permute.xlu0 %4603
  %4605 = vrot.lane.b32.xlu0 %v4458, 32
  %v4606 = vpop.permute.xlu0 %4605
  %4607 = vrot.lane.b32.xlu0 %v4459, 32
  %v4608 = vpop.permute.xlu0 %4607
  %4609 = vrot.lane.b32.xlu0 %v4460, 32
  %v4610 = vpop.permute.xlu0 %4609
  %4611 = vrot.lane.b32.xlu0 %v4461, 32
  %v4612 = vpop.permute.xlu0 %4611
  %4613 = vrot.lane.b32.xlu0 %v4462, 32
  %v4614 = vpop.permute.xlu0 %4613
  %4615 = vrot.lane.b32.xlu0 %v4463, 32
  %v4616 = vpop.permute.xlu0 %4615
  %4617 = vrot.lane.b32.xlu0 %v4464, 32
  %v4618 = vpop.permute.xlu0 %4617
  %4619 = vrot.lane.b32.xlu0 %v4465, 32
  %v4620 = vpop.permute.xlu0 %4619
  %4621 = vrot.lane.b32.xlu0 %v4466, 32
  %v4622 = vpop.permute.xlu0 %4621
  %4623 = vrot.lane.b32.xlu0 %v4467, 32
  %v4624 = vpop.permute.xlu0 %4623
  %4625 = vrot.lane.b32.xlu0 %v4468, 32
  %v4626 = vpop.permute.xlu0 %4625
  %4627 = vrot.lane.b32.xlu0 %v4469, 32
  %v4628 = vpop.permute.xlu0 %4627
  %4629 = vrot.lane.b32.xlu0 %v4470, 32
  %v4630 = vpop.permute.xlu0 %4629
  %4631 = vrot.lane.b32.xlu0 %v4471, 32
  %v4632 = vpop.permute.xlu0 %4631
  %4633 = vrot.lane.b32.xlu0 %v4472, 32
  %v4634 = vpop.permute.xlu0 %4633
  %4635 = vrot.lane.b32.xlu0 %v4473, 32
  %v4636 = vpop.permute.xlu0 %4635
  %4637 = vrot.lane.b32.xlu0 %v4474, 32
  %v4638 = vpop.permute.xlu0 %4637
  %4639 = vrot.lane.b32.xlu0 %v4475, 32
  %v4640 = vpop.permute.xlu0 %4639
  %4641 = vrot.lane.b32.xlu0 %v4476, 32
  %v4642 = vpop.permute.xlu0 %4641
  %4643 = vrot.lane.b32.xlu0 %v4477, 32
  %v4644 = vpop.permute.xlu0 %4643
  %4645 = vrot.lane.b32.xlu0 %v4478, 32
  %v4646 = vpop.permute.xlu0 %4645
  %4647 = vrot.lane.b32.xlu0 %v4479, 32
  %v4648 = vpop.permute.xlu0 %4647
  %4649 = vrot.lane.b32.xlu0 %v4480, 32
  %v4650 = vpop.permute.xlu0 %4649
  %4651 = vrot.lane.b32.xlu0 %v4481, 32
  %v4652 = vpop.permute.xlu0 %4651
  %4653 = vrot.lane.b32.xlu0 %v4482, 32
  %v4654 = vpop.permute.xlu0 %4653
  %4655 = vrot.lane.b32.xlu0 %v4483, 32
  %v4656 = vpop.permute.xlu0 %4655
  %4657 = vrot.lane.b32.xlu0 %v4484, 32
  %v4658 = vpop.permute.xlu0 %4657
  %4659 = vrot.lane.b32.xlu0 %v4485, 32
  %v4660 = vpop.permute.xlu0 %4659
  %4661 = vrot.lane.b32.xlu0 %v4486, 32
  %v4662 = vpop.permute.xlu0 %4661
  %4663 = vrot.lane.b32.xlu0 %v4487, 32
  %v4664 = vpop.permute.xlu0 %4663
  %4665 = vrot.lane.b32.xlu0 %v4488, 32
  %v4666 = vpop.permute.xlu0 %4665
  %4667 = vrot.lane.b32.xlu0 %v4489, 32
  %v4668 = vpop.permute.xlu0 %4667
  %4669 = vrot.lane.b32.xlu0 %v4490, 32
  %v4670 = vpop.permute.xlu0 %4669
  %4671 = vrot.lane.b32.xlu0 %v4491, 32
  %v4672 = vpop.permute.xlu0 %4671
  %4673 = vrot.lane.b32.xlu0 %v4492, 32
  %v4674 = vpop.permute.xlu0 %4673
  %4675 = vrot.lane.b32.xlu0 %v4493, 32
  %v4676 = vpop.permute.xlu0 %4675
  %4677 = vrot.lane.b32.xlu0 %v4494, 32
  %v4678 = vpop.permute.xlu0 %4677
  %4679 = vrot.lane.b32.xlu0 %v4495, 32
  %v4680 = vpop.permute.xlu0 %4679
  %4681 = vrot.lane.b32.xlu0 %v4496, 32
  %v4682 = vpop.permute.xlu0 %4681
  %4683 = vrot.lane.b32.xlu0 %v4497, 32
  %v4684 = vpop.permute.xlu0 %4683
  %4685 = vrot.lane.b32.xlu0 %v4498, 32
  %v4686 = vpop.permute.xlu0 %4685
  %4687 = vrot.lane.b32.xlu0 %v4499, 32
  %v4688 = vpop.permute.xlu0 %4687
  %4689 = vrot.lane.b32.xlu0 %v4500, 32
  %v4690 = vpop.permute.xlu0 %4689
  %4691 = vrot.lane.b32.xlu0 %v4501, 32
  %v4692 = vpop.permute.xlu0 %4691
  %4693 = vrot.lane.b32.xlu0 %v4502, 32
  %v4694 = vpop.permute.xlu0 %4693
  %4759 = vst.msk [vmem:[#allocation3] sm:$0xff] %vm615, %v4568
  %4760 = vst.msk [vmem:[#allocation3 + $0x18] sm:$0xff] %vm615, %v4570
  %4761 = vst.msk [vmem:[#allocation3 + $0x30] sm:$0xff] %vm615, %v4572
  %4762 = vst.msk [vmem:[#allocation3 + $0x48] sm:$0xff] %vm615, %v4574
  %4763 = vst.msk [vmem:[#allocation3 + $0x60] sm:$0xff] %vm615, %v4576
  %4764 = vst.msk [vmem:[#allocation3 + $0x78] sm:$0xff] %vm615, %v4578
  %4765 = vst.msk [vmem:[#allocation3 + $0x90] sm:$0xff] %vm615, %v4580
  %4766 = vst.msk [vmem:[#allocation3 + $0xa8] sm:$0xff] %vm615, %v4582
  %4767 = vst.msk [vmem:[#allocation3 + $0xc0] sm:$0xff] %vm615, %v4584
  %4768 = vst.msk [vmem:[#allocation3 + $0xd8] sm:$0xff] %vm615, %v4586
  %4769 = vst.msk [vmem:[#allocation3 + $0xf0] sm:$0xff] %vm615, %v4588
  %4770 = vst.msk [vmem:[#allocation3 + $0x108] sm:$0xff] %vm615, %v4590
  %4771 = vst.msk [vmem:[#allocation3 + $0x120] sm:$0xff] %vm615, %v4592
  %4772 = vst.msk [vmem:[#allocation3 + $0x138] sm:$0xff] %vm615, %v4594
  %4773 = vst.msk [vmem:[#allocation3 + $0x150] sm:$0xff] %vm615, %v4596
  %4774 = vst.msk [vmem:[#allocation3 + $0x168] sm:$0xff] %vm615, %v4598
  %4775 = vst.msk [vmem:[#allocation3 + $0x180] sm:$0xff] %vm615, %v4600
  %4776 = vst.msk [vmem:[#allocation3 + $0x198] sm:$0xff] %vm615, %v4602
  %4777 = vst.msk [vmem:[#allocation3 + $0x1b0] sm:$0xff] %vm615, %v4604
  %4778 = vst.msk [vmem:[#allocation3 + $0x1c8] sm:$0xff] %vm615, %v4606
  %4779 = vst.msk [vmem:[#allocation3 + $0x1e0] sm:$0xff] %vm615, %v4608
  %4780 = vst.msk [vmem:[#allocation3 + $0x1f8] sm:$0xff] %vm615, %v4610
  %4781 = vst.msk [vmem:[#allocation3 + $0x210] sm:$0xff] %vm615, %v4612
  %4782 = vst.msk [vmem:[#allocation3 + $0x228] sm:$0xff] %vm615, %v4614
  %4783 = vst.msk [vmem:[#allocation3 + $0x240] sm:$0xff] %vm615, %v4616
  %4784 = vst.msk [vmem:[#allocation3 + $0x258] sm:$0xff] %vm615, %v4618
  %4785 = vst.msk [vmem:[#allocation3 + $0x270] sm:$0xff] %vm615, %v4620
  %4786 = vst.msk [vmem:[#allocation3 + $0x288] sm:$0xff] %vm615, %v4622
  %4787 = vst.msk [vmem:[#allocation3 + $0x2a0] sm:$0xff] %vm615, %v4624
  %4788 = vst.msk [vmem:[#allocation3 + $0x2b8] sm:$0xff] %vm615, %v4626
  %4789 = vst.msk [vmem:[#allocation3 + $0x2d0] sm:$0xff] %vm615, %v4628
  %4790 = vst.msk [vmem:[#allocation3 + $0x2e8] sm:$0xff] %vm615, %v4630
  %4791 = vst.msk [vmem:[#allocation3 + $0x300] sm:$0xff] %vm615, %v4632
  %4792 = vst.msk [vmem:[#allocation3 + $0x318] sm:$0xff] %vm615, %v4634
  %4793 = vst.msk [vmem:[#allocation3 + $0x330] sm:$0xff] %vm615, %v4636
  %4794 = vst.msk [vmem:[#allocation3 + $0x348] sm:$0xff] %vm615, %v4638
  %4795 = vst.msk [vmem:[#allocation3 + $0x360] sm:$0xff] %vm615, %v4640
  %4796 = vst.msk [vmem:[#allocation3 + $0x378] sm:$0xff] %vm615, %v4642
  %4797 = vst.msk [vmem:[#allocation3 + $0x390] sm:$0xff] %vm615, %v4644
  %4798 = vst.msk [vmem:[#allocation3 + $0x3a8] sm:$0xff] %vm615, %v4646
  %4799 = vst.msk [vmem:[#allocation3 + $0x3c0] sm:$0xff] %vm615, %v4648
  %4800 = vst.msk [vmem:[#allocation3 + $0x3d8] sm:$0xff] %vm615, %v4650
  %4801 = vst.msk [vmem:[#allocation3 + $0x3f0] sm:$0xff] %vm615, %v4652
  %4802 = vst.msk [vmem:[#allocation3 + $0x408] sm:$0xff] %vm615, %v4654
  %4803 = vst.msk [vmem:[#allocation3 + $0x420] sm:$0xff] %vm615, %v4656
  %4804 = vst.msk [vmem:[#allocation3 + $0x438] sm:$0xff] %vm615, %v4658
  %4805 = vst.msk [vmem:[#allocation3 + $0x450] sm:$0xff] %vm615, %v4660
  %4806 = vst.msk [vmem:[#allocation3 + $0x468] sm:$0xff] %vm615, %v4662
  %4807 = vst.msk [vmem:[#allocation3 + $0x480] sm:$0xff] %vm615, %v4664
  %4808 = vst.msk [vmem:[#allocation3 + $0x498] sm:$0xff] %vm615, %v4666
  %4809 = vst.msk [vmem:[#allocation3 + $0x4b0] sm:$0xff] %vm615, %v4668
  %4810 = vst.msk [vmem:[#allocation3 + $0x4c8] sm:$0xff] %vm615, %v4670
  %4811 = vst.msk [vmem:[#allocation3 + $0x4e0] sm:$0xff] %vm615, %v4672
  %4812 = vst.msk [vmem:[#allocation3 + $0x4f8] sm:$0xff] %vm615, %v4674
  %4813 = vst.msk [vmem:[#allocation3 + $0x510] sm:$0xff] %vm615, %v4676
  %4814 = vst.msk [vmem:[#allocation3 + $0x528] sm:$0xff] %vm615, %v4678
  %4815 = vst.msk [vmem:[#allocation3 + $0x540] sm:$0xff] %vm615, %v4680
  %4816 = vst.msk [vmem:[#allocation3 + $0x558] sm:$0xff] %vm615, %v4682
  %4817 = vst.msk [vmem:[#allocation3 + $0x570] sm:$0xff] %vm615, %v4684
  %4818 = vst.msk [vmem:[#allocation3 + $0x588] sm:$0xff] %vm615, %v4686
  %4819 = vst.msk [vmem:[#allocation3 + $0x5a0] sm:$0xff] %vm615, %v4688
  %4820 = vst.msk [vmem:[#allocation3 + $0x5b8] sm:$0xff] %vm615, %v4690
  %4821 = vst.msk [vmem:[#allocation3 + $0x5d0] sm:$0xff] %vm615, %v4692
  %4822 = vst.msk [vmem:[#allocation3 + $0x5e8] sm:$0xff] %vm615, %v4694
  %v4823 = vld [vmem:[#allocation2 + $0x9] sm:$0xff]
  %v4824 = vld [vmem:[#allocation2 + $0x11] sm:$0xff]
  %v4825 = vld [vmem:[#allocation2 + $0x19] sm:$0xff]
  %v4826 = vld [vmem:[#allocation2 + $0x21] sm:$0xff]
  %v4827 = vld [vmem:[#allocation2 + $0x29] sm:$0xff]
  %v4828 = vld [vmem:[#allocation2 + $0x31] sm:$0xff]
  %v4829 = vld [vmem:[#allocation2 + $0x39] sm:$0xff]
  %v4830 = vld [vmem:[#allocation2 + $0x41] sm:$0xff]
  %v4831 = vld [vmem:[#allocation2 + $0x49] sm:$0xff]
  %v4832 = vld [vmem:[#allocation2 + $0x51] sm:$0xff]
  %v4833 = vld [vmem:[#allocation2 + $0x59] sm:$0xff]
  %v4834 = vld [vmem:[#allocation2 + $0x61] sm:$0xff]
  %v4835 = vld [vmem:[#allocation2 + $0x69] sm:$0xff]
  %v4836 = vld [vmem:[#allocation2 + $0x71] sm:$0xff]
  %v4837 = vld [vmem:[#allocation2 + $0x79] sm:$0xff]
  %v4838 = vld [vmem:[#allocation2 + $0x81] sm:$0xff]
  %v4839 = vld [vmem:[#allocation2 + $0x89] sm:$0xff]
  %v4840 = vld [vmem:[#allocation2 + $0x91] sm:$0xff]
  %v4841 = vld [vmem:[#allocation2 + $0x99] sm:$0xff]
  %v4842 = vld [vmem:[#allocation2 + $0xa1] sm:$0xff]
  %v4843 = vld [vmem:[#allocation2 + $0xa9] sm:$0xff]
  %v4844 = vld [vmem:[#allocation2 + $0xb1] sm:$0xff]
  %v4845 = vld [vmem:[#allocation2 + $0xb9] sm:$0xff]
  %v4846 = vld [vmem:[#allocation2 + $0xc1] sm:$0xff]
  %v4847 = vld [vmem:[#allocation2 + $0xc9] sm:$0xff]
  %v4848 = vld [vmem:[#allocation2 + $0xd1] sm:$0xff]
  %v4849 = vld [vmem:[#allocation2 + $0xd9] sm:$0xff]
  %v4850 = vld [vmem:[#allocation2 + $0xe1] sm:$0xff]
  %v4851 = vld [vmem:[#allocation2 + $0xe9] sm:$0xff]
  %v4852 = vld [vmem:[#allocation2 + $0xf1] sm:$0xff]
  %v4853 = vld [vmem:[#allocation2 + $0xf9] sm:$0xff]
  %v4854 = vld [vmem:[#allocation2 + $0x101] sm:$0xff]
  %v4855 = vld [vmem:[#allocation2 + $0x109] sm:$0xff]
  %v4856 = vld [vmem:[#allocation2 + $0x111] sm:$0xff]
  %v4857 = vld [vmem:[#allocation2 + $0x119] sm:$0xff]
  %v4858 = vld [vmem:[#allocation2 + $0x121] sm:$0xff]
  %v4859 = vld [vmem:[#allocation2 + $0x129] sm:$0xff]
  %v4860 = vld [vmem:[#allocation2 + $0x131] sm:$0xff]
  %v4861 = vld [vmem:[#allocation2 + $0x139] sm:$0xff]
  %v4862 = vld [vmem:[#allocation2 + $0x141] sm:$0xff]
  %v4863 = vld [vmem:[#allocation2 + $0x149] sm:$0xff]
  %v4864 = vld [vmem:[#allocation2 + $0x151] sm:$0xff]
  %v4865 = vld [vmem:[#allocation2 + $0x159] sm:$0xff]
  %v4866 = vld [vmem:[#allocation2 + $0x161] sm:$0xff]
  %v4867 = vld [vmem:[#allocation2 + $0x169] sm:$0xff]
  %v4868 = vld [vmem:[#allocation2 + $0x171] sm:$0xff]
  %v4869 = vld [vmem:[#allocation2 + $0x179] sm:$0xff]
  %v4870 = vld [vmem:[#allocation2 + $0x181] sm:$0xff]
  %v4871 = vld [vmem:[#allocation2 + $0x189] sm:$0xff]
  %v4872 = vld [vmem:[#allocation2 + $0x191] sm:$0xff]
  %v4873 = vld [vmem:[#allocation2 + $0x199] sm:$0xff]
  %v4874 = vld [vmem:[#allocation2 + $0x1a1] sm:$0xff]
  %v4875 = vld [vmem:[#allocation2 + $0x1a9] sm:$0xff]
  %v4876 = vld [vmem:[#allocation2 + $0x1b1] sm:$0xff]
  %v4877 = vld [vmem:[#allocation2 + $0x1b9] sm:$0xff]
  %v4878 = vld [vmem:[#allocation2 + $0x1c1] sm:$0xff]
  %v4879 = vld [vmem:[#allocation2 + $0x1c9] sm:$0xff]
  %v4880 = vld [vmem:[#allocation2 + $0x1d1] sm:$0xff]
  %v4881 = vld [vmem:[#allocation2 + $0x1d9] sm:$0xff]
  %v4882 = vld [vmem:[#allocation2 + $0x1e1] sm:$0xff]
  %v4883 = vld [vmem:[#allocation2 + $0x1e9] sm:$0xff]
  %v4884 = vld [vmem:[#allocation2 + $0x1f1] sm:$0xff]
  %v4885 = vld [vmem:[#allocation2 + $0x1f9] sm:$0xff]
  %v4886 = vld [vmem:[#allocation2 + $0x201] sm:$0xff]
  %4951 = vrot.lane.b32.xlu0 %v4823, 64
  %v4952 = vpop.permute.xlu0 %4951
  %4953 = vrot.lane.b32.xlu0 %v4824, 64
  %v4954 = vpop.permute.xlu0 %4953
  %4955 = vrot.lane.b32.xlu0 %v4825, 64
  %v4956 = vpop.permute.xlu0 %4955
  %4957 = vrot.lane.b32.xlu0 %v4826, 64
  %v4958 = vpop.permute.xlu0 %4957
  %4959 = vrot.lane.b32.xlu0 %v4827, 64
  %v4960 = vpop.permute.xlu0 %4959
  %4961 = vrot.lane.b32.xlu0 %v4828, 64
  %v4962 = vpop.permute.xlu0 %4961
  %4963 = vrot.lane.b32.xlu0 %v4829, 64
  %v4964 = vpop.permute.xlu0 %4963
  %4965 = vrot.lane.b32.xlu0 %v4830, 64
  %v4966 = vpop.permute.xlu0 %4965
  %4967 = vrot.lane.b32.xlu0 %v4831, 64
  %v4968 = vpop.permute.xlu0 %4967
  %4969 = vrot.lane.b32.xlu0 %v4832, 64
  %v4970 = vpop.permute.xlu0 %4969
  %4971 = vrot.lane.b32.xlu0 %v4833, 64
  %v4972 = vpop.permute.xlu0 %4971
  %4973 = vrot.lane.b32.xlu0 %v4834, 64
  %v4974 = vpop.permute.xlu0 %4973
  %4975 = vrot.lane.b32.xlu0 %v4835, 64
  %v4976 = vpop.permute.xlu0 %4975
  %4977 = vrot.lane.b32.xlu0 %v4836, 64
  %v4978 = vpop.permute.xlu0 %4977
  %4979 = vrot.lane.b32.xlu0 %v4837, 64
  %v4980 = vpop.permute.xlu0 %4979
  %4981 = vrot.lane.b32.xlu0 %v4838, 64
  %v4982 = vpop.permute.xlu0 %4981
  %4983 = vrot.lane.b32.xlu0 %v4839, 64
  %v4984 = vpop.permute.xlu0 %4983
  %4985 = vrot.lane.b32.xlu0 %v4840, 64
  %v4986 = vpop.permute.xlu0 %4985
  %4987 = vrot.lane.b32.xlu0 %v4841, 64
  %v4988 = vpop.permute.xlu0 %4987
  %4989 = vrot.lane.b32.xlu0 %v4842, 64
  %v4990 = vpop.permute.xlu0 %4989
  %4991 = vrot.lane.b32.xlu0 %v4843, 64
  %v4992 = vpop.permute.xlu0 %4991
  %4993 = vrot.lane.b32.xlu0 %v4844, 64
  %v4994 = vpop.permute.xlu0 %4993
  %4995 = vrot.lane.b32.xlu0 %v4845, 64
  %v4996 = vpop.permute.xlu0 %4995
  %4997 = vrot.lane.b32.xlu0 %v4846, 64
  %v4998 = vpop.permute.xlu0 %4997
  %4999 = vrot.lane.b32.xlu0 %v4847, 64
  %v5000 = vpop.permute.xlu0 %4999
  %5001 = vrot.lane.b32.xlu0 %v4848, 64
  %v5002 = vpop.permute.xlu0 %5001
  %5003 = vrot.lane.b32.xlu0 %v4849, 64
  %v5004 = vpop.permute.xlu0 %5003
  %5005 = vrot.lane.b32.xlu0 %v4850, 64
  %v5006 = vpop.permute.xlu0 %5005
  %5007 = vrot.lane.b32.xlu0 %v4851, 64
  %v5008 = vpop.permute.xlu0 %5007
  %5009 = vrot.lane.b32.xlu0 %v4852, 64
  %v5010 = vpop.permute.xlu0 %5009
  %5011 = vrot.lane.b32.xlu0 %v4853, 64
  %v5012 = vpop.permute.xlu0 %5011
  %5013 = vrot.lane.b32.xlu0 %v4854, 64
  %v5014 = vpop.permute.xlu0 %5013
  %5015 = vrot.lane.b32.xlu0 %v4855, 64
  %v5016 = vpop.permute.xlu0 %5015
  %5017 = vrot.lane.b32.xlu0 %v4856, 64
  %v5018 = vpop.permute.xlu0 %5017
  %5019 = vrot.lane.b32.xlu0 %v4857, 64
  %v5020 = vpop.permute.xlu0 %5019
  %5021 = vrot.lane.b32.xlu0 %v4858, 64
  %v5022 = vpop.permute.xlu0 %5021
  %5023 = vrot.lane.b32.xlu0 %v4859, 64
  %v5024 = vpop.permute.xlu0 %5023
  %5025 = vrot.lane.b32.xlu0 %v4860, 64
  %v5026 = vpop.permute.xlu0 %5025
  %5027 = vrot.lane.b32.xlu0 %v4861, 64
  %v5028 = vpop.permute.xlu0 %5027
  %5029 = vrot.lane.b32.xlu0 %v4862, 64
  %v5030 = vpop.permute.xlu0 %5029
  %5031 = vrot.lane.b32.xlu0 %v4863, 64
  %v5032 = vpop.permute.xlu0 %5031
  %5033 = vrot.lane.b32.xlu0 %v4864, 64
  %v5034 = vpop.permute.xlu0 %5033
  %5035 = vrot.lane.b32.xlu0 %v4865, 64
  %v5036 = vpop.permute.xlu0 %5035
  %5037 = vrot.lane.b32.xlu0 %v4866, 64
  %v5038 = vpop.permute.xlu0 %5037
  %5039 = vrot.lane.b32.xlu0 %v4867, 64
  %v5040 = vpop.permute.xlu0 %5039
  %5041 = vrot.lane.b32.xlu0 %v4868, 64
  %v5042 = vpop.permute.xlu0 %5041
  %5043 = vrot.lane.b32.xlu0 %v4869, 64
  %v5044 = vpop.permute.xlu0 %5043
  %5045 = vrot.lane.b32.xlu0 %v4870, 64
  %v5046 = vpop.permute.xlu0 %5045
  %5047 = vrot.lane.b32.xlu0 %v4871, 64
  %v5048 = vpop.permute.xlu0 %5047
  %5049 = vrot.lane.b32.xlu0 %v4872, 64
  %v5050 = vpop.permute.xlu0 %5049
  %5051 = vrot.lane.b32.xlu0 %v4873, 64
  %v5052 = vpop.permute.xlu0 %5051
  %5053 = vrot.lane.b32.xlu0 %v4874, 64
  %v5054 = vpop.permute.xlu0 %5053
  %5055 = vrot.lane.b32.xlu0 %v4875, 64
  %v5056 = vpop.permute.xlu0 %5055
  %5057 = vrot.lane.b32.xlu0 %v4876, 64
  %v5058 = vpop.permute.xlu0 %5057
  %5059 = vrot.lane.b32.xlu0 %v4877, 64
  %v5060 = vpop.permute.xlu0 %5059
  %5061 = vrot.lane.b32.xlu0 %v4878, 64
  %v5062 = vpop.permute.xlu0 %5061
  %5063 = vrot.lane.b32.xlu0 %v4879, 64
  %v5064 = vpop.permute.xlu0 %5063
  %5065 = vrot.lane.b32.xlu0 %v4880, 64
  %v5066 = vpop.permute.xlu0 %5065
  %5067 = vrot.lane.b32.xlu0 %v4881, 64
  %v5068 = vpop.permute.xlu0 %5067
  %5069 = vrot.lane.b32.xlu0 %v4882, 64
  %v5070 = vpop.permute.xlu0 %5069
  %5071 = vrot.lane.b32.xlu0 %v4883, 64
  %v5072 = vpop.permute.xlu0 %5071
  %5073 = vrot.lane.b32.xlu0 %v4884, 64
  %v5074 = vpop.permute.xlu0 %5073
  %5075 = vrot.lane.b32.xlu0 %v4885, 64
  %v5076 = vpop.permute.xlu0 %5075
  %5077 = vrot.lane.b32.xlu0 %v4886, 64
  %v5078 = vpop.permute.xlu0 %5077
  %5143 = vst.msk [vmem:[#allocation3] sm:$0xff] %vm1000, %v4952
  %5144 = vst.msk [vmem:[#allocation3 + $0x18] sm:$0xff] %vm1000, %v4954
  %5145 = vst.msk [vmem:[#allocation3 + $0x30] sm:$0xff] %vm1000, %v4956
  %5146 = vst.msk [vmem:[#allocation3 + $0x48] sm:$0xff] %vm1000, %v4958
  %5147 = vst.msk [vmem:[#allocation3 + $0x60] sm:$0xff] %vm1000, %v4960
  %5148 = vst.msk [vmem:[#allocation3 + $0x78] sm:$0xff] %vm1000, %v4962
  %5149 = vst.msk [vmem:[#allocation3 + $0x90] sm:$0xff] %vm1000, %v4964
  %5150 = vst.msk [vmem:[#allocation3 + $0xa8] sm:$0xff] %vm1000, %v4966
  %5151 = vst.msk [vmem:[#allocation3 + $0xc0] sm:$0xff] %vm1000, %v4968
  %5152 = vst.msk [vmem:[#allocation3 + $0xd8] sm:$0xff] %vm1000, %v4970
  %5153 = vst.msk [vmem:[#allocation3 + $0xf0] sm:$0xff] %vm1000, %v4972
  %5154 = vst.msk [vmem:[#allocation3 + $0x108] sm:$0xff] %vm1000, %v4974
  %5155 = vst.msk [vmem:[#allocation3 + $0x120] sm:$0xff] %vm1000, %v4976
  %5156 = vst.msk [vmem:[#allocation3 + $0x138] sm:$0xff] %vm1000, %v4978
  %5157 = vst.msk [vmem:[#allocation3 + $0x150] sm:$0xff] %vm1000, %v4980
  %5158 = vst.msk [vmem:[#allocation3 + $0x168] sm:$0xff] %vm1000, %v4982
  %5159 = vst.msk [vmem:[#allocation3 + $0x180] sm:$0xff] %vm1000, %v4984
  %5160 = vst.msk [vmem:[#allocation3 + $0x198] sm:$0xff] %vm1000, %v4986
  %5161 = vst.msk [vmem:[#allocation3 + $0x1b0] sm:$0xff] %vm1000, %v4988
  %5162 = vst.msk [vmem:[#allocation3 + $0x1c8] sm:$0xff] %vm1000, %v4990
  %5163 = vst.msk [vmem:[#allocation3 + $0x1e0] sm:$0xff] %vm1000, %v4992
  %5164 = vst.msk [vmem:[#allocation3 + $0x1f8] sm:$0xff] %vm1000, %v4994
  %5165 = vst.msk [vmem:[#allocation3 + $0x210] sm:$0xff] %vm1000, %v4996
  %5166 = vst.msk [vmem:[#allocation3 + $0x228] sm:$0xff] %vm1000, %v4998
  %5167 = vst.msk [vmem:[#allocation3 + $0x240] sm:$0xff] %vm1000, %v5000
  %5168 = vst.msk [vmem:[#allocation3 + $0x258] sm:$0xff] %vm1000, %v5002
  %5169 = vst.msk [vmem:[#allocation3 + $0x270] sm:$0xff] %vm1000, %v5004
  %5170 = vst.msk [vmem:[#allocation3 + $0x288] sm:$0xff] %vm1000, %v5006
  %5171 = vst.msk [vmem:[#allocation3 + $0x2a0] sm:$0xff] %vm1000, %v5008
  %5172 = vst.msk [vmem:[#allocation3 + $0x2b8] sm:$0xff] %vm1000, %v5010
  %5173 = vst.msk [vmem:[#allocation3 + $0x2d0] sm:$0xff] %vm1000, %v5012
  %5174 = vst.msk [vmem:[#allocation3 + $0x2e8] sm:$0xff] %vm1000, %v5014
  %5175 = vst.msk [vmem:[#allocation3 + $0x300] sm:$0xff] %vm1000, %v5016
  %5176 = vst.msk [vmem:[#allocation3 + $0x318] sm:$0xff] %vm1000, %v5018
  %5177 = vst.msk [vmem:[#allocation3 + $0x330] sm:$0xff] %vm1000, %v5020
  %5178 = vst.msk [vmem:[#allocation3 + $0x348] sm:$0xff] %vm1000, %v5022
  %5179 = vst.msk [vmem:[#allocation3 + $0x360] sm:$0xff] %vm1000, %v5024
  %5180 = vst.msk [vmem:[#allocation3 + $0x378] sm:$0xff] %vm1000, %v5026
  %5181 = vst.msk [vmem:[#allocation3 + $0x390] sm:$0xff] %vm1000, %v5028
  %5182 = vst.msk [vmem:[#allocation3 + $0x3a8] sm:$0xff] %vm1000, %v5030
  %5183 = vst.msk [vmem:[#allocation3 + $0x3c0] sm:$0xff] %vm1000, %v5032
  %5184 = vst.msk [vmem:[#allocation3 + $0x3d8] sm:$0xff] %vm1000, %v5034
  %5185 = vst.msk [vmem:[#allocation3 + $0x3f0] sm:$0xff] %vm1000, %v5036
  %5186 = vst.msk [vmem:[#allocation3 + $0x408] sm:$0xff] %vm1000, %v5038
  %5187 = vst.msk [vmem:[#allocation3 + $0x420] sm:$0xff] %vm1000, %v5040
  %5188 = vst.msk [vmem:[#allocation3 + $0x438] sm:$0xff] %vm1000, %v5042
  %5189 = vst.msk [vmem:[#allocation3 + $0x450] sm:$0xff] %vm1000, %v5044
  %5190 = vst.msk [vmem:[#allocation3 + $0x468] sm:$0xff] %vm1000, %v5046
  %5191 = vst.msk [vmem:[#allocation3 + $0x480] sm:$0xff] %vm1000, %v5048
  %5192 = vst.msk [vmem:[#allocation3 + $0x498] sm:$0xff] %vm1000, %v5050
  %5193 = vst.msk [vmem:[#allocation3 + $0x4b0] sm:$0xff] %vm1000, %v5052
  %5194 = vst.msk [vmem:[#allocation3 + $0x4c8] sm:$0xff] %vm1000, %v5054
  %5195 = vst.msk [vmem:[#allocation3 + $0x4e0] sm:$0xff] %vm1000, %v5056
  %5196 = vst.msk [vmem:[#allocation3 + $0x4f8] sm:$0xff] %vm1000, %v5058
  %5197 = vst.msk [vmem:[#allocation3 + $0x510] sm:$0xff] %vm1000, %v5060
  %5198 = vst.msk [vmem:[#allocation3 + $0x528] sm:$0xff] %vm1000, %v5062
  %5199 = vst.msk [vmem:[#allocation3 + $0x540] sm:$0xff] %vm1000, %v5064
  %5200 = vst.msk [vmem:[#allocation3 + $0x558] sm:$0xff] %vm1000, %v5066
  %5201 = vst.msk [vmem:[#allocation3 + $0x570] sm:$0xff] %vm1000, %v5068
  %5202 = vst.msk [vmem:[#allocation3 + $0x588] sm:$0xff] %vm1000, %v5070
  %5203 = vst.msk [vmem:[#allocation3 + $0x5a0] sm:$0xff] %vm1000, %v5072
  %5204 = vst.msk [vmem:[#allocation3 + $0x5b8] sm:$0xff] %vm1000, %v5074
  %5205 = vst.msk [vmem:[#allocation3 + $0x5d0] sm:$0xff] %vm1000, %v5076
  %5206 = vst.msk [vmem:[#allocation3 + $0x5e8] sm:$0xff] %vm1000, %v5078
  %v5207 = vld [vmem:[#allocation2 + $0xf] sm:$0xff]
  %v5208 = vld [vmem:[#allocation2 + $0x17] sm:$0xff]
  %v5209 = vld [vmem:[#allocation2 + $0x1f] sm:$0xff]
  %v5210 = vld [vmem:[#allocation2 + $0x27] sm:$0xff]
  %v5211 = vld [vmem:[#allocation2 + $0x2f] sm:$0xff]
  %v5212 = vld [vmem:[#allocation2 + $0x37] sm:$0xff]
  %v5213 = vld [vmem:[#allocation2 + $0x3f] sm:$0xff]
  %v5214 = vld [vmem:[#allocation2 + $0x47] sm:$0xff]
  %v5215 = vld [vmem:[#allocation2 + $0x4f] sm:$0xff]
  %v5216 = vld [vmem:[#allocation2 + $0x57] sm:$0xff]
  %v5217 = vld [vmem:[#allocation2 + $0x5f] sm:$0xff]
  %v5218 = vld [vmem:[#allocation2 + $0x67] sm:$0xff]
  %v5219 = vld [vmem:[#allocation2 + $0x6f] sm:$0xff]
  %v5220 = vld [vmem:[#allocation2 + $0x77] sm:$0xff]
  %v5221 = vld [vmem:[#allocation2 + $0x7f] sm:$0xff]
  %v5222 = vld [vmem:[#allocation2 + $0x87] sm:$0xff]
  %v5223 = vld [vmem:[#allocation2 + $0x8f] sm:$0xff]
  %v5224 = vld [vmem:[#allocation2 + $0x97] sm:$0xff]
  %v5225 = vld [vmem:[#allocation2 + $0x9f] sm:$0xff]
  %v5226 = vld [vmem:[#allocation2 + $0xa7] sm:$0xff]
  %v5227 = vld [vmem:[#allocation2 + $0xaf] sm:$0xff]
  %v5228 = vld [vmem:[#allocation2 + $0xb7] sm:$0xff]
  %v5229 = vld [vmem:[#allocation2 + $0xbf] sm:$0xff]
  %v5230 = vld [vmem:[#allocation2 + $0xc7] sm:$0xff]
  %v5231 = vld [vmem:[#allocation2 + $0xcf] sm:$0xff]
  %v5232 = vld [vmem:[#allocation2 + $0xd7] sm:$0xff]
  %v5233 = vld [vmem:[#allocation2 + $0xdf] sm:$0xff]
  %v5234 = vld [vmem:[#allocation2 + $0xe7] sm:$0xff]
  %v5235 = vld [vmem:[#allocation2 + $0xef] sm:$0xff]
  %v5236 = vld [vmem:[#allocation2 + $0xf7] sm:$0xff]
  %v5237 = vld [vmem:[#allocation2 + $0xff] sm:$0xff]
  %v5238 = vld [vmem:[#allocation2 + $0x107] sm:$0xff]
  %v5239 = vld [vmem:[#allocation2 + $0x10f] sm:$0xff]
  %v5240 = vld [vmem:[#allocation2 + $0x117] sm:$0xff]
  %v5241 = vld [vmem:[#allocation2 + $0x11f] sm:$0xff]
  %v5242 = vld [vmem:[#allocation2 + $0x127] sm:$0xff]
  %v5243 = vld [vmem:[#allocation2 + $0x12f] sm:$0xff]
  %v5244 = vld [vmem:[#allocation2 + $0x137] sm:$0xff]
  %v5245 = vld [vmem:[#allocation2 + $0x13f] sm:$0xff]
  %v5246 = vld [vmem:[#allocation2 + $0x147] sm:$0xff]
  %v5247 = vld [vmem:[#allocation2 + $0x14f] sm:$0xff]
  %v5248 = vld [vmem:[#allocation2 + $0x157] sm:$0xff]
  %v5249 = vld [vmem:[#allocation2 + $0x15f] sm:$0xff]
  %v5250 = vld [vmem:[#allocation2 + $0x167] sm:$0xff]
  %v5251 = vld [vmem:[#allocation2 + $0x16f] sm:$0xff]
  %v5252 = vld [vmem:[#allocation2 + $0x177] sm:$0xff]
  %v5253 = vld [vmem:[#allocation2 + $0x17f] sm:$0xff]
  %v5254 = vld [vmem:[#allocation2 + $0x187] sm:$0xff]
  %v5255 = vld [vmem:[#allocation2 + $0x18f] sm:$0xff]
  %v5256 = vld [vmem:[#allocation2 + $0x197] sm:$0xff]
  %v5257 = vld [vmem:[#allocation2 + $0x19f] sm:$0xff]
  %v5258 = vld [vmem:[#allocation2 + $0x1a7] sm:$0xff]
  %v5259 = vld [vmem:[#allocation2 + $0x1af] sm:$0xff]
  %v5260 = vld [vmem:[#allocation2 + $0x1b7] sm:$0xff]
  %v5261 = vld [vmem:[#allocation2 + $0x1bf] sm:$0xff]
  %v5262 = vld [vmem:[#allocation2 + $0x1c7] sm:$0xff]
  %v5263 = vld [vmem:[#allocation2 + $0x1cf] sm:$0xff]
  %v5264 = vld [vmem:[#allocation2 + $0x1d7] sm:$0xff]
  %v5265 = vld [vmem:[#allocation2 + $0x1df] sm:$0xff]
  %v5266 = vld [vmem:[#allocation2 + $0x1e7] sm:$0xff]
  %v5267 = vld [vmem:[#allocation2 + $0x1ef] sm:$0xff]
  %v5268 = vld [vmem:[#allocation2 + $0x1f7] sm:$0xff]
  %v5269 = vld [vmem:[#allocation2 + $0x1ff] sm:$0xff]
  %v5270 = vld [vmem:[#allocation2 + $0x207] sm:$0xff]
  %5335 = vrot.lane.b32.xlu0 %v5207, 96
  %v5336 = vpop.permute.xlu0 %5335
  %5337 = vrot.lane.b32.xlu0 %v5208, 96
  %v5338 = vpop.permute.xlu0 %5337
  %5339 = vrot.lane.b32.xlu0 %v5209, 96
  %v5340 = vpop.permute.xlu0 %5339
  %5341 = vrot.lane.b32.xlu0 %v5210, 96
  %v5342 = vpop.permute.xlu0 %5341
  %5343 = vrot.lane.b32.xlu0 %v5211, 96
  %v5344 = vpop.permute.xlu0 %5343
  %5345 = vrot.lane.b32.xlu0 %v5212, 96
  %v5346 = vpop.permute.xlu0 %5345
  %5347 = vrot.lane.b32.xlu0 %v5213, 96
  %v5348 = vpop.permute.xlu0 %5347
  %5349 = vrot.lane.b32.xlu0 %v5214, 96
  %v5350 = vpop.permute.xlu0 %5349
  %5351 = vrot.lane.b32.xlu0 %v5215, 96
  %v5352 = vpop.permute.xlu0 %5351
  %5353 = vrot.lane.b32.xlu0 %v5216, 96
  %v5354 = vpop.permute.xlu0 %5353
  %5355 = vrot.lane.b32.xlu0 %v5217, 96
  %v5356 = vpop.permute.xlu0 %5355
  %5357 = vrot.lane.b32.xlu0 %v5218, 96
  %v5358 = vpop.permute.xlu0 %5357
  %5359 = vrot.lane.b32.xlu0 %v5219, 96
  %v5360 = vpop.permute.xlu0 %5359
  %5361 = vrot.lane.b32.xlu0 %v5220, 96
  %v5362 = vpop.permute.xlu0 %5361
  %5363 = vrot.lane.b32.xlu0 %v5221, 96
  %v5364 = vpop.permute.xlu0 %5363
  %5365 = vrot.lane.b32.xlu0 %v5222, 96
  %v5366 = vpop.permute.xlu0 %5365
  %5367 = vrot.lane.b32.xlu0 %v5223, 96
  %v5368 = vpop.permute.xlu0 %5367
  %5369 = vrot.lane.b32.xlu0 %v5224, 96
  %v5370 = vpop.permute.xlu0 %5369
  %5371 = vrot.lane.b32.xlu0 %v5225, 96
  %v5372 = vpop.permute.xlu0 %5371
  %5373 = vrot.lane.b32.xlu0 %v5226, 96
  %v5374 = vpop.permute.xlu0 %5373
  %5375 = vrot.lane.b32.xlu0 %v5227, 96
  %v5376 = vpop.permute.xlu0 %5375
  %5377 = vrot.lane.b32.xlu0 %v5228, 96
  %v5378 = vpop.permute.xlu0 %5377
  %5379 = vrot.lane.b32.xlu0 %v5229, 96
  %v5380 = vpop.permute.xlu0 %5379
  %5381 = vrot.lane.b32.xlu0 %v5230, 96
  %v5382 = vpop.permute.xlu0 %5381
  %5383 = vrot.lane.b32.xlu0 %v5231, 96
  %v5384 = vpop.permute.xlu0 %5383
  %5385 = vrot.lane.b32.xlu0 %v5232, 96
  %v5386 = vpop.permute.xlu0 %5385
  %5387 = vrot.lane.b32.xlu0 %v5233, 96
  %v5388 = vpop.permute.xlu0 %5387
  %5389 = vrot.lane.b32.xlu0 %v5234, 96
  %v5390 = vpop.permute.xlu0 %5389
  %5391 = vrot.lane.b32.xlu0 %v5235, 96
  %v5392 = vpop.permute.xlu0 %5391
  %5393 = vrot.lane.b32.xlu0 %v5236, 96
  %v5394 = vpop.permute.xlu0 %5393
  %5395 = vrot.lane.b32.xlu0 %v5237, 96
  %v5396 = vpop.permute.xlu0 %5395
  %5397 = vrot.lane.b32.xlu0 %v5238, 96
  %v5398 = vpop.permute.xlu0 %5397
  %5399 = vrot.lane.b32.xlu0 %v5239, 96
  %v5400 = vpop.permute.xlu0 %5399
  %5401 = vrot.lane.b32.xlu0 %v5240, 96
  %v5402 = vpop.permute.xlu0 %5401
  %5403 = vrot.lane.b32.xlu0 %v5241, 96
  %v5404 = vpop.permute.xlu0 %5403
  %5405 = vrot.lane.b32.xlu0 %v5242, 96
  %v5406 = vpop.permute.xlu0 %5405
  %5407 = vrot.lane.b32.xlu0 %v5243, 96
  %v5408 = vpop.permute.xlu0 %5407
  %5409 = vrot.lane.b32.xlu0 %v5244, 96
  %v5410 = vpop.permute.xlu0 %5409
  %5411 = vrot.lane.b32.xlu0 %v5245, 96
  %v5412 = vpop.permute.xlu0 %5411
  %5413 = vrot.lane.b32.xlu0 %v5246, 96
  %v5414 = vpop.permute.xlu0 %5413
  %5415 = vrot.lane.b32.xlu0 %v5247, 96
  %v5416 = vpop.permute.xlu0 %5415
  %5417 = vrot.lane.b32.xlu0 %v5248, 96
  %v5418 = vpop.permute.xlu0 %5417
  %5419 = vrot.lane.b32.xlu0 %v5249, 96
  %v5420 = vpop.permute.xlu0 %5419
  %5421 = vrot.lane.b32.xlu0 %v5250, 96
  %v5422 = vpop.permute.xlu0 %5421
  %5423 = vrot.lane.b32.xlu0 %v5251, 96
  %v5424 = vpop.permute.xlu0 %5423
  %5425 = vrot.lane.b32.xlu0 %v5252, 96
  %v5426 = vpop.permute.xlu0 %5425
  %5427 = vrot.lane.b32.xlu0 %v5253, 96
  %v5428 = vpop.permute.xlu0 %5427
  %5429 = vrot.lane.b32.xlu0 %v5254, 96
  %v5430 = vpop.permute.xlu0 %5429
  %5431 = vrot.lane.b32.xlu0 %v5255, 96
  %v5432 = vpop.permute.xlu0 %5431
  %5433 = vrot.lane.b32.xlu0 %v5256, 96
  %v5434 = vpop.permute.xlu0 %5433
  %5435 = vrot.lane.b32.xlu0 %v5257, 96
  %v5436 = vpop.permute.xlu0 %5435
  %5437 = vrot.lane.b32.xlu0 %v5258, 96
  %v5438 = vpop.permute.xlu0 %5437
  %5439 = vrot.lane.b32.xlu0 %v5259, 96
  %v5440 = vpop.permute.xlu0 %5439
  %5441 = vrot.lane.b32.xlu0 %v5260, 96
  %v5442 = vpop.permute.xlu0 %5441
  %5443 = vrot.lane.b32.xlu0 %v5261, 96
  %v5444 = vpop.permute.xlu0 %5443
  %5445 = vrot.lane.b32.xlu0 %v5262, 96
  %v5446 = vpop.permute.xlu0 %5445
  %5447 = vrot.lane.b32.xlu0 %v5263, 96
  %v5448 = vpop.permute.xlu0 %5447
  %5449 = vrot.lane.b32.xlu0 %v5264, 96
  %v5450 = vpop.permute.xlu0 %5449
  %5451 = vrot.lane.b32.xlu0 %v5265, 96
  %v5452 = vpop.permute.xlu0 %5451
  %5453 = vrot.lane.b32.xlu0 %v5266, 96
  %v5454 = vpop.permute.xlu0 %5453
  %5455 = vrot.lane.b32.xlu0 %v5267, 96
  %v5456 = vpop.permute.xlu0 %5455
  %5457 = vrot.lane.b32.xlu0 %v5268, 96
  %v5458 = vpop.permute.xlu0 %5457
  %5459 = vrot.lane.b32.xlu0 %v5269, 96
  %v5460 = vpop.permute.xlu0 %5459
  %5461 = vrot.lane.b32.xlu0 %v5270, 96
  %v5462 = vpop.permute.xlu0 %5461
  %5527 = vst.msk [vmem:[#allocation3] sm:$0xff] %vm1385, %v5336
  %5528 = vst.msk [vmem:[#allocation3 + $0x18] sm:$0xff] %vm1385, %v5338
  %5529 = vst.msk [vmem:[#allocation3 + $0x30] sm:$0xff] %vm1385, %v5340
  %5530 = vst.msk [vmem:[#allocation3 + $0x48] sm:$0xff] %vm1385, %v5342
  %5531 = vst.msk [vmem:[#allocation3 + $0x60] sm:$0xff] %vm1385, %v5344
  %5532 = vst.msk [vmem:[#allocation3 + $0x78] sm:$0xff] %vm1385, %v5346
  %5533 = vst.msk [vmem:[#allocation3 + $0x90] sm:$0xff] %vm1385, %v5348
  %5534 = vst.msk [vmem:[#allocation3 + $0xa8] sm:$0xff] %vm1385, %v5350
  %5535 = vst.msk [vmem:[#allocation3 + $0xc0] sm:$0xff] %vm1385, %v5352
  %5536 = vst.msk [vmem:[#allocation3 + $0xd8] sm:$0xff] %vm1385, %v5354
  %5537 = vst.msk [vmem:[#allocation3 + $0xf0] sm:$0xff] %vm1385, %v5356
  %5538 = vst.msk [vmem:[#allocation3 + $0x108] sm:$0xff] %vm1385, %v5358
  %5539 = vst.msk [vmem:[#allocation3 + $0x120] sm:$0xff] %vm1385, %v5360
  %5540 = vst.msk [vmem:[#allocation3 + $0x138] sm:$0xff] %vm1385, %v5362
  %5541 = vst.msk [vmem:[#allocation3 + $0x150] sm:$0xff] %vm1385, %v5364
  %5542 = vst.msk [vmem:[#allocation3 + $0x168] sm:$0xff] %vm1385, %v5366
  %5543 = vst.msk [vmem:[#allocation3 + $0x180] sm:$0xff] %vm1385, %v5368
  %5544 = vst.msk [vmem:[#allocation3 + $0x198] sm:$0xff] %vm1385, %v5370
  %5545 = vst.msk [vmem:[#allocation3 + $0x1b0] sm:$0xff] %vm1385, %v5372
  %5546 = vst.msk [vmem:[#allocation3 + $0x1c8] sm:$0xff] %vm1385, %v5374
  %5547 = vst.msk [vmem:[#allocation3 + $0x1e0] sm:$0xff] %vm1385, %v5376
  %5548 = vst.msk [vmem:[#allocation3 + $0x1f8] sm:$0xff] %vm1385, %v5378
  %5549 = vst.msk [vmem:[#allocation3 + $0x210] sm:$0xff] %vm1385, %v5380
  %5550 = vst.msk [vmem:[#allocation3 + $0x228] sm:$0xff] %vm1385, %v5382
  %5551 = vst.msk [vmem:[#allocation3 + $0x240] sm:$0xff] %vm1385, %v5384
  %5552 = vst.msk [vmem:[#allocation3 + $0x258] sm:$0xff] %vm1385, %v5386
  %5553 = vst.msk [vmem:[#allocation3 + $0x270] sm:$0xff] %vm1385, %v5388
  %5554 = vst.msk [vmem:[#allocation3 + $0x288] sm:$0xff] %vm1385, %v5390
  %5555 = vst.msk [vmem:[#allocation3 + $0x2a0] sm:$0xff] %vm1385, %v5392
  %5556 = vst.msk [vmem:[#allocation3 + $0x2b8] sm:$0xff] %vm1385, %v5394
  %5557 = vst.msk [vmem:[#allocation3 + $0x2d0] sm:$0xff] %vm1385, %v5396
  %5558 = vst.msk [vmem:[#allocation3 + $0x2e8] sm:$0xff] %vm1385, %v5398
  %5559 = vst.msk [vmem:[#allocation3 + $0x300] sm:$0xff] %vm1385, %v5400
  %5560 = vst.msk [vmem:[#allocation3 + $0x318] sm:$0xff] %vm1385, %v5402
  %5561 = vst.msk [vmem:[#allocation3 + $0x330] sm:$0xff] %vm1385, %v5404
  %5562 = vst.msk [vmem:[#allocation3 + $0x348] sm:$0xff] %vm1385, %v5406
  %5563 = vst.msk [vmem:[#allocation3 + $0x360] sm:$0xff] %vm1385, %v5408
  %5564 = vst.msk [vmem:[#allocation3 + $0x378] sm:$0xff] %vm1385, %v5410
  %5565 = vst.msk [vmem:[#allocation3 + $0x390] sm:$0xff] %vm1385, %v5412
  %5566 = vst.msk [vmem:[#allocation3 + $0x3a8] sm:$0xff] %vm1385, %v5414
  %5567 = vst.msk [vmem:[#allocation3 + $0x3c0] sm:$0xff] %vm1385, %v5416
  %5568 = vst.msk [vmem:[#allocation3 + $0x3d8] sm:$0xff] %vm1385, %v5418
  %5569 = vst.msk [vmem:[#allocation3 + $0x3f0] sm:$0xff] %vm1385, %v5420
  %5570 = vst.msk [vmem:[#allocation3 + $0x408] sm:$0xff] %vm1385, %v5422
  %5571 = vst.msk [vmem:[#allocation3 + $0x420] sm:$0xff] %vm1385, %v5424
  %5572 = vst.msk [vmem:[#allocation3 + $0x438] sm:$0xff] %vm1385, %v5426
  %5573 = vst.msk [vmem:[#allocation3 + $0x450] sm:$0xff] %vm1385, %v5428
  %5574 = vst.msk [vmem:[#allocation3 + $0x468] sm:$0xff] %vm1385, %v5430
  %5575 = vst.msk [vmem:[#allocation3 + $0x480] sm:$0xff] %vm1385, %v5432
  %5576 = vst.msk [vmem:[#allocation3 + $0x498] sm:$0xff] %vm1385, %v5434
  %5577 = vst.msk [vmem:[#allocation3 + $0x4b0] sm:$0xff] %vm1385, %v5436
  %5578 = vst.msk [vmem:[#allocation3 + $0x4c8] sm:$0xff] %vm1385, %v5438
  %5579 = vst.msk [vmem:[#allocation3 + $0x4e0] sm:$0xff] %vm1385, %v5440
  %5580 = vst.msk [vmem:[#allocation3 + $0x4f8] sm:$0xff] %vm1385, %v5442
  %5581 = vst.msk [vmem:[#allocation3 + $0x510] sm:$0xff] %vm1385, %v5444
  %5582 = vst.msk [vmem:[#allocation3 + $0x528] sm:$0xff] %vm1385, %v5446
  %5583 = vst.msk [vmem:[#allocation3 + $0x540] sm:$0xff] %vm1385, %v5448
  %5584 = vst.msk [vmem:[#allocation3 + $0x558] sm:$0xff] %vm1385, %v5450
  %5585 = vst.msk [vmem:[#allocation3 + $0x570] sm:$0xff] %vm1385, %v5452
  %5586 = vst.msk [vmem:[#allocation3 + $0x588] sm:$0xff] %vm1385, %v5454
  %5587 = vst.msk [vmem:[#allocation3 + $0x5a0] sm:$0xff] %vm1385, %v5456
  %5588 = vst.msk [vmem:[#allocation3 + $0x5b8] sm:$0xff] %vm1385, %v5458
  %5589 = vst.msk [vmem:[#allocation3 + $0x5d0] sm:$0xff] %vm1385, %v5460
  %5590 = vst.msk [vmem:[#allocation3 + $0x5e8] sm:$0xff] %vm1385, %v5462
  %v5591 = vld [vmem:[#allocation2 + $0x10] sm:$0xff]
  %v5592 = vld [vmem:[#allocation2 + $0x18] sm:$0xff]
  %v5593 = vld [vmem:[#allocation2 + $0x20] sm:$0xff]
  %v5594 = vld [vmem:[#allocation2 + $0x28] sm:$0xff]
  %v5595 = vld [vmem:[#allocation2 + $0x30] sm:$0xff]
  %v5596 = vld [vmem:[#allocation2 + $0x38] sm:$0xff]
  %v5597 = vld [vmem:[#allocation2 + $0x40] sm:$0xff]
  %v5598 = vld [vmem:[#allocation2 + $0x48] sm:$0xff]
  %v5599 = vld [vmem:[#allocation2 + $0x50] sm:$0xff]
  %v5600 = vld [vmem:[#allocation2 + $0x58] sm:$0xff]
  %v5601 = vld [vmem:[#allocation2 + $0x60] sm:$0xff]
  %v5602 = vld [vmem:[#allocation2 + $0x68] sm:$0xff]
  %v5603 = vld [vmem:[#allocation2 + $0x70] sm:$0xff]
  %v5604 = vld [vmem:[#allocation2 + $0x78] sm:$0xff]
  %v5605 = vld [vmem:[#allocation2 + $0x80] sm:$0xff]
  %v5606 = vld [vmem:[#allocation2 + $0x88] sm:$0xff]
  %v5607 = vld [vmem:[#allocation2 + $0x90] sm:$0xff]
  %v5608 = vld [vmem:[#allocation2 + $0x98] sm:$0xff]
  %v5609 = vld [vmem:[#allocation2 + $0xa0] sm:$0xff]
  %v5610 = vld [vmem:[#allocation2 + $0xa8] sm:$0xff]
  %v5611 = vld [vmem:[#allocation2 + $0xb0] sm:$0xff]
  %v5612 = vld [vmem:[#allocation2 + $0xb8] sm:$0xff]
  %v5613 = vld [vmem:[#allocation2 + $0xc0] sm:$0xff]
  %v5614 = vld [vmem:[#allocation2 + $0xc8] sm:$0xff]
  %v5615 = vld [vmem:[#allocation2 + $0xd0] sm:$0xff]
  %v5616 = vld [vmem:[#allocation2 + $0xd8] sm:$0xff]
  %v5617 = vld [vmem:[#allocation2 + $0xe0] sm:$0xff]
  %v5618 = vld [vmem:[#allocation2 + $0xe8] sm:$0xff]
  %v5619 = vld [vmem:[#allocation2 + $0xf0] sm:$0xff]
  %v5620 = vld [vmem:[#allocation2 + $0xf8] sm:$0xff]
  %v5621 = vld [vmem:[#allocation2 + $0x100] sm:$0xff]
  %v5622 = vld [vmem:[#allocation2 + $0x108] sm:$0xff]
  %v5623 = vld [vmem:[#allocation2 + $0x110] sm:$0xff]
  %v5624 = vld [vmem:[#allocation2 + $0x118] sm:$0xff]
  %v5625 = vld [vmem:[#allocation2 + $0x120] sm:$0xff]
  %v5626 = vld [vmem:[#allocation2 + $0x128] sm:$0xff]
  %v5627 = vld [vmem:[#allocation2 + $0x130] sm:$0xff]
  %v5628 = vld [vmem:[#allocation2 + $0x138] sm:$0xff]
  %v5629 = vld [vmem:[#allocation2 + $0x140] sm:$0xff]
  %v5630 = vld [vmem:[#allocation2 + $0x148] sm:$0xff]
  %v5631 = vld [vmem:[#allocation2 + $0x150] sm:$0xff]
  %v5632 = vld [vmem:[#allocation2 + $0x158] sm:$0xff]
  %v5633 = vld [vmem:[#allocation2 + $0x160] sm:$0xff]
  %v5634 = vld [vmem:[#allocation2 + $0x168] sm:$0xff]
  %v5635 = vld [vmem:[#allocation2 + $0x170] sm:$0xff]
  %v5636 = vld [vmem:[#allocation2 + $0x178] sm:$0xff]
  %v5637 = vld [vmem:[#allocation2 + $0x180] sm:$0xff]
  %v5638 = vld [vmem:[#allocation2 + $0x188] sm:$0xff]
  %v5639 = vld [vmem:[#allocation2 + $0x190] sm:$0xff]
  %v5640 = vld [vmem:[#allocation2 + $0x198] sm:$0xff]
  %v5641 = vld [vmem:[#allocation2 + $0x1a0] sm:$0xff]
  %v5642 = vld [vmem:[#allocation2 + $0x1a8] sm:$0xff]
  %v5643 = vld [vmem:[#allocation2 + $0x1b0] sm:$0xff]
  %v5644 = vld [vmem:[#allocation2 + $0x1b8] sm:$0xff]
  %v5645 = vld [vmem:[#allocation2 + $0x1c0] sm:$0xff]
  %v5646 = vld [vmem:[#allocation2 + $0x1c8] sm:$0xff]
  %v5647 = vld [vmem:[#allocation2 + $0x1d0] sm:$0xff]
  %v5648 = vld [vmem:[#allocation2 + $0x1d8] sm:$0xff]
  %v5649 = vld [vmem:[#allocation2 + $0x1e0] sm:$0xff]
  %v5650 = vld [vmem:[#allocation2 + $0x1e8] sm:$0xff]
  %v5651 = vld [vmem:[#allocation2 + $0x1f0] sm:$0xff]
  %v5652 = vld [vmem:[#allocation2 + $0x1f8] sm:$0xff]
  %v5653 = vld [vmem:[#allocation2 + $0x200] sm:$0xff]
  %v5654 = vld [vmem:[#allocation2 + $0x208] sm:$0xff]
  %5655 = vst.msk [vmem:[#allocation3 + $0x8] sm:$0xff] %vm34, %v5591
  %5656 = vst.msk [vmem:[#allocation3 + $0x20] sm:$0xff] %vm34, %v5592
  %5657 = vst.msk [vmem:[#allocation3 + $0x38] sm:$0xff] %vm34, %v5593
  %5658 = vst.msk [vmem:[#allocation3 + $0x50] sm:$0xff] %vm34, %v5594
  %5659 = vst.msk [vmem:[#allocation3 + $0x68] sm:$0xff] %vm34, %v5595
  %5660 = vst.msk [vmem:[#allocation3 + $0x80] sm:$0xff] %vm34, %v5596
  %5661 = vst.msk [vmem:[#allocation3 + $0x98] sm:$0xff] %vm34, %v5597
  %5662 = vst.msk [vmem:[#allocation3 + $0xb0] sm:$0xff] %vm34, %v5598
  %5663 = vst.msk [vmem:[#allocation3 + $0xc8] sm:$0xff] %vm34, %v5599
  %5664 = vst.msk [vmem:[#allocation3 + $0xe0] sm:$0xff] %vm34, %v5600
  %5665 = vst.msk [vmem:[#allocation3 + $0xf8] sm:$0xff] %vm34, %v5601
  %5666 = vst.msk [vmem:[#allocation3 + $0x110] sm:$0xff] %vm34, %v5602
  %5667 = vst.msk [vmem:[#allocation3 + $0x128] sm:$0xff] %vm34, %v5603
  %5668 = vst.msk [vmem:[#allocation3 + $0x140] sm:$0xff] %vm34, %v5604
  %5669 = vst.msk [vmem:[#allocation3 + $0x158] sm:$0xff] %vm34, %v5605
  %5670 = vst.msk [vmem:[#allocation3 + $0x170] sm:$0xff] %vm34, %v5606
  %5671 = vst.msk [vmem:[#allocation3 + $0x188] sm:$0xff] %vm34, %v5607
  %5672 = vst.msk [vmem:[#allocation3 + $0x1a0] sm:$0xff] %vm34, %v5608
  %5673 = vst.msk [vmem:[#allocation3 + $0x1b8] sm:$0xff] %vm34, %v5609
  %5674 = vst.msk [vmem:[#allocation3 + $0x1d0] sm:$0xff] %vm34, %v5610
  %5675 = vst.msk [vmem:[#allocation3 + $0x1e8] sm:$0xff] %vm34, %v5611
  %5676 = vst.msk [vmem:[#allocation3 + $0x200] sm:$0xff] %vm34, %v5612
  %5677 = vst.msk [vmem:[#allocation3 + $0x218] sm:$0xff] %vm34, %v5613
  %5678 = vst.msk [vmem:[#allocation3 + $0x230] sm:$0xff] %vm34, %v5614
  %5679 = vst.msk [vmem:[#allocation3 + $0x248] sm:$0xff] %vm34, %v5615
  %5680 = vst.msk [vmem:[#allocation3 + $0x260] sm:$0xff] %vm34, %v5616
  %5681 = vst.msk [vmem:[#allocation3 + $0x278] sm:$0xff] %vm34, %v5617
  %5682 = vst.msk [vmem:[#allocation3 + $0x290] sm:$0xff] %vm34, %v5618
  %5683 = vst.msk [vmem:[#allocation3 + $0x2a8] sm:$0xff] %vm34, %v5619
  %5684 = vst.msk [vmem:[#allocation3 + $0x2c0] sm:$0xff] %vm34, %v5620
  %5685 = vst.msk [vmem:[#allocation3 + $0x2d8] sm:$0xff] %vm34, %v5621
  %5686 = vst.msk [vmem:[#allocation3 + $0x2f0] sm:$0xff] %vm34, %v5622
  %5687 = vst.msk [vmem:[#allocation3 + $0x308] sm:$0xff] %vm34, %v5623
  %5688 = vst.msk [vmem:[#allocation3 + $0x320] sm:$0xff] %vm34, %v5624
  %5689 = vst.msk [vmem:[#allocation3 + $0x338] sm:$0xff] %vm34, %v5625
  %5690 = vst.msk [vmem:[#allocation3 + $0x350] sm:$0xff] %vm34, %v5626
  %5691 = vst.msk [vmem:[#allocation3 + $0x368] sm:$0xff] %vm34, %v5627
  %5692 = vst.msk [vmem:[#allocation3 + $0x380] sm:$0xff] %vm34, %v5628
  %5693 = vst.msk [vmem:[#allocation3 + $0x398] sm:$0xff] %vm34, %v5629
  %5694 = vst.msk [vmem:[#allocation3 + $0x3b0] sm:$0xff] %vm34, %v5630
  %5695 = vst.msk [vmem:[#allocation3 + $0x3c8] sm:$0xff] %vm34, %v5631
  %5696 = vst.msk [vmem:[#allocation3 + $0x3e0] sm:$0xff] %vm34, %v5632
  %5697 = vst.msk [vmem:[#allocation3 + $0x3f8] sm:$0xff] %vm34, %v5633
  %5698 = vst.msk [vmem:[#allocation3 + $0x410] sm:$0xff] %vm34, %v5634
  %5699 = vst.msk [vmem:[#allocation3 + $0x428] sm:$0xff] %vm34, %v5635
  %5700 = vst.msk [vmem:[#allocation3 + $0x440] sm:$0xff] %vm34, %v5636
  %5701 = vst.msk [vmem:[#allocation3 + $0x458] sm:$0xff] %vm34, %v5637
  %5702 = vst.msk [vmem:[#allocation3 + $0x470] sm:$0xff] %vm34, %v5638
  %5703 = vst.msk [vmem:[#allocation3 + $0x488] sm:$0xff] %vm34, %v5639
  %5704 = vst.msk [vmem:[#allocation3 + $0x4a0] sm:$0xff] %vm34, %v5640
  %5705 = vst.msk [vmem:[#allocation3 + $0x4b8] sm:$0xff] %vm34, %v5641
  %5706 = vst.msk [vmem:[#allocation3 + $0x4d0] sm:$0xff] %vm34, %v5642
  %5707 = vst.msk [vmem:[#allocation3 + $0x4e8] sm:$0xff] %vm34, %v5643
  %5708 = vst.msk [vmem:[#allocation3 + $0x500] sm:$0xff] %vm34, %v5644
  %5709 = vst.msk [vmem:[#allocation3 + $0x518] sm:$0xff] %vm34, %v5645
  %5710 = vst.msk [vmem:[#allocation3 + $0x530] sm:$0xff] %vm34, %v5646
  %5711 = vst.msk [vmem:[#allocation3 + $0x548] sm:$0xff] %vm34, %v5647
  %5712 = vst.msk [vmem:[#allocation3 + $0x560] sm:$0xff] %vm34, %v5648
  %5713 = vst.msk [vmem:[#allocation3 + $0x578] sm:$0xff] %vm34, %v5649
  %5714 = vst.msk [vmem:[#allocation3 + $0x590] sm:$0xff] %vm34, %v5650
  %5715 = vst.msk [vmem:[#allocation3 + $0x5a8] sm:$0xff] %vm34, %v5651
  %5716 = vst.msk [vmem:[#allocation3 + $0x5c0] sm:$0xff] %vm34, %v5652
  %5717 = vst.msk [vmem:[#allocation3 + $0x5d8] sm:$0xff] %vm34, %v5653
  %5718 = vst.msk [vmem:[#allocation3 + $0x5f0] sm:$0xff] %vm34, %v5654
  %v5719 = vld [vmem:[#allocation2 + $0x11] sm:$0xff]
  %v5720 = vld [vmem:[#allocation2 + $0x19] sm:$0xff]
  %v5721 = vld [vmem:[#allocation2 + $0x21] sm:$0xff]
  %v5722 = vld [vmem:[#allocation2 + $0x29] sm:$0xff]
  %v5723 = vld [vmem:[#allocation2 + $0x31] sm:$0xff]
  %v5724 = vld [vmem:[#allocation2 + $0x39] sm:$0xff]
  %v5725 = vld [vmem:[#allocation2 + $0x41] sm:$0xff]
  %v5726 = vld [vmem:[#allocation2 + $0x49] sm:$0xff]
  %v5727 = vld [vmem:[#allocation2 + $0x51] sm:$0xff]
  %v5728 = vld [vmem:[#allocation2 + $0x59] sm:$0xff]
  %v5729 = vld [vmem:[#allocation2 + $0x61] sm:$0xff]
  %v5730 = vld [vmem:[#allocation2 + $0x69] sm:$0xff]
  %v5731 = vld [vmem:[#allocation2 + $0x71] sm:$0xff]
  %v5732 = vld [vmem:[#allocation2 + $0x79] sm:$0xff]
  %v5733 = vld [vmem:[#allocation2 + $0x81] sm:$0xff]
  %v5734 = vld [vmem:[#allocation2 + $0x89] sm:$0xff]
  %v5735 = vld [vmem:[#allocation2 + $0x91] sm:$0xff]
  %v5736 = vld [vmem:[#allocation2 + $0x99] sm:$0xff]
  %v5737 = vld [vmem:[#allocation2 + $0xa1] sm:$0xff]
  %v5738 = vld [vmem:[#allocation2 + $0xa9] sm:$0xff]
  %v5739 = vld [vmem:[#allocation2 + $0xb1] sm:$0xff]
  %v5740 = vld [vmem:[#allocation2 + $0xb9] sm:$0xff]
  %v5741 = vld [vmem:[#allocation2 + $0xc1] sm:$0xff]
  %v5742 = vld [vmem:[#allocation2 + $0xc9] sm:$0xff]
  %v5743 = vld [vmem:[#allocation2 + $0xd1] sm:$0xff]
  %v5744 = vld [vmem:[#allocation2 + $0xd9] sm:$0xff]
  %v5745 = vld [vmem:[#allocation2 + $0xe1] sm:$0xff]
  %v5746 = vld [vmem:[#allocation2 + $0xe9] sm:$0xff]
  %v5747 = vld [vmem:[#allocation2 + $0xf1] sm:$0xff]
  %v5748 = vld [vmem:[#allocation2 + $0xf9] sm:$0xff]
  %v5749 = vld [vmem:[#allocation2 + $0x101] sm:$0xff]
  %v5750 = vld [vmem:[#allocation2 + $0x109] sm:$0xff]
  %v5751 = vld [vmem:[#allocation2 + $0x111] sm:$0xff]
  %v5752 = vld [vmem:[#allocation2 + $0x119] sm:$0xff]
  %v5753 = vld [vmem:[#allocation2 + $0x121] sm:$0xff]
  %v5754 = vld [vmem:[#allocation2 + $0x129] sm:$0xff]
  %v5755 = vld [vmem:[#allocation2 + $0x131] sm:$0xff]
  %v5756 = vld [vmem:[#allocation2 + $0x139] sm:$0xff]
  %v5757 = vld [vmem:[#allocation2 + $0x141] sm:$0xff]
  %v5758 = vld [vmem:[#allocation2 + $0x149] sm:$0xff]
  %v5759 = vld [vmem:[#allocation2 + $0x151] sm:$0xff]
  %v5760 = vld [vmem:[#allocation2 + $0x159] sm:$0xff]
  %v5761 = vld [vmem:[#allocation2 + $0x161] sm:$0xff]
  %v5762 = vld [vmem:[#allocation2 + $0x169] sm:$0xff]
  %v5763 = vld [vmem:[#allocation2 + $0x171] sm:$0xff]
  %v5764 = vld [vmem:[#allocation2 + $0x179] sm:$0xff]
  %v5765 = vld [vmem:[#allocation2 + $0x181] sm:$0xff]
  %v5766 = vld [vmem:[#allocation2 + $0x189] sm:$0xff]
  %v5767 = vld [vmem:[#allocation2 + $0x191] sm:$0xff]
  %v5768 = vld [vmem:[#allocation2 + $0x199] sm:$0xff]
  %v5769 = vld [vmem:[#allocation2 + $0x1a1] sm:$0xff]
  %v5770 = vld [vmem:[#allocation2 + $0x1a9] sm:$0xff]
  %v5771 = vld [vmem:[#allocation2 + $0x1b1] sm:$0xff]
  %v5772 = vld [vmem:[#allocation2 + $0x1b9] sm:$0xff]
  %v5773 = vld [vmem:[#allocation2 + $0x1c1] sm:$0xff]
  %v5774 = vld [vmem:[#allocation2 + $0x1c9] sm:$0xff]
  %v5775 = vld [vmem:[#allocation2 + $0x1d1] sm:$0xff]
  %v5776 = vld [vmem:[#allocation2 + $0x1d9] sm:$0xff]
  %v5777 = vld [vmem:[#allocation2 + $0x1e1] sm:$0xff]
  %v5778 = vld [vmem:[#allocation2 + $0x1e9] sm:$0xff]
  %v5779 = vld [vmem:[#allocation2 + $0x1f1] sm:$0xff]
  %v5780 = vld [vmem:[#allocation2 + $0x1f9] sm:$0xff]
  %v5781 = vld [vmem:[#allocation2 + $0x201] sm:$0xff]
  %v5782 = vld [vmem:[#allocation2 + $0x209] sm:$0xff]
  %5847 = vrot.lane.b32.xlu0 %v5719, 32
  %v5848 = vpop.permute.xlu0 %5847
  %5849 = vrot.lane.b32.xlu0 %v5720, 32
  %v5850 = vpop.permute.xlu0 %5849
  %5851 = vrot.lane.b32.xlu0 %v5721, 32
  %v5852 = vpop.permute.xlu0 %5851
  %5853 = vrot.lane.b32.xlu0 %v5722, 32
  %v5854 = vpop.permute.xlu0 %5853
  %5855 = vrot.lane.b32.xlu0 %v5723, 32
  %v5856 = vpop.permute.xlu0 %5855
  %5857 = vrot.lane.b32.xlu0 %v5724, 32
  %v5858 = vpop.permute.xlu0 %5857
  %5859 = vrot.lane.b32.xlu0 %v5725, 32
  %v5860 = vpop.permute.xlu0 %5859
  %5861 = vrot.lane.b32.xlu0 %v5726, 32
  %v5862 = vpop.permute.xlu0 %5861
  %5863 = vrot.lane.b32.xlu0 %v5727, 32
  %v5864 = vpop.permute.xlu0 %5863
  %5865 = vrot.lane.b32.xlu0 %v5728, 32
  %v5866 = vpop.permute.xlu0 %5865
  %5867 = vrot.lane.b32.xlu0 %v5729, 32
  %v5868 = vpop.permute.xlu0 %5867
  %5869 = vrot.lane.b32.xlu0 %v5730, 32
  %v5870 = vpop.permute.xlu0 %5869
  %5871 = vrot.lane.b32.xlu0 %v5731, 32
  %v5872 = vpop.permute.xlu0 %5871
  %5873 = vrot.lane.b32.xlu0 %v5732, 32
  %v5874 = vpop.permute.xlu0 %5873
  %5875 = vrot.lane.b32.xlu0 %v5733, 32
  %v5876 = vpop.permute.xlu0 %5875
  %5877 = vrot.lane.b32.xlu0 %v5734, 32
  %v5878 = vpop.permute.xlu0 %5877
  %5879 = vrot.lane.b32.xlu0 %v5735, 32
  %v5880 = vpop.permute.xlu0 %5879
  %5881 = vrot.lane.b32.xlu0 %v5736, 32
  %v5882 = vpop.permute.xlu0 %5881
  %5883 = vrot.lane.b32.xlu0 %v5737, 32
  %v5884 = vpop.permute.xlu0 %5883
  %5885 = vrot.lane.b32.xlu0 %v5738, 32
  %v5886 = vpop.permute.xlu0 %5885
  %5887 = vrot.lane.b32.xlu0 %v5739, 32
  %v5888 = vpop.permute.xlu0 %5887
  %5889 = vrot.lane.b32.xlu0 %v5740, 32
  %v5890 = vpop.permute.xlu0 %5889
  %5891 = vrot.lane.b32.xlu0 %v5741, 32
  %v5892 = vpop.permute.xlu0 %5891
  %5893 = vrot.lane.b32.xlu0 %v5742, 32
  %v5894 = vpop.permute.xlu0 %5893
  %5895 = vrot.lane.b32.xlu0 %v5743, 32
  %v5896 = vpop.permute.xlu0 %5895
  %5897 = vrot.lane.b32.xlu0 %v5744, 32
  %v5898 = vpop.permute.xlu0 %5897
  %5899 = vrot.lane.b32.xlu0 %v5745, 32
  %v5900 = vpop.permute.xlu0 %5899
  %5901 = vrot.lane.b32.xlu0 %v5746, 32
  %v5902 = vpop.permute.xlu0 %5901
  %5903 = vrot.lane.b32.xlu0 %v5747, 32
  %v5904 = vpop.permute.xlu0 %5903
  %5905 = vrot.lane.b32.xlu0 %v5748, 32
  %v5906 = vpop.permute.xlu0 %5905
  %5907 = vrot.lane.b32.xlu0 %v5749, 32
  %v5908 = vpop.permute.xlu0 %5907
  %5909 = vrot.lane.b32.xlu0 %v5750, 32
  %v5910 = vpop.permute.xlu0 %5909
  %5911 = vrot.lane.b32.xlu0 %v5751, 32
  %v5912 = vpop.permute.xlu0 %5911
  %5913 = vrot.lane.b32.xlu0 %v5752, 32
  %v5914 = vpop.permute.xlu0 %5913
  %5915 = vrot.lane.b32.xlu0 %v5753, 32
  %v5916 = vpop.permute.xlu0 %5915
  %5917 = vrot.lane.b32.xlu0 %v5754, 32
  %v5918 = vpop.permute.xlu0 %5917
  %5919 = vrot.lane.b32.xlu0 %v5755, 32
  %v5920 = vpop.permute.xlu0 %5919
  %5921 = vrot.lane.b32.xlu0 %v5756, 32
  %v5922 = vpop.permute.xlu0 %5921
  %5923 = vrot.lane.b32.xlu0 %v5757, 32
  %v5924 = vpop.permute.xlu0 %5923
  %5925 = vrot.lane.b32.xlu0 %v5758, 32
  %v5926 = vpop.permute.xlu0 %5925
  %5927 = vrot.lane.b32.xlu0 %v5759, 32
  %v5928 = vpop.permute.xlu0 %5927
  %5929 = vrot.lane.b32.xlu0 %v5760, 32
  %v5930 = vpop.permute.xlu0 %5929
  %5931 = vrot.lane.b32.xlu0 %v5761, 32
  %v5932 = vpop.permute.xlu0 %5931
  %5933 = vrot.lane.b32.xlu0 %v5762, 32
  %v5934 = vpop.permute.xlu0 %5933
  %5935 = vrot.lane.b32.xlu0 %v5763, 32
  %v5936 = vpop.permute.xlu0 %5935
  %5937 = vrot.lane.b32.xlu0 %v5764, 32
  %v5938 = vpop.permute.xlu0 %5937
  %5939 = vrot.lane.b32.xlu0 %v5765, 32
  %v5940 = vpop.permute.xlu0 %5939
  %5941 = vrot.lane.b32.xlu0 %v5766, 32
  %v5942 = vpop.permute.xlu0 %5941
  %5943 = vrot.lane.b32.xlu0 %v5767, 32
  %v5944 = vpop.permute.xlu0 %5943
  %5945 = vrot.lane.b32.xlu0 %v5768, 32
  %v5946 = vpop.permute.xlu0 %5945
  %5947 = vrot.lane.b32.xlu0 %v5769, 32
  %v5948 = vpop.permute.xlu0 %5947
  %5949 = vrot.lane.b32.xlu0 %v5770, 32
  %v5950 = vpop.permute.xlu0 %5949
  %5951 = vrot.lane.b32.xlu0 %v5771, 32
  %v5952 = vpop.permute.xlu0 %5951
  %5953 = vrot.lane.b32.xlu0 %v5772, 32
  %v5954 = vpop.permute.xlu0 %5953
  %5955 = vrot.lane.b32.xlu0 %v5773, 32
  %v5956 = vpop.permute.xlu0 %5955
  %5957 = vrot.lane.b32.xlu0 %v5774, 32
  %v5958 = vpop.permute.xlu0 %5957
  %5959 = vrot.lane.b32.xlu0 %v5775, 32
  %v5960 = vpop.permute.xlu0 %5959
  %5961 = vrot.lane.b32.xlu0 %v5776, 32
  %v5962 = vpop.permute.xlu0 %5961
  %5963 = vrot.lane.b32.xlu0 %v5777, 32
  %v5964 = vpop.permute.xlu0 %5963
  %5965 = vrot.lane.b32.xlu0 %v5778, 32
  %v5966 = vpop.permute.xlu0 %5965
  %5967 = vrot.lane.b32.xlu0 %v5779, 32
  %v5968 = vpop.permute.xlu0 %5967
  %5969 = vrot.lane.b32.xlu0 %v5780, 32
  %v5970 = vpop.permute.xlu0 %5969
  %5971 = vrot.lane.b32.xlu0 %v5781, 32
  %v5972 = vpop.permute.xlu0 %5971
  %5973 = vrot.lane.b32.xlu0 %v5782, 32
  %v5974 = vpop.permute.xlu0 %5973
  %6039 = vst.msk [vmem:[#allocation3 + $0x8] sm:$0xff] %vm615, %v5848
  %6040 = vst.msk [vmem:[#allocation3 + $0x20] sm:$0xff] %vm615, %v5850
  %6041 = vst.msk [vmem:[#allocation3 + $0x38] sm:$0xff] %vm615, %v5852
  %6042 = vst.msk [vmem:[#allocation3 + $0x50] sm:$0xff] %vm615, %v5854
  %6043 = vst.msk [vmem:[#allocation3 + $0x68] sm:$0xff] %vm615, %v5856
  %6044 = vst.msk [vmem:[#allocation3 + $0x80] sm:$0xff] %vm615, %v5858
  %6045 = vst.msk [vmem:[#allocation3 + $0x98] sm:$0xff] %vm615, %v5860
  %6046 = vst.msk [vmem:[#allocation3 + $0xb0] sm:$0xff] %vm615, %v5862
  %6047 = vst.msk [vmem:[#allocation3 + $0xc8] sm:$0xff] %vm615, %v5864
  %6048 = vst.msk [vmem:[#allocation3 + $0xe0] sm:$0xff] %vm615, %v5866
  %6049 = vst.msk [vmem:[#allocation3 + $0xf8] sm:$0xff] %vm615, %v5868
  %6050 = vst.msk [vmem:[#allocation3 + $0x110] sm:$0xff] %vm615, %v5870
  %6051 = vst.msk [vmem:[#allocation3 + $0x128] sm:$0xff] %vm615, %v5872
  %6052 = vst.msk [vmem:[#allocation3 + $0x140] sm:$0xff] %vm615, %v5874
  %6053 = vst.msk [vmem:[#allocation3 + $0x158] sm:$0xff] %vm615, %v5876
  %6054 = vst.msk [vmem:[#allocation3 + $0x170] sm:$0xff] %vm615, %v5878
  %6055 = vst.msk [vmem:[#allocation3 + $0x188] sm:$0xff] %vm615, %v5880
  %6056 = vst.msk [vmem:[#allocation3 + $0x1a0] sm:$0xff] %vm615, %v5882
  %6057 = vst.msk [vmem:[#allocation3 + $0x1b8] sm:$0xff] %vm615, %v5884
  %6058 = vst.msk [vmem:[#allocation3 + $0x1d0] sm:$0xff] %vm615, %v5886
  %6059 = vst.msk [vmem:[#allocation3 + $0x1e8] sm:$0xff] %vm615, %v5888
  %6060 = vst.msk [vmem:[#allocation3 + $0x200] sm:$0xff] %vm615, %v5890
  %6061 = vst.msk [vmem:[#allocation3 + $0x218] sm:$0xff] %vm615, %v5892
  %6062 = vst.msk [vmem:[#allocation3 + $0x230] sm:$0xff] %vm615, %v5894
  %6063 = vst.msk [vmem:[#allocation3 + $0x248] sm:$0xff] %vm615, %v5896
  %6064 = vst.msk [vmem:[#allocation3 + $0x260] sm:$0xff] %vm615, %v5898
  %6065 = vst.msk [vmem:[#allocation3 + $0x278] sm:$0xff] %vm615, %v5900
  %6066 = vst.msk [vmem:[#allocation3 + $0x290] sm:$0xff] %vm615, %v5902
  %6067 = vst.msk [vmem:[#allocation3 + $0x2a8] sm:$0xff] %vm615, %v5904
  %6068 = vst.msk [vmem:[#allocation3 + $0x2c0] sm:$0xff] %vm615, %v5906
  %6069 = vst.msk [vmem:[#allocation3 + $0x2d8] sm:$0xff] %vm615, %v5908
  %6070 = vst.msk [vmem:[#allocation3 + $0x2f0] sm:$0xff] %vm615, %v5910
  %6071 = vst.msk [vmem:[#allocation3 + $0x308] sm:$0xff] %vm615, %v5912
  %6072 = vst.msk [vmem:[#allocation3 + $0x320] sm:$0xff] %vm615, %v5914
  %6073 = vst.msk [vmem:[#allocation3 + $0x338] sm:$0xff] %vm615, %v5916
  %6074 = vst.msk [vmem:[#allocation3 + $0x350] sm:$0xff] %vm615, %v5918
  %6075 = vst.msk [vmem:[#allocation3 + $0x368] sm:$0xff] %vm615, %v5920
  %6076 = vst.msk [vmem:[#allocation3 + $0x380] sm:$0xff] %vm615, %v5922
  %6077 = vst.msk [vmem:[#allocation3 + $0x398] sm:$0xff] %vm615, %v5924
  %6078 = vst.msk [vmem:[#allocation3 + $0x3b0] sm:$0xff] %vm615, %v5926
  %6079 = vst.msk [vmem:[#allocation3 + $0x3c8] sm:$0xff] %vm615, %v5928
  %6080 = vst.msk [vmem:[#allocation3 + $0x3e0] sm:$0xff] %vm615, %v5930
  %6081 = vst.msk [vmem:[#allocation3 + $0x3f8] sm:$0xff] %vm615, %v5932
  %6082 = vst.msk [vmem:[#allocation3 + $0x410] sm:$0xff] %vm615, %v5934
  %6083 = vst.msk [vmem:[#allocation3 + $0x428] sm:$0xff] %vm615, %v5936
  %6084 = vst.msk [vmem:[#allocation3 + $0x440] sm:$0xff] %vm615, %v5938
  %6085 = vst.msk [vmem:[#allocation3 + $0x458] sm:$0xff] %vm615, %v5940
  %6086 = vst.msk [vmem:[#allocation3 + $0x470] sm:$0xff] %vm615, %v5942
  %6087 = vst.msk [vmem:[#allocation3 + $0x488] sm:$0xff] %vm615, %v5944
  %6088 = vst.msk [vmem:[#allocation3 + $0x4a0] sm:$0xff] %vm615, %v5946
  %6089 = vst.msk [vmem:[#allocation3 + $0x4b8] sm:$0xff] %vm615, %v5948
  %6090 = vst.msk [vmem:[#allocation3 + $0x4d0] sm:$0xff] %vm615, %v5950
  %6091 = vst.msk [vmem:[#allocation3 + $0x4e8] sm:$0xff] %vm615, %v5952
  %6092 = vst.msk [vmem:[#allocation3 + $0x500] sm:$0xff] %vm615, %v5954
  %6093 = vst.msk [vmem:[#allocation3 + $0x518] sm:$0xff] %vm615, %v5956
  %6094 = vst.msk [vmem:[#allocation3 + $0x530] sm:$0xff] %vm615, %v5958
  %6095 = vst.msk [vmem:[#allocation3 + $0x548] sm:$0xff] %vm615, %v5960
  %6096 = vst.msk [vmem:[#allocation3 + $0x560] sm:$0xff] %vm615, %v5962
  %6097 = vst.msk [vmem:[#allocation3 + $0x578] sm:$0xff] %vm615, %v5964
  %6098 = vst.msk [vmem:[#allocation3 + $0x590] sm:$0xff] %vm615, %v5966
  %6099 = vst.msk [vmem:[#allocation3 + $0x5a8] sm:$0xff] %vm615, %v5968
  %6100 = vst.msk [vmem:[#allocation3 + $0x5c0] sm:$0xff] %vm615, %v5970
  %6101 = vst.msk [vmem:[#allocation3 + $0x5d8] sm:$0xff] %vm615, %v5972
  %6102 = vst.msk [vmem:[#allocation3 + $0x5f0] sm:$0xff] %vm615, %v5974
  %v6103 = vld [vmem:[#allocation2 + $0x17] sm:$0xff]
  %v6104 = vld [vmem:[#allocation2 + $0x1f] sm:$0xff]
  %v6105 = vld [vmem:[#allocation2 + $0x27] sm:$0xff]
  %v6106 = vld [vmem:[#allocation2 + $0x2f] sm:$0xff]
  %v6107 = vld [vmem:[#allocation2 + $0x37] sm:$0xff]
  %v6108 = vld [vmem:[#allocation2 + $0x3f] sm:$0xff]
  %v6109 = vld [vmem:[#allocation2 + $0x47] sm:$0xff]
  %v6110 = vld [vmem:[#allocation2 + $0x4f] sm:$0xff]
  %v6111 = vld [vmem:[#allocation2 + $0x57] sm:$0xff]
  %v6112 = vld [vmem:[#allocation2 + $0x5f] sm:$0xff]
  %v6113 = vld [vmem:[#allocation2 + $0x67] sm:$0xff]
  %v6114 = vld [vmem:[#allocation2 + $0x6f] sm:$0xff]
  %v6115 = vld [vmem:[#allocation2 + $0x77] sm:$0xff]
  %v6116 = vld [vmem:[#allocation2 + $0x7f] sm:$0xff]
  %v6117 = vld [vmem:[#allocation2 + $0x87] sm:$0xff]
  %v6118 = vld [vmem:[#allocation2 + $0x8f] sm:$0xff]
  %v6119 = vld [vmem:[#allocation2 + $0x97] sm:$0xff]
  %v6120 = vld [vmem:[#allocation2 + $0x9f] sm:$0xff]
  %v6121 = vld [vmem:[#allocation2 + $0xa7] sm:$0xff]
  %v6122 = vld [vmem:[#allocation2 + $0xaf] sm:$0xff]
  %v6123 = vld [vmem:[#allocation2 + $0xb7] sm:$0xff]
  %v6124 = vld [vmem:[#allocation2 + $0xbf] sm:$0xff]
  %v6125 = vld [vmem:[#allocation2 + $0xc7] sm:$0xff]
  %v6126 = vld [vmem:[#allocation2 + $0xcf] sm:$0xff]
  %v6127 = vld [vmem:[#allocation2 + $0xd7] sm:$0xff]
  %v6128 = vld [vmem:[#allocation2 + $0xdf] sm:$0xff]
  %v6129 = vld [vmem:[#allocation2 + $0xe7] sm:$0xff]
  %v6130 = vld [vmem:[#allocation2 + $0xef] sm:$0xff]
  %v6131 = vld [vmem:[#allocation2 + $0xf7] sm:$0xff]
  %v6132 = vld [vmem:[#allocation2 + $0xff] sm:$0xff]
  %v6133 = vld [vmem:[#allocation2 + $0x107] sm:$0xff]
  %v6134 = vld [vmem:[#allocation2 + $0x10f] sm:$0xff]
  %v6135 = vld [vmem:[#allocation2 + $0x117] sm:$0xff]
  %v6136 = vld [vmem:[#allocation2 + $0x11f] sm:$0xff]
  %v6137 = vld [vmem:[#allocation2 + $0x127] sm:$0xff]
  %v6138 = vld [vmem:[#allocation2 + $0x12f] sm:$0xff]
  %v6139 = vld [vmem:[#allocation2 + $0x137] sm:$0xff]
  %v6140 = vld [vmem:[#allocation2 + $0x13f] sm:$0xff]
  %v6141 = vld [vmem:[#allocation2 + $0x147] sm:$0xff]
  %v6142 = vld [vmem:[#allocation2 + $0x14f] sm:$0xff]
  %v6143 = vld [vmem:[#allocation2 + $0x157] sm:$0xff]
  %v6144 = vld [vmem:[#allocation2 + $0x15f] sm:$0xff]
  %v6145 = vld [vmem:[#allocation2 + $0x167] sm:$0xff]
  %v6146 = vld [vmem:[#allocation2 + $0x16f] sm:$0xff]
  %v6147 = vld [vmem:[#allocation2 + $0x177] sm:$0xff]
  %v6148 = vld [vmem:[#allocation2 + $0x17f] sm:$0xff]
  %v6149 = vld [vmem:[#allocation2 + $0x187] sm:$0xff]
  %v6150 = vld [vmem:[#allocation2 + $0x18f] sm:$0xff]
  %v6151 = vld [vmem:[#allocation2 + $0x197] sm:$0xff]
  %v6152 = vld [vmem:[#allocation2 + $0x19f] sm:$0xff]
  %v6153 = vld [vmem:[#allocation2 + $0x1a7] sm:$0xff]
  %v6154 = vld [vmem:[#allocation2 + $0x1af] sm:$0xff]
  %v6155 = vld [vmem:[#allocation2 + $0x1b7] sm:$0xff]
  %v6156 = vld [vmem:[#allocation2 + $0x1bf] sm:$0xff]
  %v6157 = vld [vmem:[#allocation2 + $0x1c7] sm:$0xff]
  %v6158 = vld [vmem:[#allocation2 + $0x1cf] sm:$0xff]
  %v6159 = vld [vmem:[#allocation2 + $0x1d7] sm:$0xff]
  %v6160 = vld [vmem:[#allocation2 + $0x1df] sm:$0xff]
  %v6161 = vld [vmem:[#allocation2 + $0x1e7] sm:$0xff]
  %v6162 = vld [vmem:[#allocation2 + $0x1ef] sm:$0xff]
  %v6163 = vld [vmem:[#allocation2 + $0x1f7] sm:$0xff]
  %v6164 = vld [vmem:[#allocation2 + $0x1ff] sm:$0xff]
  %v6165 = vld [vmem:[#allocation2 + $0x207] sm:$0xff]
  %v6166 = vld [vmem:[#allocation2 + $0x20f] sm:$0xff]
  %6231 = vrot.lane.b32.xlu0 %v6103, 64
  %v6232 = vpop.permute.xlu0 %6231
  %6233 = vrot.lane.b32.xlu0 %v6104, 64
  %v6234 = vpop.permute.xlu0 %6233
  %6235 = vrot.lane.b32.xlu0 %v6105, 64
  %v6236 = vpop.permute.xlu0 %6235
  %6237 = vrot.lane.b32.xlu0 %v6106, 64
  %v6238 = vpop.permute.xlu0 %6237
  %6239 = vrot.lane.b32.xlu0 %v6107, 64
  %v6240 = vpop.permute.xlu0 %6239
  %6241 = vrot.lane.b32.xlu0 %v6108, 64
  %v6242 = vpop.permute.xlu0 %6241
  %6243 = vrot.lane.b32.xlu0 %v6109, 64
  %v6244 = vpop.permute.xlu0 %6243
  %6245 = vrot.lane.b32.xlu0 %v6110, 64
  %v6246 = vpop.permute.xlu0 %6245
  %6247 = vrot.lane.b32.xlu0 %v6111, 64
  %v6248 = vpop.permute.xlu0 %6247
  %6249 = vrot.lane.b32.xlu0 %v6112, 64
  %v6250 = vpop.permute.xlu0 %6249
  %6251 = vrot.lane.b32.xlu0 %v6113, 64
  %v6252 = vpop.permute.xlu0 %6251
  %6253 = vrot.lane.b32.xlu0 %v6114, 64
  %v6254 = vpop.permute.xlu0 %6253
  %6255 = vrot.lane.b32.xlu0 %v6115, 64
  %v6256 = vpop.permute.xlu0 %6255
  %6257 = vrot.lane.b32.xlu0 %v6116, 64
  %v6258 = vpop.permute.xlu0 %6257
  %6259 = vrot.lane.b32.xlu0 %v6117, 64
  %v6260 = vpop.permute.xlu0 %6259
  %6261 = vrot.lane.b32.xlu0 %v6118, 64
  %v6262 = vpop.permute.xlu0 %6261
  %6263 = vrot.lane.b32.xlu0 %v6119, 64
  %v6264 = vpop.permute.xlu0 %6263
  %6265 = vrot.lane.b32.xlu0 %v6120, 64
  %v6266 = vpop.permute.xlu0 %6265
  %6267 = vrot.lane.b32.xlu0 %v6121, 64
  %v6268 = vpop.permute.xlu0 %6267
  %6269 = vrot.lane.b32.xlu0 %v6122, 64
  %v6270 = vpop.permute.xlu0 %6269
  %6271 = vrot.lane.b32.xlu0 %v6123, 64
  %v6272 = vpop.permute.xlu0 %6271
  %6273 = vrot.lane.b32.xlu0 %v6124, 64
  %v6274 = vpop.permute.xlu0 %6273
  %6275 = vrot.lane.b32.xlu0 %v6125, 64
  %v6276 = vpop.permute.xlu0 %6275
  %6277 = vrot.lane.b32.xlu0 %v6126, 64
  %v6278 = vpop.permute.xlu0 %6277
  %6279 = vrot.lane.b32.xlu0 %v6127, 64
  %v6280 = vpop.permute.xlu0 %6279
  %6281 = vrot.lane.b32.xlu0 %v6128, 64
  %v6282 = vpop.permute.xlu0 %6281
  %6283 = vrot.lane.b32.xlu0 %v6129, 64
  %v6284 = vpop.permute.xlu0 %6283
  %6285 = vrot.lane.b32.xlu0 %v6130, 64
  %v6286 = vpop.permute.xlu0 %6285
  %6287 = vrot.lane.b32.xlu0 %v6131, 64
  %v6288 = vpop.permute.xlu0 %6287
  %6289 = vrot.lane.b32.xlu0 %v6132, 64
  %v6290 = vpop.permute.xlu0 %6289
  %6291 = vrot.lane.b32.xlu0 %v6133, 64
  %v6292 = vpop.permute.xlu0 %6291
  %6293 = vrot.lane.b32.xlu0 %v6134, 64
  %v6294 = vpop.permute.xlu0 %6293
  %6295 = vrot.lane.b32.xlu0 %v6135, 64
  %v6296 = vpop.permute.xlu0 %6295
  %6297 = vrot.lane.b32.xlu0 %v6136, 64
  %v6298 = vpop.permute.xlu0 %6297
  %6299 = vrot.lane.b32.xlu0 %v6137, 64
  %v6300 = vpop.permute.xlu0 %6299
  %6301 = vrot.lane.b32.xlu0 %v6138, 64
  %v6302 = vpop.permute.xlu0 %6301
  %6303 = vrot.lane.b32.xlu0 %v6139, 64
  %v6304 = vpop.permute.xlu0 %6303
  %6305 = vrot.lane.b32.xlu0 %v6140, 64
  %v6306 = vpop.permute.xlu0 %6305
  %6307 = vrot.lane.b32.xlu0 %v6141, 64
  %v6308 = vpop.permute.xlu0 %6307
  %6309 = vrot.lane.b32.xlu0 %v6142, 64
  %v6310 = vpop.permute.xlu0 %6309
  %6311 = vrot.lane.b32.xlu0 %v6143, 64
  %v6312 = vpop.permute.xlu0 %6311
  %6313 = vrot.lane.b32.xlu0 %v6144, 64
  %v6314 = vpop.permute.xlu0 %6313
  %6315 = vrot.lane.b32.xlu0 %v6145, 64
  %v6316 = vpop.permute.xlu0 %6315
  %6317 = vrot.lane.b32.xlu0 %v6146, 64
  %v6318 = vpop.permute.xlu0 %6317
  %6319 = vrot.lane.b32.xlu0 %v6147, 64
  %v6320 = vpop.permute.xlu0 %6319
  %6321 = vrot.lane.b32.xlu0 %v6148, 64
  %v6322 = vpop.permute.xlu0 %6321
  %6323 = vrot.lane.b32.xlu0 %v6149, 64
  %v6324 = vpop.permute.xlu0 %6323
  %6325 = vrot.lane.b32.xlu0 %v6150, 64
  %v6326 = vpop.permute.xlu0 %6325
  %6327 = vrot.lane.b32.xlu0 %v6151, 64
  %v6328 = vpop.permute.xlu0 %6327
  %6329 = vrot.lane.b32.xlu0 %v6152, 64
  %v6330 = vpop.permute.xlu0 %6329
  %6331 = vrot.lane.b32.xlu0 %v6153, 64
  %v6332 = vpop.permute.xlu0 %6331
  %6333 = vrot.lane.b32.xlu0 %v6154, 64
  %v6334 = vpop.permute.xlu0 %6333
  %6335 = vrot.lane.b32.xlu0 %v6155, 64
  %v6336 = vpop.permute.xlu0 %6335
  %6337 = vrot.lane.b32.xlu0 %v6156, 64
  %v6338 = vpop.permute.xlu0 %6337
  %6339 = vrot.lane.b32.xlu0 %v6157, 64
  %v6340 = vpop.permute.xlu0 %6339
  %6341 = vrot.lane.b32.xlu0 %v6158, 64
  %v6342 = vpop.permute.xlu0 %6341
  %6343 = vrot.lane.b32.xlu0 %v6159, 64
  %v6344 = vpop.permute.xlu0 %6343
  %6345 = vrot.lane.b32.xlu0 %v6160, 64
  %v6346 = vpop.permute.xlu0 %6345
  %6347 = vrot.lane.b32.xlu0 %v6161, 64
  %v6348 = vpop.permute.xlu0 %6347
  %6349 = vrot.lane.b32.xlu0 %v6162, 64
  %v6350 = vpop.permute.xlu0 %6349
  %6351 = vrot.lane.b32.xlu0 %v6163, 64
  %v6352 = vpop.permute.xlu0 %6351
  %6353 = vrot.lane.b32.xlu0 %v6164, 64
  %v6354 = vpop.permute.xlu0 %6353
  %6355 = vrot.lane.b32.xlu0 %v6165, 64
  %v6356 = vpop.permute.xlu0 %6355
  %6357 = vrot.lane.b32.xlu0 %v6166, 64
  %v6358 = vpop.permute.xlu0 %6357
  %6423 = vst.msk [vmem:[#allocation3 + $0x8] sm:$0xff] %vm1000, %v6232
  %6424 = vst.msk [vmem:[#allocation3 + $0x20] sm:$0xff] %vm1000, %v6234
  %6425 = vst.msk [vmem:[#allocation3 + $0x38] sm:$0xff] %vm1000, %v6236
  %6426 = vst.msk [vmem:[#allocation3 + $0x50] sm:$0xff] %vm1000, %v6238
  %6427 = vst.msk [vmem:[#allocation3 + $0x68] sm:$0xff] %vm1000, %v6240
  %6428 = vst.msk [vmem:[#allocation3 + $0x80] sm:$0xff] %vm1000, %v6242
  %6429 = vst.msk [vmem:[#allocation3 + $0x98] sm:$0xff] %vm1000, %v6244
  %6430 = vst.msk [vmem:[#allocation3 + $0xb0] sm:$0xff] %vm1000, %v6246
  %6431 = vst.msk [vmem:[#allocation3 + $0xc8] sm:$0xff] %vm1000, %v6248
  %6432 = vst.msk [vmem:[#allocation3 + $0xe0] sm:$0xff] %vm1000, %v6250
  %6433 = vst.msk [vmem:[#allocation3 + $0xf8] sm:$0xff] %vm1000, %v6252
  %6434 = vst.msk [vmem:[#allocation3 + $0x110] sm:$0xff] %vm1000, %v6254
  %6435 = vst.msk [vmem:[#allocation3 + $0x128] sm:$0xff] %vm1000, %v6256
  %6436 = vst.msk [vmem:[#allocation3 + $0x140] sm:$0xff] %vm1000, %v6258
  %6437 = vst.msk [vmem:[#allocation3 + $0x158] sm:$0xff] %vm1000, %v6260
  %6438 = vst.msk [vmem:[#allocation3 + $0x170] sm:$0xff] %vm1000, %v6262
  %6439 = vst.msk [vmem:[#allocation3 + $0x188] sm:$0xff] %vm1000, %v6264
  %6440 = vst.msk [vmem:[#allocation3 + $0x1a0] sm:$0xff] %vm1000, %v6266
  %6441 = vst.msk [vmem:[#allocation3 + $0x1b8] sm:$0xff] %vm1000, %v6268
  %6442 = vst.msk [vmem:[#allocation3 + $0x1d0] sm:$0xff] %vm1000, %v6270
  %6443 = vst.msk [vmem:[#allocation3 + $0x1e8] sm:$0xff] %vm1000, %v6272
  %6444 = vst.msk [vmem:[#allocation3 + $0x200] sm:$0xff] %vm1000, %v6274
  %6445 = vst.msk [vmem:[#allocation3 + $0x218] sm:$0xff] %vm1000, %v6276
  %6446 = vst.msk [vmem:[#allocation3 + $0x230] sm:$0xff] %vm1000, %v6278
  %6447 = vst.msk [vmem:[#allocation3 + $0x248] sm:$0xff] %vm1000, %v6280
  %6448 = vst.msk [vmem:[#allocation3 + $0x260] sm:$0xff] %vm1000, %v6282
  %6449 = vst.msk [vmem:[#allocation3 + $0x278] sm:$0xff] %vm1000, %v6284
  %6450 = vst.msk [vmem:[#allocation3 + $0x290] sm:$0xff] %vm1000, %v6286
  %6451 = vst.msk [vmem:[#allocation3 + $0x2a8] sm:$0xff] %vm1000, %v6288
  %6452 = vst.msk [vmem:[#allocation3 + $0x2c0] sm:$0xff] %vm1000, %v6290
  %6453 = vst.msk [vmem:[#allocation3 + $0x2d8] sm:$0xff] %vm1000, %v6292
  %6454 = vst.msk [vmem:[#allocation3 + $0x2f0] sm:$0xff] %vm1000, %v6294
  %6455 = vst.msk [vmem:[#allocation3 + $0x308] sm:$0xff] %vm1000, %v6296
  %6456 = vst.msk [vmem:[#allocation3 + $0x320] sm:$0xff] %vm1000, %v6298
  %6457 = vst.msk [vmem:[#allocation3 + $0x338] sm:$0xff] %vm1000, %v6300
  %6458 = vst.msk [vmem:[#allocation3 + $0x350] sm:$0xff] %vm1000, %v6302
  %6459 = vst.msk [vmem:[#allocation3 + $0x368] sm:$0xff] %vm1000, %v6304
  %6460 = vst.msk [vmem:[#allocation3 + $0x380] sm:$0xff] %vm1000, %v6306
  %6461 = vst.msk [vmem:[#allocation3 + $0x398] sm:$0xff] %vm1000, %v6308
  %6462 = vst.msk [vmem:[#allocation3 + $0x3b0] sm:$0xff] %vm1000, %v6310
  %6463 = vst.msk [vmem:[#allocation3 + $0x3c8] sm:$0xff] %vm1000, %v6312
  %6464 = vst.msk [vmem:[#allocation3 + $0x3e0] sm:$0xff] %vm1000, %v6314
  %6465 = vst.msk [vmem:[#allocation3 + $0x3f8] sm:$0xff] %vm1000, %v6316
  %6466 = vst.msk [vmem:[#allocation3 + $0x410] sm:$0xff] %vm1000, %v6318
  %6467 = vst.msk [vmem:[#allocation3 + $0x428] sm:$0xff] %vm1000, %v6320
  %6468 = vst.msk [vmem:[#allocation3 + $0x440] sm:$0xff] %vm1000, %v6322
  %6469 = vst.msk [vmem:[#allocation3 + $0x458] sm:$0xff] %vm1000, %v6324
  %6470 = vst.msk [vmem:[#allocation3 + $0x470] sm:$0xff] %vm1000, %v6326
  %6471 = vst.msk [vmem:[#allocation3 + $0x488] sm:$0xff] %vm1000, %v6328
  %6472 = vst.msk [vmem:[#allocation3 + $0x4a0] sm:$0xff] %vm1000, %v6330
  %6473 = vst.msk [vmem:[#allocation3 + $0x4b8] sm:$0xff] %vm1000, %v6332
  %6474 = vst.msk [vmem:[#allocation3 + $0x4d0] sm:$0xff] %vm1000, %v6334
  %6475 = vst.msk [vmem:[#allocation3 + $0x4e8] sm:$0xff] %vm1000, %v6336
  %6476 = vst.msk [vmem:[#allocation3 + $0x500] sm:$0xff] %vm1000, %v6338
  %6477 = vst.msk [vmem:[#allocation3 + $0x518] sm:$0xff] %vm1000, %v6340
  %6478 = vst.msk [vmem:[#allocation3 + $0x530] sm:$0xff] %vm1000, %v6342
  %6479 = vst.msk [vmem:[#allocation3 + $0x548] sm:$0xff] %vm1000, %v6344
  %6480 = vst.msk [vmem:[#allocation3 + $0x560] sm:$0xff] %vm1000, %v6346
  %6481 = vst.msk [vmem:[#allocation3 + $0x578] sm:$0xff] %vm1000, %v6348
  %6482 = vst.msk [vmem:[#allocation3 + $0x590] sm:$0xff] %vm1000, %v6350
  %6483 = vst.msk [vmem:[#allocation3 + $0x5a8] sm:$0xff] %vm1000, %v6352
  %6484 = vst.msk [vmem:[#allocation3 + $0x5c0] sm:$0xff] %vm1000, %v6354
  %6485 = vst.msk [vmem:[#allocation3 + $0x5d8] sm:$0xff] %vm1000, %v6356
  %6486 = vst.msk [vmem:[#allocation3 + $0x5f0] sm:$0xff] %vm1000, %v6358
  %v6487 = vld [vmem:[#allocation2 + $0x18] sm:$0xff]
  %v6488 = vld [vmem:[#allocation2 + $0x20] sm:$0xff]
  %v6489 = vld [vmem:[#allocation2 + $0x28] sm:$0xff]
  %v6490 = vld [vmem:[#allocation2 + $0x30] sm:$0xff]
  %v6491 = vld [vmem:[#allocation2 + $0x38] sm:$0xff]
  %v6492 = vld [vmem:[#allocation2 + $0x40] sm:$0xff]
  %v6493 = vld [vmem:[#allocation2 + $0x48] sm:$0xff]
  %v6494 = vld [vmem:[#allocation2 + $0x50] sm:$0xff]
  %v6495 = vld [vmem:[#allocation2 + $0x58] sm:$0xff]
  %v6496 = vld [vmem:[#allocation2 + $0x60] sm:$0xff]
  %v6497 = vld [vmem:[#allocation2 + $0x68] sm:$0xff]
  %v6498 = vld [vmem:[#allocation2 + $0x70] sm:$0xff]
  %v6499 = vld [vmem:[#allocation2 + $0x78] sm:$0xff]
  %v6500 = vld [vmem:[#allocation2 + $0x80] sm:$0xff]
  %v6501 = vld [vmem:[#allocation2 + $0x88] sm:$0xff]
  %v6502 = vld [vmem:[#allocation2 + $0x90] sm:$0xff]
  %v6503 = vld [vmem:[#allocation2 + $0x98] sm:$0xff]
  %v6504 = vld [vmem:[#allocation2 + $0xa0] sm:$0xff]
  %v6505 = vld [vmem:[#allocation2 + $0xa8] sm:$0xff]
  %v6506 = vld [vmem:[#allocation2 + $0xb0] sm:$0xff]
  %v6507 = vld [vmem:[#allocation2 + $0xb8] sm:$0xff]
  %v6508 = vld [vmem:[#allocation2 + $0xc0] sm:$0xff]
  %v6509 = vld [vmem:[#allocation2 + $0xc8] sm:$0xff]
  %v6510 = vld [vmem:[#allocation2 + $0xd0] sm:$0xff]
  %v6511 = vld [vmem:[#allocation2 + $0xd8] sm:$0xff]
  %v6512 = vld [vmem:[#allocation2 + $0xe0] sm:$0xff]
  %v6513 = vld [vmem:[#allocation2 + $0xe8] sm:$0xff]
  %v6514 = vld [vmem:[#allocation2 + $0xf0] sm:$0xff]
  %v6515 = vld [vmem:[#allocation2 + $0xf8] sm:$0xff]
  %v6516 = vld [vmem:[#allocation2 + $0x100] sm:$0xff]
  %v6517 = vld [vmem:[#allocation2 + $0x108] sm:$0xff]
  %v6518 = vld [vmem:[#allocation2 + $0x110] sm:$0xff]
  %v6519 = vld [vmem:[#allocation2 + $0x118] sm:$0xff]
  %v6520 = vld [vmem:[#allocation2 + $0x120] sm:$0xff]
  %v6521 = vld [vmem:[#allocation2 + $0x128] sm:$0xff]
  %v6522 = vld [vmem:[#allocation2 + $0x130] sm:$0xff]
  %v6523 = vld [vmem:[#allocation2 + $0x138] sm:$0xff]
  %v6524 = vld [vmem:[#allocation2 + $0x140] sm:$0xff]
  %v6525 = vld [vmem:[#allocation2 + $0x148] sm:$0xff]
  %v6526 = vld [vmem:[#allocation2 + $0x150] sm:$0xff]
  %v6527 = vld [vmem:[#allocation2 + $0x158] sm:$0xff]
  %v6528 = vld [vmem:[#allocation2 + $0x160] sm:$0xff]
  %v6529 = vld [vmem:[#allocation2 + $0x168] sm:$0xff]
  %v6530 = vld [vmem:[#allocation2 + $0x170] sm:$0xff]
  %v6531 = vld [vmem:[#allocation2 + $0x178] sm:$0xff]
  %v6532 = vld [vmem:[#allocation2 + $0x180] sm:$0xff]
  %v6533 = vld [vmem:[#allocation2 + $0x188] sm:$0xff]
  %v6534 = vld [vmem:[#allocation2 + $0x190] sm:$0xff]
  %v6535 = vld [vmem:[#allocation2 + $0x198] sm:$0xff]
  %v6536 = vld [vmem:[#allocation2 + $0x1a0] sm:$0xff]
  %v6537 = vld [vmem:[#allocation2 + $0x1a8] sm:$0xff]
  %v6538 = vld [vmem:[#allocation2 + $0x1b0] sm:$0xff]
  %v6539 = vld [vmem:[#allocation2 + $0x1b8] sm:$0xff]
  %v6540 = vld [vmem:[#allocation2 + $0x1c0] sm:$0xff]
  %v6541 = vld [vmem:[#allocation2 + $0x1c8] sm:$0xff]
  %v6542 = vld [vmem:[#allocation2 + $0x1d0] sm:$0xff]
  %v6543 = vld [vmem:[#allocation2 + $0x1d8] sm:$0xff]
  %v6544 = vld [vmem:[#allocation2 + $0x1e0] sm:$0xff]
  %v6545 = vld [vmem:[#allocation2 + $0x1e8] sm:$0xff]
  %v6546 = vld [vmem:[#allocation2 + $0x1f0] sm:$0xff]
  %v6547 = vld [vmem:[#allocation2 + $0x1f8] sm:$0xff]
  %v6548 = vld [vmem:[#allocation2 + $0x200] sm:$0xff]
  %v6549 = vld [vmem:[#allocation2 + $0x208] sm:$0xff]
  %v6550 = vld [vmem:[#allocation2 + $0x210] sm:$0xff]
  %6615 = vrot.lane.b32.xlu0 %v6487, 96
  %v6616 = vpop.permute.xlu0 %6615
  %6617 = vrot.lane.b32.xlu0 %v6488, 96
  %v6618 = vpop.permute.xlu0 %6617
  %6619 = vrot.lane.b32.xlu0 %v6489, 96
  %v6620 = vpop.permute.xlu0 %6619
  %6621 = vrot.lane.b32.xlu0 %v6490, 96
  %v6622 = vpop.permute.xlu0 %6621
  %6623 = vrot.lane.b32.xlu0 %v6491, 96
  %v6624 = vpop.permute.xlu0 %6623
  %6625 = vrot.lane.b32.xlu0 %v6492, 96
  %v6626 = vpop.permute.xlu0 %6625
  %6627 = vrot.lane.b32.xlu0 %v6493, 96
  %v6628 = vpop.permute.xlu0 %6627
  %6629 = vrot.lane.b32.xlu0 %v6494, 96
  %v6630 = vpop.permute.xlu0 %6629
  %6631 = vrot.lane.b32.xlu0 %v6495, 96
  %v6632 = vpop.permute.xlu0 %6631
  %6633 = vrot.lane.b32.xlu0 %v6496, 96
  %v6634 = vpop.permute.xlu0 %6633
  %6635 = vrot.lane.b32.xlu0 %v6497, 96
  %v6636 = vpop.permute.xlu0 %6635
  %6637 = vrot.lane.b32.xlu0 %v6498, 96
  %v6638 = vpop.permute.xlu0 %6637
  %6639 = vrot.lane.b32.xlu0 %v6499, 96
  %v6640 = vpop.permute.xlu0 %6639
  %6641 = vrot.lane.b32.xlu0 %v6500, 96
  %v6642 = vpop.permute.xlu0 %6641
  %6643 = vrot.lane.b32.xlu0 %v6501, 96
  %v6644 = vpop.permute.xlu0 %6643
  %6645 = vrot.lane.b32.xlu0 %v6502, 96
  %v6646 = vpop.permute.xlu0 %6645
  %6647 = vrot.lane.b32.xlu0 %v6503, 96
  %v6648 = vpop.permute.xlu0 %6647
  %6649 = vrot.lane.b32.xlu0 %v6504, 96
  %v6650 = vpop.permute.xlu0 %6649
  %6651 = vrot.lane.b32.xlu0 %v6505, 96
  %v6652 = vpop.permute.xlu0 %6651
  %6653 = vrot.lane.b32.xlu0 %v6506, 96
  %v6654 = vpop.permute.xlu0 %6653
  %6655 = vrot.lane.b32.xlu0 %v6507, 96
  %v6656 = vpop.permute.xlu0 %6655
  %6657 = vrot.lane.b32.xlu0 %v6508, 96
  %v6658 = vpop.permute.xlu0 %6657
  %6659 = vrot.lane.b32.xlu0 %v6509, 96
  %v6660 = vpop.permute.xlu0 %6659
  %6661 = vrot.lane.b32.xlu0 %v6510, 96
  %v6662 = vpop.permute.xlu0 %6661
  %6663 = vrot.lane.b32.xlu0 %v6511, 96
  %v6664 = vpop.permute.xlu0 %6663
  %6665 = vrot.lane.b32.xlu0 %v6512, 96
  %v6666 = vpop.permute.xlu0 %6665
  %6667 = vrot.lane.b32.xlu0 %v6513, 96
  %v6668 = vpop.permute.xlu0 %6667
  %6669 = vrot.lane.b32.xlu0 %v6514, 96
  %v6670 = vpop.permute.xlu0 %6669
  %6671 = vrot.lane.b32.xlu0 %v6515, 96
  %v6672 = vpop.permute.xlu0 %6671
  %6673 = vrot.lane.b32.xlu0 %v6516, 96
  %v6674 = vpop.permute.xlu0 %6673
  %6675 = vrot.lane.b32.xlu0 %v6517, 96
  %v6676 = vpop.permute.xlu0 %6675
  %6677 = vrot.lane.b32.xlu0 %v6518, 96
  %v6678 = vpop.permute.xlu0 %6677
  %6679 = vrot.lane.b32.xlu0 %v6519, 96
  %v6680 = vpop.permute.xlu0 %6679
  %6681 = vrot.lane.b32.xlu0 %v6520, 96
  %v6682 = vpop.permute.xlu0 %6681
  %6683 = vrot.lane.b32.xlu0 %v6521, 96
  %v6684 = vpop.permute.xlu0 %6683
  %6685 = vrot.lane.b32.xlu0 %v6522, 96
  %v6686 = vpop.permute.xlu0 %6685
  %6687 = vrot.lane.b32.xlu0 %v6523, 96
  %v6688 = vpop.permute.xlu0 %6687
  %6689 = vrot.lane.b32.xlu0 %v6524, 96
  %v6690 = vpop.permute.xlu0 %6689
  %6691 = vrot.lane.b32.xlu0 %v6525, 96
  %v6692 = vpop.permute.xlu0 %6691
  %6693 = vrot.lane.b32.xlu0 %v6526, 96
  %v6694 = vpop.permute.xlu0 %6693
  %6695 = vrot.lane.b32.xlu0 %v6527, 96
  %v6696 = vpop.permute.xlu0 %6695
  %6697 = vrot.lane.b32.xlu0 %v6528, 96
  %v6698 = vpop.permute.xlu0 %6697
  %6699 = vrot.lane.b32.xlu0 %v6529, 96
  %v6700 = vpop.permute.xlu0 %6699
  %6701 = vrot.lane.b32.xlu0 %v6530, 96
  %v6702 = vpop.permute.xlu0 %6701
  %6703 = vrot.lane.b32.xlu0 %v6531, 96
  %v6704 = vpop.permute.xlu0 %6703
  %6705 = vrot.lane.b32.xlu0 %v6532, 96
  %v6706 = vpop.permute.xlu0 %6705
  %6707 = vrot.lane.b32.xlu0 %v6533, 96
  %v6708 = vpop.permute.xlu0 %6707
  %6709 = vrot.lane.b32.xlu0 %v6534, 96
  %v6710 = vpop.permute.xlu0 %6709
  %6711 = vrot.lane.b32.xlu0 %v6535, 96
  %v6712 = vpop.permute.xlu0 %6711
  %6713 = vrot.lane.b32.xlu0 %v6536, 96
  %v6714 = vpop.permute.xlu0 %6713
  %6715 = vrot.lane.b32.xlu0 %v6537, 96
  %v6716 = vpop.permute.xlu0 %6715
  %6717 = vrot.lane.b32.xlu0 %v6538, 96
  %v6718 = vpop.permute.xlu0 %6717
  %6719 = vrot.lane.b32.xlu0 %v6539, 96
  %v6720 = vpop.permute.xlu0 %6719
  %6721 = vrot.lane.b32.xlu0 %v6540, 96
  %v6722 = vpop.permute.xlu0 %6721
  %6723 = vrot.lane.b32.xlu0 %v6541, 96
  %v6724 = vpop.permute.xlu0 %6723
  %6725 = vrot.lane.b32.xlu0 %v6542, 96
  %v6726 = vpop.permute.xlu0 %6725
  %6727 = vrot.lane.b32.xlu0 %v6543, 96
  %v6728 = vpop.permute.xlu0 %6727
  %6729 = vrot.lane.b32.xlu0 %v6544, 96
  %v6730 = vpop.permute.xlu0 %6729
  %6731 = vrot.lane.b32.xlu0 %v6545, 96
  %v6732 = vpop.permute.xlu0 %6731
  %6733 = vrot.lane.b32.xlu0 %v6546, 96
  %v6734 = vpop.permute.xlu0 %6733
  %6735 = vrot.lane.b32.xlu0 %v6547, 96
  %v6736 = vpop.permute.xlu0 %6735
  %6737 = vrot.lane.b32.xlu0 %v6548, 96
  %v6738 = vpop.permute.xlu0 %6737
  %6739 = vrot.lane.b32.xlu0 %v6549, 96
  %v6740 = vpop.permute.xlu0 %6739
  %6741 = vrot.lane.b32.xlu0 %v6550, 96
  %v6742 = vpop.permute.xlu0 %6741
  %6807 = vst.msk [vmem:[#allocation3 + $0x8] sm:$0xff] %vm1385, %v6616
  %6808 = vst.msk [vmem:[#allocation3 + $0x20] sm:$0xff] %vm1385, %v6618
  %6809 = vst.msk [vmem:[#allocation3 + $0x38] sm:$0xff] %vm1385, %v6620
  %6810 = vst.msk [vmem:[#allocation3 + $0x50] sm:$0xff] %vm1385, %v6622
  %6811 = vst.msk [vmem:[#allocation3 + $0x68] sm:$0xff] %vm1385, %v6624
  %6812 = vst.msk [vmem:[#allocation3 + $0x80] sm:$0xff] %vm1385, %v6626
  %6813 = vst.msk [vmem:[#allocation3 + $0x98] sm:$0xff] %vm1385, %v6628
  %6814 = vst.msk [vmem:[#allocation3 + $0xb0] sm:$0xff] %vm1385, %v6630
  %6815 = vst.msk [vmem:[#allocation3 + $0xc8] sm:$0xff] %vm1385, %v6632
  %6816 = vst.msk [vmem:[#allocation3 + $0xe0] sm:$0xff] %vm1385, %v6634
  %6817 = vst.msk [vmem:[#allocation3 + $0xf8] sm:$0xff] %vm1385, %v6636
  %6818 = vst.msk [vmem:[#allocation3 + $0x110] sm:$0xff] %vm1385, %v6638
  %6819 = vst.msk [vmem:[#allocation3 + $0x128] sm:$0xff] %vm1385, %v6640
  %6820 = vst.msk [vmem:[#allocation3 + $0x140] sm:$0xff] %vm1385, %v6642
  %6821 = vst.msk [vmem:[#allocation3 + $0x158] sm:$0xff] %vm1385, %v6644
  %6822 = vst.msk [vmem:[#allocation3 + $0x170] sm:$0xff] %vm1385, %v6646
  %6823 = vst.msk [vmem:[#allocation3 + $0x188] sm:$0xff] %vm1385, %v6648
  %6824 = vst.msk [vmem:[#allocation3 + $0x1a0] sm:$0xff] %vm1385, %v6650
  %6825 = vst.msk [vmem:[#allocation3 + $0x1b8] sm:$0xff] %vm1385, %v6652
  %6826 = vst.msk [vmem:[#allocation3 + $0x1d0] sm:$0xff] %vm1385, %v6654
  %6827 = vst.msk [vmem:[#allocation3 + $0x1e8] sm:$0xff] %vm1385, %v6656
  %6828 = vst.msk [vmem:[#allocation3 + $0x200] sm:$0xff] %vm1385, %v6658
  %6829 = vst.msk [vmem:[#allocation3 + $0x218] sm:$0xff] %vm1385, %v6660
  %6830 = vst.msk [vmem:[#allocation3 + $0x230] sm:$0xff] %vm1385, %v6662
  %6831 = vst.msk [vmem:[#allocation3 + $0x248] sm:$0xff] %vm1385, %v6664
  %6832 = vst.msk [vmem:[#allocation3 + $0x260] sm:$0xff] %vm1385, %v6666
  %6833 = vst.msk [vmem:[#allocation3 + $0x278] sm:$0xff] %vm1385, %v6668
  %6834 = vst.msk [vmem:[#allocation3 + $0x290] sm:$0xff] %vm1385, %v6670
  %6835 = vst.msk [vmem:[#allocation3 + $0x2a8] sm:$0xff] %vm1385, %v6672
  %6836 = vst.msk [vmem:[#allocation3 + $0x2c0] sm:$0xff] %vm1385, %v6674
  %6837 = vst.msk [vmem:[#allocation3 + $0x2d8] sm:$0xff] %vm1385, %v6676
  %6838 = vst.msk [vmem:[#allocation3 + $0x2f0] sm:$0xff] %vm1385, %v6678
  %6839 = vst.msk [vmem:[#allocation3 + $0x308] sm:$0xff] %vm1385, %v6680
  %6840 = vst.msk [vmem:[#allocation3 + $0x320] sm:$0xff] %vm1385, %v6682
  %6841 = vst.msk [vmem:[#allocation3 + $0x338] sm:$0xff] %vm1385, %v6684
  %6842 = vst.msk [vmem:[#allocation3 + $0x350] sm:$0xff] %vm1385, %v6686
  %6843 = vst.msk [vmem:[#allocation3 + $0x368] sm:$0xff] %vm1385, %v6688
  %6844 = vst.msk [vmem:[#allocation3 + $0x380] sm:$0xff] %vm1385, %v6690
  %6845 = vst.msk [vmem:[#allocation3 + $0x398] sm:$0xff] %vm1385, %v6692
  %6846 = vst.msk [vmem:[#allocation3 + $0x3b0] sm:$0xff] %vm1385, %v6694
  %6847 = vst.msk [vmem:[#allocation3 + $0x3c8] sm:$0xff] %vm1385, %v6696
  %6848 = vst.msk [vmem:[#allocation3 + $0x3e0] sm:$0xff] %vm1385, %v6698
  %6849 = vst.msk [vmem:[#allocation3 + $0x3f8] sm:$0xff] %vm1385, %v6700
  %6850 = vst.msk [vmem:[#allocation3 + $0x410] sm:$0xff] %vm1385, %v6702
  %6851 = vst.msk [vmem:[#allocation3 + $0x428] sm:$0xff] %vm1385, %v6704
  %6852 = vst.msk [vmem:[#allocation3 + $0x440] sm:$0xff] %vm1385, %v6706
  %6853 = vst.msk [vmem:[#allocation3 + $0x458] sm:$0xff] %vm1385, %v6708
  %6854 = vst.msk [vmem:[#allocation3 + $0x470] sm:$0xff] %vm1385, %v6710
  %6855 = vst.msk [vmem:[#allocation3 + $0x488] sm:$0xff] %vm1385, %v6712
  %6856 = vst.msk [vmem:[#allocation3 + $0x4a0] sm:$0xff] %vm1385, %v6714
  %6857 = vst.msk [vmem:[#allocation3 + $0x4b8] sm:$0xff] %vm1385, %v6716
  %6858 = vst.msk [vmem:[#allocation3 + $0x4d0] sm:$0xff] %vm1385, %v6718
  %6859 = vst.msk [vmem:[#allocation3 + $0x4e8] sm:$0xff] %vm1385, %v6720
  %6860 = vst.msk [vmem:[#allocation3 + $0x500] sm:$0xff] %vm1385, %v6722
  %6861 = vst.msk [vmem:[#allocation3 + $0x518] sm:$0xff] %vm1385, %v6724
  %6862 = vst.msk [vmem:[#allocation3 + $0x530] sm:$0xff] %vm1385, %v6726
  %6863 = vst.msk [vmem:[#allocation3 + $0x548] sm:$0xff] %vm1385, %v6728
  %6864 = vst.msk [vmem:[#allocation3 + $0x560] sm:$0xff] %vm1385, %v6730
  %6865 = vst.msk [vmem:[#allocation3 + $0x578] sm:$0xff] %vm1385, %v6732
  %6866 = vst.msk [vmem:[#allocation3 + $0x590] sm:$0xff] %vm1385, %v6734
  %6867 = vst.msk [vmem:[#allocation3 + $0x5a8] sm:$0xff] %vm1385, %v6736
  %6868 = vst.msk [vmem:[#allocation3 + $0x5c0] sm:$0xff] %vm1385, %v6738
  %6869 = vst.msk [vmem:[#allocation3 + $0x5d8] sm:$0xff] %vm1385, %v6740
  %6870 = vst.msk [vmem:[#allocation3 + $0x5f0] sm:$0xff] %vm1385, %v6742
  %v6871 = vld [vmem:[#allocation2 + $0x19] sm:$0xff]
  %v6872 = vld [vmem:[#allocation2 + $0x21] sm:$0xff]
  %v6873 = vld [vmem:[#allocation2 + $0x29] sm:$0xff]
  %v6874 = vld [vmem:[#allocation2 + $0x31] sm:$0xff]
  %v6875 = vld [vmem:[#allocation2 + $0x39] sm:$0xff]
  %v6876 = vld [vmem:[#allocation2 + $0x41] sm:$0xff]
  %v6877 = vld [vmem:[#allocation2 + $0x49] sm:$0xff]
  %v6878 = vld [vmem:[#allocation2 + $0x51] sm:$0xff]
  %v6879 = vld [vmem:[#allocation2 + $0x59] sm:$0xff]
  %v6880 = vld [vmem:[#allocation2 + $0x61] sm:$0xff]
  %v6881 = vld [vmem:[#allocation2 + $0x69] sm:$0xff]
  %v6882 = vld [vmem:[#allocation2 + $0x71] sm:$0xff]
  %v6883 = vld [vmem:[#allocation2 + $0x79] sm:$0xff]
  %v6884 = vld [vmem:[#allocation2 + $0x81] sm:$0xff]
  %v6885 = vld [vmem:[#allocation2 + $0x89] sm:$0xff]
  %v6886 = vld [vmem:[#allocation2 + $0x91] sm:$0xff]
  %v6887 = vld [vmem:[#allocation2 + $0x99] sm:$0xff]
  %v6888 = vld [vmem:[#allocation2 + $0xa1] sm:$0xff]
  %v6889 = vld [vmem:[#allocation2 + $0xa9] sm:$0xff]
  %v6890 = vld [vmem:[#allocation2 + $0xb1] sm:$0xff]
  %v6891 = vld [vmem:[#allocation2 + $0xb9] sm:$0xff]
  %v6892 = vld [vmem:[#allocation2 + $0xc1] sm:$0xff]
  %v6893 = vld [vmem:[#allocation2 + $0xc9] sm:$0xff]
  %v6894 = vld [vmem:[#allocation2 + $0xd1] sm:$0xff]
  %v6895 = vld [vmem:[#allocation2 + $0xd9] sm:$0xff]
  %v6896 = vld [vmem:[#allocation2 + $0xe1] sm:$0xff]
  %v6897 = vld [vmem:[#allocation2 + $0xe9] sm:$0xff]
  %v6898 = vld [vmem:[#allocation2 + $0xf1] sm:$0xff]
  %v6899 = vld [vmem:[#allocation2 + $0xf9] sm:$0xff]
  %v6900 = vld [vmem:[#allocation2 + $0x101] sm:$0xff]
  %v6901 = vld [vmem:[#allocation2 + $0x109] sm:$0xff]
  %v6902 = vld [vmem:[#allocation2 + $0x111] sm:$0xff]
  %v6903 = vld [vmem:[#allocation2 + $0x119] sm:$0xff]
  %v6904 = vld [vmem:[#allocation2 + $0x121] sm:$0xff]
  %v6905 = vld [vmem:[#allocation2 + $0x129] sm:$0xff]
  %v6906 = vld [vmem:[#allocation2 + $0x131] sm:$0xff]
  %v6907 = vld [vmem:[#allocation2 + $0x139] sm:$0xff]
  %v6908 = vld [vmem:[#allocation2 + $0x141] sm:$0xff]
  %v6909 = vld [vmem:[#allocation2 + $0x149] sm:$0xff]
  %v6910 = vld [vmem:[#allocation2 + $0x151] sm:$0xff]
  %v6911 = vld [vmem:[#allocation2 + $0x159] sm:$0xff]
  %v6912 = vld [vmem:[#allocation2 + $0x161] sm:$0xff]
  %v6913 = vld [vmem:[#allocation2 + $0x169] sm:$0xff]
  %v6914 = vld [vmem:[#allocation2 + $0x171] sm:$0xff]
  %v6915 = vld [vmem:[#allocation2 + $0x179] sm:$0xff]
  %v6916 = vld [vmem:[#allocation2 + $0x181] sm:$0xff]
  %v6917 = vld [vmem:[#allocation2 + $0x189] sm:$0xff]
  %v6918 = vld [vmem:[#allocation2 + $0x191] sm:$0xff]
  %v6919 = vld [vmem:[#allocation2 + $0x199] sm:$0xff]
  %v6920 = vld [vmem:[#allocation2 + $0x1a1] sm:$0xff]
  %v6921 = vld [vmem:[#allocation2 + $0x1a9] sm:$0xff]
  %v6922 = vld [vmem:[#allocation2 + $0x1b1] sm:$0xff]
  %v6923 = vld [vmem:[#allocation2 + $0x1b9] sm:$0xff]
  %v6924 = vld [vmem:[#allocation2 + $0x1c1] sm:$0xff]
  %v6925 = vld [vmem:[#allocation2 + $0x1c9] sm:$0xff]
  %v6926 = vld [vmem:[#allocation2 + $0x1d1] sm:$0xff]
  %v6927 = vld [vmem:[#allocation2 + $0x1d9] sm:$0xff]
  %v6928 = vld [vmem:[#allocation2 + $0x1e1] sm:$0xff]
  %v6929 = vld [vmem:[#allocation2 + $0x1e9] sm:$0xff]
  %v6930 = vld [vmem:[#allocation2 + $0x1f1] sm:$0xff]
  %v6931 = vld [vmem:[#allocation2 + $0x1f9] sm:$0xff]
  %v6932 = vld [vmem:[#allocation2 + $0x201] sm:$0xff]
  %v6933 = vld [vmem:[#allocation2 + $0x209] sm:$0xff]
  %v6934 = vld [vmem:[#allocation2 + $0x211] sm:$0xff]
  %6935 = vst.msk [vmem:[#allocation3 + $0x10] sm:$0xff] %vm34, %v6871
  %6936 = vst.msk [vmem:[#allocation3 + $0x28] sm:$0xff] %vm34, %v6872
  %6937 = vst.msk [vmem:[#allocation3 + $0x40] sm:$0xff] %vm34, %v6873
  %6938 = vst.msk [vmem:[#allocation3 + $0x58] sm:$0xff] %vm34, %v6874
  %6939 = vst.msk [vmem:[#allocation3 + $0x70] sm:$0xff] %vm34, %v6875
  %6940 = vst.msk [vmem:[#allocation3 + $0x88] sm:$0xff] %vm34, %v6876
  %6941 = vst.msk [vmem:[#allocation3 + $0xa0] sm:$0xff] %vm34, %v6877
  %6942 = vst.msk [vmem:[#allocation3 + $0xb8] sm:$0xff] %vm34, %v6878
  %6943 = vst.msk [vmem:[#allocation3 + $0xd0] sm:$0xff] %vm34, %v6879
  %6944 = vst.msk [vmem:[#allocation3 + $0xe8] sm:$0xff] %vm34, %v6880
  %6945 = vst.msk [vmem:[#allocation3 + $0x100] sm:$0xff] %vm34, %v6881
  %6946 = vst.msk [vmem:[#allocation3 + $0x118] sm:$0xff] %vm34, %v6882
  %6947 = vst.msk [vmem:[#allocation3 + $0x130] sm:$0xff] %vm34, %v6883
  %6948 = vst.msk [vmem:[#allocation3 + $0x148] sm:$0xff] %vm34, %v6884
  %6949 = vst.msk [vmem:[#allocation3 + $0x160] sm:$0xff] %vm34, %v6885
  %6950 = vst.msk [vmem:[#allocation3 + $0x178] sm:$0xff] %vm34, %v6886
  %6951 = vst.msk [vmem:[#allocation3 + $0x190] sm:$0xff] %vm34, %v6887
  %6952 = vst.msk [vmem:[#allocation3 + $0x1a8] sm:$0xff] %vm34, %v6888
  %6953 = vst.msk [vmem:[#allocation3 + $0x1c0] sm:$0xff] %vm34, %v6889
  %6954 = vst.msk [vmem:[#allocation3 + $0x1d8] sm:$0xff] %vm34, %v6890
  %6955 = vst.msk [vmem:[#allocation3 + $0x1f0] sm:$0xff] %vm34, %v6891
  %6956 = vst.msk [vmem:[#allocation3 + $0x208] sm:$0xff] %vm34, %v6892
  %6957 = vst.msk [vmem:[#allocation3 + $0x220] sm:$0xff] %vm34, %v6893
  %6958 = vst.msk [vmem:[#allocation3 + $0x238] sm:$0xff] %vm34, %v6894
  %6959 = vst.msk [vmem:[#allocation3 + $0x250] sm:$0xff] %vm34, %v6895
  %6960 = vst.msk [vmem:[#allocation3 + $0x268] sm:$0xff] %vm34, %v6896
  %6961 = vst.msk [vmem:[#allocation3 + $0x280] sm:$0xff] %vm34, %v6897
  %6962 = vst.msk [vmem:[#allocation3 + $0x298] sm:$0xff] %vm34, %v6898
  %6963 = vst.msk [vmem:[#allocation3 + $0x2b0] sm:$0xff] %vm34, %v6899
  %6964 = vst.msk [vmem:[#allocation3 + $0x2c8] sm:$0xff] %vm34, %v6900
  %6965 = vst.msk [vmem:[#allocation3 + $0x2e0] sm:$0xff] %vm34, %v6901
  %6966 = vst.msk [vmem:[#allocation3 + $0x2f8] sm:$0xff] %vm34, %v6902
  %6967 = vst.msk [vmem:[#allocation3 + $0x310] sm:$0xff] %vm34, %v6903
  %6968 = vst.msk [vmem:[#allocation3 + $0x328] sm:$0xff] %vm34, %v6904
  %6969 = vst.msk [vmem:[#allocation3 + $0x340] sm:$0xff] %vm34, %v6905
  %6970 = vst.msk [vmem:[#allocation3 + $0x358] sm:$0xff] %vm34, %v6906
  %6971 = vst.msk [vmem:[#allocation3 + $0x370] sm:$0xff] %vm34, %v6907
  %6972 = vst.msk [vmem:[#allocation3 + $0x388] sm:$0xff] %vm34, %v6908
  %6973 = vst.msk [vmem:[#allocation3 + $0x3a0] sm:$0xff] %vm34, %v6909
  %6974 = vst.msk [vmem:[#allocation3 + $0x3b8] sm:$0xff] %vm34, %v6910
  %6975 = vst.msk [vmem:[#allocation3 + $0x3d0] sm:$0xff] %vm34, %v6911
  %6976 = vst.msk [vmem:[#allocation3 + $0x3e8] sm:$0xff] %vm34, %v6912
  %6977 = vst.msk [vmem:[#allocation3 + $0x400] sm:$0xff] %vm34, %v6913
  %6978 = vst.msk [vmem:[#allocation3 + $0x418] sm:$0xff] %vm34, %v6914
  %6979 = vst.msk [vmem:[#allocation3 + $0x430] sm:$0xff] %vm34, %v6915
  %6980 = vst.msk [vmem:[#allocation3 + $0x448] sm:$0xff] %vm34, %v6916
  %6981 = vst.msk [vmem:[#allocation3 + $0x460] sm:$0xff] %vm34, %v6917
  %6982 = vst.msk [vmem:[#allocation3 + $0x478] sm:$0xff] %vm34, %v6918
  %6983 = vst.msk [vmem:[#allocation3 + $0x490] sm:$0xff] %vm34, %v6919
  %6984 = vst.msk [vmem:[#allocation3 + $0x4a8] sm:$0xff] %vm34, %v6920
  %6985 = vst.msk [vmem:[#allocation3 + $0x4c0] sm:$0xff] %vm34, %v6921
  %6986 = vst.msk [vmem:[#allocation3 + $0x4d8] sm:$0xff] %vm34, %v6922
  %6987 = vst.msk [vmem:[#allocation3 + $0x4f0] sm:$0xff] %vm34, %v6923
  %6988 = vst.msk [vmem:[#allocation3 + $0x508] sm:$0xff] %vm34, %v6924
  %6989 = vst.msk [vmem:[#allocation3 + $0x520] sm:$0xff] %vm34, %v6925
  %6990 = vst.msk [vmem:[#allocation3 + $0x538] sm:$0xff] %vm34, %v6926
  %6991 = vst.msk [vmem:[#allocation3 + $0x550] sm:$0xff] %vm34, %v6927
  %6992 = vst.msk [vmem:[#allocation3 + $0x568] sm:$0xff] %vm34, %v6928
  %6993 = vst.msk [vmem:[#allocation3 + $0x580] sm:$0xff] %vm34, %v6929
  %6994 = vst.msk [vmem:[#allocation3 + $0x598] sm:$0xff] %vm34, %v6930
  %6995 = vst.msk [vmem:[#allocation3 + $0x5b0] sm:$0xff] %vm34, %v6931
  %6996 = vst.msk [vmem:[#allocation3 + $0x5c8] sm:$0xff] %vm34, %v6932
  %6997 = vst.msk [vmem:[#allocation3 + $0x5e0] sm:$0xff] %vm34, %v6933
  %6998 = vst.msk [vmem:[#allocation3 + $0x5f8] sm:$0xff] %vm34, %v6934
  %v6999 = vld [vmem:[#allocation3] sm:$0xff]
  %v7000 = vld [vmem:[#allocation3 + $0x8] sm:$0xff]
  %v7001 = vld [vmem:[#allocation3 + $0x10] sm:$0xff]
  %v7002 = vld [vmem:[#allocation3 + $0x18] sm:$0xff]
  %v7003 = vld [vmem:[#allocation3 + $0x20] sm:$0xff]
  %v7004 = vld [vmem:[#allocation3 + $0x28] sm:$0xff]
  %v7005 = vld [vmem:[#allocation3 + $0x30] sm:$0xff]
  %v7006 = vld [vmem:[#allocation3 + $0x38] sm:$0xff]
  %v7007 = vld [vmem:[#allocation3 + $0x40] sm:$0xff]
  %v7008 = vld [vmem:[#allocation3 + $0x48] sm:$0xff]
  %v7009 = vld [vmem:[#allocation3 + $0x50] sm:$0xff]
  %v7010 = vld [vmem:[#allocation3 + $0x58] sm:$0xff]
  %v7011 = vld [vmem:[#allocation3 + $0x60] sm:$0xff]
  %v7012 = vld [vmem:[#allocation3 + $0x68] sm:$0xff]
  %v7013 = vld [vmem:[#allocation3 + $0x70] sm:$0xff]
  %v7014 = vld [vmem:[#allocation3 + $0x78] sm:$0xff]
  %v7015 = vld [vmem:[#allocation3 + $0x80] sm:$0xff]
  %v7016 = vld [vmem:[#allocation3 + $0x88] sm:$0xff]
  %v7017 = vld [vmem:[#allocation3 + $0x90] sm:$0xff]
  %v7018 = vld [vmem:[#allocation3 + $0x98] sm:$0xff]
  %v7019 = vld [vmem:[#allocation3 + $0xa0] sm:$0xff]
  %v7020 = vld [vmem:[#allocation3 + $0xa8] sm:$0xff]
  %v7021 = vld [vmem:[#allocation3 + $0xb0] sm:$0xff]
  %v7022 = vld [vmem:[#allocation3 + $0xb8] sm:$0xff]
  %v7023 = vld [vmem:[#allocation3 + $0xc0] sm:$0xff]
  %v7024 = vld [vmem:[#allocation3 + $0xc8] sm:$0xff]
  %v7025 = vld [vmem:[#allocation3 + $0xd0] sm:$0xff]
  %v7026 = vld [vmem:[#allocation3 + $0xd8] sm:$0xff]
  %v7027 = vld [vmem:[#allocation3 + $0xe0] sm:$0xff]
  %v7028 = vld [vmem:[#allocation3 + $0xe8] sm:$0xff]
  %v7029 = vld [vmem:[#allocation3 + $0xf0] sm:$0xff]
  %v7030 = vld [vmem:[#allocation3 + $0xf8] sm:$0xff]
  %v7031 = vld [vmem:[#allocation3 + $0x100] sm:$0xff]
  %v7032 = vld [vmem:[#allocation3 + $0x108] sm:$0xff]
  %v7033 = vld [vmem:[#allocation3 + $0x110] sm:$0xff]
  %v7034 = vld [vmem:[#allocation3 + $0x118] sm:$0xff]
  %v7035 = vld [vmem:[#allocation3 + $0x120] sm:$0xff]
  %v7036 = vld [vmem:[#allocation3 + $0x128] sm:$0xff]
  %v7037 = vld [vmem:[#allocation3 + $0x130] sm:$0xff]
  %v7038 = vld [vmem:[#allocation3 + $0x138] sm:$0xff]
  %v7039 = vld [vmem:[#allocation3 + $0x140] sm:$0xff]
  %v7040 = vld [vmem:[#allocation3 + $0x148] sm:$0xff]
  %v7041 = vld [vmem:[#allocation3 + $0x150] sm:$0xff]
  %v7042 = vld [vmem:[#allocation3 + $0x158] sm:$0xff]
  %v7043 = vld [vmem:[#allocation3 + $0x160] sm:$0xff]
  %v7044 = vld [vmem:[#allocation3 + $0x168] sm:$0xff]
  %v7045 = vld [vmem:[#allocation3 + $0x170] sm:$0xff]
  %v7046 = vld [vmem:[#allocation3 + $0x178] sm:$0xff]
  %v7047 = vld [vmem:[#allocation3 + $0x180] sm:$0xff]
  %v7048 = vld [vmem:[#allocation3 + $0x188] sm:$0xff]
  %v7049 = vld [vmem:[#allocation3 + $0x190] sm:$0xff]
  %v7050 = vld [vmem:[#allocation3 + $0x198] sm:$0xff]
  %v7051 = vld [vmem:[#allocation3 + $0x1a0] sm:$0xff]
  %v7052 = vld [vmem:[#allocation3 + $0x1a8] sm:$0xff]
  %v7053 = vld [vmem:[#allocation3 + $0x1b0] sm:$0xff]
  %v7054 = vld [vmem:[#allocation3 + $0x1b8] sm:$0xff]
  %v7055 = vld [vmem:[#allocation3 + $0x1c0] sm:$0xff]
  %v7056 = vld [vmem:[#allocation3 + $0x1c8] sm:$0xff]
  %v7057 = vld [vmem:[#allocation3 + $0x1d0] sm:$0xff]
  %v7058 = vld [vmem:[#allocation3 + $0x1d8] sm:$0xff]
  %v7059 = vld [vmem:[#allocation3 + $0x1e0] sm:$0xff]
  %v7060 = vld [vmem:[#allocation3 + $0x1e8] sm:$0xff]
  %v7061 = vld [vmem:[#allocation3 + $0x1f0] sm:$0xff]
  %v7062 = vld [vmem:[#allocation3 + $0x1f8] sm:$0xff]
  %v7063 = vld [vmem:[#allocation3 + $0x200] sm:$0xff]
  %v7064 = vld [vmem:[#allocation3 + $0x208] sm:$0xff]
  %v7065 = vld [vmem:[#allocation3 + $0x210] sm:$0xff]
  %v7066 = vld [vmem:[#allocation3 + $0x218] sm:$0xff]
  %v7067 = vld [vmem:[#allocation3 + $0x220] sm:$0xff]
  %v7068 = vld [vmem:[#allocation3 + $0x228] sm:$0xff]
  %v7069 = vld [vmem:[#allocation3 + $0x230] sm:$0xff]
  %v7070 = vld [vmem:[#allocation3 + $0x238] sm:$0xff]
  %v7071 = vld [vmem:[#allocation3 + $0x240] sm:$0xff]
  %v7072 = vld [vmem:[#allocation3 + $0x248] sm:$0xff]
  %v7073 = vld [vmem:[#allocation3 + $0x250] sm:$0xff]
  %v7074 = vld [vmem:[#allocation3 + $0x258] sm:$0xff]
  %v7075 = vld [vmem:[#allocation3 + $0x260] sm:$0xff]
  %v7076 = vld [vmem:[#allocation3 + $0x268] sm:$0xff]
  %v7077 = vld [vmem:[#allocation3 + $0x270] sm:$0xff]
  %v7078 = vld [vmem:[#allocation3 + $0x278] sm:$0xff]
  %v7079 = vld [vmem:[#allocation3 + $0x280] sm:$0xff]
  %v7080 = vld [vmem:[#allocation3 + $0x288] sm:$0xff]
  %v7081 = vld [vmem:[#allocation3 + $0x290] sm:$0xff]
  %v7082 = vld [vmem:[#allocation3 + $0x298] sm:$0xff]
  %v7083 = vld [vmem:[#allocation3 + $0x2a0] sm:$0xff]
  %v7084 = vld [vmem:[#allocation3 + $0x2a8] sm:$0xff]
  %v7085 = vld [vmem:[#allocation3 + $0x2b0] sm:$0xff]
  %v7086 = vld [vmem:[#allocation3 + $0x2b8] sm:$0xff]
  %v7087 = vld [vmem:[#allocation3 + $0x2c0] sm:$0xff]
  %v7088 = vld [vmem:[#allocation3 + $0x2c8] sm:$0xff]
  %v7089 = vld [vmem:[#allocation3 + $0x2d0] sm:$0xff]
  %v7090 = vld [vmem:[#allocation3 + $0x2d8] sm:$0xff]
  %v7091 = vld [vmem:[#allocation3 + $0x2e0] sm:$0xff]
  %v7092 = vld [vmem:[#allocation3 + $0x2e8] sm:$0xff]
  %v7093 = vld [vmem:[#allocation3 + $0x2f0] sm:$0xff]
  %v7094 = vld [vmem:[#allocation3 + $0x2f8] sm:$0xff]
  %v7095 = vld [vmem:[#allocation3 + $0x300] sm:$0xff]
  %v7096 = vld [vmem:[#allocation3 + $0x308] sm:$0xff]
  %v7097 = vld [vmem:[#allocation3 + $0x310] sm:$0xff]
  %v7098 = vld [vmem:[#allocation3 + $0x318] sm:$0xff]
  %v7099 = vld [vmem:[#allocation3 + $0x320] sm:$0xff]
  %v7100 = vld [vmem:[#allocation3 + $0x328] sm:$0xff]
  %v7101 = vld [vmem:[#allocation3 + $0x330] sm:$0xff]
  %v7102 = vld [vmem:[#allocation3 + $0x338] sm:$0xff]
  %v7103 = vld [vmem:[#allocation3 + $0x340] sm:$0xff]
  %v7104 = vld [vmem:[#allocation3 + $0x348] sm:$0xff]
  %v7105 = vld [vmem:[#allocation3 + $0x350] sm:$0xff]
  %v7106 = vld [vmem:[#allocation3 + $0x358] sm:$0xff]
  %v7107 = vld [vmem:[#allocation3 + $0x360] sm:$0xff]
  %v7108 = vld [vmem:[#allocation3 + $0x368] sm:$0xff]
  %v7109 = vld [vmem:[#allocation3 + $0x370] sm:$0xff]
  %v7110 = vld [vmem:[#allocation3 + $0x378] sm:$0xff]
  %v7111 = vld [vmem:[#allocation3 + $0x380] sm:$0xff]
  %v7112 = vld [vmem:[#allocation3 + $0x388] sm:$0xff]
  %v7113 = vld [vmem:[#allocation3 + $0x390] sm:$0xff]
  %v7114 = vld [vmem:[#allocation3 + $0x398] sm:$0xff]
  %v7115 = vld [vmem:[#allocation3 + $0x3a0] sm:$0xff]
  %v7116 = vld [vmem:[#allocation3 + $0x3a8] sm:$0xff]
  %v7117 = vld [vmem:[#allocation3 + $0x3b0] sm:$0xff]
  %v7118 = vld [vmem:[#allocation3 + $0x3b8] sm:$0xff]
  %v7119 = vld [vmem:[#allocation3 + $0x3c0] sm:$0xff]
  %v7120 = vld [vmem:[#allocation3 + $0x3c8] sm:$0xff]
  %v7121 = vld [vmem:[#allocation3 + $0x3d0] sm:$0xff]
  %v7122 = vld [vmem:[#allocation3 + $0x3d8] sm:$0xff]
  %v7123 = vld [vmem:[#allocation3 + $0x3e0] sm:$0xff]
  %v7124 = vld [vmem:[#allocation3 + $0x3e8] sm:$0xff]
  %v7125 = vld [vmem:[#allocation3 + $0x3f0] sm:$0xff]
  %v7126 = vld [vmem:[#allocation3 + $0x3f8] sm:$0xff]
  %v7127 = vld [vmem:[#allocation3 + $0x400] sm:$0xff]
  %v7128 = vld [vmem:[#allocation3 + $0x408] sm:$0xff]
  %v7129 = vld [vmem:[#allocation3 + $0x410] sm:$0xff]
  %v7130 = vld [vmem:[#allocation3 + $0x418] sm:$0xff]
  %v7131 = vld [vmem:[#allocation3 + $0x420] sm:$0xff]
  %v7132 = vld [vmem:[#allocation3 + $0x428] sm:$0xff]
  %v7133 = vld [vmem:[#allocation3 + $0x430] sm:$0xff]
  %v7134 = vld [vmem:[#allocation3 + $0x438] sm:$0xff]
  %v7135 = vld [vmem:[#allocation3 + $0x440] sm:$0xff]
  %v7136 = vld [vmem:[#allocation3 + $0x448] sm:$0xff]
  %v7137 = vld [vmem:[#allocation3 + $0x450] sm:$0xff]
  %v7138 = vld [vmem:[#allocation3 + $0x458] sm:$0xff]
  %v7139 = vld [vmem:[#allocation3 + $0x460] sm:$0xff]
  %v7140 = vld [vmem:[#allocation3 + $0x468] sm:$0xff]
  %v7141 = vld [vmem:[#allocation3 + $0x470] sm:$0xff]
  %v7142 = vld [vmem:[#allocation3 + $0x478] sm:$0xff]
  %v7143 = vld [vmem:[#allocation3 + $0x480] sm:$0xff]
  %v7144 = vld [vmem:[#allocation3 + $0x488] sm:$0xff]
  %v7145 = vld [vmem:[#allocation3 + $0x490] sm:$0xff]
  %v7146 = vld [vmem:[#allocation3 + $0x498] sm:$0xff]
  %v7147 = vld [vmem:[#allocation3 + $0x4a0] sm:$0xff]
  %v7148 = vld [vmem:[#allocation3 + $0x4a8] sm:$0xff]
  %v7149 = vld [vmem:[#allocation3 + $0x4b0] sm:$0xff]
  %v7150 = vld [vmem:[#allocation3 + $0x4b8] sm:$0xff]
  %v7151 = vld [vmem:[#allocation3 + $0x4c0] sm:$0xff]
  %v7152 = vld [vmem:[#allocation3 + $0x4c8] sm:$0xff]
  %v7153 = vld [vmem:[#allocation3 + $0x4d0] sm:$0xff]
  %v7154 = vld [vmem:[#allocation3 + $0x4d8] sm:$0xff]
  %v7155 = vld [vmem:[#allocation3 + $0x4e0] sm:$0xff]
  %v7156 = vld [vmem:[#allocation3 + $0x4e8] sm:$0xff]
  %v7157 = vld [vmem:[#allocation3 + $0x4f0] sm:$0xff]
  %v7158 = vld [vmem:[#allocation3 + $0x4f8] sm:$0xff]
  %v7159 = vld [vmem:[#allocation3 + $0x500] sm:$0xff]
  %v7160 = vld [vmem:[#allocation3 + $0x508] sm:$0xff]
  %v7161 = vld [vmem:[#allocation3 + $0x510] sm:$0xff]
  %v7162 = vld [vmem:[#allocation3 + $0x518] sm:$0xff]
  %v7163 = vld [vmem:[#allocation3 + $0x520] sm:$0xff]
  %v7164 = vld [vmem:[#allocation3 + $0x528] sm:$0xff]
  %v7165 = vld [vmem:[#allocation3 + $0x530] sm:$0xff]
  %v7166 = vld [vmem:[#allocation3 + $0x538] sm:$0xff]
  %v7167 = vld [vmem:[#allocation3 + $0x540] sm:$0xff]
  %v7168 = vld [vmem:[#allocation3 + $0x548] sm:$0xff]
  %v7169 = vld [vmem:[#allocation3 + $0x550] sm:$0xff]
  %v7170 = vld [vmem:[#allocation3 + $0x558] sm:$0xff]
  %v7171 = vld [vmem:[#allocation3 + $0x560] sm:$0xff]
  %v7172 = vld [vmem:[#allocation3 + $0x568] sm:$0xff]
  %v7173 = vld [vmem:[#allocation3 + $0x570] sm:$0xff]
  %v7174 = vld [vmem:[#allocation3 + $0x578] sm:$0xff]
  %v7175 = vld [vmem:[#allocation3 + $0x580] sm:$0xff]
  %v7176 = vld [vmem:[#allocation3 + $0x588] sm:$0xff]
  %v7177 = vld [vmem:[#allocation3 + $0x590] sm:$0xff]
  %v7178 = vld [vmem:[#allocation3 + $0x598] sm:$0xff]
  %v7179 = vld [vmem:[#allocation3 + $0x5a0] sm:$0xff]
  %v7180 = vld [vmem:[#allocation3 + $0x5a8] sm:$0xff]
  %v7181 = vld [vmem:[#allocation3 + $0x5b0] sm:$0xff]
  %v7182 = vld [vmem:[#allocation3 + $0x5b8] sm:$0xff]
  %v7183 = vld [vmem:[#allocation3 + $0x5c0] sm:$0xff]
  %v7184 = vld [vmem:[#allocation3 + $0x5c8] sm:$0xff]
  %v7185 = vld [vmem:[#allocation3 + $0x5d0] sm:$0xff]
  %v7186 = vld [vmem:[#allocation3 + $0x5d8] sm:$0xff]
  %v7187 = vld [vmem:[#allocation3 + $0x5e0] sm:$0xff]
  %v7188 = vld [vmem:[#allocation3 + $0x5e8] sm:$0xff]
  %v7189 = vld [vmem:[#allocation3 + $0x5f0] sm:$0xff]
  %v7190 = vld [vmem:[#allocation3 + $0x5f8] sm:$0xff]
  %v7191 = vld [vmem:[%s4] sm:$0xff]
  %v7192 = vld [vmem:[%s4 + $0x8] sm:$0xff]
  %v7193 = vld [vmem:[%s4 + $0x10] sm:$0xff]
  %v7194 = vld [vmem:[%s4 + $0x18] sm:$0xff]
  %v7195 = vld [vmem:[%s4 + $0x20] sm:$0xff]
  %v7196 = vld [vmem:[%s4 + $0x28] sm:$0xff]
  %v7197 = vld [vmem:[%s4 + $0x30] sm:$0xff]
  %v7198 = vld [vmem:[%s4 + $0x38] sm:$0xff]
  %v7199 = vld [vmem:[%s4 + $0x40] sm:$0xff]
  %v7200 = vld [vmem:[%s4 + $0x48] sm:$0xff]
  %v7201 = vld [vmem:[%s4 + $0x50] sm:$0xff]
  %v7202 = vld [vmem:[%s4 + $0x58] sm:$0xff]
  %v7203 = vld [vmem:[%s4 + $0x60] sm:$0xff]
  %v7204 = vld [vmem:[%s4 + $0x68] sm:$0xff]
  %v7205 = vld [vmem:[%s4 + $0x70] sm:$0xff]
  %v7206 = vld [vmem:[%s4 + $0x78] sm:$0xff]
  %v7207 = vld [vmem:[%s4 + $0x80] sm:$0xff]
  %v7208 = vld [vmem:[%s4 + $0x88] sm:$0xff]
  %v7209 = vld [vmem:[%s4 + $0x90] sm:$0xff]
  %v7210 = vld [vmem:[%s4 + $0x98] sm:$0xff]
  %v7211 = vld [vmem:[%s4 + $0xa0] sm:$0xff]
  %v7212 = vld [vmem:[%s4 + $0xa8] sm:$0xff]
  %v7213 = vld [vmem:[%s4 + $0xb0] sm:$0xff]
  %v7214 = vld [vmem:[%s4 + $0xb8] sm:$0xff]
  %v7215 = vld [vmem:[%s4 + $0xc0] sm:$0xff]
  %v7216 = vld [vmem:[%s4 + $0xc8] sm:$0xff]
  %v7217 = vld [vmem:[%s4 + $0xd0] sm:$0xff]
  %v7218 = vld [vmem:[%s4 + $0xd8] sm:$0xff]
  %v7219 = vld [vmem:[%s4 + $0xe0] sm:$0xff]
  %v7220 = vld [vmem:[%s4 + $0xe8] sm:$0xff]
  %v7221 = vld [vmem:[%s4 + $0xf0] sm:$0xff]
  %v7222 = vld [vmem:[%s4 + $0xf8] sm:$0xff]
  %v7223 = vld [vmem:[%s4 + $0x100] sm:$0xff]
  %v7224 = vld [vmem:[%s4 + $0x108] sm:$0xff]
  %v7225 = vld [vmem:[%s4 + $0x110] sm:$0xff]
  %v7226 = vld [vmem:[%s4 + $0x118] sm:$0xff]
  %v7227 = vld [vmem:[%s5] sm:$0x1]
  %v7229 = vlaneseq
  %v7230 = vshrl.u32 %v7229, 7
  %v7231 = vsub.s32 0, %v7230
  %v7232 = vrot.slane %v7227, %v7231
  %v7235 = vsel %vm34, %v7001, 0
  %v7238 = vsel %vm34, %v7004, 0
  %v7241 = vsel %vm34, %v7007, 0
  %v7244 = vsel %vm34, %v7010, 0
  %v7247 = vsel %vm34, %v7013, 0
  %v7250 = vsel %vm34, %v7016, 0
  %v7253 = vsel %vm34, %v7019, 0
  %v7256 = vsel %vm34, %v7022, 0
  %v7259 = vsel %vm34, %v7025, 0
  %v7262 = vsel %vm34, %v7028, 0
  %v7265 = vsel %vm34, %v7031, 0
  %v7268 = vsel %vm34, %v7034, 0
  %v7271 = vsel %vm34, %v7037, 0
  %v7274 = vsel %vm34, %v7040, 0
  %v7277 = vsel %vm34, %v7043, 0
  %v7280 = vsel %vm34, %v7046, 0
  %v7283 = vsel %vm34, %v7049, 0
  %v7286 = vsel %vm34, %v7052, 0
  %v7289 = vsel %vm34, %v7055, 0
  %v7292 = vsel %vm34, %v7058, 0
  %v7295 = vsel %vm34, %v7061, 0
  %v7298 = vsel %vm34, %v7064, 0
  %v7301 = vsel %vm34, %v7067, 0
  %v7304 = vsel %vm34, %v7070, 0
  %v7307 = vsel %vm34, %v7073, 0
  %v7310 = vsel %vm34, %v7076, 0
  %v7313 = vsel %vm34, %v7079, 0
  %v7316 = vsel %vm34, %v7082, 0
  %v7319 = vsel %vm34, %v7085, 0
  %v7322 = vsel %vm34, %v7088, 0
  %v7325 = vsel %vm34, %v7091, 0
  %v7328 = vsel %vm34, %v7094, 0
  %v7331 = vsel %vm34, %v7097, 0
  %v7334 = vsel %vm34, %v7100, 0
  %v7337 = vsel %vm34, %v7103, 0
  %v7340 = vsel %vm34, %v7106, 0
  %v7343 = vsel %vm34, %v7109, 0
  %v7346 = vsel %vm34, %v7112, 0
  %v7349 = vsel %vm34, %v7115, 0
  %v7352 = vsel %vm34, %v7118, 0
  %v7355 = vsel %vm34, %v7121, 0
  %v7358 = vsel %vm34, %v7124, 0
  %v7361 = vsel %vm34, %v7127, 0
  %v7364 = vsel %vm34, %v7130, 0
  %v7367 = vsel %vm34, %v7133, 0
  %v7370 = vsel %vm34, %v7136, 0
  %v7373 = vsel %vm34, %v7139, 0
  %v7376 = vsel %vm34, %v7142, 0
  %v7379 = vsel %vm34, %v7145, 0
  %v7382 = vsel %vm34, %v7148, 0
  %v7385 = vsel %vm34, %v7151, 0
  %v7388 = vsel %vm34, %v7154, 0
  %v7391 = vsel %vm34, %v7157, 0
  %v7394 = vsel %vm34, %v7160, 0
  %v7397 = vsel %vm34, %v7163, 0
  %v7400 = vsel %vm34, %v7166, 0
  %v7403 = vsel %vm34, %v7169, 0
  %v7406 = vsel %vm34, %v7172, 0
  %v7409 = vsel %vm34, %v7175, 0
  %v7412 = vsel %vm34, %v7178, 0
  %v7415 = vsel %vm34, %v7181, 0
  %v7418 = vsel %vm34, %v7184, 0
  %v7421 = vsel %vm34, %v7187, 0
  %v7424 = vsel %vm34, %v7190, 0
  %7426 = vmatprep.subr.mxu0 0.0
  %7427 = vmatpush1.msra.mxu0 %v7206
  %7428 = vmatprep.subr.mxu0 0.0
  %7429 = vmatpush1.msra.mxu0 %v7205
  %7430 = vmatprep.subr.mxu0 0.0
  %7431 = vmatpush1.msra.mxu0 %v7204
  %7432 = vmatprep.subr.mxu0 0.0
  %7433 = vmatpush1.msra.mxu0 %v7203
  %7434 = vmatprep.subr.mxu0 0.0
  %7435 = vmatpush1.msra.mxu0 %v7202
  %7436 = vmatprep.subr.mxu0 0.0
  %7437 = vmatpush1.msra.mxu0 %v7201
  %7438 = vmatprep.subr.mxu0 0.0
  %7439 = vmatpush1.msra.mxu0 %v7200
  %7440 = vmatprep.subr.mxu0 0.0
  %7441 = vmatpush1.msra.mxu0 %v7199
  %7442 = vmatprep.subr.mxu0 0.0
  %7443 = vmatpush1.msra.mxu0 %v7198
  %7444 = vmatprep.subr.mxu0 0.0
  %7445 = vmatpush1.msra.mxu0 %v7197
  %7446 = vmatprep.subr.mxu0 0.0
  %7447 = vmatpush1.msra.mxu0 %v7196
  %7448 = vmatprep.subr.mxu0 0.0
  %7449 = vmatpush1.msra.mxu0 %v7195
  %7450 = vmatprep.subr.mxu0 0.0
  %7451 = vmatpush1.msra.mxu0 %v7194
  %7452 = vmatprep.subr.mxu0 0.0
  %7453 = vmatpush1.msra.mxu0 %v7193
  %7454 = vmatprep.subr.mxu0 0.0
  %7455 = vmatpush1.msra.mxu0 %v7192
  %7456 = vmatprep.subr.mxu0 0.0
  %7457 = vmatpush1.msra.mxu0 %v7191
  %7458 = vmatprep.subr.mxu0 0.0
  %7459 = vmatpush2.msra.mxu0 %v7222
  %7460 = vmatprep.subr.mxu0 0.0
  %7461 = vmatpush2.msra.mxu0 %v7221
  %7462 = vmatprep.subr.mxu0 0.0
  %7463 = vmatpush2.msra.mxu0 %v7220
  %7464 = vmatprep.subr.mxu0 0.0
  %7465 = vmatpush2.msra.mxu0 %v7219
  %7466 = vmatprep.subr.mxu0 0.0
  %7467 = vmatpush2.msra.mxu0 %v7218
  %7468 = vmatprep.subr.mxu0 0.0
  %7469 = vmatpush2.msra.mxu0 %v7217
  %7470 = vmatprep.subr.mxu0 0.0
  %7471 = vmatpush2.msra.mxu0 %v7216
  %7472 = vmatprep.subr.mxu0 0.0
  %7473 = vmatpush2.msra.mxu0 %v7215
  %7474 = vmatprep.subr.mxu0 0.0
  %7475 = vmatpush2.msra.mxu0 %v7214
  %7476 = vmatprep.subr.mxu0 0.0
  %7477 = vmatpush2.msra.mxu0 %v7213
  %7478 = vmatprep.subr.mxu0 0.0
  %7479 = vmatpush2.msra.mxu0 %v7212
  %7480 = vmatprep.subr.mxu0 0.0
  %7481 = vmatpush2.msra.mxu0 %v7211
  %7482 = vmatprep.subr.mxu0 0.0
  %7483 = vmatpush2.msra.mxu0 %v7210
  %7484 = vmatprep.subr.mxu0 0.0
  %7485 = vmatpush2.msra.mxu0 %v7209
  %7486 = vmatprep.subr.mxu0 0.0
  %7487 = vmatpush2.msra.mxu0 %v7208
  %7488 = vmatprep.subr.mxu0 0.0
  %7489 = vmatpush2.msra.mxu0 %v7207
  %7490 = vmatprep.mubr.f32.mxu0 %v7000
  %7491 = vmatmul.mubr.f32.gmra.mxu0 %v6999
  %v7492 = vpop.f32.mrf.mxu0
  %v7493 = vadd.f32 %v7232, %v7492
  %v7494 = vpop.f32.mrf.mxu0
  %7495 = vmatprep.mubr.f32.mxu0 %v7003
  %7496 = vmatmul.mubr.f32.gmra.mxu0 %v7002
  %v7497 = vpop.f32.mrf.mxu0
  %v7498 = vadd.f32 %v7232, %v7497
  %v7499 = vpop.f32.mrf.mxu0
  %7500 = vmatprep.mubr.f32.mxu0 %v7006
  %7501 = vmatmul.mubr.f32.gmra.mxu0 %v7005
  %v7502 = vpop.f32.mrf.mxu0
  %v7503 = vadd.f32 %v7232, %v7502
  %v7504 = vpop.f32.mrf.mxu0
  %7505 = vmatprep.mubr.f32.mxu0 %v7009
  %7506 = vmatmul.mubr.f32.gmra.mxu0 %v7008
  %v7507 = vpop.f32.mrf.mxu0
  %v7508 = vadd.f32 %v7232, %v7507
  %v7509 = vpop.f32.mrf.mxu0
  %7510 = vmatprep.mubr.f32.mxu0 %v7012
  %7511 = vmatmul.mubr.f32.gmra.mxu0 %v7011
  %v7512 = vpop.f32.mrf.mxu0
  %v7513 = vadd.f32 %v7232, %v7512
  %v7514 = vpop.f32.mrf.mxu0
  %7515 = vmatprep.mubr.f32.mxu0 %v7015
  %7516 = vmatmul.mubr.f32.gmra.mxu0 %v7014
  %v7517 = vpop.f32.mrf.mxu0
  %v7518 = vadd.f32 %v7232, %v7517
  %v7519 = vpop.f32.mrf.mxu0
  %7520 = vmatprep.mubr.f32.mxu0 %v7018
  %7521 = vmatmul.mubr.f32.gmra.mxu0 %v7017
  %v7522 = vpop.f32.mrf.mxu0
  %v7523 = vadd.f32 %v7232, %v7522
  %v7524 = vpop.f32.mrf.mxu0
  %7525 = vmatprep.mubr.f32.mxu0 %v7021
  %7526 = vmatmul.mubr.f32.gmra.mxu0 %v7020
  %v7527 = vpop.f32.mrf.mxu0
  %v7528 = vadd.f32 %v7232, %v7527
  %v7529 = vpop.f32.mrf.mxu0
  %7530 = vmatprep.mubr.f32.mxu0 %v7024
  %7531 = vmatmul.mubr.f32.gmra.mxu0 %v7023
  %v7532 = vpop.f32.mrf.mxu0
  %v7533 = vadd.f32 %v7232, %v7532
  %v7534 = vpop.f32.mrf.mxu0
  %7535 = vmatprep.mubr.f32.mxu0 %v7027
  %7536 = vmatmul.mubr.f32.gmra.mxu0 %v7026
  %v7537 = vpop.f32.mrf.mxu0
  %v7538 = vadd.f32 %v7232, %v7537
  %v7539 = vpop.f32.mrf.mxu0
  %7540 = vmatprep.mubr.f32.mxu0 %v7030
  %7541 = vmatmul.mubr.f32.gmra.mxu0 %v7029
  %v7542 = vpop.f32.mrf.mxu0
  %v7543 = vadd.f32 %v7232, %v7542
  %v7544 = vpop.f32.mrf.mxu0
  %7545 = vmatprep.mubr.f32.mxu0 %v7033
  %7546 = vmatmul.mubr.f32.gmra.mxu0 %v7032
  %v7547 = vpop.f32.mrf.mxu0
  %v7548 = vadd.f32 %v7232, %v7547
  %v7549 = vpop.f32.mrf.mxu0
  %7550 = vmatprep.mubr.f32.mxu0 %v7036
  %7551 = vmatmul.mubr.f32.gmra.mxu0 %v7035
  %v7552 = vpop.f32.mrf.mxu0
  %v7553 = vadd.f32 %v7232, %v7552
  %v7554 = vpop.f32.mrf.mxu0
  %7555 = vmatprep.mubr.f32.mxu0 %v7039
  %7556 = vmatmul.mubr.f32.gmra.mxu0 %v7038
  %v7557 = vpop.f32.mrf.mxu0
  %v7558 = vadd.f32 %v7232, %v7557
  %v7559 = vpop.f32.mrf.mxu0
  %7560 = vmatprep.mubr.f32.mxu0 %v7042
  %7561 = vmatmul.mubr.f32.gmra.mxu0 %v7041
  %v7562 = vpop.f32.mrf.mxu0
  %v7563 = vadd.f32 %v7232, %v7562
  %v7564 = vpop.f32.mrf.mxu0
  %7565 = vmatprep.mubr.f32.mxu0 %v7045
  %7566 = vmatmul.mubr.f32.gmra.mxu0 %v7044
  %v7567 = vpop.f32.mrf.mxu0
  %v7568 = vadd.f32 %v7232, %v7567
  %v7569 = vpop.f32.mrf.mxu0
  %7570 = vmatprep.mubr.f32.mxu0 %v7048
  %7571 = vmatmul.mubr.f32.gmra.mxu0 %v7047
  %v7572 = vpop.f32.mrf.mxu0
  %v7573 = vadd.f32 %v7232, %v7572
  %v7574 = vpop.f32.mrf.mxu0
  %7575 = vmatprep.mubr.f32.mxu0 %v7051
  %7576 = vmatmul.mubr.f32.gmra.mxu0 %v7050
  %v7577 = vpop.f32.mrf.mxu0
  %v7578 = vadd.f32 %v7232, %v7577
  %v7579 = vpop.f32.mrf.mxu0
  %7580 = vmatprep.mubr.f32.mxu0 %v7054
  %7581 = vmatmul.mubr.f32.gmra.mxu0 %v7053
  %v7582 = vpop.f32.mrf.mxu0
  %v7583 = vadd.f32 %v7232, %v7582
  %v7584 = vpop.f32.mrf.mxu0
  %7585 = vmatprep.mubr.f32.mxu0 %v7057
  %7586 = vmatmul.mubr.f32.gmra.mxu0 %v7056
  %v7587 = vpop.f32.mrf.mxu0
  %v7588 = vadd.f32 %v7232, %v7587
  %v7589 = vpop.f32.mrf.mxu0
  %7590 = vmatprep.mubr.f32.mxu0 %v7060
  %7591 = vmatmul.mubr.f32.gmra.mxu0 %v7059
  %v7592 = vpop.f32.mrf.mxu0
  %v7593 = vadd.f32 %v7232, %v7592
  %v7594 = vpop.f32.mrf.mxu0
  %7595 = vmatprep.mubr.f32.mxu0 %v7063
  %7596 = vmatmul.mubr.f32.gmra.mxu0 %v7062
  %v7597 = vpop.f32.mrf.mxu0
  %v7598 = vadd.f32 %v7232, %v7597
  %v7599 = vpop.f32.mrf.mxu0
  %7600 = vmatprep.mubr.f32.mxu0 %v7066
  %7601 = vmatmul.mubr.f32.gmra.mxu0 %v7065
  %v7602 = vpop.f32.mrf.mxu0
  %v7603 = vadd.f32 %v7232, %v7602
  %v7604 = vpop.f32.mrf.mxu0
  %7605 = vmatprep.mubr.f32.mxu0 %v7069
  %7606 = vmatmul.mubr.f32.gmra.mxu0 %v7068
  %v7607 = vpop.f32.mrf.mxu0
  %v7608 = vadd.f32 %v7232, %v7607
  %v7609 = vpop.f32.mrf.mxu0
  %7610 = vmatprep.mubr.f32.mxu0 %v7072
  %7611 = vmatmul.mubr.f32.gmra.mxu0 %v7071
  %v7612 = vpop.f32.mrf.mxu0
  %v7613 = vadd.f32 %v7232, %v7612
  %v7614 = vpop.f32.mrf.mxu0
  %7615 = vmatprep.mubr.f32.mxu0 %v7075
  %7616 = vmatmul.mubr.f32.gmra.mxu0 %v7074
  %v7617 = vpop.f32.mrf.mxu0
  %v7618 = vadd.f32 %v7232, %v7617
  %v7619 = vpop.f32.mrf.mxu0
  %7620 = vmatprep.mubr.f32.mxu0 %v7078
  %7621 = vmatmul.mubr.f32.gmra.mxu0 %v7077
  %v7622 = vpop.f32.mrf.mxu0
  %v7623 = vadd.f32 %v7232, %v7622
  %v7624 = vpop.f32.mrf.mxu0
  %7625 = vmatprep.mubr.f32.mxu0 %v7081
  %7626 = vmatmul.mubr.f32.gmra.mxu0 %v7080
  %v7627 = vpop.f32.mrf.mxu0
  %v7628 = vadd.f32 %v7232, %v7627
  %v7629 = vpop.f32.mrf.mxu0
  %7630 = vmatprep.mubr.f32.mxu0 %v7084
  %7631 = vmatmul.mubr.f32.gmra.mxu0 %v7083
  %v7632 = vpop.f32.mrf.mxu0
  %v7633 = vadd.f32 %v7232, %v7632
  %v7634 = vpop.f32.mrf.mxu0
  %7635 = vmatprep.mubr.f32.mxu0 %v7087
  %7636 = vmatmul.mubr.f32.gmra.mxu0 %v7086
  %v7637 = vpop.f32.mrf.mxu0
  %v7638 = vadd.f32 %v7232, %v7637
  %v7639 = vpop.f32.mrf.mxu0
  %7640 = vmatprep.mubr.f32.mxu0 %v7090
  %7641 = vmatmul.mubr.f32.gmra.mxu0 %v7089
  %v7642 = vpop.f32.mrf.mxu0
  %v7643 = vadd.f32 %v7232, %v7642
  %v7644 = vpop.f32.mrf.mxu0
  %7645 = vmatprep.mubr.f32.mxu0 %v7093
  %7646 = vmatmul.mubr.f32.gmra.mxu0 %v7092
  %v7647 = vpop.f32.mrf.mxu0
  %v7648 = vadd.f32 %v7232, %v7647
  %v7649 = vpop.f32.mrf.mxu0
  %7650 = vmatprep.mubr.f32.mxu0 %v7096
  %7651 = vmatmul.mubr.f32.gmra.mxu0 %v7095
  %v7652 = vpop.f32.mrf.mxu0
  %v7653 = vadd.f32 %v7232, %v7652
  %v7654 = vpop.f32.mrf.mxu0
  %7655 = vmatprep.mubr.f32.mxu0 %v7099
  %7656 = vmatmul.mubr.f32.gmra.mxu0 %v7098
  %v7657 = vpop.f32.mrf.mxu0
  %v7658 = vadd.f32 %v7232, %v7657
  %v7659 = vpop.f32.mrf.mxu0
  %7660 = vmatprep.mubr.f32.mxu0 %v7102
  %7661 = vmatmul.mubr.f32.gmra.mxu0 %v7101
  %v7662 = vpop.f32.mrf.mxu0
  %v7663 = vadd.f32 %v7232, %v7662
  %v7664 = vpop.f32.mrf.mxu0
  %7665 = vmatprep.mubr.f32.mxu0 %v7105
  %7666 = vmatmul.mubr.f32.gmra.mxu0 %v7104
  %v7667 = vpop.f32.mrf.mxu0
  %v7668 = vadd.f32 %v7232, %v7667
  %v7669 = vpop.f32.mrf.mxu0
  %7670 = vmatprep.mubr.f32.mxu0 %v7108
  %7671 = vmatmul.mubr.f32.gmra.mxu0 %v7107
  %v7672 = vpop.f32.mrf.mxu0
  %v7673 = vadd.f32 %v7232, %v7672
  %v7674 = vpop.f32.mrf.mxu0
  %7675 = vmatprep.mubr.f32.mxu0 %v7111
  %7676 = vmatmul.mubr.f32.gmra.mxu0 %v7110
  %v7677 = vpop.f32.mrf.mxu0
  %v7678 = vadd.f32 %v7232, %v7677
  %v7679 = vpop.f32.mrf.mxu0
  %7680 = vmatprep.mubr.f32.mxu0 %v7114
  %7681 = vmatmul.mubr.f32.gmra.mxu0 %v7113
  %v7682 = vpop.f32.mrf.mxu0
  %v7683 = vadd.f32 %v7232, %v7682
  %v7684 = vpop.f32.mrf.mxu0
  %7685 = vmatprep.mubr.f32.mxu0 %v7117
  %7686 = vmatmul.mubr.f32.gmra.mxu0 %v7116
  %v7687 = vpop.f32.mrf.mxu0
  %v7688 = vadd.f32 %v7232, %v7687
  %v7689 = vpop.f32.mrf.mxu0
  %7690 = vmatprep.mubr.f32.mxu0 %v7120
  %7691 = vmatmul.mubr.f32.gmra.mxu0 %v7119
  %v7692 = vpop.f32.mrf.mxu0
  %v7693 = vadd.f32 %v7232, %v7692
  %v7694 = vpop.f32.mrf.mxu0
  %7695 = vmatprep.mubr.f32.mxu0 %v7123
  %7696 = vmatmul.mubr.f32.gmra.mxu0 %v7122
  %v7697 = vpop.f32.mrf.mxu0
  %v7698 = vadd.f32 %v7232, %v7697
  %v7699 = vpop.f32.mrf.mxu0
  %7700 = vmatprep.mubr.f32.mxu0 %v7126
  %7701 = vmatmul.mubr.f32.gmra.mxu0 %v7125
  %v7702 = vpop.f32.mrf.mxu0
  %v7703 = vadd.f32 %v7232, %v7702
  %v7704 = vpop.f32.mrf.mxu0
  %7705 = vmatprep.mubr.f32.mxu0 %v7129
  %7706 = vmatmul.mubr.f32.gmra.mxu0 %v7128
  %v7707 = vpop.f32.mrf.mxu0
  %v7708 = vadd.f32 %v7232, %v7707
  %v7709 = vpop.f32.mrf.mxu0
  %7710 = vmatprep.mubr.f32.mxu0 %v7132
  %7711 = vmatmul.mubr.f32.gmra.mxu0 %v7131
  %v7712 = vpop.f32.mrf.mxu0
  %v7713 = vadd.f32 %v7232, %v7712
  %v7714 = vpop.f32.mrf.mxu0
  %7715 = vmatprep.mubr.f32.mxu0 %v7135
  %7716 = vmatmul.mubr.f32.gmra.mxu0 %v7134
  %v7717 = vpop.f32.mrf.mxu0
  %v7718 = vadd.f32 %v7232, %v7717
  %v7719 = vpop.f32.mrf.mxu0
  %7720 = vmatprep.mubr.f32.mxu0 %v7138
  %7721 = vmatmul.mubr.f32.gmra.mxu0 %v7137
  %v7722 = vpop.f32.mrf.mxu0
  %v7723 = vadd.f32 %v7232, %v7722
  %v7724 = vpop.f32.mrf.mxu0
  %7725 = vmatprep.mubr.f32.mxu0 %v7141
  %7726 = vmatmul.mubr.f32.gmra.mxu0 %v7140
  %v7727 = vpop.f32.mrf.mxu0
  %v7728 = vadd.f32 %v7232, %v7727
  %v7729 = vpop.f32.mrf.mxu0
  %7730 = vmatprep.mubr.f32.mxu0 %v7144
  %7731 = vmatmul.mubr.f32.gmra.mxu0 %v7143
  %v7732 = vpop.f32.mrf.mxu0
  %v7733 = vadd.f32 %v7232, %v7732
  %v7734 = vpop.f32.mrf.mxu0
  %7735 = vmatprep.mubr.f32.mxu0 %v7147
  %7736 = vmatmul.mubr.f32.gmra.mxu0 %v7146
  %v7737 = vpop.f32.mrf.mxu0
  %v7738 = vadd.f32 %v7232, %v7737
  %v7739 = vpop.f32.mrf.mxu0
  %7740 = vmatprep.mubr.f32.mxu0 %v7150
  %7741 = vmatmul.mubr.f32.gmra.mxu0 %v7149
  %v7742 = vpop.f32.mrf.mxu0
  %v7743 = vadd.f32 %v7232, %v7742
  %v7744 = vpop.f32.mrf.mxu0
  %7745 = vmatprep.mubr.f32.mxu0 %v7153
  %7746 = vmatmul.mubr.f32.gmra.mxu0 %v7152
  %v7747 = vpop.f32.mrf.mxu0
  %v7748 = vadd.f32 %v7232, %v7747
  %v7749 = vpop.f32.mrf.mxu0
  %7750 = vmatprep.mubr.f32.mxu0 %v7156
  %7751 = vmatmul.mubr.f32.gmra.mxu0 %v7155
  %v7752 = vpop.f32.mrf.mxu0
  %v7753 = vadd.f32 %v7232, %v7752
  %v7754 = vpop.f32.mrf.mxu0
  %7755 = vmatprep.mubr.f32.mxu0 %v7159
  %7756 = vmatmul.mubr.f32.gmra.mxu0 %v7158
  %v7757 = vpop.f32.mrf.mxu0
  %v7758 = vadd.f32 %v7232, %v7757
  %v7759 = vpop.f32.mrf.mxu0
  %7760 = vmatprep.mubr.f32.mxu0 %v7162
  %7761 = vmatmul.mubr.f32.gmra.mxu0 %v7161
  %v7762 = vpop.f32.mrf.mxu0
  %v7763 = vadd.f32 %v7232, %v7762
  %v7764 = vpop.f32.mrf.mxu0
  %7765 = vmatprep.mubr.f32.mxu0 %v7165
  %7766 = vmatmul.mubr.f32.gmra.mxu0 %v7164
  %v7767 = vpop.f32.mrf.mxu0
  %v7768 = vadd.f32 %v7232, %v7767
  %v7769 = vpop.f32.mrf.mxu0
  %7770 = vmatprep.mubr.f32.mxu0 %v7168
  %7771 = vmatmul.mubr.f32.gmra.mxu0 %v7167
  %v7772 = vpop.f32.mrf.mxu0
  %v7773 = vadd.f32 %v7232, %v7772
  %v7774 = vpop.f32.mrf.mxu0
  %7775 = vmatprep.mubr.f32.mxu0 %v7171
  %7776 = vmatmul.mubr.f32.gmra.mxu0 %v7170
  %v7777 = vpop.f32.mrf.mxu0
  %v7778 = vadd.f32 %v7232, %v7777
  %v7779 = vpop.f32.mrf.mxu0
  %7780 = vmatprep.mubr.f32.mxu0 %v7174
  %7781 = vmatmul.mubr.f32.gmra.mxu0 %v7173
  %v7782 = vpop.f32.mrf.mxu0
  %v7783 = vadd.f32 %v7232, %v7782
  %v7784 = vpop.f32.mrf.mxu0
  %7785 = vmatprep.mubr.f32.mxu0 %v7177
  %7786 = vmatmul.mubr.f32.gmra.mxu0 %v7176
  %v7787 = vpop.f32.mrf.mxu0
  %v7788 = vadd.f32 %v7232, %v7787
  %v7789 = vpop.f32.mrf.mxu0
  %7790 = vmatprep.mubr.f32.mxu0 %v7180
  %7791 = vmatmul.mubr.f32.gmra.mxu0 %v7179
  %v7792 = vpop.f32.mrf.mxu0
  %v7793 = vadd.f32 %v7232, %v7792
  %v7794 = vpop.f32.mrf.mxu0
  %7795 = vmatprep.mubr.f32.mxu0 %v7183
  %7796 = vmatmul.mubr.f32.gmra.mxu0 %v7182
  %v7797 = vpop.f32.mrf.mxu0
  %v7798 = vadd.f32 %v7232, %v7797
  %v7799 = vpop.f32.mrf.mxu0
  %7800 = vmatprep.mubr.f32.mxu0 %v7186
  %7801 = vmatmul.mubr.f32.gmra.mxu0 %v7185
  %v7802 = vpop.f32.mrf.mxu0
  %v7803 = vadd.f32 %v7232, %v7802
  %v7804 = vpop.f32.mrf.mxu0
  %7805 = vmatprep.mubr.f32.mxu0 %v7189
  %7806 = vmatmul.mubr.f32.gmra.mxu0 %v7188
  %v7807 = vpop.f32.mrf.mxu0
  %v7808 = vadd.f32 %v7232, %v7807
  %v7809 = vpop.f32.mrf.mxu0
  %7810 = vdwg.mxu0
  %7811 = vmatprep.subr.mxu0 0.0
  %7812 = vmatpush1.msra.mxu0 0.0
  %7813 = vmatprep.subr.mxu0 0.0
  %7814 = vmatpush1.msra.mxu0 0.0
  %7815 = vmatprep.subr.mxu0 0.0
  %7816 = vmatpush1.msra.mxu0 0.0
  %7817 = vmatprep.subr.mxu0 0.0
  %7818 = vmatpush1.msra.mxu0 0.0
  %7819 = vmatprep.subr.mxu0 0.0
  %7820 = vmatpush1.msra.mxu0 0.0
  %7821 = vmatprep.subr.mxu0 0.0
  %7822 = vmatpush1.msra.mxu0 0.0
  %7823 = vmatprep.subr.mxu0 0.0
  %7824 = vmatpush1.msra.mxu0 0.0
  %7825 = vmatprep.subr.mxu0 0.0
  %7826 = vmatpush1.msra.mxu0 0.0
  %7827 = vmatprep.subr.mxu0 0.0
  %7828 = vmatpush1.msra.mxu0 0.0
  %7829 = vmatprep.subr.mxu0 0.0
  %7830 = vmatpush1.msra.mxu0 0.0
  %7831 = vmatprep.subr.mxu0 0.0
  %7832 = vmatpush1.msra.mxu0 0.0
  %7833 = vmatprep.subr.mxu0 0.0
  %7834 = vmatpush1.msra.mxu0 0.0
  %7835 = vmatprep.subr.mxu0 0.0
  %7836 = vmatpush1.msra.mxu0 %v7226
  %7837 = vmatprep.subr.mxu0 0.0
  %7838 = vmatpush1.msra.mxu0 %v7225
  %7839 = vmatprep.subr.mxu0 0.0
  %7840 = vmatpush1.msra.mxu0 %v7224
  %7841 = vmatprep.subr.mxu0 0.0
  %7842 = vmatpush1.msra.mxu0 %v7223
  %7843 = vmatprep.subr.mxu0 0.0
  %7844 = vmatpush2.msra.mxu0 0.0
  %7845 = vmatprep.subr.mxu0 0.0
  %7846 = vmatpush2.msra.mxu0 0.0
  %7847 = vmatprep.subr.mxu0 0.0
  %7848 = vmatpush2.msra.mxu0 0.0
  %7849 = vmatprep.subr.mxu0 0.0
  %7850 = vmatpush2.msra.mxu0 0.0
  %7851 = vmatprep.subr.mxu0 0.0
  %7852 = vmatpush2.msra.mxu0 0.0
  %7853 = vmatprep.subr.mxu0 0.0
  %7854 = vmatpush2.msra.mxu0 0.0
  %7855 = vmatprep.subr.mxu0 0.0
  %7856 = vmatpush2.msra.mxu0 0.0
  %7857 = vmatprep.subr.mxu0 0.0
  %7858 = vmatpush2.msra.mxu0 0.0
  %7859 = vmatprep.subr.mxu0 0.0
  %7860 = vmatpush2.msra.mxu0 0.0
  %7861 = vmatprep.subr.mxu0 0.0
  %7862 = vmatpush2.msra.mxu0 0.0
  %7863 = vmatprep.subr.mxu0 0.0
  %7864 = vmatpush2.msra.mxu0 0.0
  %7865 = vmatprep.subr.mxu0 0.0
  %7866 = vmatpush2.msra.mxu0 0.0
  %7867 = vmatprep.subr.mxu0 0.0
  %7868 = vmatpush2.msra.mxu0 0.0
  %7869 = vmatprep.subr.mxu0 0.0
  %7870 = vmatpush2.msra.mxu0 0.0
  %7871 = vmatprep.subr.mxu0 0.0
  %7872 = vmatpush2.msra.mxu0 0.0
  %7873 = vmatprep.subr.mxu0 0.0
  %7874 = vmatpush2.msra.mxu0 0.0
  %7875 = vmatprep.mubr.f32.mxu0 0.0
  %7876 = vmatmul.mubr.f32.gmra.mxu0 %v7235
  %v7877 = vpop.f32.mrf.mxu0
  %v7878 = vadd.f32 %v7493, %v7877
  %v7879 = vpop.f32.mrf.mxu0
  %7880 = vmatprep.mubr.f32.mxu0 0.0
  %7881 = vmatmul.mubr.f32.gmra.mxu0 %v7238
  %v7882 = vpop.f32.mrf.mxu0
  %v7883 = vadd.f32 %v7498, %v7882
  %v7884 = vpop.f32.mrf.mxu0
  %7885 = vmatprep.mubr.f32.mxu0 0.0
  %7886 = vmatmul.mubr.f32.gmra.mxu0 %v7241
  %v7887 = vpop.f32.mrf.mxu0
  %v7888 = vadd.f32 %v7503, %v7887
  %v7889 = vpop.f32.mrf.mxu0
  %7890 = vmatprep.mubr.f32.mxu0 0.0
  %7891 = vmatmul.mubr.f32.gmra.mxu0 %v7244
  %v7892 = vpop.f32.mrf.mxu0
  %v7893 = vadd.f32 %v7508, %v7892
  %v7894 = vpop.f32.mrf.mxu0
  %7895 = vmatprep.mubr.f32.mxu0 0.0
  %7896 = vmatmul.mubr.f32.gmra.mxu0 %v7247
  %v7897 = vpop.f32.mrf.mxu0
  %v7898 = vadd.f32 %v7513, %v7897
  %v7899 = vpop.f32.mrf.mxu0
  %7900 = vmatprep.mubr.f32.mxu0 0.0
  %7901 = vmatmul.mubr.f32.gmra.mxu0 %v7250
  %v7902 = vpop.f32.mrf.mxu0
  %v7903 = vadd.f32 %v7518, %v7902
  %v7904 = vpop.f32.mrf.mxu0
  %7905 = vmatprep.mubr.f32.mxu0 0.0
  %7906 = vmatmul.mubr.f32.gmra.mxu0 %v7253
  %v7907 = vpop.f32.mrf.mxu0
  %v7908 = vadd.f32 %v7523, %v7907
  %v7909 = vpop.f32.mrf.mxu0
  %7910 = vmatprep.mubr.f32.mxu0 0.0
  %7911 = vmatmul.mubr.f32.gmra.mxu0 %v7256
  %v7912 = vpop.f32.mrf.mxu0
  %v7913 = vadd.f32 %v7528, %v7912
  %v7914 = vpop.f32.mrf.mxu0
  %7915 = vmatprep.mubr.f32.mxu0 0.0
  %7916 = vmatmul.mubr.f32.gmra.mxu0 %v7259
  %v7917 = vpop.f32.mrf.mxu0
  %v7918 = vadd.f32 %v7533, %v7917
  %v7919 = vpop.f32.mrf.mxu0
  %7920 = vmatprep.mubr.f32.mxu0 0.0
  %7921 = vmatmul.mubr.f32.gmra.mxu0 %v7262
  %v7922 = vpop.f32.mrf.mxu0
  %v7923 = vadd.f32 %v7538, %v7922
  %v7924 = vpop.f32.mrf.mxu0
  %7925 = vmatprep.mubr.f32.mxu0 0.0
  %7926 = vmatmul.mubr.f32.gmra.mxu0 %v7265
  %v7927 = vpop.f32.mrf.mxu0
  %v7928 = vadd.f32 %v7543, %v7927
  %v7929 = vpop.f32.mrf.mxu0
  %7930 = vmatprep.mubr.f32.mxu0 0.0
  %7931 = vmatmul.mubr.f32.gmra.mxu0 %v7268
  %v7932 = vpop.f32.mrf.mxu0
  %v7933 = vadd.f32 %v7548, %v7932
  %v7934 = vpop.f32.mrf.mxu0
  %7935 = vmatprep.mubr.f32.mxu0 0.0
  %7936 = vmatmul.mubr.f32.gmra.mxu0 %v7271
  %v7937 = vpop.f32.mrf.mxu0
  %v7938 = vadd.f32 %v7553, %v7937
  %v7939 = vpop.f32.mrf.mxu0
  %7940 = vmatprep.mubr.f32.mxu0 0.0
  %7941 = vmatmul.mubr.f32.gmra.mxu0 %v7274
  %v7942 = vpop.f32.mrf.mxu0
  %v7943 = vadd.f32 %v7558, %v7942
  %v7944 = vpop.f32.mrf.mxu0
  %7945 = vmatprep.mubr.f32.mxu0 0.0
  %7946 = vmatmul.mubr.f32.gmra.mxu0 %v7277
  %v7947 = vpop.f32.mrf.mxu0
  %v7948 = vadd.f32 %v7563, %v7947
  %v7949 = vpop.f32.mrf.mxu0
  %7950 = vmatprep.mubr.f32.mxu0 0.0
  %7951 = vmatmul.mubr.f32.gmra.mxu0 %v7280
  %v7952 = vpop.f32.mrf.mxu0
  %v7953 = vadd.f32 %v7568, %v7952
  %v7954 = vpop.f32.mrf.mxu0
  %7955 = vmatprep.mubr.f32.mxu0 0.0
  %7956 = vmatmul.mubr.f32.gmra.mxu0 %v7283
  %v7957 = vpop.f32.mrf.mxu0
  %v7958 = vadd.f32 %v7573, %v7957
  %v7959 = vpop.f32.mrf.mxu0
  %7960 = vmatprep.mubr.f32.mxu0 0.0
  %7961 = vmatmul.mubr.f32.gmra.mxu0 %v7286
  %v7962 = vpop.f32.mrf.mxu0
  %v7963 = vadd.f32 %v7578, %v7962
  %v7964 = vpop.f32.mrf.mxu0
  %7965 = vmatprep.mubr.f32.mxu0 0.0
  %7966 = vmatmul.mubr.f32.gmra.mxu0 %v7289
  %v7967 = vpop.f32.mrf.mxu0
  %v7968 = vadd.f32 %v7583, %v7967
  %v7969 = vpop.f32.mrf.mxu0
  %7970 = vmatprep.mubr.f32.mxu0 0.0
  %7971 = vmatmul.mubr.f32.gmra.mxu0 %v7292
  %v7972 = vpop.f32.mrf.mxu0
  %v7973 = vadd.f32 %v7588, %v7972
  %v7974 = vpop.f32.mrf.mxu0
  %7975 = vmatprep.mubr.f32.mxu0 0.0
  %7976 = vmatmul.mubr.f32.gmra.mxu0 %v7295
  %v7977 = vpop.f32.mrf.mxu0
  %v7978 = vadd.f32 %v7593, %v7977
  %v7979 = vpop.f32.mrf.mxu0
  %7980 = vmatprep.mubr.f32.mxu0 0.0
  %7981 = vmatmul.mubr.f32.gmra.mxu0 %v7298
  %v7982 = vpop.f32.mrf.mxu0
  %v7983 = vadd.f32 %v7598, %v7982
  %v7984 = vpop.f32.mrf.mxu0
  %7985 = vmatprep.mubr.f32.mxu0 0.0
  %7986 = vmatmul.mubr.f32.gmra.mxu0 %v7301
  %v7987 = vpop.f32.mrf.mxu0
  %v7988 = vadd.f32 %v7603, %v7987
  %v7989 = vpop.f32.mrf.mxu0
  %7990 = vmatprep.mubr.f32.mxu0 0.0
  %7991 = vmatmul.mubr.f32.gmra.mxu0 %v7304
  %v7992 = vpop.f32.mrf.mxu0
  %v7993 = vadd.f32 %v7608, %v7992
  %v7994 = vpop.f32.mrf.mxu0
  %7995 = vmatprep.mubr.f32.mxu0 0.0
  %7996 = vmatmul.mubr.f32.gmra.mxu0 %v7307
  %v7997 = vpop.f32.mrf.mxu0
  %v7998 = vadd.f32 %v7613, %v7997
  %v7999 = vpop.f32.mrf.mxu0
  %8000 = vmatprep.mubr.f32.mxu0 0.0
  %8001 = vmatmul.mubr.f32.gmra.mxu0 %v7310
  %v8002 = vpop.f32.mrf.mxu0
  %v8003 = vadd.f32 %v7618, %v8002
  %v8004 = vpop.f32.mrf.mxu0
  %8005 = vmatprep.mubr.f32.mxu0 0.0
  %8006 = vmatmul.mubr.f32.gmra.mxu0 %v7313
  %v8007 = vpop.f32.mrf.mxu0
  %v8008 = vadd.f32 %v7623, %v8007
  %v8009 = vpop.f32.mrf.mxu0
  %8010 = vmatprep.mubr.f32.mxu0 0.0
  %8011 = vmatmul.mubr.f32.gmra.mxu0 %v7316
  %v8012 = vpop.f32.mrf.mxu0
  %v8013 = vadd.f32 %v7628, %v8012
  %v8014 = vpop.f32.mrf.mxu0
  %8015 = vmatprep.mubr.f32.mxu0 0.0
  %8016 = vmatmul.mubr.f32.gmra.mxu0 %v7319
  %v8017 = vpop.f32.mrf.mxu0
  %v8018 = vadd.f32 %v7633, %v8017
  %v8019 = vpop.f32.mrf.mxu0
  %8020 = vmatprep.mubr.f32.mxu0 0.0
  %8021 = vmatmul.mubr.f32.gmra.mxu0 %v7322
  %v8022 = vpop.f32.mrf.mxu0
  %v8023 = vadd.f32 %v7638, %v8022
  %v8024 = vpop.f32.mrf.mxu0
  %8025 = vmatprep.mubr.f32.mxu0 0.0
  %8026 = vmatmul.mubr.f32.gmra.mxu0 %v7325
  %v8027 = vpop.f32.mrf.mxu0
  %v8028 = vadd.f32 %v7643, %v8027
  %v8029 = vpop.f32.mrf.mxu0
  %8030 = vmatprep.mubr.f32.mxu0 0.0
  %8031 = vmatmul.mubr.f32.gmra.mxu0 %v7328
  %v8032 = vpop.f32.mrf.mxu0
  %v8033 = vadd.f32 %v7648, %v8032
  %v8034 = vpop.f32.mrf.mxu0
  %8035 = vmatprep.mubr.f32.mxu0 0.0
  %8036 = vmatmul.mubr.f32.gmra.mxu0 %v7331
  %v8037 = vpop.f32.mrf.mxu0
  %v8038 = vadd.f32 %v7653, %v8037
  %v8039 = vpop.f32.mrf.mxu0
  %8040 = vmatprep.mubr.f32.mxu0 0.0
  %8041 = vmatmul.mubr.f32.gmra.mxu0 %v7334
  %v8042 = vpop.f32.mrf.mxu0
  %v8043 = vadd.f32 %v7658, %v8042
  %v8044 = vpop.f32.mrf.mxu0
  %8045 = vmatprep.mubr.f32.mxu0 0.0
  %8046 = vmatmul.mubr.f32.gmra.mxu0 %v7337
  %v8047 = vpop.f32.mrf.mxu0
  %v8048 = vadd.f32 %v7663, %v8047
  %v8049 = vpop.f32.mrf.mxu0
  %8050 = vmatprep.mubr.f32.mxu0 0.0
  %8051 = vmatmul.mubr.f32.gmra.mxu0 %v7340
  %v8052 = vpop.f32.mrf.mxu0
  %v8053 = vadd.f32 %v7668, %v8052
  %v8054 = vpop.f32.mrf.mxu0
  %8055 = vmatprep.mubr.f32.mxu0 0.0
  %8056 = vmatmul.mubr.f32.gmra.mxu0 %v7343
  %v8057 = vpop.f32.mrf.mxu0
  %v8058 = vadd.f32 %v7673, %v8057
  %v8059 = vpop.f32.mrf.mxu0
  %8060 = vmatprep.mubr.f32.mxu0 0.0
  %8061 = vmatmul.mubr.f32.gmra.mxu0 %v7346
  %v8062 = vpop.f32.mrf.mxu0
  %v8063 = vadd.f32 %v7678, %v8062
  %v8064 = vpop.f32.mrf.mxu0
  %8065 = vmatprep.mubr.f32.mxu0 0.0
  %8066 = vmatmul.mubr.f32.gmra.mxu0 %v7349
  %v8067 = vpop.f32.mrf.mxu0
  %v8068 = vadd.f32 %v7683, %v8067
  %v8069 = vpop.f32.mrf.mxu0
  %8070 = vmatprep.mubr.f32.mxu0 0.0
  %8071 = vmatmul.mubr.f32.gmra.mxu0 %v7352
  %v8072 = vpop.f32.mrf.mxu0
  %v8073 = vadd.f32 %v7688, %v8072
  %v8074 = vpop.f32.mrf.mxu0
  %8075 = vmatprep.mubr.f32.mxu0 0.0
  %8076 = vmatmul.mubr.f32.gmra.mxu0 %v7355
  %v8077 = vpop.f32.mrf.mxu0
  %v8078 = vadd.f32 %v7693, %v8077
  %v8079 = vpop.f32.mrf.mxu0
  %8080 = vmatprep.mubr.f32.mxu0 0.0
  %8081 = vmatmul.mubr.f32.gmra.mxu0 %v7358
  %v8082 = vpop.f32.mrf.mxu0
  %v8083 = vadd.f32 %v7698, %v8082
  %v8084 = vpop.f32.mrf.mxu0
  %8085 = vmatprep.mubr.f32.mxu0 0.0
  %8086 = vmatmul.mubr.f32.gmra.mxu0 %v7361
  %v8087 = vpop.f32.mrf.mxu0
  %v8088 = vadd.f32 %v7703, %v8087
  %v8089 = vpop.f32.mrf.mxu0
  %8090 = vmatprep.mubr.f32.mxu0 0.0
  %8091 = vmatmul.mubr.f32.gmra.mxu0 %v7364
  %v8092 = vpop.f32.mrf.mxu0
  %v8093 = vadd.f32 %v7708, %v8092
  %v8094 = vpop.f32.mrf.mxu0
  %8095 = vmatprep.mubr.f32.mxu0 0.0
  %8096 = vmatmul.mubr.f32.gmra.mxu0 %v7367
  %v8097 = vpop.f32.mrf.mxu0
  %v8098 = vadd.f32 %v7713, %v8097
  %v8099 = vpop.f32.mrf.mxu0
  %8100 = vmatprep.mubr.f32.mxu0 0.0
  %8101 = vmatmul.mubr.f32.gmra.mxu0 %v7370
  %v8102 = vpop.f32.mrf.mxu0
  %v8103 = vadd.f32 %v7718, %v8102
  %v8104 = vpop.f32.mrf.mxu0
  %8105 = vmatprep.mubr.f32.mxu0 0.0
  %8106 = vmatmul.mubr.f32.gmra.mxu0 %v7373
  %v8107 = vpop.f32.mrf.mxu0
  %v8108 = vadd.f32 %v7723, %v8107
  %v8109 = vpop.f32.mrf.mxu0
  %8110 = vmatprep.mubr.f32.mxu0 0.0
  %8111 = vmatmul.mubr.f32.gmra.mxu0 %v7376
  %v8112 = vpop.f32.mrf.mxu0
  %v8113 = vadd.f32 %v7728, %v8112
  %v8114 = vpop.f32.mrf.mxu0
  %8115 = vmatprep.mubr.f32.mxu0 0.0
  %8116 = vmatmul.mubr.f32.gmra.mxu0 %v7379
  %v8117 = vpop.f32.mrf.mxu0
  %v8118 = vadd.f32 %v7733, %v8117
  %v8119 = vpop.f32.mrf.mxu0
  %8120 = vmatprep.mubr.f32.mxu0 0.0
  %8121 = vmatmul.mubr.f32.gmra.mxu0 %v7382
  %v8122 = vpop.f32.mrf.mxu0
  %v8123 = vadd.f32 %v7738, %v8122
  %v8124 = vpop.f32.mrf.mxu0
  %8125 = vmatprep.mubr.f32.mxu0 0.0
  %8126 = vmatmul.mubr.f32.gmra.mxu0 %v7385
  %v8127 = vpop.f32.mrf.mxu0
  %v8128 = vadd.f32 %v7743, %v8127
  %v8129 = vpop.f32.mrf.mxu0
  %8130 = vmatprep.mubr.f32.mxu0 0.0
  %8131 = vmatmul.mubr.f32.gmra.mxu0 %v7388
  %v8132 = vpop.f32.mrf.mxu0
  %v8133 = vadd.f32 %v7748, %v8132
  %v8134 = vpop.f32.mrf.mxu0
  %8135 = vmatprep.mubr.f32.mxu0 0.0
  %8136 = vmatmul.mubr.f32.gmra.mxu0 %v7391
  %v8137 = vpop.f32.mrf.mxu0
  %v8138 = vadd.f32 %v7753, %v8137
  %v8139 = vpop.f32.mrf.mxu0
  %8140 = vmatprep.mubr.f32.mxu0 0.0
  %8141 = vmatmul.mubr.f32.gmra.mxu0 %v7394
  %v8142 = vpop.f32.mrf.mxu0
  %v8143 = vadd.f32 %v7758, %v8142
  %v8144 = vpop.f32.mrf.mxu0
  %8145 = vmatprep.mubr.f32.mxu0 0.0
  %8146 = vmatmul.mubr.f32.gmra.mxu0 %v7397
  %v8147 = vpop.f32.mrf.mxu0
  %v8148 = vadd.f32 %v7763, %v8147
  %v8149 = vpop.f32.mrf.mxu0
  %8150 = vmatprep.mubr.f32.mxu0 0.0
  %8151 = vmatmul.mubr.f32.gmra.mxu0 %v7400
  %v8152 = vpop.f32.mrf.mxu0
  %v8153 = vadd.f32 %v7768, %v8152
  %v8154 = vpop.f32.mrf.mxu0
  %8155 = vmatprep.mubr.f32.mxu0 0.0
  %8156 = vmatmul.mubr.f32.gmra.mxu0 %v7403
  %v8157 = vpop.f32.mrf.mxu0
  %v8158 = vadd.f32 %v7773, %v8157
  %v8159 = vpop.f32.mrf.mxu0
  %8160 = vmatprep.mubr.f32.mxu0 0.0
  %8161 = vmatmul.mubr.f32.gmra.mxu0 %v7406
  %v8162 = vpop.f32.mrf.mxu0
  %v8163 = vadd.f32 %v7778, %v8162
  %v8164 = vpop.f32.mrf.mxu0
  %8165 = vmatprep.mubr.f32.mxu0 0.0
  %8166 = vmatmul.mubr.f32.gmra.mxu0 %v7409
  %v8167 = vpop.f32.mrf.mxu0
  %v8168 = vadd.f32 %v7783, %v8167
  %v8169 = vpop.f32.mrf.mxu0
  %8170 = vmatprep.mubr.f32.mxu0 0.0
  %8171 = vmatmul.mubr.f32.gmra.mxu0 %v7412
  %v8172 = vpop.f32.mrf.mxu0
  %v8173 = vadd.f32 %v7788, %v8172
  %v8174 = vpop.f32.mrf.mxu0
  %8175 = vmatprep.mubr.f32.mxu0 0.0
  %8176 = vmatmul.mubr.f32.gmra.mxu0 %v7415
  %v8177 = vpop.f32.mrf.mxu0
  %v8178 = vadd.f32 %v7793, %v8177
  %v8179 = vpop.f32.mrf.mxu0
  %8180 = vmatprep.mubr.f32.mxu0 0.0
  %8181 = vmatmul.mubr.f32.gmra.mxu0 %v7418
  %v8182 = vpop.f32.mrf.mxu0
  %v8183 = vadd.f32 %v7798, %v8182
  %v8184 = vpop.f32.mrf.mxu0
  %8185 = vmatprep.mubr.f32.mxu0 0.0
  %8186 = vmatmul.mubr.f32.gmra.mxu0 %v7421
  %v8187 = vpop.f32.mrf.mxu0
  %v8188 = vadd.f32 %v7803, %v8187
  %v8189 = vpop.f32.mrf.mxu0
  %8190 = vmatprep.mubr.f32.mxu0 0.0
  %8191 = vmatmul.mubr.f32.gmra.mxu0 %v7424
  %v8192 = vpop.f32.mrf.mxu0
  %v8193 = vadd.f32 %v7808, %v8192
  %v8194 = vpop.f32.mrf.mxu0
  %8195 = vdwg.mxu0
  %v8196 = vmax.f32 %v7878, 0.0
  %v8197 = vmax.f32 %v7883, 0.0
  %v8198 = vmax.f32 %v7888, 0.0
  %v8199 = vmax.f32 %v7893, 0.0
  %v8200 = vmax.f32 %v7898, 0.0
  %v8201 = vmax.f32 %v7903, 0.0
  %v8202 = vmax.f32 %v7908, 0.0
  %v8203 = vmax.f32 %v7913, 0.0
  %v8204 = vmax.f32 %v7918, 0.0
  %v8205 = vmax.f32 %v7923, 0.0
  %v8206 = vmax.f32 %v7928, 0.0
  %v8207 = vmax.f32 %v7933, 0.0
  %v8208 = vmax.f32 %v7938, 0.0
  %v8209 = vmax.f32 %v7943, 0.0
  %v8210 = vmax.f32 %v7948, 0.0
  %v8211 = vmax.f32 %v7953, 0.0
  %v8212 = vmax.f32 %v7958, 0.0
  %v8213 = vmax.f32 %v7963, 0.0
  %v8214 = vmax.f32 %v7968, 0.0
  %v8215 = vmax.f32 %v7973, 0.0
  %v8216 = vmax.f32 %v7978, 0.0
  %v8217 = vmax.f32 %v7983, 0.0
  %v8218 = vmax.f32 %v7988, 0.0
  %v8219 = vmax.f32 %v7993, 0.0
  %v8220 = vmax.f32 %v7998, 0.0
  %v8221 = vmax.f32 %v8003, 0.0
  %v8222 = vmax.f32 %v8008, 0.0
  %v8223 = vmax.f32 %v8013, 0.0
  %v8224 = vmax.f32 %v8018, 0.0
  %v8225 = vmax.f32 %v8023, 0.0
  %v8226 = vmax.f32 %v8028, 0.0
  %v8227 = vmax.f32 %v8033, 0.0
  %v8228 = vmax.f32 %v8038, 0.0
  %v8229 = vmax.f32 %v8043, 0.0
  %v8230 = vmax.f32 %v8048, 0.0
  %v8231 = vmax.f32 %v8053, 0.0
  %v8232 = vmax.f32 %v8058, 0.0
  %v8233 = vmax.f32 %v8063, 0.0
  %v8234 = vmax.f32 %v8068, 0.0
  %v8235 = vmax.f32 %v8073, 0.0
  %v8236 = vmax.f32 %v8078, 0.0
  %v8237 = vmax.f32 %v8083, 0.0
  %v8238 = vmax.f32 %v8088, 0.0
  %v8239 = vmax.f32 %v8093, 0.0
  %v8240 = vmax.f32 %v8098, 0.0
  %v8241 = vmax.f32 %v8103, 0.0
  %v8242 = vmax.f32 %v8108, 0.0
  %v8243 = vmax.f32 %v8113, 0.0
  %v8244 = vmax.f32 %v8118, 0.0
  %v8245 = vmax.f32 %v8123, 0.0
  %v8246 = vmax.f32 %v8128, 0.0
  %v8247 = vmax.f32 %v8133, 0.0
  %v8248 = vmax.f32 %v8138, 0.0
  %v8249 = vmax.f32 %v8143, 0.0
  %v8250 = vmax.f32 %v8148, 0.0
  %v8251 = vmax.f32 %v8153, 0.0
  %v8252 = vmax.f32 %v8158, 0.0
  %v8253 = vmax.f32 %v8163, 0.0
  %v8254 = vmax.f32 %v8168, 0.0
  %v8255 = vmax.f32 %v8173, 0.0
  %v8256 = vmax.f32 %v8178, 0.0
  %v8257 = vmax.f32 %v8183, 0.0
  %v8258 = vmax.f32 %v8188, 0.0
  %v8259 = vmax.f32 %v8193, 0.0
  %8260 = vst.msk [vmem:[#allocation2 + $0x10] sm:$0xff] %vm34, %v8196
  %8261 = vst.msk [vmem:[#allocation2 + $0x18] sm:$0xff] %vm34, %v8197
  %8262 = vst.msk [vmem:[#allocation2 + $0x20] sm:$0xff] %vm34, %v8198
  %8263 = vst.msk [vmem:[#allocation2 + $0x28] sm:$0xff] %vm34, %v8199
  %8264 = vst.msk [vmem:[#allocation2 + $0x30] sm:$0xff] %vm34, %v8200
  %8265 = vst.msk [vmem:[#allocation2 + $0x38] sm:$0xff] %vm34, %v8201
  %8266 = vst.msk [vmem:[#allocation2 + $0x40] sm:$0xff] %vm34, %v8202
  %8267 = vst.msk [vmem:[#allocation2 + $0x48] sm:$0xff] %vm34, %v8203
  %8268 = vst.msk [vmem:[#allocation2 + $0x50] sm:$0xff] %vm34, %v8204
  %8269 = vst.msk [vmem:[#allocation2 + $0x58] sm:$0xff] %vm34, %v8205
  %8270 = vst.msk [vmem:[#allocation2 + $0x60] sm:$0xff] %vm34, %v8206
  %8271 = vst.msk [vmem:[#allocation2 + $0x68] sm:$0xff] %vm34, %v8207
  %8272 = vst.msk [vmem:[#allocation2 + $0x70] sm:$0xff] %vm34, %v8208
  %8273 = vst.msk [vmem:[#allocation2 + $0x78] sm:$0xff] %vm34, %v8209
  %8274 = vst.msk [vmem:[#allocation2 + $0x80] sm:$0xff] %vm34, %v8210
  %8275 = vst.msk [vmem:[#allocation2 + $0x88] sm:$0xff] %vm34, %v8211
  %8276 = vst.msk [vmem:[#allocation2 + $0x90] sm:$0xff] %vm34, %v8212
  %8277 = vst.msk [vmem:[#allocation2 + $0x98] sm:$0xff] %vm34, %v8213
  %8278 = vst.msk [vmem:[#allocation2 + $0xa0] sm:$0xff] %vm34, %v8214
  %8279 = vst.msk [vmem:[#allocation2 + $0xa8] sm:$0xff] %vm34, %v8215
  %8280 = vst.msk [vmem:[#allocation2 + $0xb0] sm:$0xff] %vm34, %v8216
  %8281 = vst.msk [vmem:[#allocation2 + $0xb8] sm:$0xff] %vm34, %v8217
  %8282 = vst.msk [vmem:[#allocation2 + $0xc0] sm:$0xff] %vm34, %v8218
  %8283 = vst.msk [vmem:[#allocation2 + $0xc8] sm:$0xff] %vm34, %v8219
  %8284 = vst.msk [vmem:[#allocation2 + $0xd0] sm:$0xff] %vm34, %v8220
  %8285 = vst.msk [vmem:[#allocation2 + $0xd8] sm:$0xff] %vm34, %v8221
  %8286 = vst.msk [vmem:[#allocation2 + $0xe0] sm:$0xff] %vm34, %v8222
  %8287 = vst.msk [vmem:[#allocation2 + $0xe8] sm:$0xff] %vm34, %v8223
  %8288 = vst.msk [vmem:[#allocation2 + $0xf0] sm:$0xff] %vm34, %v8224
  %8289 = vst.msk [vmem:[#allocation2 + $0xf8] sm:$0xff] %vm34, %v8225
  %8290 = vst.msk [vmem:[#allocation2 + $0x100] sm:$0xff] %vm34, %v8226
  %8291 = vst.msk [vmem:[#allocation2 + $0x108] sm:$0xff] %vm34, %v8227
  %8292 = vst.msk [vmem:[#allocation2 + $0x110] sm:$0xff] %vm34, %v8228
  %8293 = vst.msk [vmem:[#allocation2 + $0x118] sm:$0xff] %vm34, %v8229
  %8294 = vst.msk [vmem:[#allocation2 + $0x120] sm:$0xff] %vm34, %v8230
  %8295 = vst.msk [vmem:[#allocation2 + $0x128] sm:$0xff] %vm34, %v8231
  %8296 = vst.msk [vmem:[#allocation2 + $0x130] sm:$0xff] %vm34, %v8232
  %8297 = vst.msk [vmem:[#allocation2 + $0x138] sm:$0xff] %vm34, %v8233
  %8298 = vst.msk [vmem:[#allocation2 + $0x140] sm:$0xff] %vm34, %v8234
  %8299 = vst.msk [vmem:[#allocation2 + $0x148] sm:$0xff] %vm34, %v8235
  %8300 = vst.msk [vmem:[#allocation2 + $0x150] sm:$0xff] %vm34, %v8236
  %8301 = vst.msk [vmem:[#allocation2 + $0x158] sm:$0xff] %vm34, %v8237
  %8302 = vst.msk [vmem:[#allocation2 + $0x160] sm:$0xff] %vm34, %v8238
  %8303 = vst.msk [vmem:[#allocation2 + $0x168] sm:$0xff] %vm34, %v8239
  %8304 = vst.msk [vmem:[#allocation2 + $0x170] sm:$0xff] %vm34, %v8240
  %8305 = vst.msk [vmem:[#allocation2 + $0x178] sm:$0xff] %vm34, %v8241
  %8306 = vst.msk [vmem:[#allocation2 + $0x180] sm:$0xff] %vm34, %v8242
  %8307 = vst.msk [vmem:[#allocation2 + $0x188] sm:$0xff] %vm34, %v8243
  %8308 = vst.msk [vmem:[#allocation2 + $0x190] sm:$0xff] %vm34, %v8244
  %8309 = vst.msk [vmem:[#allocation2 + $0x198] sm:$0xff] %vm34, %v8245
  %8310 = vst.msk [vmem:[#allocation2 + $0x1a0] sm:$0xff] %vm34, %v8246
  %8311 = vst.msk [vmem:[#allocation2 + $0x1a8] sm:$0xff] %vm34, %v8247
  %8312 = vst.msk [vmem:[#allocation2 + $0x1b0] sm:$0xff] %vm34, %v8248
  %8313 = vst.msk [vmem:[#allocation2 + $0x1b8] sm:$0xff] %vm34, %v8249
  %8314 = vst.msk [vmem:[#allocation2 + $0x1c0] sm:$0xff] %vm34, %v8250
  %8315 = vst.msk [vmem:[#allocation2 + $0x1c8] sm:$0xff] %vm34, %v8251
  %8316 = vst.msk [vmem:[#allocation2 + $0x1d0] sm:$0xff] %vm34, %v8252
  %8317 = vst.msk [vmem:[#allocation2 + $0x1d8] sm:$0xff] %vm34, %v8253
  %8318 = vst.msk [vmem:[#allocation2 + $0x1e0] sm:$0xff] %vm34, %v8254
  %8319 = vst.msk [vmem:[#allocation2 + $0x1e8] sm:$0xff] %vm34, %v8255
  %8320 = vst.msk [vmem:[#allocation2 + $0x1f0] sm:$0xff] %vm34, %v8256
  %8321 = vst.msk [vmem:[#allocation2 + $0x1f8] sm:$0xff] %vm34, %v8257
  %8322 = vst.msk [vmem:[#allocation2 + $0x200] sm:$0xff] %vm34, %v8258
  %8323 = vst.msk [vmem:[#allocation2 + $0x208] sm:$0xff] %vm34, %v8259
  %v8324 = vld [vmem:[#allocation2 + $0x10] sm:$0xff]
  %v8325 = vld [vmem:[#allocation2 + $0x18] sm:$0xff]
  %v8326 = vld [vmem:[#allocation2 + $0x20] sm:$0xff]
  %v8327 = vld [vmem:[#allocation2 + $0x28] sm:$0xff]
  %v8328 = vld [vmem:[#allocation2 + $0x30] sm:$0xff]
  %v8329 = vld [vmem:[#allocation2 + $0x38] sm:$0xff]
  %v8330 = vld [vmem:[#allocation2 + $0x40] sm:$0xff]
  %v8331 = vld [vmem:[#allocation2 + $0x48] sm:$0xff]
  %v8332 = vld [vmem:[#allocation2 + $0x50] sm:$0xff]
  %v8333 = vld [vmem:[#allocation2 + $0x58] sm:$0xff]
  %v8334 = vld [vmem:[#allocation2 + $0x60] sm:$0xff]
  %v8335 = vld [vmem:[#allocation2 + $0x68] sm:$0xff]
  %v8336 = vld [vmem:[#allocation2 + $0x70] sm:$0xff]
  %v8337 = vld [vmem:[#allocation2 + $0x78] sm:$0xff]
  %v8338 = vld [vmem:[#allocation2 + $0x80] sm:$0xff]
  %v8339 = vld [vmem:[#allocation2 + $0x88] sm:$0xff]
  %v8340 = vld [vmem:[#allocation2 + $0x90] sm:$0xff]
  %v8341 = vld [vmem:[#allocation2 + $0x98] sm:$0xff]
  %v8342 = vld [vmem:[#allocation2 + $0xa0] sm:$0xff]
  %v8343 = vld [vmem:[#allocation2 + $0xa8] sm:$0xff]
  %v8344 = vld [vmem:[#allocation2 + $0xb0] sm:$0xff]
  %v8345 = vld [vmem:[#allocation2 + $0xb8] sm:$0xff]
  %v8346 = vld [vmem:[#allocation2 + $0xc0] sm:$0xff]
  %v8347 = vld [vmem:[#allocation2 + $0xc8] sm:$0xff]
  %v8348 = vld [vmem:[#allocation2 + $0xd0] sm:$0xff]
  %v8349 = vld [vmem:[#allocation2 + $0xd8] sm:$0xff]
  %v8350 = vld [vmem:[#allocation2 + $0xe0] sm:$0xff]
  %v8351 = vld [vmem:[#allocation2 + $0xe8] sm:$0xff]
  %v8352 = vld [vmem:[#allocation2 + $0xf0] sm:$0xff]
  %v8353 = vld [vmem:[#allocation2 + $0xf8] sm:$0xff]
  %v8354 = vld [vmem:[#allocation2 + $0x100] sm:$0xff]
  %v8355 = vld [vmem:[#allocation2 + $0x108] sm:$0xff]
  %v8356 = vld [vmem:[#allocation2 + $0x110] sm:$0xff]
  %v8357 = vld [vmem:[#allocation2 + $0x118] sm:$0xff]
  %v8358 = vld [vmem:[#allocation2 + $0x120] sm:$0xff]
  %v8359 = vld [vmem:[#allocation2 + $0x128] sm:$0xff]
  %v8360 = vld [vmem:[#allocation2 + $0x130] sm:$0xff]
  %v8361 = vld [vmem:[#allocation2 + $0x138] sm:$0xff]
  %v8362 = vld [vmem:[#allocation2 + $0x140] sm:$0xff]
  %v8363 = vld [vmem:[#allocation2 + $0x148] sm:$0xff]
  %v8364 = vld [vmem:[#allocation2 + $0x150] sm:$0xff]
  %v8365 = vld [vmem:[#allocation2 + $0x158] sm:$0xff]
  %v8366 = vld [vmem:[#allocation2 + $0x160] sm:$0xff]
  %v8367 = vld [vmem:[#allocation2 + $0x168] sm:$0xff]
  %v8368 = vld [vmem:[#allocation2 + $0x170] sm:$0xff]
  %v8369 = vld [vmem:[#allocation2 + $0x178] sm:$0xff]
  %v8370 = vld [vmem:[#allocation2 + $0x180] sm:$0xff]
  %v8371 = vld [vmem:[#allocation2 + $0x188] sm:$0xff]
  %v8372 = vld [vmem:[#allocation2 + $0x190] sm:$0xff]
  %v8373 = vld [vmem:[#allocation2 + $0x198] sm:$0xff]
  %v8374 = vld [vmem:[#allocation2 + $0x1a0] sm:$0xff]
  %v8375 = vld [vmem:[#allocation2 + $0x1a8] sm:$0xff]
  %v8376 = vld [vmem:[#allocation2 + $0x1b0] sm:$0xff]
  %v8377 = vld [vmem:[#allocation2 + $0x1b8] sm:$0xff]
  %v8378 = vld [vmem:[#allocation2 + $0x1c0] sm:$0xff]
  %v8379 = vld [vmem:[#allocation2 + $0x1c8] sm:$0xff]
  %v8380 = vld [vmem:[#allocation2 + $0x1d0] sm:$0xff]
  %v8381 = vld [vmem:[#allocation2 + $0x1d8] sm:$0xff]
  %v8382 = vld [vmem:[#allocation2 + $0x1e0] sm:$0xff]
  %v8383 = vld [vmem:[#allocation2 + $0x1e8] sm:$0xff]
  %v8384 = vld [vmem:[#allocation2 + $0x1f0] sm:$0xff]
  %v8385 = vld [vmem:[#allocation2 + $0x1f8] sm:$0xff]
  %v8386 = vld [vmem:[#allocation2 + $0x200] sm:$0xff]
  %v8387 = vld [vmem:[#allocation2 + $0x208] sm:$0xff]
  %v8388 = vld [vmem:[#allocation2 + $0x210] sm:$0xff]
  %v8389 = vmax.f32 %v8324, %v8325
  %v8390 = vmax.f32 %v8325, %v8326
  %v8391 = vmax.f32 %v8326, %v8327
  %v8392 = vmax.f32 %v8327, %v8328
  %v8393 = vmax.f32 %v8328, %v8329
  %v8394 = vmax.f32 %v8329, %v8330
  %v8395 = vmax.f32 %v8330, %v8331
  %v8396 = vmax.f32 %v8331, %v8332
  %v8397 = vmax.f32 %v8332, %v8333
  %v8398 = vmax.f32 %v8333, %v8334
  %v8399 = vmax.f32 %v8334, %v8335
  %v8400 = vmax.f32 %v8335, %v8336
  %v8401 = vmax.f32 %v8336, %v8337
  %v8402 = vmax.f32 %v8337, %v8338
  %v8403 = vmax.f32 %v8338, %v8339
  %v8404 = vmax.f32 %v8339, %v8340
  %v8405 = vmax.f32 %v8340, %v8341
  %v8406 = vmax.f32 %v8341, %v8342
  %v8407 = vmax.f32 %v8342, %v8343
  %v8408 = vmax.f32 %v8343, %v8344
  %v8409 = vmax.f32 %v8344, %v8345
  %v8410 = vmax.f32 %v8345, %v8346
  %v8411 = vmax.f32 %v8346, %v8347
  %v8412 = vmax.f32 %v8347, %v8348
  %v8413 = vmax.f32 %v8348, %v8349
  %v8414 = vmax.f32 %v8349, %v8350
  %v8415 = vmax.f32 %v8350, %v8351
  %v8416 = vmax.f32 %v8351, %v8352
  %v8417 = vmax.f32 %v8352, %v8353
  %v8418 = vmax.f32 %v8353, %v8354
  %v8419 = vmax.f32 %v8354, %v8355
  %v8420 = vmax.f32 %v8355, %v8356
  %v8421 = vmax.f32 %v8356, %v8357
  %v8422 = vmax.f32 %v8357, %v8358
  %v8423 = vmax.f32 %v8358, %v8359
  %v8424 = vmax.f32 %v8359, %v8360
  %v8425 = vmax.f32 %v8360, %v8361
  %v8426 = vmax.f32 %v8361, %v8362
  %v8427 = vmax.f32 %v8362, %v8363
  %v8428 = vmax.f32 %v8363, %v8364
  %v8429 = vmax.f32 %v8364, %v8365
  %v8430 = vmax.f32 %v8365, %v8366
  %v8431 = vmax.f32 %v8366, %v8367
  %v8432 = vmax.f32 %v8367, %v8368
  %v8433 = vmax.f32 %v8368, %v8369
  %v8434 = vmax.f32 %v8369, %v8370
  %v8435 = vmax.f32 %v8370, %v8371
  %v8436 = vmax.f32 %v8371, %v8372
  %v8437 = vmax.f32 %v8372, %v8373
  %v8438 = vmax.f32 %v8373, %v8374
  %v8439 = vmax.f32 %v8374, %v8375
  %v8440 = vmax.f32 %v8375, %v8376
  %v8441 = vmax.f32 %v8376, %v8377
  %v8442 = vmax.f32 %v8377, %v8378
  %v8443 = vmax.f32 %v8378, %v8379
  %v8444 = vmax.f32 %v8379, %v8380
  %v8445 = vmax.f32 %v8380, %v8381
  %v8446 = vmax.f32 %v8381, %v8382
  %v8447 = vmax.f32 %v8382, %v8383
  %v8448 = vmax.f32 %v8383, %v8384
  %v8449 = vmax.f32 %v8384, %v8385
  %v8450 = vmax.f32 %v8385, %v8386
  %v8451 = vmax.f32 %v8386, %v8387
  %v8452 = vmax.f32 %v8387, %v8388
  %8453 = vst.msk [vmem:[#allocation2 + $0x10] sm:$0xff] %vm34, %v8389
  %8454 = vst.msk [vmem:[#allocation2 + $0x18] sm:$0xff] %vm34, %v8390
  %8455 = vst.msk [vmem:[#allocation2 + $0x20] sm:$0xff] %vm34, %v8391
  %8456 = vst.msk [vmem:[#allocation2 + $0x28] sm:$0xff] %vm34, %v8392
  %8457 = vst.msk [vmem:[#allocation2 + $0x30] sm:$0xff] %vm34, %v8393
  %8458 = vst.msk [vmem:[#allocation2 + $0x38] sm:$0xff] %vm34, %v8394
  %8459 = vst.msk [vmem:[#allocation2 + $0x40] sm:$0xff] %vm34, %v8395
  %8460 = vst.msk [vmem:[#allocation2 + $0x48] sm:$0xff] %vm34, %v8396
  %8461 = vst.msk [vmem:[#allocation2 + $0x50] sm:$0xff] %vm34, %v8397
  %8462 = vst.msk [vmem:[#allocation2 + $0x58] sm:$0xff] %vm34, %v8398
  %8463 = vst.msk [vmem:[#allocation2 + $0x60] sm:$0xff] %vm34, %v8399
  %8464 = vst.msk [vmem:[#allocation2 + $0x68] sm:$0xff] %vm34, %v8400
  %8465 = vst.msk [vmem:[#allocation2 + $0x70] sm:$0xff] %vm34, %v8401
  %8466 = vst.msk [vmem:[#allocation2 + $0x78] sm:$0xff] %vm34, %v8402
  %8467 = vst.msk [vmem:[#allocation2 + $0x80] sm:$0xff] %vm34, %v8403
  %8468 = vst.msk [vmem:[#allocation2 + $0x88] sm:$0xff] %vm34, %v8404
  %8469 = vst.msk [vmem:[#allocation2 + $0x90] sm:$0xff] %vm34, %v8405
  %8470 = vst.msk [vmem:[#allocation2 + $0x98] sm:$0xff] %vm34, %v8406
  %8471 = vst.msk [vmem:[#allocation2 + $0xa0] sm:$0xff] %vm34, %v8407
  %8472 = vst.msk [vmem:[#allocation2 + $0xa8] sm:$0xff] %vm34, %v8408
  %8473 = vst.msk [vmem:[#allocation2 + $0xb0] sm:$0xff] %vm34, %v8409
  %8474 = vst.msk [vmem:[#allocation2 + $0xb8] sm:$0xff] %vm34, %v8410
  %8475 = vst.msk [vmem:[#allocation2 + $0xc0] sm:$0xff] %vm34, %v8411
  %8476 = vst.msk [vmem:[#allocation2 + $0xc8] sm:$0xff] %vm34, %v8412
  %8477 = vst.msk [vmem:[#allocation2 + $0xd0] sm:$0xff] %vm34, %v8413
  %8478 = vst.msk [vmem:[#allocation2 + $0xd8] sm:$0xff] %vm34, %v8414
  %8479 = vst.msk [vmem:[#allocation2 + $0xe0] sm:$0xff] %vm34, %v8415
  %8480 = vst.msk [vmem:[#allocation2 + $0xe8] sm:$0xff] %vm34, %v8416
  %8481 = vst.msk [vmem:[#allocation2 + $0xf0] sm:$0xff] %vm34, %v8417
  %8482 = vst.msk [vmem:[#allocation2 + $0xf8] sm:$0xff] %vm34, %v8418
  %8483 = vst.msk [vmem:[#allocation2 + $0x100] sm:$0xff] %vm34, %v8419
  %8484 = vst.msk [vmem:[#allocation2 + $0x108] sm:$0xff] %vm34, %v8420
  %8485 = vst.msk [vmem:[#allocation2 + $0x110] sm:$0xff] %vm34, %v8421
  %8486 = vst.msk [vmem:[#allocation2 + $0x118] sm:$0xff] %vm34, %v8422
  %8487 = vst.msk [vmem:[#allocation2 + $0x120] sm:$0xff] %vm34, %v8423
  %8488 = vst.msk [vmem:[#allocation2 + $0x128] sm:$0xff] %vm34, %v8424
  %8489 = vst.msk [vmem:[#allocation2 + $0x130] sm:$0xff] %vm34, %v8425
  %8490 = vst.msk [vmem:[#allocation2 + $0x138] sm:$0xff] %vm34, %v8426
  %8491 = vst.msk [vmem:[#allocation2 + $0x140] sm:$0xff] %vm34, %v8427
  %8492 = vst.msk [vmem:[#allocation2 + $0x148] sm:$0xff] %vm34, %v8428
  %8493 = vst.msk [vmem:[#allocation2 + $0x150] sm:$0xff] %vm34, %v8429
  %8494 = vst.msk [vmem:[#allocation2 + $0x158] sm:$0xff] %vm34, %v8430
  %8495 = vst.msk [vmem:[#allocation2 + $0x160] sm:$0xff] %vm34, %v8431
  %8496 = vst.msk [vmem:[#allocation2 + $0x168] sm:$0xff] %vm34, %v8432
  %8497 = vst.msk [vmem:[#allocation2 + $0x170] sm:$0xff] %vm34, %v8433
  %8498 = vst.msk [vmem:[#allocation2 + $0x178] sm:$0xff] %vm34, %v8434
  %8499 = vst.msk [vmem:[#allocation2 + $0x180] sm:$0xff] %vm34, %v8435
  %8500 = vst.msk [vmem:[#allocation2 + $0x188] sm:$0xff] %vm34, %v8436
  %8501 = vst.msk [vmem:[#allocation2 + $0x190] sm:$0xff] %vm34, %v8437
  %8502 = vst.msk [vmem:[#allocation2 + $0x198] sm:$0xff] %vm34, %v8438
  %8503 = vst.msk [vmem:[#allocation2 + $0x1a0] sm:$0xff] %vm34, %v8439
  %8504 = vst.msk [vmem:[#allocation2 + $0x1a8] sm:$0xff] %vm34, %v8440
  %8505 = vst.msk [vmem:[#allocation2 + $0x1b0] sm:$0xff] %vm34, %v8441
  %8506 = vst.msk [vmem:[#allocation2 + $0x1b8] sm:$0xff] %vm34, %v8442
  %8507 = vst.msk [vmem:[#allocation2 + $0x1c0] sm:$0xff] %vm34, %v8443
  %8508 = vst.msk [vmem:[#allocation2 + $0x1c8] sm:$0xff] %vm34, %v8444
  %8509 = vst.msk [vmem:[#allocation2 + $0x1d0] sm:$0xff] %vm34, %v8445
  %8510 = vst.msk [vmem:[#allocation2 + $0x1d8] sm:$0xff] %vm34, %v8446
  %8511 = vst.msk [vmem:[#allocation2 + $0x1e0] sm:$0xff] %vm34, %v8447
  %8512 = vst.msk [vmem:[#allocation2 + $0x1e8] sm:$0xff] %vm34, %v8448
  %8513 = vst.msk [vmem:[#allocation2 + $0x1f0] sm:$0xff] %vm34, %v8449
  %8514 = vst.msk [vmem:[#allocation2 + $0x1f8] sm:$0xff] %vm34, %v8450
  %8515 = vst.msk [vmem:[#allocation2 + $0x200] sm:$0xff] %vm34, %v8451
  %8516 = vst.msk [vmem:[#allocation2 + $0x208] sm:$0xff] %vm34, %v8452
  %v8517 = vld [vmem:[#allocation2 + $0x10] sm:$0xff]
  %v8518 = vld [vmem:[#allocation2 + $0x18] sm:$0xff]
  %v8519 = vld [vmem:[#allocation2 + $0x20] sm:$0xff]
  %v8520 = vld [vmem:[#allocation2 + $0x28] sm:$0xff]
  %v8521 = vld [vmem:[#allocation2 + $0x30] sm:$0xff]
  %v8522 = vld [vmem:[#allocation2 + $0x38] sm:$0xff]
  %v8523 = vld [vmem:[#allocation2 + $0x40] sm:$0xff]
  %v8524 = vld [vmem:[#allocation2 + $0x48] sm:$0xff]
  %v8525 = vld [vmem:[#allocation2 + $0x50] sm:$0xff]
  %v8526 = vld [vmem:[#allocation2 + $0x58] sm:$0xff]
  %v8527 = vld [vmem:[#allocation2 + $0x60] sm:$0xff]
  %v8528 = vld [vmem:[#allocation2 + $0x68] sm:$0xff]
  %v8529 = vld [vmem:[#allocation2 + $0x70] sm:$0xff]
  %v8530 = vld [vmem:[#allocation2 + $0x78] sm:$0xff]
  %v8531 = vld [vmem:[#allocation2 + $0x80] sm:$0xff]
  %v8532 = vld [vmem:[#allocation2 + $0x88] sm:$0xff]
  %v8533 = vld [vmem:[#allocation2 + $0x90] sm:$0xff]
  %v8534 = vld [vmem:[#allocation2 + $0x98] sm:$0xff]
  %v8535 = vld [vmem:[#allocation2 + $0xa0] sm:$0xff]
  %v8536 = vld [vmem:[#allocation2 + $0xa8] sm:$0xff]
  %v8537 = vld [vmem:[#allocation2 + $0xb0] sm:$0xff]
  %v8538 = vld [vmem:[#allocation2 + $0xb8] sm:$0xff]
  %v8539 = vld [vmem:[#allocation2 + $0xc0] sm:$0xff]
  %v8540 = vld [vmem:[#allocation2 + $0xc8] sm:$0xff]
  %v8541 = vld [vmem:[#allocation2 + $0xd0] sm:$0xff]
  %v8542 = vld [vmem:[#allocation2 + $0xd8] sm:$0xff]
  %v8543 = vld [vmem:[#allocation2 + $0xe0] sm:$0xff]
  %v8544 = vld [vmem:[#allocation2 + $0xe8] sm:$0xff]
  %v8545 = vld [vmem:[#allocation2 + $0xf0] sm:$0xff]
  %v8546 = vld [vmem:[#allocation2 + $0xf8] sm:$0xff]
  %v8547 = vld [vmem:[#allocation2 + $0x100] sm:$0xff]
  %v8548 = vld [vmem:[#allocation2 + $0x108] sm:$0xff]
  %v8549 = vld [vmem:[#allocation2 + $0x110] sm:$0xff]
  %v8550 = vld [vmem:[#allocation2 + $0x118] sm:$0xff]
  %v8551 = vld [vmem:[#allocation2 + $0x120] sm:$0xff]
  %v8552 = vld [vmem:[#allocation2 + $0x128] sm:$0xff]
  %v8553 = vld [vmem:[#allocation2 + $0x130] sm:$0xff]
  %v8554 = vld [vmem:[#allocation2 + $0x138] sm:$0xff]
  %v8555 = vld [vmem:[#allocation2 + $0x140] sm:$0xff]
  %v8556 = vld [vmem:[#allocation2 + $0x148] sm:$0xff]
  %v8557 = vld [vmem:[#allocation2 + $0x150] sm:$0xff]
  %v8558 = vld [vmem:[#allocation2 + $0x158] sm:$0xff]
  %v8559 = vld [vmem:[#allocation2 + $0x160] sm:$0xff]
  %v8560 = vld [vmem:[#allocation2 + $0x168] sm:$0xff]
  %v8561 = vld [vmem:[#allocation2 + $0x170] sm:$0xff]
  %v8562 = vld [vmem:[#allocation2 + $0x178] sm:$0xff]
  %v8563 = vld [vmem:[#allocation2 + $0x180] sm:$0xff]
  %v8564 = vld [vmem:[#allocation2 + $0x188] sm:$0xff]
  %v8565 = vld [vmem:[#allocation2 + $0x190] sm:$0xff]
  %v8566 = vld [vmem:[#allocation2 + $0x198] sm:$0xff]
  %v8567 = vld [vmem:[#allocation2 + $0x1a0] sm:$0xff]
  %v8568 = vld [vmem:[#allocation2 + $0x1a8] sm:$0xff]
  %v8569 = vld [vmem:[#allocation2 + $0x1b0] sm:$0xff]
  %v8570 = vld [vmem:[#allocation2 + $0x1b8] sm:$0xff]
  %v8571 = vld [vmem:[#allocation2 + $0x1c0] sm:$0xff]
  %v8572 = vld [vmem:[#allocation2 + $0x1c8] sm:$0xff]
  %v8573 = vld [vmem:[#allocation2 + $0x1d0] sm:$0xff]
  %v8574 = vld [vmem:[#allocation2 + $0x1d8] sm:$0xff]
  %v8575 = vld [vmem:[#allocation2 + $0x1e0] sm:$0xff]
  %v8576 = vld [vmem:[#allocation2 + $0x1e8] sm:$0xff]
  %v8577 = vld [vmem:[#allocation2 + $0x1f0] sm:$0xff]
  %v8578 = vld [vmem:[#allocation2 + $0x1f8] sm:$0xff]
  %v8579 = vld [vmem:[#allocation2 + $0x200] sm:$0xff]
  %v8580 = vld [vmem:[#allocation2 + $0x208] sm:$0xff]
  %v8581 = vld [vmem:[#allocation2 + $0x11] sm:$0xff]
  %v8582 = vld [vmem:[#allocation2 + $0x19] sm:$0xff]
  %v8583 = vld [vmem:[#allocation2 + $0x21] sm:$0xff]
  %v8584 = vld [vmem:[#allocation2 + $0x29] sm:$0xff]
  %v8585 = vld [vmem:[#allocation2 + $0x31] sm:$0xff]
  %v8586 = vld [vmem:[#allocation2 + $0x39] sm:$0xff]
  %v8587 = vld [vmem:[#allocation2 + $0x41] sm:$0xff]
  %v8588 = vld [vmem:[#allocation2 + $0x49] sm:$0xff]
  %v8589 = vld [vmem:[#allocation2 + $0x51] sm:$0xff]
  %v8590 = vld [vmem:[#allocation2 + $0x59] sm:$0xff]
  %v8591 = vld [vmem:[#allocation2 + $0x61] sm:$0xff]
  %v8592 = vld [vmem:[#allocation2 + $0x69] sm:$0xff]
  %v8593 = vld [vmem:[#allocation2 + $0x71] sm:$0xff]
  %v8594 = vld [vmem:[#allocation2 + $0x79] sm:$0xff]
  %v8595 = vld [vmem:[#allocation2 + $0x81] sm:$0xff]
  %v8596 = vld [vmem:[#allocation2 + $0x89] sm:$0xff]
  %v8597 = vld [vmem:[#allocation2 + $0x91] sm:$0xff]
  %v8598 = vld [vmem:[#allocation2 + $0x99] sm:$0xff]
  %v8599 = vld [vmem:[#allocation2 + $0xa1] sm:$0xff]
  %v8600 = vld [vmem:[#allocation2 + $0xa9] sm:$0xff]
  %v8601 = vld [vmem:[#allocation2 + $0xb1] sm:$0xff]
  %v8602 = vld [vmem:[#allocation2 + $0xb9] sm:$0xff]
  %v8603 = vld [vmem:[#allocation2 + $0xc1] sm:$0xff]
  %v8604 = vld [vmem:[#allocation2 + $0xc9] sm:$0xff]
  %v8605 = vld [vmem:[#allocation2 + $0xd1] sm:$0xff]
  %v8606 = vld [vmem:[#allocation2 + $0xd9] sm:$0xff]
  %v8607 = vld [vmem:[#allocation2 + $0xe1] sm:$0xff]
  %v8608 = vld [vmem:[#allocation2 + $0xe9] sm:$0xff]
  %v8609 = vld [vmem:[#allocation2 + $0xf1] sm:$0xff]
  %v8610 = vld [vmem:[#allocation2 + $0xf9] sm:$0xff]
  %v8611 = vld [vmem:[#allocation2 + $0x101] sm:$0xff]
  %v8612 = vld [vmem:[#allocation2 + $0x109] sm:$0xff]
  %v8613 = vld [vmem:[#allocation2 + $0x111] sm:$0xff]
  %v8614 = vld [vmem:[#allocation2 + $0x119] sm:$0xff]
  %v8615 = vld [vmem:[#allocation2 + $0x121] sm:$0xff]
  %v8616 = vld [vmem:[#allocation2 + $0x129] sm:$0xff]
  %v8617 = vld [vmem:[#allocation2 + $0x131] sm:$0xff]
  %v8618 = vld [vmem:[#allocation2 + $0x139] sm:$0xff]
  %v8619 = vld [vmem:[#allocation2 + $0x141] sm:$0xff]
  %v8620 = vld [vmem:[#allocation2 + $0x149] sm:$0xff]
  %v8621 = vld [vmem:[#allocation2 + $0x151] sm:$0xff]
  %v8622 = vld [vmem:[#allocation2 + $0x159] sm:$0xff]
  %v8623 = vld [vmem:[#allocation2 + $0x161] sm:$0xff]
  %v8624 = vld [vmem:[#allocation2 + $0x169] sm:$0xff]
  %v8625 = vld [vmem:[#allocation2 + $0x171] sm:$0xff]
  %v8626 = vld [vmem:[#allocation2 + $0x179] sm:$0xff]
  %v8627 = vld [vmem:[#allocation2 + $0x181] sm:$0xff]
  %v8628 = vld [vmem:[#allocation2 + $0x189] sm:$0xff]
  %v8629 = vld [vmem:[#allocation2 + $0x191] sm:$0xff]
  %v8630 = vld [vmem:[#allocation2 + $0x199] sm:$0xff]
  %v8631 = vld [vmem:[#allocation2 + $0x1a1] sm:$0xff]
  %v8632 = vld [vmem:[#allocation2 + $0x1a9] sm:$0xff]
  %v8633 = vld [vmem:[#allocation2 + $0x1b1] sm:$0xff]
  %v8634 = vld [vmem:[#allocation2 + $0x1b9] sm:$0xff]
  %v8635 = vld [vmem:[#allocation2 + $0x1c1] sm:$0xff]
  %v8636 = vld [vmem:[#allocation2 + $0x1c9] sm:$0xff]
  %v8637 = vld [vmem:[#allocation2 + $0x1d1] sm:$0xff]
  %v8638 = vld [vmem:[#allocation2 + $0x1d9] sm:$0xff]
  %v8639 = vld [vmem:[#allocation2 + $0x1e1] sm:$0xff]
  %v8640 = vld [vmem:[#allocation2 + $0x1e9] sm:$0xff]
  %v8641 = vld [vmem:[#allocation2 + $0x1f1] sm:$0xff]
  %v8642 = vld [vmem:[#allocation2 + $0x1f9] sm:$0xff]
  %v8643 = vld [vmem:[#allocation2 + $0x201] sm:$0xff]
  %v8644 = vld [vmem:[#allocation2 + $0x209] sm:$0xff]
  %v8645 = vmax.f32 %v8517, %v8581
  %v8646 = vmax.f32 %v8518, %v8582
  %v8647 = vmax.f32 %v8519, %v8583
  %v8648 = vmax.f32 %v8520, %v8584
  %v8649 = vmax.f32 %v8521, %v8585
  %v8650 = vmax.f32 %v8522, %v8586
  %v8651 = vmax.f32 %v8523, %v8587
  %v8652 = vmax.f32 %v8524, %v8588
  %v8653 = vmax.f32 %v8525, %v8589
  %v8654 = vmax.f32 %v8526, %v8590
  %v8655 = vmax.f32 %v8527, %v8591
  %v8656 = vmax.f32 %v8528, %v8592
  %v8657 = vmax.f32 %v8529, %v8593
  %v8658 = vmax.f32 %v8530, %v8594
  %v8659 = vmax.f32 %v8531, %v8595
  %v8660 = vmax.f32 %v8532, %v8596
  %v8661 = vmax.f32 %v8533, %v8597
  %v8662 = vmax.f32 %v8534, %v8598
  %v8663 = vmax.f32 %v8535, %v8599
  %v8664 = vmax.f32 %v8536, %v8600
  %v8665 = vmax.f32 %v8537, %v8601
  %v8666 = vmax.f32 %v8538, %v8602
  %v8667 = vmax.f32 %v8539, %v8603
  %v8668 = vmax.f32 %v8540, %v8604
  %v8669 = vmax.f32 %v8541, %v8605
  %v8670 = vmax.f32 %v8542, %v8606
  %v8671 = vmax.f32 %v8543, %v8607
  %v8672 = vmax.f32 %v8544, %v8608
  %v8673 = vmax.f32 %v8545, %v8609
  %v8674 = vmax.f32 %v8546, %v8610
  %v8675 = vmax.f32 %v8547, %v8611
  %v8676 = vmax.f32 %v8548, %v8612
  %v8677 = vmax.f32 %v8549, %v8613
  %v8678 = vmax.f32 %v8550, %v8614
  %v8679 = vmax.f32 %v8551, %v8615
  %v8680 = vmax.f32 %v8552, %v8616
  %v8681 = vmax.f32 %v8553, %v8617
  %v8682 = vmax.f32 %v8554, %v8618
  %v8683 = vmax.f32 %v8555, %v8619
  %v8684 = vmax.f32 %v8556, %v8620
  %v8685 = vmax.f32 %v8557, %v8621
  %v8686 = vmax.f32 %v8558, %v8622
  %v8687 = vmax.f32 %v8559, %v8623
  %v8688 = vmax.f32 %v8560, %v8624
  %v8689 = vmax.f32 %v8561, %v8625
  %v8690 = vmax.f32 %v8562, %v8626
  %v8691 = vmax.f32 %v8563, %v8627
  %v8692 = vmax.f32 %v8564, %v8628
  %v8693 = vmax.f32 %v8565, %v8629
  %v8694 = vmax.f32 %v8566, %v8630
  %v8695 = vmax.f32 %v8567, %v8631
  %v8696 = vmax.f32 %v8568, %v8632
  %v8697 = vmax.f32 %v8569, %v8633
  %v8698 = vmax.f32 %v8570, %v8634
  %v8699 = vmax.f32 %v8571, %v8635
  %v8700 = vmax.f32 %v8572, %v8636
  %v8701 = vmax.f32 %v8573, %v8637
  %v8702 = vmax.f32 %v8574, %v8638
  %v8703 = vmax.f32 %v8575, %v8639
  %v8704 = vmax.f32 %v8576, %v8640
  %v8705 = vmax.f32 %v8577, %v8641
  %v8706 = vmax.f32 %v8578, %v8642
  %v8707 = vmax.f32 %v8579, %v8643
  %v8708 = vmax.f32 %v8580, %v8644
  %8709 = vst.msk [vmem:[#allocation2 + $0x10] sm:$0xff] %vm34, %v8645
  %8710 = vst.msk [vmem:[#allocation2 + $0x18] sm:$0xff] %vm34, %v8646
  %8711 = vst.msk [vmem:[#allocation2 + $0x20] sm:$0xff] %vm34, %v8647
  %8712 = vst.msk [vmem:[#allocation2 + $0x28] sm:$0xff] %vm34, %v8648
  %8713 = vst.msk [vmem:[#allocation2 + $0x30] sm:$0xff] %vm34, %v8649
  %8714 = vst.msk [vmem:[#allocation2 + $0x38] sm:$0xff] %vm34, %v8650
  %8715 = vst.msk [vmem:[#allocation2 + $0x40] sm:$0xff] %vm34, %v8651
  %8716 = vst.msk [vmem:[#allocation2 + $0x48] sm:$0xff] %vm34, %v8652
  %8717 = vst.msk [vmem:[#allocation2 + $0x50] sm:$0xff] %vm34, %v8653
  %8718 = vst.msk [vmem:[#allocation2 + $0x58] sm:$0xff] %vm34, %v8654
  %8719 = vst.msk [vmem:[#allocation2 + $0x60] sm:$0xff] %vm34, %v8655
  %8720 = vst.msk [vmem:[#allocation2 + $0x68] sm:$0xff] %vm34, %v8656
  %8721 = vst.msk [vmem:[#allocation2 + $0x70] sm:$0xff] %vm34, %v8657
  %8722 = vst.msk [vmem:[#allocation2 + $0x78] sm:$0xff] %vm34, %v8658
  %8723 = vst.msk [vmem:[#allocation2 + $0x80] sm:$0xff] %vm34, %v8659
  %8724 = vst.msk [vmem:[#allocation2 + $0x88] sm:$0xff] %vm34, %v8660
  %8725 = vst.msk [vmem:[#allocation2 + $0x90] sm:$0xff] %vm34, %v8661
  %8726 = vst.msk [vmem:[#allocation2 + $0x98] sm:$0xff] %vm34, %v8662
  %8727 = vst.msk [vmem:[#allocation2 + $0xa0] sm:$0xff] %vm34, %v8663
  %8728 = vst.msk [vmem:[#allocation2 + $0xa8] sm:$0xff] %vm34, %v8664
  %8729 = vst.msk [vmem:[#allocation2 + $0xb0] sm:$0xff] %vm34, %v8665
  %8730 = vst.msk [vmem:[#allocation2 + $0xb8] sm:$0xff] %vm34, %v8666
  %8731 = vst.msk [vmem:[#allocation2 + $0xc0] sm:$0xff] %vm34, %v8667
  %8732 = vst.msk [vmem:[#allocation2 + $0xc8] sm:$0xff] %vm34, %v8668
  %8733 = vst.msk [vmem:[#allocation2 + $0xd0] sm:$0xff] %vm34, %v8669
  %8734 = vst.msk [vmem:[#allocation2 + $0xd8] sm:$0xff] %vm34, %v8670
  %8735 = vst.msk [vmem:[#allocation2 + $0xe0] sm:$0xff] %vm34, %v8671
  %8736 = vst.msk [vmem:[#allocation2 + $0xe8] sm:$0xff] %vm34, %v8672
  %8737 = vst.msk [vmem:[#allocation2 + $0xf0] sm:$0xff] %vm34, %v8673
  %8738 = vst.msk [vmem:[#allocation2 + $0xf8] sm:$0xff] %vm34, %v8674
  %8739 = vst.msk [vmem:[#allocation2 + $0x100] sm:$0xff] %vm34, %v8675
  %8740 = vst.msk [vmem:[#allocation2 + $0x108] sm:$0xff] %vm34, %v8676
  %8741 = vst.msk [vmem:[#allocation2 + $0x110] sm:$0xff] %vm34, %v8677
  %8742 = vst.msk [vmem:[#allocation2 + $0x118] sm:$0xff] %vm34, %v8678
  %8743 = vst.msk [vmem:[#allocation2 + $0x120] sm:$0xff] %vm34, %v8679
  %8744 = vst.msk [vmem:[#allocation2 + $0x128] sm:$0xff] %vm34, %v8680
  %8745 = vst.msk [vmem:[#allocation2 + $0x130] sm:$0xff] %vm34, %v8681
  %8746 = vst.msk [vmem:[#allocation2 + $0x138] sm:$0xff] %vm34, %v8682
  %8747 = vst.msk [vmem:[#allocation2 + $0x140] sm:$0xff] %vm34, %v8683
  %8748 = vst.msk [vmem:[#allocation2 + $0x148] sm:$0xff] %vm34, %v8684
  %8749 = vst.msk [vmem:[#allocation2 + $0x150] sm:$0xff] %vm34, %v8685
  %8750 = vst.msk [vmem:[#allocation2 + $0x158] sm:$0xff] %vm34, %v8686
  %8751 = vst.msk [vmem:[#allocation2 + $0x160] sm:$0xff] %vm34, %v8687
  %8752 = vst.msk [vmem:[#allocation2 + $0x168] sm:$0xff] %vm34, %v8688
  %8753 = vst.msk [vmem:[#allocation2 + $0x170] sm:$0xff] %vm34, %v8689
  %8754 = vst.msk [vmem:[#allocation2 + $0x178] sm:$0xff] %vm34, %v8690
  %8755 = vst.msk [vmem:[#allocation2 + $0x180] sm:$0xff] %vm34, %v8691
  %8756 = vst.msk [vmem:[#allocation2 + $0x188] sm:$0xff] %vm34, %v8692
  %8757 = vst.msk [vmem:[#allocation2 + $0x190] sm:$0xff] %vm34, %v8693
  %8758 = vst.msk [vmem:[#allocation2 + $0x198] sm:$0xff] %vm34, %v8694
  %8759 = vst.msk [vmem:[#allocation2 + $0x1a0] sm:$0xff] %vm34, %v8695
  %8760 = vst.msk [vmem:[#allocation2 + $0x1a8] sm:$0xff] %vm34, %v8696
  %8761 = vst.msk [vmem:[#allocation2 + $0x1b0] sm:$0xff] %vm34, %v8697
  %8762 = vst.msk [vmem:[#allocation2 + $0x1b8] sm:$0xff] %vm34, %v8698
  %8763 = vst.msk [vmem:[#allocation2 + $0x1c0] sm:$0xff] %vm34, %v8699
  %8764 = vst.msk [vmem:[#allocation2 + $0x1c8] sm:$0xff] %vm34, %v8700
  %8765 = vst.msk [vmem:[#allocation2 + $0x1d0] sm:$0xff] %vm34, %v8701
  %8766 = vst.msk [vmem:[#allocation2 + $0x1d8] sm:$0xff] %vm34, %v8702
  %8767 = vst.msk [vmem:[#allocation2 + $0x1e0] sm:$0xff] %vm34, %v8703
  %8768 = vst.msk [vmem:[#allocation2 + $0x1e8] sm:$0xff] %vm34, %v8704
  %8769 = vst.msk [vmem:[#allocation2 + $0x1f0] sm:$0xff] %vm34, %v8705
  %8770 = vst.msk [vmem:[#allocation2 + $0x1f8] sm:$0xff] %vm34, %v8706
  %8771 = vst.msk [vmem:[#allocation2 + $0x200] sm:$0xff] %vm34, %v8707
  %8772 = vst.msk [vmem:[#allocation2 + $0x208] sm:$0xff] %vm34, %v8708
  %s8773 = scalar_lea.vmem [#allocation2], 25
  %v8774 = vld [vmem:[%s8773] ss:$64 sm:$0x1]
  %v8775 = vld [vmem:[%s8773] ss:$64 sm:$0x2]
  %v8776 = vor.u32 %v8774, %v8775
  %v8777 = vld [vmem:[%s8773] ss:$64 sm:$0x4]
  %v8778 = vor.u32 %v8776, %v8777
  %v8779 = vld [vmem:[%s8773] ss:$64 sm:$0x8]
  %v8780 = vor.u32 %v8778, %v8779
  %v8781 = vld [vmem:[%s8773] ss:$64 sm:$0x10]
  %v8782 = vor.u32 %v8780, %v8781
  %v8783 = vld [vmem:[%s8773] ss:$64 sm:$0x20]
  %v8784 = vor.u32 %v8782, %v8783
  %v8785 = vld [vmem:[%s8773] ss:$64 sm:$0x40]
  %v8786 = vor.u32 %v8784, %v8785
  %v8787 = vld [vmem:[%s8773] ss:$64 sm:$0x80]
  %v8788 = vor.u32 %v8786, %v8787
  %8789 = vst.msk [vmem:[#allocation4] sm:$0xff] %vm34, %v8788
  %s8790 = scalar_lea.vmem [#allocation2], 27
  %v8791 = vld [vmem:[%s8790] ss:$64 sm:$0x1]
  %v8792 = vld [vmem:[%s8790] ss:$64 sm:$0x2]
  %v8793 = vor.u32 %v8791, %v8792
  %v8794 = vld [vmem:[%s8790] ss:$64 sm:$0x4]
  %v8795 = vor.u32 %v8793, %v8794
  %v8796 = vld [vmem:[%s8790] ss:$64 sm:$0x8]
  %v8797 = vor.u32 %v8795, %v8796
  %v8798 = vld [vmem:[%s8790] ss:$64 sm:$0x10]
  %v8799 = vor.u32 %v8797, %v8798
  %v8800 = vld [vmem:[%s8790] ss:$64 sm:$0x20]
  %v8801 = vor.u32 %v8799, %v8800
  %v8802 = vld [vmem:[%s8790] ss:$64 sm:$0x40]
  %v8803 = vor.u32 %v8801, %v8802
  %v8804 = vld [vmem:[%s8790] ss:$64 sm:$0x80]
  %v8805 = vor.u32 %v8803, %v8804
  %8807 = vrot.lane.b32.xlu0 %v8805, 32
  %v8808 = vpop.permute.xlu0 %8807
  %8810 = vst.msk [vmem:[#allocation4] sm:$0xff] %vm615, %v8808
  %s8811 = scalar_lea.vmem [#allocation2], 29
  %v8812 = vld [vmem:[%s8811] ss:$64 sm:$0x1]
  %v8813 = vld [vmem:[%s8811] ss:$64 sm:$0x2]
  %v8814 = vor.u32 %v8812, %v8813
  %v8815 = vld [vmem:[%s8811] ss:$64 sm:$0x4]
  %v8816 = vor.u32 %v8814, %v8815
  %v8817 = vld [vmem:[%s8811] ss:$64 sm:$0x8]
  %v8818 = vor.u32 %v8816, %v8817
  %v8819 = vld [vmem:[%s8811] ss:$64 sm:$0x10]
  %v8820 = vor.u32 %v8818, %v8819
  %v8821 = vld [vmem:[%s8811] ss:$64 sm:$0x20]
  %v8822 = vor.u32 %v8820, %v8821
  %v8823 = vld [vmem:[%s8811] ss:$64 sm:$0x40]
  %v8824 = vor.u32 %v8822, %v8823
  %v8825 = vld [vmem:[%s8811] ss:$64 sm:$0x80]
  %v8826 = vor.u32 %v8824, %v8825
  %8828 = vrot.lane.b32.xlu0 %v8826, 64
  %v8829 = vpop.permute.xlu0 %8828
  %8831 = vst.msk [vmem:[#allocation4] sm:$0xff] %vm1000, %v8829
  %s8832 = scalar_lea.vmem [#allocation2], 41
  %v8833 = vld [vmem:[%s8832] ss:$64 sm:$0x1]
  %v8834 = vld [vmem:[%s8832] ss:$64 sm:$0x2]
  %v8835 = vor.u32 %v8833, %v8834
  %v8836 = vld [vmem:[%s8832] ss:$64 sm:$0x4]
  %v8837 = vor.u32 %v8835, %v8836
  %v8838 = vld [vmem:[%s8832] ss:$64 sm:$0x8]
  %v8839 = vor.u32 %v8837, %v8838
  %v8840 = vld [vmem:[%s8832] ss:$64 sm:$0x10]
  %v8841 = vor.u32 %v8839, %v8840
  %v8842 = vld [vmem:[%s8832] ss:$64 sm:$0x20]
  %v8843 = vor.u32 %v8841, %v8842
  %v8844 = vld [vmem:[%s8832] ss:$64 sm:$0x40]
  %v8845 = vor.u32 %v8843, %v8844
  %v8846 = vld [vmem:[%s8832] ss:$64 sm:$0x80]
  %v8847 = vor.u32 %v8845, %v8846
  %8849 = vrot.lane.b32.xlu0 %v8847, 96
  %v8850 = vpop.permute.xlu0 %8849
  %8852 = vst.msk [vmem:[#allocation4] sm:$0xff] %vm1385, %v8850
  %s8853 = scalar_lea.vmem [#allocation2], 43
  %v8854 = vld [vmem:[%s8853] ss:$64 sm:$0x1]
  %v8855 = vld [vmem:[%s8853] ss:$64 sm:$0x2]
  %v8856 = vor.u32 %v8854, %v8855
  %v8857 = vld [vmem:[%s8853] ss:$64 sm:$0x4]
  %v8858 = vor.u32 %v8856, %v8857
  %v8859 = vld [vmem:[%s8853] ss:$64 sm:$0x8]
  %v8860 = vor.u32 %v8858, %v8859
  %v8861 = vld [vmem:[%s8853] ss:$64 sm:$0x10]
  %v8862 = vor.u32 %v8860, %v8861
  %v8863 = vld [vmem:[%s8853] ss:$64 sm:$0x20]
  %v8864 = vor.u32 %v8862, %v8863
  %v8865 = vld [vmem:[%s8853] ss:$64 sm:$0x40]
  %v8866 = vor.u32 %v8864, %v8865
  %v8867 = vld [vmem:[%s8853] ss:$64 sm:$0x80]
  %v8868 = vor.u32 %v8866, %v8867
  %8869 = vst.msk [vmem:[#allocation4 + $0x8] sm:$0xff] %vm34, %v8868
  %s8870 = scalar_lea.vmem [#allocation2], 45
  %v8871 = vld [vmem:[%s8870] ss:$64 sm:$0x1]
  %v8872 = vld [vmem:[%s8870] ss:$64 sm:$0x2]
  %v8873 = vor.u32 %v8871, %v8872
  %v8874 = vld [vmem:[%s8870] ss:$64 sm:$0x4]
  %v8875 = vor.u32 %v8873, %v8874
  %v8876 = vld [vmem:[%s8870] ss:$64 sm:$0x8]
  %v8877 = vor.u32 %v8875, %v8876
  %v8878 = vld [vmem:[%s8870] ss:$64 sm:$0x10]
  %v8879 = vor.u32 %v8877, %v8878
  %v8880 = vld [vmem:[%s8870] ss:$64 sm:$0x20]
  %v8881 = vor.u32 %v8879, %v8880
  %v8882 = vld [vmem:[%s8870] ss:$64 sm:$0x40]
  %v8883 = vor.u32 %v8881, %v8882
  %v8884 = vld [vmem:[%s8870] ss:$64 sm:$0x80]
  %v8885 = vor.u32 %v8883, %v8884
  %8887 = vrot.lane.b32.xlu0 %v8885, 32
  %v8888 = vpop.permute.xlu0 %8887
  %8890 = vst.msk [vmem:[#allocation4 + $0x8] sm:$0xff] %vm615, %v8888
  %s8891 = scalar_lea.vmem [#allocation2], 57
  %v8892 = vld [vmem:[%s8891] ss:$64 sm:$0x1]
  %v8893 = vld [vmem:[%s8891] ss:$64 sm:$0x2]
  %v8894 = vor.u32 %v8892, %v8893
  %v8895 = vld [vmem:[%s8891] ss:$64 sm:$0x4]
  %v8896 = vor.u32 %v8894, %v8895
  %v8897 = vld [vmem:[%s8891] ss:$64 sm:$0x8]
  %v8898 = vor.u32 %v8896, %v8897
  %v8899 = vld [vmem:[%s8891] ss:$64 sm:$0x10]
  %v8900 = vor.u32 %v8898, %v8899
  %v8901 = vld [vmem:[%s8891] ss:$64 sm:$0x20]
  %v8902 = vor.u32 %v8900, %v8901
  %v8903 = vld [vmem:[%s8891] ss:$64 sm:$0x40]
  %v8904 = vor.u32 %v8902, %v8903
  %v8905 = vld [vmem:[%s8891] ss:$64 sm:$0x80]
  %v8906 = vor.u32 %v8904, %v8905
  %8908 = vrot.lane.b32.xlu0 %v8906, 64
  %v8909 = vpop.permute.xlu0 %8908
  %8911 = vst.msk [vmem:[#allocation4 + $0x8] sm:$0xff] %vm1000, %v8909
  %s8912 = scalar_lea.vmem [#allocation2], 59
  %v8913 = vld [vmem:[%s8912] ss:$64 sm:$0x1]
  %v8914 = vld [vmem:[%s8912] ss:$64 sm:$0x2]
  %v8915 = vor.u32 %v8913, %v8914
  %v8916 = vld [vmem:[%s8912] ss:$64 sm:$0x4]
  %v8917 = vor.u32 %v8915, %v8916
  %v8918 = vld [vmem:[%s8912] ss:$64 sm:$0x8]
  %v8919 = vor.u32 %v8917, %v8918
  %v8920 = vld [vmem:[%s8912] ss:$64 sm:$0x10]
  %v8921 = vor.u32 %v8919, %v8920
  %v8922 = vld [vmem:[%s8912] ss:$64 sm:$0x20]
  %v8923 = vor.u32 %v8921, %v8922
  %v8924 = vld [vmem:[%s8912] ss:$64 sm:$0x40]
  %v8925 = vor.u32 %v8923, %v8924
  %v8926 = vld [vmem:[%s8912] ss:$64 sm:$0x80]
  %v8927 = vor.u32 %v8925, %v8926
  %8929 = vrot.lane.b32.xlu0 %v8927, 96
  %v8930 = vpop.permute.xlu0 %8929
  %8932 = vst.msk [vmem:[#allocation4 + $0x8] sm:$0xff] %vm1385, %v8930
  %s8933 = scalar_lea.vmem [#allocation2], 61
  %v8934 = vld [vmem:[%s8933] ss:$64 sm:$0x1]
  %v8935 = vld [vmem:[%s8933] ss:$64 sm:$0x2]
  %v8936 = vor.u32 %v8934, %v8935
  %v8937 = vld [vmem:[%s8933] ss:$64 sm:$0x4]
  %v8938 = vor.u32 %v8936, %v8937
  %v8939 = vld [vmem:[%s8933] ss:$64 sm:$0x8]
  %v8940 = vor.u32 %v8938, %v8939
  %v8941 = vld [vmem:[%s8933] ss:$64 sm:$0x10]
  %v8942 = vor.u32 %v8940, %v8941
  %v8943 = vld [vmem:[%s8933] ss:$64 sm:$0x20]
  %v8944 = vor.u32 %v8942, %v8943
  %v8945 = vld [vmem:[%s8933] ss:$64 sm:$0x40]
  %v8946 = vor.u32 %v8944, %v8945
  %v8947 = vld [vmem:[%s8933] ss:$64 sm:$0x80]
  %v8948 = vor.u32 %v8946, %v8947
  %8949 = vst.msk [vmem:[#allocation4 + $0x10] sm:$0xff] %vm34, %v8948
  %v8950 = vld [vmem:[#allocation4] sm:$0xff]
  %v8951 = vld [vmem:[#allocation4 + $0x8] sm:$0xff]
  %v8952 = vld [vmem:[#allocation4 + $0x10] sm:$0xff]
  %v8953 = vld [vmem:[%s6] sm:$0xff]
  %v8954 = vld [vmem:[%s6 + $0x8] sm:$0xff]
  %v8955 = vld [vmem:[%s6 + $0x10] sm:$0xff]
  %v8956 = vld [vmem:[%s6 + $0x18] sm:$0xff]
  %v8957 = vld [vmem:[%s6 + $0x20] sm:$0xff]
  %v8958 = vld [vmem:[%s6 + $0x28] sm:$0xff]
  %v8959 = vld [vmem:[%s6 + $0x30] sm:$0xff]
  %v8960 = vld [vmem:[%s6 + $0x38] sm:$0xff]
  %v8961 = vld [vmem:[%s6 + $0x40] sm:$0xff]
  %v8962 = vld [vmem:[%s6 + $0x48] sm:$0xff]
  %v8963 = vld [vmem:[%s6 + $0x50] sm:$0xff]
  %v8964 = vld [vmem:[%s6 + $0x58] sm:$0xff]
  %v8965 = vld [vmem:[%s6 + $0x60] sm:$0xff]
  %v8966 = vld [vmem:[%s6 + $0x68] sm:$0xff]
  %v8967 = vld [vmem:[%s6 + $0x70] sm:$0xff]
  %v8968 = vld [vmem:[%s6 + $0x78] sm:$0xff]
  %v8969 = vld [vmem:[%s6 + $0x80] sm:$0xff]
  %v8970 = vld [vmem:[%s6 + $0x88] sm:$0xff]
  %v8971 = vld [vmem:[%s6 + $0x90] sm:$0xff]
  %v8972 = vld [vmem:[%s6 + $0x98] sm:$0xff]
  %v8973 = vld [vmem:[%s6 + $0xa0] sm:$0xff]
  %v8974 = vld [vmem:[%s6 + $0xa8] sm:$0xff]
  %v8975 = vld [vmem:[%s6 + $0xb0] sm:$0xff]
  %v8976 = vld [vmem:[%s6 + $0xb8] sm:$0xff]
  %v8977 = vld [vmem:[%s6 + $0xc0] sm:$0xff]
  %v8978 = vld [vmem:[%s6 + $0xc8] sm:$0xff]
  %v8979 = vld [vmem:[%s6 + $0xd0] sm:$0xff]
  %v8980 = vld [vmem:[%s6 + $0xd8] sm:$0xff]
  %v8981 = vld [vmem:[%s6 + $0xe0] sm:$0xff]
  %v8982 = vld [vmem:[%s6 + $0xe8] sm:$0xff]
  %v8983 = vld [vmem:[%s6 + $0xf0] sm:$0xff]
  %v8984 = vld [vmem:[%s6 + $0xf8] sm:$0xff]
  %v8985 = vld [vmem:[%s6 + $0x100] sm:$0xff]
  %v8986 = vld [vmem:[%s6 + $0x108] sm:$0xff]
  %v8987 = vld [vmem:[%s6 + $0x110] sm:$0xff]
  %v8988 = vld [vmem:[%s6 + $0x118] sm:$0xff]
  %v8989 = vld [vmem:[%s6 + $0x120] sm:$0xff]
  %v8990 = vld [vmem:[%s6 + $0x128] sm:$0xff]
  %v8991 = vld [vmem:[%s6 + $0x130] sm:$0xff]
  %v8992 = vld [vmem:[%s6 + $0x138] sm:$0xff]
  %v8993 = vld [vmem:[%s6 + $0x140] sm:$0xff]
  %v8994 = vld [vmem:[%s6 + $0x148] sm:$0xff]
  %v8995 = vld [vmem:[%s6 + $0x150] sm:$0xff]
  %v8996 = vld [vmem:[%s6 + $0x158] sm:$0xff]
  %v8997 = vld [vmem:[%s6 + $0x160] sm:$0xff]
  %v8998 = vld [vmem:[%s6 + $0x168] sm:$0xff]
  %v8999 = vld [vmem:[%s6 + $0x170] sm:$0xff]
  %v9000 = vld [vmem:[%s6 + $0x178] sm:$0xff]
  %v9001 = vld [vmem:[%s6 + $0x180] sm:$0xff]
  %v9002 = vld [vmem:[%s6 + $0x188] sm:$0xff]
  %v9003 = vld [vmem:[%s6 + $0x190] sm:$0xff]
  %v9004 = vld [vmem:[%s6 + $0x198] sm:$0xff]
  %v9005 = vld [vmem:[%s6 + $0x1a0] sm:$0xff]
  %v9006 = vld [vmem:[%s6 + $0x1a8] sm:$0xff]
  %v9007 = vld [vmem:[%s6 + $0x1b0] sm:$0xff]
  %v9008 = vld [vmem:[%s6 + $0x1b8] sm:$0xff]
  %v9009 = vld [vmem:[%s6 + $0x1c0] sm:$0xff]
  %v9010 = vld [vmem:[%s6 + $0x1c8] sm:$0xff]
  %v9011 = vld [vmem:[%s6 + $0x1d0] sm:$0xff]
  %v9012 = vld [vmem:[%s6 + $0x1d8] sm:$0xff]
  %v9013 = vld [vmem:[%s6 + $0x1e0] sm:$0xff]
  %v9014 = vld [vmem:[%s6 + $0x1e8] sm:$0xff]
  %v9015 = vld [vmem:[%s6 + $0x1f0] sm:$0xff]
  %v9016 = vld [vmem:[%s6 + $0x1f8] sm:$0xff]
  %v9017 = vld [vmem:[%s6 + $0x200] sm:$0xff]
  %v9018 = vld [vmem:[%s6 + $0x208] sm:$0xff]
  %v9019 = vld [vmem:[%s6 + $0x210] sm:$0xff]
  %v9020 = vld [vmem:[%s6 + $0x218] sm:$0xff]
  %v9021 = vld [vmem:[%s6 + $0x220] sm:$0xff]
  %v9022 = vld [vmem:[%s6 + $0x228] sm:$0xff]
  %v9023 = vld [vmem:[%s6 + $0x230] sm:$0xff]
  %v9024 = vld [vmem:[%s6 + $0x238] sm:$0xff]
  %v9025 = vld [vmem:[%s6 + $0x240] sm:$0xff]
  %v9026 = vld [vmem:[%s6 + $0x248] sm:$0xff]
  %v9027 = vld [vmem:[%s6 + $0x250] sm:$0xff]
  %v9028 = vld [vmem:[%s6 + $0x258] sm:$0xff]
  %v9029 = vld [vmem:[%s6 + $0x260] sm:$0xff]
  %v9030 = vld [vmem:[%s6 + $0x268] sm:$0xff]
  %v9031 = vld [vmem:[%s6 + $0x270] sm:$0xff]
  %v9032 = vld [vmem:[%s6 + $0x278] sm:$0xff]
  %v9033 = vld [vmem:[%s6 + $0x280] sm:$0xff]
  %v9034 = vld [vmem:[%s6 + $0x288] sm:$0xff]
  %v9035 = vld [vmem:[%s6 + $0x290] sm:$0xff]
  %v9036 = vld [vmem:[%s6 + $0x298] sm:$0xff]
  %v9037 = vld [vmem:[%s6 + $0x2a0] sm:$0xff]
  %v9038 = vld [vmem:[%s6 + $0x2a8] sm:$0xff]
  %v9039 = vld [vmem:[%s6 + $0x2b0] sm:$0xff]
  %v9040 = vld [vmem:[%s6 + $0x2b8] sm:$0xff]
  %v9041 = vld [vmem:[%s6 + $0x2c0] sm:$0xff]
  %v9042 = vld [vmem:[%s6 + $0x2c8] sm:$0xff]
  %v9043 = vld [vmem:[%s6 + $0x2d0] sm:$0xff]
  %v9044 = vld [vmem:[%s6 + $0x2d8] sm:$0xff]
  %v9045 = vld [vmem:[%s6 + $0x2e0] sm:$0xff]
  %v9046 = vld [vmem:[%s6 + $0x2e8] sm:$0xff]
  %v9047 = vld [vmem:[%s6 + $0x2f0] sm:$0xff]
  %v9048 = vld [vmem:[%s6 + $0x2f8] sm:$0xff]
  %v9049 = vld [vmem:[%s6 + $0x300] sm:$0xff]
  %v9050 = vld [vmem:[%s6 + $0x308] sm:$0xff]
  %v9051 = vld [vmem:[%s6 + $0x310] sm:$0xff]
  %v9052 = vld [vmem:[%s6 + $0x318] sm:$0xff]
  %v9053 = vld [vmem:[%s6 + $0x320] sm:$0xff]
  %v9054 = vld [vmem:[%s6 + $0x328] sm:$0xff]
  %v9055 = vld [vmem:[%s6 + $0x330] sm:$0xff]
  %v9056 = vld [vmem:[%s6 + $0x338] sm:$0xff]
  %v9057 = vld [vmem:[%s6 + $0x340] sm:$0xff]
  %v9058 = vld [vmem:[%s6 + $0x348] sm:$0xff]
  %v9059 = vld [vmem:[%s6 + $0x350] sm:$0xff]
  %v9060 = vld [vmem:[%s6 + $0x358] sm:$0xff]
  %v9062 = vsel %vm34, %v8952, 0
  %9064 = vmatprep.subr.mxu0 %v8999
  %9065 = vmatpush1.msra.mxu0 %v8998
  %9066 = vmatprep.subr.mxu0 %v8996
  %9067 = vmatpush1.msra.mxu0 %v8995
  %9068 = vmatprep.subr.mxu0 %v8993
  %9069 = vmatpush1.msra.mxu0 %v8992
  %9070 = vmatprep.subr.mxu0 %v8990
  %9071 = vmatpush1.msra.mxu0 %v8989
  %9072 = vmatprep.subr.mxu0 %v8987
  %9073 = vmatpush1.msra.mxu0 %v8986
  %9074 = vmatprep.subr.mxu0 %v8984
  %9075 = vmatpush1.msra.mxu0 %v8983
  %9076 = vmatprep.subr.mxu0 %v8981
  %9077 = vmatpush1.msra.mxu0 %v8980
  %9078 = vmatprep.subr.mxu0 %v8978
  %9079 = vmatpush1.msra.mxu0 %v8977
  %9080 = vmatprep.subr.mxu0 %v8975
  %9081 = vmatpush1.msra.mxu0 %v8974
  %9082 = vmatprep.subr.mxu0 %v8972
  %9083 = vmatpush1.msra.mxu0 %v8971
  %9084 = vmatprep.subr.mxu0 %v8969
  %9085 = vmatpush1.msra.mxu0 %v8968
  %9086 = vmatprep.subr.mxu0 %v8966
  %9087 = vmatpush1.msra.mxu0 %v8965
  %9088 = vmatprep.subr.mxu0 %v8963
  %9089 = vmatpush1.msra.mxu0 %v8962
  %9090 = vmatprep.subr.mxu0 %v8960
  %9091 = vmatpush1.msra.mxu0 %v8959
  %9092 = vmatprep.subr.mxu0 %v8957
  %9093 = vmatpush1.msra.mxu0 %v8956
  %9094 = vmatprep.subr.mxu0 %v8954
  %9095 = vmatpush1.msra.mxu0 %v8953
  %9096 = vmatprep.subr.mxu0 %v9047
  %9097 = vmatpush2.msra.mxu0 %v9046
  %9098 = vmatprep.subr.mxu0 %v9044
  %9099 = vmatpush2.msra.mxu0 %v9043
  %9100 = vmatprep.subr.mxu0 %v9041
  %9101 = vmatpush2.msra.mxu0 %v9040
  %9102 = vmatprep.subr.mxu0 %v9038
  %9103 = vmatpush2.msra.mxu0 %v9037
  %9104 = vmatprep.subr.mxu0 %v9035
  %9105 = vmatpush2.msra.mxu0 %v9034
  %9106 = vmatprep.subr.mxu0 %v9032
  %9107 = vmatpush2.msra.mxu0 %v9031
  %9108 = vmatprep.subr.mxu0 %v9029
  %9109 = vmatpush2.msra.mxu0 %v9028
  %9110 = vmatprep.subr.mxu0 %v9026
  %9111 = vmatpush2.msra.mxu0 %v9025
  %9112 = vmatprep.subr.mxu0 %v9023
  %9113 = vmatpush2.msra.mxu0 %v9022
  %9114 = vmatprep.subr.mxu0 %v9020
  %9115 = vmatpush2.msra.mxu0 %v9019
  %9116 = vmatprep.subr.mxu0 %v9017
  %9117 = vmatpush2.msra.mxu0 %v9016
  %9118 = vmatprep.subr.mxu0 %v9014
  %9119 = vmatpush2.msra.mxu0 %v9013
  %9120 = vmatprep.subr.mxu0 %v9011
  %9121 = vmatpush2.msra.mxu0 %v9010
  %9122 = vmatprep.subr.mxu0 %v9008
  %9123 = vmatpush2.msra.mxu0 %v9007
  %9124 = vmatprep.subr.mxu0 %v9005
  %9125 = vmatpush2.msra.mxu0 %v9004
  %9126 = vmatprep.subr.mxu0 %v9002
  %9127 = vmatpush2.msra.mxu0 %v9001
  %9128 = vmatprep.mubr.f32.mxu0 %v8951
  %9129 = vmatmul.mubr.f32.gmra.mxu0 %v8950
  %v9130 = vpop.f32.mrf.mxu0
  %v9131 = vadd.f32 0.0, %v9130
  %v9132 = vpop.f32.mrf.mxu0
  %v9133 = vadd.f32 0.0, %v9132
  %9134 = vdwg.mxu0
  %9135 = vmatprep.subr.mxu0 0.0
  %9136 = vmatpush1.msra.mxu0 0.0
  %9137 = vmatprep.subr.mxu0 0.0
  %9138 = vmatpush1.msra.mxu0 0.0
  %9139 = vmatprep.subr.mxu0 0.0
  %9140 = vmatpush1.msra.mxu0 0.0
  %9141 = vmatprep.subr.mxu0 0.0
  %9142 = vmatpush1.msra.mxu0 0.0
  %9143 = vmatprep.subr.mxu0 0.0
  %9144 = vmatpush1.msra.mxu0 0.0
  %9145 = vmatprep.subr.mxu0 0.0
  %9146 = vmatpush1.msra.mxu0 0.0
  %9147 = vmatprep.subr.mxu0 0.0
  %9148 = vmatpush1.msra.mxu0 0.0
  %9149 = vmatprep.subr.mxu0 0.0
  %9150 = vmatpush1.msra.mxu0 0.0
  %9151 = vmatprep.subr.mxu0 0.0
  %9152 = vmatpush1.msra.mxu0 0.0
  %9153 = vmatprep.subr.mxu0 0.0
  %9154 = vmatpush1.msra.mxu0 0.0
  %9155 = vmatprep.subr.mxu0 0.0
  %9156 = vmatpush1.msra.mxu0 0.0
  %9157 = vmatprep.subr.mxu0 0.0
  %9158 = vmatpush1.msra.mxu0 0.0
  %9159 = vmatprep.subr.mxu0 %v9059
  %9160 = vmatpush1.msra.mxu0 %v9058
  %9161 = vmatprep.subr.mxu0 %v9056
  %9162 = vmatpush1.msra.mxu0 %v9055
  %9163 = vmatprep.subr.mxu0 %v9053
  %9164 = vmatpush1.msra.mxu0 %v9052
  %9165 = vmatprep.subr.mxu0 %v9050
  %9166 = vmatpush1.msra.mxu0 %v9049
  %9167 = vmatprep.subr.mxu0 0.0
  %9168 = vmatpush2.msra.mxu0 0.0
  %9169 = vmatprep.subr.mxu0 0.0
  %9170 = vmatpush2.msra.mxu0 0.0
  %9171 = vmatprep.subr.mxu0 0.0
  %9172 = vmatpush2.msra.mxu0 0.0
  %9173 = vmatprep.subr.mxu0 0.0
  %9174 = vmatpush2.msra.mxu0 0.0
  %9175 = vmatprep.subr.mxu0 0.0
  %9176 = vmatpush2.msra.mxu0 0.0
  %9177 = vmatprep.subr.mxu0 0.0
  %9178 = vmatpush2.msra.mxu0 0.0
  %9179 = vmatprep.subr.mxu0 0.0
  %9180 = vmatpush2.msra.mxu0 0.0
  %9181 = vmatprep.subr.mxu0 0.0
  %9182 = vmatpush2.msra.mxu0 0.0
  %9183 = vmatprep.subr.mxu0 0.0
  %9184 = vmatpush2.msra.mxu0 0.0
  %9185 = vmatprep.subr.mxu0 0.0
  %9186 = vmatpush2.msra.mxu0 0.0
  %9187 = vmatprep.subr.mxu0 0.0
  %9188 = vmatpush2.msra.mxu0 0.0
  %9189 = vmatprep.subr.mxu0 0.0
  %9190 = vmatpush2.msra.mxu0 0.0
  %9191 = vmatprep.subr.mxu0 0.0
  %9192 = vmatpush2.msra.mxu0 0.0
  %9193 = vmatprep.subr.mxu0 0.0
  %9194 = vmatpush2.msra.mxu0 0.0
  %9195 = vmatprep.subr.mxu0 0.0
  %9196 = vmatpush2.msra.mxu0 0.0
  %9197 = vmatprep.subr.mxu0 0.0
  %9198 = vmatpush2.msra.mxu0 0.0
  %9199 = vmatprep.mubr.f32.mxu0 0.0
  %9200 = vmatmul.mubr.f32.gmra.mxu0 %v9062
  %v9201 = vpop.f32.mrf.mxu0
  %v9202 = vadd.f32 %v9131, %v9201
  %v9203 = vpop.f32.mrf.mxu0
  %v9204 = vadd.f32 %v9133, %v9203
  %9205 = vdwg.mxu0
  %9206 = vmatprep.subr.mxu0 0.0
  %9207 = vmatpush1.msra.mxu0 %v9000
  %9208 = vmatprep.subr.mxu0 0.0
  %9209 = vmatpush1.msra.mxu0 %v8997
  %9210 = vmatprep.subr.mxu0 0.0
  %9211 = vmatpush1.msra.mxu0 %v8994
  %9212 = vmatprep.subr.mxu0 0.0
  %9213 = vmatpush1.msra.mxu0 %v8991
  %9214 = vmatprep.subr.mxu0 0.0
  %9215 = vmatpush1.msra.mxu0 %v8988
  %9216 = vmatprep.subr.mxu0 0.0
  %9217 = vmatpush1.msra.mxu0 %v8985
  %9218 = vmatprep.subr.mxu0 0.0
  %9219 = vmatpush1.msra.mxu0 %v8982
  %9220 = vmatprep.subr.mxu0 0.0
  %9221 = vmatpush1.msra.mxu0 %v8979
  %9222 = vmatprep.subr.mxu0 0.0
  %9223 = vmatpush1.msra.mxu0 %v8976
  %9224 = vmatprep.subr.mxu0 0.0
  %9225 = vmatpush1.msra.mxu0 %v8973
  %9226 = vmatprep.subr.mxu0 0.0
  %9227 = vmatpush1.msra.mxu0 %v8970
  %9228 = vmatprep.subr.mxu0 0.0
  %9229 = vmatpush1.msra.mxu0 %v8967
  %9230 = vmatprep.subr.mxu0 0.0
  %9231 = vmatpush1.msra.mxu0 %v8964
  %9232 = vmatprep.subr.mxu0 0.0
  %9233 = vmatpush1.msra.mxu0 %v8961
  %9234 = vmatprep.subr.mxu0 0.0
  %9235 = vmatpush1.msra.mxu0 %v8958
  %9236 = vmatprep.subr.mxu0 0.0
  %9237 = vmatpush1.msra.mxu0 %v8955
  %9238 = vmatprep.subr.mxu0 0.0
  %9239 = vmatpush2.msra.mxu0 %v9048
  %9240 = vmatprep.subr.mxu0 0.0
  %9241 = vmatpush2.msra.mxu0 %v9045
  %9242 = vmatprep.subr.mxu0 0.0
  %9243 = vmatpush2.msra.mxu0 %v9042
  %9244 = vmatprep.subr.mxu0 0.0
  %9245 = vmatpush2.msra.mxu0 %v9039
  %9246 = vmatprep.subr.mxu0 0.0
  %9247 = vmatpush2.msra.mxu0 %v9036
  %9248 = vmatprep.subr.mxu0 0.0
  %9249 = vmatpush2.msra.mxu0 %v9033
  %9250 = vmatprep.subr.mxu0 0.0
  %9251 = vmatpush2.msra.mxu0 %v9030
  %9252 = vmatprep.subr.mxu0 0.0
  %9253 = vmatpush2.msra.mxu0 %v9027
  %9254 = vmatprep.subr.mxu0 0.0
  %9255 = vmatpush2.msra.mxu0 %v9024
  %9256 = vmatprep.subr.mxu0 0.0
  %9257 = vmatpush2.msra.mxu0 %v9021
  %9258 = vmatprep.subr.mxu0 0.0
  %9259 = vmatpush2.msra.mxu0 %v9018
  %9260 = vmatprep.subr.mxu0 0.0
  %9261 = vmatpush2.msra.mxu0 %v9015
  %9262 = vmatprep.subr.mxu0 0.0
  %9263 = vmatpush2.msra.mxu0 %v9012
  %9264 = vmatprep.subr.mxu0 0.0
  %9265 = vmatpush2.msra.mxu0 %v9009
  %9266 = vmatprep.subr.mxu0 0.0
  %9267 = vmatpush2.msra.mxu0 %v9006
  %9268 = vmatprep.subr.mxu0 0.0
  %9269 = vmatpush2.msra.mxu0 %v9003
  %9270 = vmatprep.mubr.f32.mxu0 %v8951
  %9271 = vmatmul.mubr.f32.gmra.mxu0 %v8950
  %v9272 = vpop.f32.mrf.mxu0
  %v9273 = vadd.f32 0.0, %v9272
  %v9274 = vpop.f32.mrf.mxu0
  %9275 = vdwg.mxu0
  %9276 = vmatprep.subr.mxu0 0.0
  %9277 = vmatpush1.msra.mxu0 0.0
  %9278 = vmatprep.subr.mxu0 0.0
  %9279 = vmatpush1.msra.mxu0 0.0
  %9280 = vmatprep.subr.mxu0 0.0
  %9281 = vmatpush1.msra.mxu0 0.0
  %9282 = vmatprep.subr.mxu0 0.0
  %9283 = vmatpush1.msra.mxu0 0.0
  %9284 = vmatprep.subr.mxu0 0.0
  %9285 = vmatpush1.msra.mxu0 0.0
  %9286 = vmatprep.subr.mxu0 0.0
  %9287 = vmatpush1.msra.mxu0 0.0
  %9288 = vmatprep.subr.mxu0 0.0
  %9289 = vmatpush1.msra.mxu0 0.0
  %9290 = vmatprep.subr.mxu0 0.0
  %9291 = vmatpush1.msra.mxu0 0.0
  %9292 = vmatprep.subr.mxu0 0.0
  %9293 = vmatpush1.msra.mxu0 0.0
  %9294 = vmatprep.subr.mxu0 0.0
  %9295 = vmatpush1.msra.mxu0 0.0
  %9296 = vmatprep.subr.mxu0 0.0
  %9297 = vmatpush1.msra.mxu0 0.0
  %9298 = vmatprep.subr.mxu0 0.0
  %9299 = vmatpush1.msra.mxu0 0.0
  %9300 = vmatprep.subr.mxu0 0.0
  %9301 = vmatpush1.msra.mxu0 %v9060
  %9302 = vmatprep.subr.mxu0 0.0
  %9303 = vmatpush1.msra.mxu0 %v9057
  %9304 = vmatprep.subr.mxu0 0.0
  %9305 = vmatpush1.msra.mxu0 %v9054
  %9306 = vmatprep.subr.mxu0 0.0
  %9307 = vmatpush1.msra.mxu0 %v9051
  %9308 = vmatprep.subr.mxu0 0.0
  %9309 = vmatpush2.msra.mxu0 0.0
  %9310 = vmatprep.subr.mxu0 0.0
  %9311 = vmatpush2.msra.mxu0 0.0
  %9312 = vmatprep.subr.mxu0 0.0
  %9313 = vmatpush2.msra.mxu0 0.0
  %9314 = vmatprep.subr.mxu0 0.0
  %9315 = vmatpush2.msra.mxu0 0.0
  %9316 = vmatprep.subr.mxu0 0.0
  %9317 = vmatpush2.msra.mxu0 0.0
  %9318 = vmatprep.subr.mxu0 0.0
  %9319 = vmatpush2.msra.mxu0 0.0
  %9320 = vmatprep.subr.mxu0 0.0
  %9321 = vmatpush2.msra.mxu0 0.0
  %9322 = vmatprep.subr.mxu0 0.0
  %9323 = vmatpush2.msra.mxu0 0.0
  %9324 = vmatprep.subr.mxu0 0.0
  %9325 = vmatpush2.msra.mxu0 0.0
  %9326 = vmatprep.subr.mxu0 0.0
  %9327 = vmatpush2.msra.mxu0 0.0
  %9328 = vmatprep.subr.mxu0 0.0
  %9329 = vmatpush2.msra.mxu0 0.0
  %9330 = vmatprep.subr.mxu0 0.0
  %9331 = vmatpush2.msra.mxu0 0.0
  %9332 = vmatprep.subr.mxu0 0.0
  %9333 = vmatpush2.msra.mxu0 0.0
  %9334 = vmatprep.subr.mxu0 0.0
  %9335 = vmatpush2.msra.mxu0 0.0
  %9336 = vmatprep.subr.mxu0 0.0
  %9337 = vmatpush2.msra.mxu0 0.0
  %9338 = vmatprep.subr.mxu0 0.0
  %9339 = vmatpush2.msra.mxu0 0.0
  %9340 = vmatprep.mubr.f32.mxu0 0.0
  %9341 = vmatmul.mubr.f32.gmra.mxu0 %v9062
  %v9342 = vpop.f32.mrf.mxu0
  %v9343 = vadd.f32 %v9273, %v9342
  %v9344 = vpop.f32.mrf.mxu0
  %9345 = vdwg.mxu0
  %9346 = vst [vmem:[%s9] sm:$0xff] %v9202
  %9347 = vst [vmem:[%s9 + $0x8] sm:$0xff] %v9204
  %9348 = vst.msk [vmem:[%s9 + $0x10] sm:$0xff] %vm34, %v9343
  %v9349 = vld [vmem:[%s7] sm:$0xff]
  %v9350 = vld [vmem:[%s7 + $0x8] sm:$0xff]
  %v9351 = vld [vmem:[%s7 + $0x10] sm:$0xff]
  %v9352 = vld [vmem:[%s7 + $0x18] sm:$0xff]
  %v9353 = vld [vmem:[%s7 + $0x20] sm:$0xff]
  %v9354 = vld [vmem:[%s7 + $0x28] sm:$0xff]
  %v9355 = vld [vmem:[%s7 + $0x30] sm:$0xff]
  %v9356 = vld [vmem:[%s7 + $0x38] sm:$0xff]
  %v9357 = vld [vmem:[%s7 + $0x40] sm:$0xff]
  %v9358 = vld [vmem:[%s7 + $0x48] sm:$0xff]
  %v9359 = vld [vmem:[%s7 + $0x50] sm:$0xff]
  %v9360 = vld [vmem:[%s7 + $0x58] sm:$0xff]
  %v9361 = vld [vmem:[%s7 + $0x60] sm:$0xff]
  %v9362 = vld [vmem:[%s7 + $0x68] sm:$0xff]
  %v9363 = vld [vmem:[%s7 + $0x70] sm:$0xff]
  %v9364 = vld [vmem:[%s7 + $0x78] sm:$0xff]
  %v9365 = vld [vmem:[%s7 + $0x80] sm:$0xff]
  %v9366 = vld [vmem:[%s7 + $0x88] sm:$0xff]
  %v9367 = vld [vmem:[%s7 + $0x90] sm:$0xff]
  %v9368 = vld [vmem:[%s7 + $0x98] sm:$0xff]
  %v9369 = vld [vmem:[%s7 + $0xa0] sm:$0xff]
  %v9370 = vld [vmem:[%s7 + $0xa8] sm:$0xff]
  %v9371 = vld [vmem:[%s7 + $0xb0] sm:$0xff]
  %v9372 = vld [vmem:[%s7 + $0xb8] sm:$0xff]
  %v9373 = vld [vmem:[%s7 + $0xc0] sm:$0xff]
  %v9374 = vld [vmem:[%s7 + $0xc8] sm:$0xff]
  %v9375 = vld [vmem:[%s7 + $0xd0] sm:$0xff]
  %v9376 = vld [vmem:[%s7 + $0xd8] sm:$0xff]
  %v9377 = vld [vmem:[%s7 + $0xe0] sm:$0xff]
  %v9378 = vld [vmem:[%s7 + $0xe8] sm:$0xff]
  %v9379 = vld [vmem:[%s7 + $0xf0] sm:$0xff]
  %v9380 = vld [vmem:[%s7 + $0xf8] sm:$0xff]
  %v9381 = vld [vmem:[%s7 + $0x100] sm:$0xff]
  %v9382 = vld [vmem:[%s7 + $0x108] sm:$0xff]
  %v9383 = vld [vmem:[%s7 + $0x110] sm:$0xff]
  %v9384 = vld [vmem:[%s7 + $0x118] sm:$0xff]
  %v9385 = vld [vmem:[%s8] sm:$0x1]
  %v9387 = vlaneseq
  %v9388 = vshrl.u32 %v9387, 7
  %v9389 = vsub.s32 0, %v9388
  %v9390 = vrot.slane %v9385, %v9389
  %9392 = vmatprep.subr.mxu0 0.0
  %9393 = vmatpush1.msra.mxu0 %v9364
  %9394 = vmatprep.subr.mxu0 0.0
  %9395 = vmatpush1.msra.mxu0 %v9363
  %9396 = vmatprep.subr.mxu0 0.0
  %9397 = vmatpush1.msra.mxu0 %v9362
  %9398 = vmatprep.subr.mxu0 0.0
  %9399 = vmatpush1.msra.mxu0 %v9361
  %9400 = vmatprep.subr.mxu0 0.0
  %9401 = vmatpush1.msra.mxu0 %v9360
  %9402 = vmatprep.subr.mxu0 0.0
  %9403 = vmatpush1.msra.mxu0 %v9359
  %9404 = vmatprep.subr.mxu0 0.0
  %9405 = vmatpush1.msra.mxu0 %v9358
  %9406 = vmatprep.subr.mxu0 0.0
  %9407 = vmatpush1.msra.mxu0 %v9357
  %9408 = vmatprep.subr.mxu0 0.0
  %9409 = vmatpush1.msra.mxu0 %v9356
  %9410 = vmatprep.subr.mxu0 0.0
  %9411 = vmatpush1.msra.mxu0 %v9355
  %9412 = vmatprep.subr.mxu0 0.0
  %9413 = vmatpush1.msra.mxu0 %v9354
  %9414 = vmatprep.subr.mxu0 0.0
  %9415 = vmatpush1.msra.mxu0 %v9353
  %9416 = vmatprep.subr.mxu0 0.0
  %9417 = vmatpush1.msra.mxu0 %v9352
  %9418 = vmatprep.subr.mxu0 0.0
  %9419 = vmatpush1.msra.mxu0 %v9351
  %9420 = vmatprep.subr.mxu0 0.0
  %9421 = vmatpush1.msra.mxu0 %v9350
  %9422 = vmatprep.subr.mxu0 0.0
  %9423 = vmatpush1.msra.mxu0 %v9349
  %9424 = vmatprep.subr.mxu0 0.0
  %9425 = vmatpush2.msra.mxu0 %v9380
  %9426 = vmatprep.subr.mxu0 0.0
  %9427 = vmatpush2.msra.mxu0 %v9379
  %9428 = vmatprep.subr.mxu0 0.0
  %9429 = vmatpush2.msra.mxu0 %v9378
  %9430 = vmatprep.subr.mxu0 0.0
  %9431 = vmatpush2.msra.mxu0 %v9377
  %9432 = vmatprep.subr.mxu0 0.0
  %9433 = vmatpush2.msra.mxu0 %v9376
  %9434 = vmatprep.subr.mxu0 0.0
  %9435 = vmatpush2.msra.mxu0 %v9375
  %9436 = vmatprep.subr.mxu0 0.0
  %9437 = vmatpush2.msra.mxu0 %v9374
  %9438 = vmatprep.subr.mxu0 0.0
  %9439 = vmatpush2.msra.mxu0 %v9373
  %9440 = vmatprep.subr.mxu0 0.0
  %9441 = vmatpush2.msra.mxu0 %v9372
  %9442 = vmatprep.subr.mxu0 0.0
  %9443 = vmatpush2.msra.mxu0 %v9371
  %9444 = vmatprep.subr.mxu0 0.0
  %9445 = vmatpush2.msra.mxu0 %v9370
  %9446 = vmatprep.subr.mxu0 0.0
  %9447 = vmatpush2.msra.mxu0 %v9369
  %9448 = vmatprep.subr.mxu0 0.0
  %9449 = vmatpush2.msra.mxu0 %v9368
  %9450 = vmatprep.subr.mxu0 0.0
  %9451 = vmatpush2.msra.mxu0 %v9367
  %9452 = vmatprep.subr.mxu0 0.0
  %9453 = vmatpush2.msra.mxu0 %v9366
  %9454 = vmatprep.subr.mxu0 0.0
  %9455 = vmatpush2.msra.mxu0 %v9365
  %9456 = vmatprep.mubr.f32.mxu0 %v8951
  %9457 = vmatmul.mubr.f32.gmra.mxu0 %v8950
  %v9458 = vpop.f32.mrf.mxu0
  %v9459 = vadd.f32 %v9390, %v9458
  %v9460 = vpop.f32.mrf.mxu0
  %9461 = vdwg.mxu0
  %9462 = vmatprep.subr.mxu0 0.0
  %9463 = vmatpush1.msra.mxu0 0.0
  %9464 = vmatprep.subr.mxu0 0.0
  %9465 = vmatpush1.msra.mxu0 0.0
  %9466 = vmatprep.subr.mxu0 0.0
  %9467 = vmatpush1.msra.mxu0 0.0
  %9468 = vmatprep.subr.mxu0 0.0
  %9469 = vmatpush1.msra.mxu0 0.0
  %9470 = vmatprep.subr.mxu0 0.0
  %9471 = vmatpush1.msra.mxu0 0.0
  %9472 = vmatprep.subr.mxu0 0.0
  %9473 = vmatpush1.msra.mxu0 0.0
  %9474 = vmatprep.subr.mxu0 0.0
  %9475 = vmatpush1.msra.mxu0 0.0
  %9476 = vmatprep.subr.mxu0 0.0
  %9477 = vmatpush1.msra.mxu0 0.0
  %9478 = vmatprep.subr.mxu0 0.0
  %9479 = vmatpush1.msra.mxu0 0.0
  %9480 = vmatprep.subr.mxu0 0.0
  %9481 = vmatpush1.msra.mxu0 0.0
  %9482 = vmatprep.subr.mxu0 0.0
  %9483 = vmatpush1.msra.mxu0 0.0
  %9484 = vmatprep.subr.mxu0 0.0
  %9485 = vmatpush1.msra.mxu0 0.0
  %9486 = vmatprep.subr.mxu0 0.0
  %9487 = vmatpush1.msra.mxu0 %v9384
  %9488 = vmatprep.subr.mxu0 0.0
  %9489 = vmatpush1.msra.mxu0 %v9383
  %9490 = vmatprep.subr.mxu0 0.0
  %9491 = vmatpush1.msra.mxu0 %v9382
  %9492 = vmatprep.subr.mxu0 0.0
  %9493 = vmatpush1.msra.mxu0 %v9381
  %9494 = vmatprep.subr.mxu0 0.0
  %9495 = vmatpush2.msra.mxu0 0.0
  %9496 = vmatprep.subr.mxu0 0.0
  %9497 = vmatpush2.msra.mxu0 0.0
  %9498 = vmatprep.subr.mxu0 0.0
  %9499 = vmatpush2.msra.mxu0 0.0
  %9500 = vmatprep.subr.mxu0 0.0
  %9501 = vmatpush2.msra.mxu0 0.0
  %9502 = vmatprep.subr.mxu0 0.0
  %9503 = vmatpush2.msra.mxu0 0.0
  %9504 = vmatprep.subr.mxu0 0.0
  %9505 = vmatpush2.msra.mxu0 0.0
  %9506 = vmatprep.subr.mxu0 0.0
  %9507 = vmatpush2.msra.mxu0 0.0
  %9508 = vmatprep.subr.mxu0 0.0
  %9509 = vmatpush2.msra.mxu0 0.0
  %9510 = vmatprep.subr.mxu0 0.0
  %9511 = vmatpush2.msra.mxu0 0.0
  %9512 = vmatprep.subr.mxu0 0.0
  %9513 = vmatpush2.msra.mxu0 0.0
  %9514 = vmatprep.subr.mxu0 0.0
  %9515 = vmatpush2.msra.mxu0 0.0
  %9516 = vmatprep.subr.mxu0 0.0
  %9517 = vmatpush2.msra.mxu0 0.0
  %9518 = vmatprep.subr.mxu0 0.0
  %9519 = vmatpush2.msra.mxu0 0.0
  %9520 = vmatprep.subr.mxu0 0.0
  %9521 = vmatpush2.msra.mxu0 0.0
  %9522 = vmatprep.subr.mxu0 0.0
  %9523 = vmatpush2.msra.mxu0 0.0
  %9524 = vmatprep.subr.mxu0 0.0
  %9525 = vmatpush2.msra.mxu0 0.0
  %9526 = vmatprep.mubr.f32.mxu0 0.0
  %9527 = vmatmul.mubr.f32.gmra.mxu0 %v9062
  %v9528 = vpop.f32.mrf.mxu0
  %v9529 = vadd.f32 %v9459, %v9528
  %v9530 = vpop.f32.mrf.mxu0
  %9531 = vdwg.mxu0
  %vm9532 = vcmask 15360
  %9533 = vst.msk [vmem:[%s10] sm:$0xff] %vm9532, %v9529
  // Predicated region
  $region38: #{mod_zero_three_forward.1} parent=0 // pred_check
    _
  $region39: #{mod_zero_three_forward.1} parent=0 // pred_check_branch
    %9535 = sbr.rel (0) target = $region41
  $region40: #{mod_zero_three_forward.1} parent=0 // pred_region
    _
  $region41: #{mod_zero_three_forward.1} parent=0 // pred_fallthru
    _
  // Predicated region
  $region42: #{mod_zero_three_forward.1} parent=0 // pred_check
    _
  $region43: #{mod_zero_three_forward.1} parent=0 // pred_check_branch
    %9537 = sbr.rel (0) target = $region45
  $region44: #{mod_zero_three_forward.1} parent=0 // pred_region
    _
  $region45: #{mod_zero_three_forward.1} parent=0 // pred_fallthru
    _
  // Predicated region
  $region46: #{mod_zero_three_forward.1} parent=0 // pred_check
    _
  $region47: #{mod_zero_three_forward.1} parent=0 // pred_check_branch
    %9539 = sbr.rel (0) target = $region49
  $region48: #{mod_zero_three_forward.1} parent=0 // pred_region
    _
  $region49: #{mod_zero_three_forward.1} parent=0 // pred_fallthru
    _
  // Predicated region
  $region50: #{mod_zero_three_forward.1} parent=0 // pred_check
    _
  $region51: #{mod_zero_three_forward.1} parent=0 // pred_check_branch
    %9541 = sbr.rel (0) target = $region53
  $region52: #{mod_zero_three_forward.1} parent=0 // pred_region
    _
  $region53: #{mod_zero_three_forward.1} parent=0 // pred_fallthru
    _

</llo_original>
